<compile_context>
chip_gen: v7x
topology: tpu7x:2x2x1
jax: 0.10.0
libtpu: 0.0.40
codegen_flags: <defaults>
</compile_context>

<pallas_src>
import functools

import jax
import jax.numpy as jnp
from jax.experimental import pallas as pl
from jax.experimental.pallas import tpu as pltpu


# ----------------------------------------------------------------------------
# Generic Pallas kernel: Y = act(X @ W + b)  (bf16 MXU operands, f32 epilogue)
# ----------------------------------------------------------------------------
def _mm_bias_kernel(x_ref, w_ref, b_ref, o_ref, *, apply_relu):
    y = jnp.dot(x_ref[...], w_ref[...], preferred_element_type=jnp.float32)
    y = y + b_ref[...]
    if apply_relu:
        y = jnp.maximum(y, 0.0)
    o_ref[...] = y.astype(o_ref.dtype)


def _pick_tm(m, target=2048):
    """Largest row tile <= target that divides m and is a multiple of 8."""
    if m <= target:
        return m
    start = target - (target % 8)
    for t in range(start, 7, -8):
        if m % t == 0:
            return t
    return m


def matmul_bias(x, w, b, *, apply_relu, out_dtype=jnp.float32, target_tm=2048):
    """act(x @ w + b): x (M,K), w (K,N), b (N,) -> (M,N)."""
    M, K = x.shape
    K2, N = w.shape
    assert K == K2
    tm = _pick_tm(M, target_tm)
    assert M % tm == 0, "row tile must divide M (picked by _pick_tm)"
    grid = (M // tm,)
    kernel = functools.partial(_mm_bias_kernel, apply_relu=apply_relu)
    cost = pl.CostEstimate(
        flops=2 * M * K * N,
        transcendentals=0,
        bytes_accessed=int(x.size * x.dtype.itemsize
                           + w.size * w.dtype.itemsize
                           + M * N * jnp.dtype(out_dtype).itemsize),
    )
    return pl.pallas_call(
        kernel,
        out_shape=jax.ShapeDtypeStruct((M, N), out_dtype),
        grid_spec=pltpu.PrefetchScalarGridSpec(
            num_scalar_prefetch=0,
            grid=grid,
            in_specs=[
                pl.BlockSpec((tm, K), lambda i: (i, 0)),
                pl.BlockSpec((K, N), lambda i: (0, 0)),
                pl.BlockSpec((1, N), lambda i: (0, 0)),
            ],
            out_specs=pl.BlockSpec((tm, N), lambda i: (i, 0)),
        ),
        compiler_params=pltpu.CompilerParams(dimension_semantics=("parallel",)),
        cost_estimate=cost,
    )(x, w, b.reshape(1, N).astype(jnp.float32))


# ----------------------------------------------------------------------------
# Fused conv2 (im2col matmul) + global average pool kernel.
# Per grid step (one batch element): the (576, 64) conv2 activation is kept in
# VMEM and immediately reduced by a constant (64, 576) pooling matrix on the
# MXU, emitting (s_out, channel)-ordered pooled features.
# ----------------------------------------------------------------------------
def _conv2_pool_kernel(p_ref, w_ref, b_ref, pt_ref, o_ref):
    y = jnp.dot(p_ref[...], w_ref[...], preferred_element_type=jnp.float32)
    y = jnp.maximum(y + b_ref[...], 0.0)                                  # (576, 64) f32
    pooled = jnp.dot(pt_ref[...], y, preferred_element_type=jnp.float32)  # (64, 64)
    o_ref[0] = pooled.astype(o_ref.dtype)


def conv2_pool(patches, w, b, pool_t, batch):
    """patches (batch*S_in, K) bf16, w (K,C) bf16, b (C,), pool_t (S_out,S_in)
    -> (batch, S_out, C) f32 pooled activations in (spatial, channel) order."""
    MB, K = patches.shape
    s_in = MB // batch
    C = w.shape[1]
    s_out = pool_t.shape[0]
    cost = pl.CostEstimate(
        flops=2 * MB * K * C + 2 * batch * s_out * s_in * C,
        transcendentals=0,
        bytes_accessed=int(patches.size * patches.dtype.itemsize
                           + w.size * w.dtype.itemsize
                           + pool_t.size * 4 + batch * s_out * C * 4),
    )
    return pl.pallas_call(
        _conv2_pool_kernel,
        out_shape=jax.ShapeDtypeStruct((batch, s_out, C), jnp.float32),
        grid_spec=pltpu.PrefetchScalarGridSpec(
            num_scalar_prefetch=0,
            grid=(batch,),
            in_specs=[
                pl.BlockSpec((s_in, K), lambda i: (i, 0)),
                pl.BlockSpec((K, C), lambda i: (0, 0)),
                pl.BlockSpec((1, C), lambda i: (0, 0)),
                pl.BlockSpec((s_out, s_in), lambda i: (0, 0)),
            ],
            out_specs=pl.BlockSpec((1, s_out, C), lambda i: (i, 0, 0)),
        ),
        compiler_params=pltpu.CompilerParams(dimension_semantics=("parallel",)),
        cost_estimate=cost,
    )(patches, w, b.reshape(1, C).astype(jnp.float32), pool_t)


# ----------------------------------------------------------------------------
# Plain-JAX glue: im2col patch extraction and the constant pooling matrix.
# ----------------------------------------------------------------------------
def _im2col(x_nhwc, k, s, p):
    B, H, W, C = x_nhwc.shape
    xp = jnp.pad(x_nhwc, ((0, 0), (p, p), (p, p), (0, 0)))
    OH = (H + 2 * p - k) // s + 1
    OW = (W + 2 * p - k) // s + 1
    cols = []
    for kh in range(k):
        for kw in range(k):
            cols.append(xp[:, kh:kh + s * OH:s, kw:kw + s * OW:s, :])  # (B,OH,OW,C)
    patches = jnp.stack(cols, axis=3)            # (B, OH, OW, k*k, C) order (kh, kw, c)
    return patches.reshape(B * OH * OW, k * k * C), OH, OW


def _pool_matrix_t(h, w, oh, ow):
    """(oh*ow, h*w) matrix: uniform non-overlapping (h/oh, w/ow) mean pooling.
    Only the exactly-divisible case (24x24 -> 8x8) is needed here."""
    s = jnp.arange(h * w)
    hh, ww = s // w, s % w
    so = (hh // (h // oh)) * ow + (ww // (w // ow))
    m = jnp.zeros((oh * ow, h * w), jnp.float32)
    return m.at[so, s].set(1.0 / ((h // oh) * (w // ow)))


# ----------------------------------------------------------------------------
# Full forward pass (mirrors VAEEncoder.forward outputs)
# ----------------------------------------------------------------------------
def vae_encoder_forward(uv_nchw, dp_nchw, params):
    latent = params["b_mu"].shape[0]
    x = jnp.concatenate([uv_nchw, dp_nchw], axis=1)             # torch.cat(dim=1), NCHW
    x = jnp.transpose(x, (0, 2, 3, 1)).astype(jnp.bfloat16)     # -> NHWC, bf16 operands
    B, H, W, cin = x.shape

    # conv1: 4x4 s2 p1, cin -> 32, ReLU
    w1 = jnp.transpose(params["w1"], (2, 3, 1, 0)).reshape(16 * cin, 32).astype(jnp.bfloat16)
    p1, oh1, ow1 = _im2col(x, k=4, s=2, p=1)
    y1 = matmul_bias(p1, w1, params["b1"], apply_relu=True, out_dtype=jnp.bfloat16)
    y1 = y1.reshape(B, oh1, ow1, 32)

    # NOTE: the PyTorch center branch (center_conv1/2 -> x_clone) never feeds
    # (mu, logvar); it is skipped entirely (largest FLOP block of the module).

    # conv2 (32 -> 64, ReLU) fused with AdaptiveAvgPool2d((8,8)) in one kernel.
    assert (oh1, ow1) == (48, 48), "module assumes 96x96 spatial inputs"
    w2 = jnp.transpose(params["w2"], (2, 3, 1, 0)).reshape(16 * 32, 64).astype(jnp.bfloat16)
    p2, oh2, ow2 = _im2col(y1, k=4, s=2, p=1)                   # (B*576, 512) bf16
    pool_t = _pool_matrix_t(oh2, ow2, 8, 8)                     # (64, 576) constant
    pooled = conv2_pool(p2, w2, params["b2"], pool_t, B)        # (B, 64, 64) f32, (s, c)

    # fc_mu / fc_logvar fused into one matmul; weight rows pre-permuted from
    # PyTorch's (c, s) flatten order to our (s, c) order -> no HBM transpose.
    C2, s_out = 64, 64
    flat = pooled.reshape(B, s_out * C2).astype(jnp.bfloat16)
    w_fc = jnp.concatenate([params["w_mu"].T, params["w_lv"].T], axis=1)      # (4096, 2L)
    w_fc = (w_fc.reshape(C2, s_out, 2 * latent)
                .transpose(1, 0, 2)
                .reshape(s_out * C2, 2 * latent)
                .astype(jnp.bfloat16))
    b_fc = jnp.concatenate([params["b_mu"], params["b_lv"]])
    out = matmul_bias(flat, w_fc, b_fc, apply_relu=False, out_dtype=jnp.float32)
    return out[:, :latent], out[:, latent:]


# ----------------------------------------------------------------------------
# Deterministic parameter init (shapes from VAEEncoder.__init__; the center-
# branch parameters exist for fidelity but are unused by the outputs).
# ----------------------------------------------------------------------------
def init_params(key, uv_c, dp_c, latent):
    cin = uv_c + dp_c

    def norm(k, shape, fan_in):
        return jax.random.normal(k, shape, jnp.float32) / jnp.sqrt(float(fan_in))

    ks = jax.random.split(key, 12)
    return {
        "w1": norm(ks[0], (32, cin, 4, 4), cin * 16),
        "b1": norm(ks[1], (32,), cin * 16),
        "w2": norm(ks[2], (64, 32, 4, 4), 32 * 16),
        "b2": norm(ks[3], (64,), 32 * 16),
        "wc1": norm(ks[4], (128, 64, 3, 3), 64 * 9),      # unused (dead branch)
        "bc1": norm(ks[5], (128,), 64 * 9),               # unused (dead branch)
        "wc2": norm(ks[6], (64, 128, 3, 3), 128 * 9),     # unused (dead branch)
        "bc2": norm(ks[7], (64,), 128 * 9),               # unused (dead branch)
        "w_mu": norm(ks[8], (latent, 64 * 8 * 8), 64 * 8 * 8),
        "b_mu": norm(ks[9], (latent,), 64 * 8 * 8),
        "w_lv": norm(ks[10], (latent, 64 * 8 * 8), 64 * 8 * 8),
        "b_lv": norm(ks[11], (latent,), 64 * 8 * 8),
    }


# ----------------------------------------------------------------------------
# Pure-JAX reference (all-f32, HIGHEST precision) for correctness check.
# ----------------------------------------------------------------------------
def reference_forward(uv, dp, params):
    prec = jax.lax.Precision.HIGHEST

    def conv(x, w, b, stride, pad):
        y = jax.lax.conv_general_dilated(
            x, w, window_strides=(stride, stride),
            padding=((pad, pad), (pad, pad)),
            dimension_numbers=("NCHW", "OIHW", "NCHW"),
            precision=prec)
        return y + b[None, :, None, None]

    x = jnp.concatenate([uv, dp], axis=1)
    x = jax.nn.relu(conv(x, params["w1"], params["b1"], 2, 1))
    x = jax.nn.relu(conv(x, params["w2"], params["b2"], 2, 1))
    B, C, H, W = x.shape
    pooled = x.reshape(B, C, 8, H // 8, 8, W // 8).mean(axis=(3, 5))
    flat = pooled.reshape(B, -1)
    mu = jnp.dot(flat, params["w_mu"].T, precision=prec) + params["b_mu"]
    logvar = jnp.dot(flat, params["w_lv"].T, precision=prec) + params["b_lv"]
    return mu, logvar


if __name__ == "__main__":
    B, UV_C, DP_C, H, W, LATENT = 2, 2, 3, 96, 96, 32
    key = jax.random.PRNGKey(0)
    kp, ku, kd = jax.random.split(key, 3)
    params = init_params(kp, UV_C, DP_C, LATENT)
    uv = jax.random.normal(ku, (B, UV_C, H, W), jnp.float32)
    dp = jax.random.normal(kd, (B, DP_C, H, W), jnp.float32)

    fwd = jax.jit(vae_encoder_forward)
    mu, logvar = fwd(uv, dp, params)
    jax.block_until_ready((mu, logvar))

    mu_ref, lv_ref = reference_forward(uv, dp, params)
    assert mu.shape == (B, LATENT) and logvar.shape == (B, LATENT)
    # 2e-2 tolerance: bf16 MXU operands bound the achievable accuracy to ~1%.
    assert jnp.allclose(mu, mu_ref, rtol=2e-2, atol=2e-2), "mu mismatch"
    assert jnp.allclose(logvar, lv_ref, rtol=2e-2, atol=2e-2), "logvar mismatch"
    print("KERNEL_OK")
</pallas_src>

<mosaic_0001>
module attributes {stable_mosaic.version = 11 : i64} {
  func.func @_mm_bias_kernel(%arg0: i32, %arg1: memref<1536x80xbf16, #tpu.memory_space<vmem>>, %arg2: memref<80x32xbf16, #tpu.memory_space<vmem>>, %arg3: memref<1x32xf32, #tpu.memory_space<vmem>>, %arg4: memref<1536x32xbf16, #tpu.memory_space<vmem>>) attributes {dimension_semantics = [#tpu.dimension_semantics<parallel>], iteration_bounds = array<i64: 3>, scalar_prefetch = 0 : i64, scratch_operands = 0 : i64, tpu.core_type = #tpu.core_type<tc>, window_params = [{transform_indices = @transform_0, window_bounds = array<i64: 1536, 80>}, {pipeline_mode = #tpu.pipeline_mode<synchronous>, transform_indices = @transform_1, window_bounds = array<i64: 80, 32>}, {pipeline_mode = #tpu.pipeline_mode<synchronous>, transform_indices = @transform_2, window_bounds = array<i64: 1, 32>}, {transform_indices = @transform_3, window_bounds = array<i64: 1536, 32>}]} {
    %c0 = arith.constant 0 : index
    %c0_0 = arith.constant 0 : index
    %0 = vector.load %arg1[%c0, %c0_0] : memref<1536x80xbf16, #tpu.memory_space<vmem>>, vector<1536x80xbf16>
    %c0_1 = arith.constant 0 : index
    %c0_2 = arith.constant 0 : index
    %1 = vector.load %arg2[%c0_1, %c0_2] : memref<80x32xbf16, #tpu.memory_space<vmem>>, vector<80x32xbf16>
    %cst = arith.constant dense<0.000000e+00> : vector<1536x32xf32>
    %2 = tpu.matmul %0, %1, %cst {dimension_numbers = #tpu.dot_dimension_numbers<[1], [0], [0], [1], [0, 0, 1, 1], [], []>} : vector<1536x80xbf16>, vector<80x32xbf16>, vector<1536x32xf32> -> vector<1536x32xf32>
    %c0_3 = arith.constant 0 : index
    %c0_4 = arith.constant 0 : index
    %3 = vector.load %arg3[%c0_3, %c0_4] : memref<1x32xf32, #tpu.memory_space<vmem>>, vector<1x32xf32>
    %4 = vector.broadcast %3 : vector<1x32xf32> to vector<1536x32xf32>
    %5 = arith.addf %2, %4 : vector<1536x32xf32>
    %cst_5 = arith.constant 0.000000e+00 : f32
    %6 = vector.broadcast %cst_5 : f32 to vector<1536x32xf32>
    %7 = arith.maximumf %5, %6 : vector<1536x32xf32>
    %8 = arith.truncf %7 : vector<1536x32xf32> to vector<1536x32xbf16>
    %c0_6 = arith.constant 0 : index
    %c0_7 = arith.constant 0 : index
    %9 = vector.load %arg4[%c0_6, %c0_7] : memref<1536x32xbf16, #tpu.memory_space<vmem>>, vector<1536x32xbf16>
    tpu.vector_store %arg4[%c0_6, %c0_7], %8 {strides = array<i32>} : memref<1536x32xbf16, #tpu.memory_space<vmem>>, vector<1536x32xbf16>,
    return
  }
  func.func @transform_0(%arg0: i32) -> (i32, i32) {
    %c0_i32 = arith.constant 0 : i32
    %c0_i32_0 = arith.constant 0 : i32
    return %arg0, %c0_i32 : i32, i32
  }
  func.func @transform_1(%arg0: i32) -> (i32, i32) {
    %c0_i32 = arith.constant 0 : i32
    %c0_i32_0 = arith.constant 0 : i32
    %c0_i32_1 = arith.constant 0 : i32
    return %c0_i32, %c0_i32_0 : i32, i32
  }
  func.func @transform_2(%arg0: i32) -> (i32, i32) {
    %c0_i32 = arith.constant 0 : i32
    %c0_i32_0 = arith.constant 0 : i32
    %c0_i32_1 = arith.constant 0 : i32
    return %c0_i32, %c0_i32_0 : i32, i32
  }
  func.func @transform_3(%arg0: i32) -> (i32, i32) {
    %c0_i32 = arith.constant 0 : i32
    %c0_i32_0 = arith.constant 0 : i32
    return %arg0, %c0_i32 : i32, i32
  }
}

module attributes {stable_mosaic.version = 11 : i64} {
  func.func @_conv2_pool_kernel(%arg0: i32, %arg1: memref<576x512xbf16, #tpu.memory_space<vmem>>, %arg2: memref<512x64xbf16, #tpu.memory_space<vmem>>, %arg3: memref<1x64xf32, #tpu.memory_space<vmem>>, %arg4: memref<64x576xf32, #tpu.memory_space<vmem>>, %arg5: memref<1x64x64xf32, #tpu.memory_space<vmem>>) attributes {dimension_semantics = [#tpu.dimension_semantics<parallel>], iteration_bounds = array<i64: 2>, scalar_prefetch = 0 : i64, scratch_operands = 0 : i64, tpu.core_type = #tpu.core_type<tc>, window_params = [{transform_indices = @transform_0, window_bounds = array<i64: 576, 512>}, {pipeline_mode = #tpu.pipeline_mode<synchronous>, transform_indices = @transform_1, window_bounds = array<i64: 512, 64>}, {pipeline_mode = #tpu.pipeline_mode<synchronous>, transform_indices = @transform_2, window_bounds = array<i64: 1, 64>}, {pipeline_mode = #tpu.pipeline_mode<synchronous>, transform_indices = @transform_3, window_bounds = array<i64: 64, 576>}, {transform_indices = @transform_4, window_bounds = array<i64: 1, 64, 64>}]} {
    %c0 = arith.constant 0 : index
    %c0_0 = arith.constant 0 : index
    %0 = vector.load %arg1[%c0, %c0_0] : memref<576x512xbf16, #tpu.memory_space<vmem>>, vector<576x512xbf16>
    %c0_1 = arith.constant 0 : index
    %c0_2 = arith.constant 0 : index
    %1 = vector.load %arg2[%c0_1, %c0_2] : memref<512x64xbf16, #tpu.memory_space<vmem>>, vector<512x64xbf16>
    %cst = arith.constant dense<0.000000e+00> : vector<576x64xf32>
    %2 = tpu.matmul %0, %1, %cst {dimension_numbers = #tpu.dot_dimension_numbers<[1], [0], [0], [1], [0, 0, 1, 1], [], []>} : vector<576x512xbf16>, vector<512x64xbf16>, vector<576x64xf32> -> vector<576x64xf32>
    %c0_3 = arith.constant 0 : index
    %c0_4 = arith.constant 0 : index
    %3 = vector.load %arg3[%c0_3, %c0_4] : memref<1x64xf32, #tpu.memory_space<vmem>>, vector<1x64xf32>
    %4 = vector.broadcast %3 : vector<1x64xf32> to vector<576x64xf32>
    %5 = arith.addf %2, %4 : vector<576x64xf32>
    %cst_5 = arith.constant 0.000000e+00 : f32
    %6 = vector.broadcast %cst_5 : f32 to vector<576x64xf32>
    %7 = arith.maximumf %5, %6 : vector<576x64xf32>
    %c0_6 = arith.constant 0 : index
    %c0_7 = arith.constant 0 : index
    %8 = vector.load %arg4[%c0_6, %c0_7] : memref<64x576xf32, #tpu.memory_space<vmem>>, vector<64x576xf32>
    %cst_8 = arith.constant dense<0.000000e+00> : vector<64x64xf32>
    %9 = tpu.matmul %8, %7, %cst_8 {dimension_numbers = #tpu.dot_dimension_numbers<[1], [0], [0], [1], [0, 0, 1, 1], [], []>} : vector<64x576xf32>, vector<576x64xf32>, vector<64x64xf32> -> vector<64x64xf32>
    %c0_9 = arith.constant 0 : index
    %c0_10 = arith.constant 0 : index
    %c0_11 = arith.constant 0 : index
    %10 = vector.load %arg5[%c0_9, %c0_10, %c0_11] : memref<1x64x64xf32, #tpu.memory_space<vmem>>, vector<1x64x64xf32>
    %11 = vector.shape_cast %10 : vector<1x64x64xf32> to vector<64x64xf32>
    %12 = vector.shape_cast %9 : vector<64x64xf32> to vector<1x64x64xf32>
    tpu.vector_store %arg5[%c0_9, %c0_10, %c0_11], %12 {strides = array<i32>} : memref<1x64x64xf32, #tpu.memory_space<vmem>>, vector<1x64x64xf32>,
    return
  }
  func.func @transform_0(%arg0: i32) -> (i32, i32) {
    %c0_i32 = arith.constant 0 : i32
    %c0_i32_0 = arith.constant 0 : i32
    return %arg0, %c0_i32 : i32, i32
  }
  func.func @transform_1(%arg0: i32) -> (i32, i32) {
    %c0_i32 = arith.constant 0 : i32
    %c0_i32_0 = arith.constant 0 : i32
    %c0_i32_1 = arith.constant 0 : i32
    return %c0_i32, %c0_i32_0 : i32, i32
  }
  func.func @transform_2(%arg0: i32) -> (i32, i32) {
    %c0_i32 = arith.constant 0 : i32
    %c0_i32_0 = arith.constant 0 : i32
    %c0_i32_1 = arith.constant 0 : i32
    return %c0_i32, %c0_i32_0 : i32, i32
  }
  func.func @transform_3(%arg0: i32) -> (i32, i32) {
    %c0_i32 = arith.constant 0 : i32
    %c0_i32_0 = arith.constant 0 : i32
    %c0_i32_1 = arith.constant 0 : i32
    return %c0_i32, %c0_i32_0 : i32, i32
  }
  func.func @transform_4(%arg0: i32) -> (i32, i32, i32) {
    %c0_i32 = arith.constant 0 : i32
    %c0_i32_0 = arith.constant 0 : i32
    %c0_i32_1 = arith.constant 0 : i32
    return %arg0, %c0_i32, %c0_i32_0 : i32, i32, i32
  }
}

module attributes {stable_mosaic.version = 11 : i64} {
  func.func @_mm_bias_kernel(%arg0: i32, %arg1: memref<2x4096xbf16, #tpu.memory_space<vmem>>, %arg2: memref<4096x64xbf16, #tpu.memory_space<vmem>>, %arg3: memref<1x64xf32, #tpu.memory_space<vmem>>, %arg4: memref<2x64xf32, #tpu.memory_space<vmem>>) attributes {dimension_semantics = [#tpu.dimension_semantics<parallel>], iteration_bounds = array<i64: 1>, scalar_prefetch = 0 : i64, scratch_operands = 0 : i64, tpu.core_type = #tpu.core_type<tc>, window_params = [{transform_indices = @transform_0, window_bounds = array<i64: 2, 4096>}, {pipeline_mode = #tpu.pipeline_mode<synchronous>, transform_indices = @transform_1, window_bounds = array<i64: 4096, 64>}, {pipeline_mode = #tpu.pipeline_mode<synchronous>, transform_indices = @transform_2, window_bounds = array<i64: 1, 64>}, {transform_indices = @transform_3, window_bounds = array<i64: 2, 64>}]} {
    %c0 = arith.constant 0 : index
    %c0_0 = arith.constant 0 : index
    %0 = vector.load %arg1[%c0, %c0_0] : memref<2x4096xbf16, #tpu.memory_space<vmem>>, vector<2x4096xbf16>
    %c0_1 = arith.constant 0 : index
    %c0_2 = arith.constant 0 : index
    %1 = vector.load %arg2[%c0_1, %c0_2] : memref<4096x64xbf16, #tpu.memory_space<vmem>>, vector<4096x64xbf16>
    %cst = arith.constant dense<0.000000e+00> : vector<2x64xf32>
    %2 = tpu.matmul %0, %1, %cst {dimension_numbers = #tpu.dot_dimension_numbers<[1], [0], [0], [1], [0, 0, 1, 1], [], []>} : vector<2x4096xbf16>, vector<4096x64xbf16>, vector<2x64xf32> -> vector<2x64xf32>
    %c0_3 = arith.constant 0 : index
    %c0_4 = arith.constant 0 : index
    %3 = vector.load %arg3[%c0_3, %c0_4] : memref<1x64xf32, #tpu.memory_space<vmem>>, vector<1x64xf32>
    %4 = vector.broadcast %3 : vector<1x64xf32> to vector<2x64xf32>
    %5 = arith.addf %2, %4 : vector<2x64xf32>
    %c0_5 = arith.constant 0 : index
    %c0_6 = arith.constant 0 : index
    %6 = vector.load %arg4[%c0_5, %c0_6] : memref<2x64xf32, #tpu.memory_space<vmem>>, vector<2x64xf32>
    tpu.vector_store %arg4[%c0_5, %c0_6], %5 {strides = array<i32>} : memref<2x64xf32, #tpu.memory_space<vmem>>, vector<2x64xf32>,
    return
  }
  func.func @transform_0(%arg0: i32) -> (i32, i32) {
    %c0_i32 = arith.constant 0 : i32
    %c0_i32_0 = arith.constant 0 : i32
    return %arg0, %c0_i32 : i32, i32
  }
  func.func @transform_1(%arg0: i32) -> (i32, i32) {
    %c0_i32 = arith.constant 0 : i32
    %c0_i32_0 = arith.constant 0 : i32
    %c0_i32_1 = arith.constant 0 : i32
    return %c0_i32, %c0_i32_0 : i32, i32
  }
  func.func @transform_2(%arg0: i32) -> (i32, i32) {
    %c0_i32 = arith.constant 0 : i32
    %c0_i32_0 = arith.constant 0 : i32
    %c0_i32_1 = arith.constant 0 : i32
    return %c0_i32, %c0_i32_0 : i32, i32
  }
  func.func @transform_3(%arg0: i32) -> (i32, i32) {
    %c0_i32 = arith.constant 0 : i32
    %c0_i32_0 = arith.constant 0 : i32
    return %arg0, %c0_i32 : i32, i32
  }
}

</mosaic_0001>

<llo_original>
// kernel: vae_encoder_forward.3
$region0: #{vae_encoder_forward.3}
  #allocation0 [shape = 'u32[]', space=smem, size = 0x4, offset = 0x4, fixed_abs, tag = 'smem constant byte address 0x4 - core index']
  #allocation1 [shape = 'u32[144,128]{1,0:T(1,128)}', space=vmem, size = 0x12000, scoped, tag = 'internal scratch']
  %s0 = inlined_call_operand.vmem [shape: bf16[4608,80], index: 0, kind: input, shape index: {}]
  %s1 = inlined_call_operand.vmem [shape: bf16[80,32], index: 1, kind: input, shape index: {}]
  %s2 = inlined_call_operand.vmem [shape: f32[1,32], index: 2, kind: input, shape index: {}]
  %s3 = inlined_call_operand.vmem [shape: bf16[4608,32], index: 3, kind: output, shape index: {}]
  %s4 = sld [smem:[#allocation0]]
  $region45: #{vae_encoder_forward.3} parent=0
    _
  %s6 = ssub.s32 1, %s4
  %s7 = scalar_select 0, %s6, %s4
  loop: start=0, step=1, limit=5
  $region2: #{vae_encoder_forward.3} parent=0 // loop_pre_header
    _
  $region3: #{vae_encoder_forward.3} parent=0 // loop_header
    %s9 = sphi 0, %s13
    %p10 = scmp.ge.s32.totalorder %s9, 5
    %s19 = sphi 0, %s21
    %s22 = sphi 0, %s19
    %s23 = sphi 0, %s22
    %s39 = sphi 0, %s23
    %s43 = sphi 0, %s43
    %s45 = sphi 0, %s43
    %s46 = sphi 0, %s45
    %s60 = sphi 0, %s46
    %s64 = sphi 0, %s64
    %s66 = sphi 0, %s64
    %s67 = sphi 0, %s66
    %s81 = sphi 0, %s67
    %s87 = sphi 0, %s89
    %s90 = sphi 0, %s87
    %s91 = sphi 0, %s90
    %s107 = sphi 0, %s91
  $region4: #{vae_encoder_forward.3} parent=0 // loop_header_branch
    %12 = sbr.rel (%p10) target = $region8
  $region5: #{vae_encoder_forward.3} parent=0 // loop_body
    %s14 = ssub.s32 %s9, 1
    %s15 = ssub.s32 %s9, 2
    %s16 = sadd.s32 %s9, 1
    %s17 = ssub.s32 %s9, %s16
    %p18 = scmp.eq.s32.totalorder %s17, 0
    %s20 = sadd.s32 %s19, 1
    %s21 = scalar_select %p18, %s19, %s20
    %p24 = pneg %p18
    %p25 = scmp.eq.s32.totalorder %s9, 2
    %p26 = por %p24, %p25
    %p27 = scmp.ne.s32.totalorder %s19, %s22
    %p28 = scmp.eq.s32.totalorder %s9, 0
    %p29 = por %p27, %p28
    %p30 = scmp.ne.s32.totalorder %s19, %s22
    %p31 = scmp.eq.s32.totalorder %s14, 2
    %p32 = por %p30, %p31
    %p33 = scmp.ne.s32.totalorder %s22, %s23
    %p34 = scmp.eq.s32.totalorder %s14, 0
    %p35 = por %p33, %p34
    %p36 = scmp.ne.s32.totalorder %s22, %s23
    %p37 = scmp.eq.s32.totalorder %s15, 2
    %p38 = por %p36, %p37
    %p40 = scmp.ne.s32.totalorder %s23, %s39
    %p41 = scmp.eq.s32.totalorder %s15, 0
    %p42 = por %p40, %p41
    %s44 = sadd.s32 %s43, 1
    %p47 = scmp.eq.s32.totalorder %s9, 2
    %p48 = scmp.ne.s32.totalorder %s43, %s45
    %p49 = scmp.eq.s32.totalorder %s9, 0
    %p50 = por %p48, %p49
    %p51 = scmp.ne.s32.totalorder %s43, %s45
    %p52 = scmp.eq.s32.totalorder %s14, 2
    %p53 = por %p51, %p52
    %p54 = scmp.ne.s32.totalorder %s45, %s46
    %p55 = scmp.eq.s32.totalorder %s14, 0
    %p56 = por %p54, %p55
    %p57 = scmp.ne.s32.totalorder %s45, %s46
    %p58 = scmp.eq.s32.totalorder %s15, 2
    %p59 = por %p57, %p58
    %p61 = scmp.ne.s32.totalorder %s46, %s60
    %p62 = scmp.eq.s32.totalorder %s15, 0
    %p63 = por %p61, %p62
    %s65 = sadd.s32 %s64, 1
    %p68 = scmp.eq.s32.totalorder %s9, 2
    %p69 = scmp.ne.s32.totalorder %s64, %s66
    %p70 = scmp.eq.s32.totalorder %s9, 0
    %p71 = por %p69, %p70
    %p72 = scmp.ne.s32.totalorder %s64, %s66
    %p73 = scmp.eq.s32.totalorder %s14, 2
    %p74 = por %p72, %p73
    %p75 = scmp.ne.s32.totalorder %s66, %s67
    %p76 = scmp.eq.s32.totalorder %s14, 0
    %p77 = por %p75, %p76
    %p78 = scmp.ne.s32.totalorder %s66, %s67
    %p79 = scmp.eq.s32.totalorder %s15, 2
    %p80 = por %p78, %p79
    %p82 = scmp.ne.s32.totalorder %s67, %s81
    %p83 = scmp.eq.s32.totalorder %s15, 0
    %p84 = por %p82, %p83
    %s85 = ssub.s32 %s9, %s16
    %p86 = scmp.eq.s32.totalorder %s85, 0
    %s88 = sadd.s32 %s87, 1
    %s89 = scalar_select %p86, %s87, %s88
    %p92 = pneg %p86
    %p93 = scmp.eq.s32.totalorder %s9, 2
    %p94 = por %p92, %p93
    %p95 = scmp.ne.s32.totalorder %s87, %s90
    %p96 = scmp.eq.s32.totalorder %s9, 0
    %p97 = por %p95, %p96
    %p98 = scmp.ne.s32.totalorder %s87, %s90
    %p99 = scmp.eq.s32.totalorder %s14, 2
    %p100 = por %p98, %p99
    %p101 = scmp.ne.s32.totalorder %s90, %s91
    %p102 = scmp.eq.s32.totalorder %s14, 0
    %p103 = por %p101, %p102
    %p104 = scmp.ne.s32.totalorder %s90, %s91
    %p105 = scmp.eq.s32.totalorder %s15, 2
    %p106 = por %p104, %p105
    %p108 = scmp.ne.s32.totalorder %s91, %s107
    %p109 = scmp.eq.s32.totalorder %s15, 0
    %p110 = por %p108, %p109
    %p111 = scmp.le.s32.totalorder 1, %s9
    %p112 = scmp.lt.s32.totalorder %s9, 4
    %p113 = pnand %p111, %p112
    %p114 = pneg %p113
    // Predicated region
    $region9: #{vae_encoder_forward.3} parent=5 // pred_check
      _
    $region10: #{vae_encoder_forward.3} parent=5 // pred_check_branch
      %116 = sbr.rel (%p113) target = $region12
    $region11: #{vae_encoder_forward.3} parent=5 // pred_region
      %s117 = ssub.s32 %s9, 1
      // Predicated region
      $region13: #{vae_encoder_forward.3} parent=11 // pred_check
        %p118 = pneg %p56
      $region14: #{vae_encoder_forward.3} parent=11 // pred_check_branch
        %120 = sbr.rel (%p118) target = $region16
      $region15: #{vae_encoder_forward.3} parent=11 // pred_region
        _
      $region16: #{vae_encoder_forward.3} parent=11 // pred_fallthru
        _
      // Predicated region
      $region17: #{vae_encoder_forward.3} parent=11 // pred_check
        %p121 = pneg %p77
      $region18: #{vae_encoder_forward.3} parent=11 // pred_check_branch
        %123 = sbr.rel (%p121) target = $region20
      $region19: #{vae_encoder_forward.3} parent=11 // pred_region
        _
      $region20: #{vae_encoder_forward.3} parent=11 // pred_fallthru
        _
    $region12: #{vae_encoder_forward.3} parent=5 // pred_fallthru
      _
    %p124 = scmp.lt.s32.totalorder %s9, 3
    // Predicated region
    $region21: #{vae_encoder_forward.3} parent=5 // pred_check
      %p125 = pneg %p124
    $region22: #{vae_encoder_forward.3} parent=5 // pred_check_branch
      %127 = sbr.rel (%p125) target = $region24
    $region23: #{vae_encoder_forward.3} parent=5 // pred_region
      // Predicated region
      $region25: #{vae_encoder_forward.3} parent=23 // pred_check
        %p128 = pneg %p29
      $region26: #{vae_encoder_forward.3} parent=23 // pred_check_branch
        %130 = sbr.rel (%p128) target = $region28
      $region27: #{vae_encoder_forward.3} parent=23 // pred_region
        %s131 = smul.u32 192, %s9
        %p132 = scmp.lt.s32.totalorder %s131, 575
        %s133 = scalar_select %p132, %s131, 575
        %s134 = smul.addr %s133, 4
        %s135 = scalar_lea.vmem %s0, %s134
        %s136 = smul.u32 192, %s9
      $region28: #{vae_encoder_forward.3} parent=23 // pred_fallthru
        _
    $region24: #{vae_encoder_forward.3} parent=5 // pred_fallthru
      _
    %p137 = scmp.le.s32.totalorder 1, %s9
    %p138 = scmp.lt.s32.totalorder %s9, 4
    %p139 = pnand %p137, %p138
    %p140 = pneg %p139
    // Predicated region
    $region29: #{vae_encoder_forward.3} parent=5 // pred_check
      _
    $region30: #{vae_encoder_forward.3} parent=5 // pred_check_branch
      %142 = sbr.rel (%p139) target = $region32
    $region31: #{vae_encoder_forward.3} parent=5 // pred_region
      %s143 = ssub.s32 %s9, 1
      %s144 = smul.u32 192, %s14
      %p145 = scmp.lt.s32.totalorder %s144, 575
      %s146 = scalar_select %p145, %s144, 575
      %s147 = smul.addr %s146, 4
      %s148 = scalar_lea.vmem %s0, %s147
      %p149 = pneg %p35
      %p150 = pneg %p32
      %p151 = pneg %p56
      %p152 = pneg %p53
      %p153 = pneg %p77
      %p154 = pneg %p74
      %p155 = pneg %p103
      %p156 = pneg %p100
      %s157 = smul.u32 192, %s14
      %p158 = scmp.lt.s32.totalorder %s157, 575
      %s159 = scalar_select %p158, %s157, 575
      %s160 = smul.addr %s159, 4
      %s161 = scalar_lea.vmem %s3, %s160
      %s162 = smul.u32 192, %s14
      %p163 = scmp.lt.s32.totalorder %s162, 575
      %s164 = scalar_select %p163, %s162, 575
      %s165 = smul.addr %s164, 4
      %s166 = scalar_lea.vmem %s0, %s165
      %s167 = smul.u32 192, %s14
      %s168 = smul.u32 192, %s14
      %p169 = scmp.lt.s32.totalorder %s168, 575
      %s170 = scalar_select %p169, %s168, 575
      %s171 = smul.addr %s170, 4
      %s172 = scalar_lea.vmem %s3, %s171
      %s173 = smul.u32 192, %s14
      %v175 = vld [vmem:[%s166] sm:$0xf]
      %v176 = vld [vmem:[%s166 + $0x4] sm:$0xf]
      %v177 = vld [vmem:[%s166 + $0x8] sm:$0xf]
      %v178 = vld [vmem:[%s166 + $0xc] sm:$0xf]
      %v179 = vld [vmem:[%s166 + $0x10] sm:$0xf]
      %v180 = vld [vmem:[%s166 + $0x14] sm:$0xf]
      %v181 = vld [vmem:[%s166 + $0x18] sm:$0xf]
      %v182 = vld [vmem:[%s166 + $0x1c] sm:$0xf]
      %v183 = vld [vmem:[%s166 + $0x20] sm:$0xf]
      %v184 = vld [vmem:[%s166 + $0x24] sm:$0xf]
      %v185 = vld [vmem:[%s166 + $0x28] sm:$0xf]
      %v186 = vld [vmem:[%s166 + $0x2c] sm:$0xf]
      %v187 = vld [vmem:[%s166 + $0x30] sm:$0xf]
      %v188 = vld [vmem:[%s166 + $0x34] sm:$0xf]
      %v189 = vld [vmem:[%s166 + $0x38] sm:$0xf]
      %v190 = vld [vmem:[%s166 + $0x3c] sm:$0xf]
      %v191 = vld [vmem:[%s166 + $0x40] sm:$0xf]
      %v192 = vld [vmem:[%s166 + $0x44] sm:$0xf]
      %v193 = vld [vmem:[%s166 + $0x48] sm:$0xf]
      %v194 = vld [vmem:[%s166 + $0x4c] sm:$0xf]
      %v195 = vld [vmem:[%s166 + $0x50] sm:$0xf]
      %v196 = vld [vmem:[%s166 + $0x54] sm:$0xf]
      %v197 = vld [vmem:[%s166 + $0x58] sm:$0xf]
      %v198 = vld [vmem:[%s166 + $0x5c] sm:$0xf]
      %v199 = vld [vmem:[%s166 + $0x60] sm:$0xf]
      %v200 = vld [vmem:[%s166 + $0x64] sm:$0xf]
      %v201 = vld [vmem:[%s166 + $0x68] sm:$0xf]
      %v202 = vld [vmem:[%s166 + $0x6c] sm:$0xf]
      %v203 = vld [vmem:[%s166 + $0x70] sm:$0xf]
      %v204 = vld [vmem:[%s166 + $0x74] sm:$0xf]
      %v205 = vld [vmem:[%s166 + $0x78] sm:$0xf]
      %v206 = vld [vmem:[%s166 + $0x7c] sm:$0xf]
      %v207 = vld [vmem:[%s166 + $0x80] sm:$0xf]
      %v208 = vld [vmem:[%s166 + $0x84] sm:$0xf]
      %v209 = vld [vmem:[%s166 + $0x88] sm:$0xf]
      %v210 = vld [vmem:[%s166 + $0x8c] sm:$0xf]
      %v211 = vld [vmem:[%s166 + $0x90] sm:$0xf]
      %v212 = vld [vmem:[%s166 + $0x94] sm:$0xf]
      %v213 = vld [vmem:[%s166 + $0x98] sm:$0xf]
      %v214 = vld [vmem:[%s166 + $0x9c] sm:$0xf]
      %v215 = vld [vmem:[%s166 + $0xa0] sm:$0xf]
      %v216 = vld [vmem:[%s166 + $0xa4] sm:$0xf]
      %v217 = vld [vmem:[%s166 + $0xa8] sm:$0xf]
      %v218 = vld [vmem:[%s166 + $0xac] sm:$0xf]
      %v219 = vld [vmem:[%s166 + $0xb0] sm:$0xf]
      %v220 = vld [vmem:[%s166 + $0xb4] sm:$0xf]
      %v221 = vld [vmem:[%s166 + $0xb8] sm:$0xf]
      %v222 = vld [vmem:[%s166 + $0xbc] sm:$0xf]
      %v223 = vld [vmem:[%s166 + $0xc0] sm:$0xf]
      %v224 = vld [vmem:[%s166 + $0xc4] sm:$0xf]
      %v225 = vld [vmem:[%s166 + $0xc8] sm:$0xf]
      %v226 = vld [vmem:[%s166 + $0xcc] sm:$0xf]
      %v227 = vld [vmem:[%s166 + $0xd0] sm:$0xf]
      %v228 = vld [vmem:[%s166 + $0xd4] sm:$0xf]
      %v229 = vld [vmem:[%s166 + $0xd8] sm:$0xf]
      %v230 = vld [vmem:[%s166 + $0xdc] sm:$0xf]
      %v231 = vld [vmem:[%s166 + $0xe0] sm:$0xf]
      %v232 = vld [vmem:[%s166 + $0xe4] sm:$0xf]
      %v233 = vld [vmem:[%s166 + $0xe8] sm:$0xf]
      %v234 = vld [vmem:[%s166 + $0xec] sm:$0xf]
      %v235 = vld [vmem:[%s166 + $0xf0] sm:$0xf]
      %v236 = vld [vmem:[%s166 + $0xf4] sm:$0xf]
      %v237 = vld [vmem:[%s166 + $0xf8] sm:$0xf]
      %v238 = vld [vmem:[%s166 + $0xfc] sm:$0xf]
      %v239 = vld [vmem:[%s166 + $0x100] sm:$0xf]
      %v240 = vld [vmem:[%s166 + $0x104] sm:$0xf]
      %v241 = vld [vmem:[%s166 + $0x108] sm:$0xf]
      %v242 = vld [vmem:[%s166 + $0x10c] sm:$0xf]
      %v243 = vld [vmem:[%s166 + $0x110] sm:$0xf]
      %v244 = vld [vmem:[%s166 + $0x114] sm:$0xf]
      %v245 = vld [vmem:[%s166 + $0x118] sm:$0xf]
      %v246 = vld [vmem:[%s166 + $0x11c] sm:$0xf]
      %v247 = vld [vmem:[%s166 + $0x120] sm:$0xf]
      %v248 = vld [vmem:[%s166 + $0x124] sm:$0xf]
      %v249 = vld [vmem:[%s166 + $0x128] sm:$0xf]
      %v250 = vld [vmem:[%s166 + $0x12c] sm:$0xf]
      %v251 = vld [vmem:[%s166 + $0x130] sm:$0xf]
      %v252 = vld [vmem:[%s166 + $0x134] sm:$0xf]
      %v253 = vld [vmem:[%s166 + $0x138] sm:$0xf]
      %v254 = vld [vmem:[%s166 + $0x13c] sm:$0xf]
      %v255 = vld [vmem:[%s166 + $0x140] sm:$0xf]
      %v256 = vld [vmem:[%s166 + $0x144] sm:$0xf]
      %v257 = vld [vmem:[%s166 + $0x148] sm:$0xf]
      %v258 = vld [vmem:[%s166 + $0x14c] sm:$0xf]
      %v259 = vld [vmem:[%s166 + $0x150] sm:$0xf]
      %v260 = vld [vmem:[%s166 + $0x154] sm:$0xf]
      %v261 = vld [vmem:[%s166 + $0x158] sm:$0xf]
      %v262 = vld [vmem:[%s166 + $0x15c] sm:$0xf]
      %v263 = vld [vmem:[%s166 + $0x160] sm:$0xf]
      %v264 = vld [vmem:[%s166 + $0x164] sm:$0xf]
      %v265 = vld [vmem:[%s166 + $0x168] sm:$0xf]
      %v266 = vld [vmem:[%s166 + $0x16c] sm:$0xf]
      %v267 = vld [vmem:[%s166 + $0x170] sm:$0xf]
      %v268 = vld [vmem:[%s166 + $0x174] sm:$0xf]
      %v269 = vld [vmem:[%s166 + $0x178] sm:$0xf]
      %v270 = vld [vmem:[%s166 + $0x17c] sm:$0xf]
      %v271 = vld [vmem:[%s166 + $0x180] sm:$0xf]
      %v272 = vld [vmem:[%s166 + $0x184] sm:$0xf]
      %v273 = vld [vmem:[%s166 + $0x188] sm:$0xf]
      %v274 = vld [vmem:[%s166 + $0x18c] sm:$0xf]
      %v275 = vld [vmem:[%s166 + $0x190] sm:$0xf]
      %v276 = vld [vmem:[%s166 + $0x194] sm:$0xf]
      %v277 = vld [vmem:[%s166 + $0x198] sm:$0xf]
      %v278 = vld [vmem:[%s166 + $0x19c] sm:$0xf]
      %v279 = vld [vmem:[%s166 + $0x1a0] sm:$0xf]
      %v280 = vld [vmem:[%s166 + $0x1a4] sm:$0xf]
      %v281 = vld [vmem:[%s166 + $0x1a8] sm:$0xf]
      %v282 = vld [vmem:[%s166 + $0x1ac] sm:$0xf]
      %v283 = vld [vmem:[%s166 + $0x1b0] sm:$0xf]
      %v284 = vld [vmem:[%s166 + $0x1b4] sm:$0xf]
      %v285 = vld [vmem:[%s166 + $0x1b8] sm:$0xf]
      %v286 = vld [vmem:[%s166 + $0x1bc] sm:$0xf]
      %v287 = vld [vmem:[%s166 + $0x1c0] sm:$0xf]
      %v288 = vld [vmem:[%s166 + $0x1c4] sm:$0xf]
      %v289 = vld [vmem:[%s166 + $0x1c8] sm:$0xf]
      %v290 = vld [vmem:[%s166 + $0x1cc] sm:$0xf]
      %v291 = vld [vmem:[%s166 + $0x1d0] sm:$0xf]
      %v292 = vld [vmem:[%s166 + $0x1d4] sm:$0xf]
      %v293 = vld [vmem:[%s166 + $0x1d8] sm:$0xf]
      %v294 = vld [vmem:[%s166 + $0x1dc] sm:$0xf]
      %v295 = vld [vmem:[%s166 + $0x1e0] sm:$0xf]
      %v296 = vld [vmem:[%s166 + $0x1e4] sm:$0xf]
      %v297 = vld [vmem:[%s166 + $0x1e8] sm:$0xf]
      %v298 = vld [vmem:[%s166 + $0x1ec] sm:$0xf]
      %v299 = vld [vmem:[%s166 + $0x1f0] sm:$0xf]
      %v300 = vld [vmem:[%s166 + $0x1f4] sm:$0xf]
      %v301 = vld [vmem:[%s166 + $0x1f8] sm:$0xf]
      %v302 = vld [vmem:[%s166 + $0x1fc] sm:$0xf]
      %v303 = vld [vmem:[%s166 + $0x200] sm:$0xf]
      %v304 = vld [vmem:[%s166 + $0x204] sm:$0xf]
      %v305 = vld [vmem:[%s166 + $0x208] sm:$0xf]
      %v306 = vld [vmem:[%s166 + $0x20c] sm:$0xf]
      %v307 = vld [vmem:[%s166 + $0x210] sm:$0xf]
      %v308 = vld [vmem:[%s166 + $0x214] sm:$0xf]
      %v309 = vld [vmem:[%s166 + $0x218] sm:$0xf]
      %v310 = vld [vmem:[%s166 + $0x21c] sm:$0xf]
      %v311 = vld [vmem:[%s166 + $0x220] sm:$0xf]
      %v312 = vld [vmem:[%s166 + $0x224] sm:$0xf]
      %v313 = vld [vmem:[%s166 + $0x228] sm:$0xf]
      %v314 = vld [vmem:[%s166 + $0x22c] sm:$0xf]
      %v315 = vld [vmem:[%s166 + $0x230] sm:$0xf]
      %v316 = vld [vmem:[%s166 + $0x234] sm:$0xf]
      %v317 = vld [vmem:[%s166 + $0x238] sm:$0xf]
      %v318 = vld [vmem:[%s166 + $0x23c] sm:$0xf]
      %v319 = vld [vmem:[%s166 + $0x240] sm:$0xf]
      %v320 = vld [vmem:[%s166 + $0x244] sm:$0xf]
      %v321 = vld [vmem:[%s166 + $0x248] sm:$0xf]
      %v322 = vld [vmem:[%s166 + $0x24c] sm:$0xf]
      %v323 = vld [vmem:[%s166 + $0x250] sm:$0xf]
      %v324 = vld [vmem:[%s166 + $0x254] sm:$0xf]
      %v325 = vld [vmem:[%s166 + $0x258] sm:$0xf]
      %v326 = vld [vmem:[%s166 + $0x25c] sm:$0xf]
      %v327 = vld [vmem:[%s166 + $0x260] sm:$0xf]
      %v328 = vld [vmem:[%s166 + $0x264] sm:$0xf]
      %v329 = vld [vmem:[%s166 + $0x268] sm:$0xf]
      %v330 = vld [vmem:[%s166 + $0x26c] sm:$0xf]
      %v331 = vld [vmem:[%s166 + $0x270] sm:$0xf]
      %v332 = vld [vmem:[%s166 + $0x274] sm:$0xf]
      %v333 = vld [vmem:[%s166 + $0x278] sm:$0xf]
      %v334 = vld [vmem:[%s166 + $0x27c] sm:$0xf]
      %v335 = vld [vmem:[%s166 + $0x280] sm:$0xf]
      %v336 = vld [vmem:[%s166 + $0x284] sm:$0xf]
      %v337 = vld [vmem:[%s166 + $0x288] sm:$0xf]
      %v338 = vld [vmem:[%s166 + $0x28c] sm:$0xf]
      %v339 = vld [vmem:[%s166 + $0x290] sm:$0xf]
      %v340 = vld [vmem:[%s166 + $0x294] sm:$0xf]
      %v341 = vld [vmem:[%s166 + $0x298] sm:$0xf]
      %v342 = vld [vmem:[%s166 + $0x29c] sm:$0xf]
      %v343 = vld [vmem:[%s166 + $0x2a0] sm:$0xf]
      %v344 = vld [vmem:[%s166 + $0x2a4] sm:$0xf]
      %v345 = vld [vmem:[%s166 + $0x2a8] sm:$0xf]
      %v346 = vld [vmem:[%s166 + $0x2ac] sm:$0xf]
      %v347 = vld [vmem:[%s166 + $0x2b0] sm:$0xf]
      %v348 = vld [vmem:[%s166 + $0x2b4] sm:$0xf]
      %v349 = vld [vmem:[%s166 + $0x2b8] sm:$0xf]
      %v350 = vld [vmem:[%s166 + $0x2bc] sm:$0xf]
      %v351 = vld [vmem:[%s166 + $0x2c0] sm:$0xf]
      %v352 = vld [vmem:[%s166 + $0x2c4] sm:$0xf]
      %v353 = vld [vmem:[%s166 + $0x2c8] sm:$0xf]
      %v354 = vld [vmem:[%s166 + $0x2cc] sm:$0xf]
      %v355 = vld [vmem:[%s166 + $0x2d0] sm:$0xf]
      %v356 = vld [vmem:[%s166 + $0x2d4] sm:$0xf]
      %v357 = vld [vmem:[%s166 + $0x2d8] sm:$0xf]
      %v358 = vld [vmem:[%s166 + $0x2dc] sm:$0xf]
      %v359 = vld [vmem:[%s166 + $0x2e0] sm:$0xf]
      %v360 = vld [vmem:[%s166 + $0x2e4] sm:$0xf]
      %v361 = vld [vmem:[%s166 + $0x2e8] sm:$0xf]
      %v362 = vld [vmem:[%s166 + $0x2ec] sm:$0xf]
      %v363 = vld [vmem:[%s166 + $0x2f0] sm:$0xf]
      %v364 = vld [vmem:[%s166 + $0x2f4] sm:$0xf]
      %v365 = vld [vmem:[%s166 + $0x2f8] sm:$0xf]
      %v366 = vld [vmem:[%s166 + $0x2fc] sm:$0xf]
      %v367 = vld [vmem:[%s1] sm:$0xf]
      %v368 = vld [vmem:[%s1 + $0x4] sm:$0xf]
      %v369 = vld [vmem:[%s1 + $0x8] sm:$0xf]
      %v370 = vld [vmem:[%s1 + $0xc] sm:$0xf]
      %v371 = vld [vmem:[%s1 + $0x10] sm:$0xf]
      %v372 = vld [vmem:[%s1 + $0x14] sm:$0xf]
      %v373 = vld [vmem:[%s1 + $0x18] sm:$0xf]
      %v374 = vld [vmem:[%s1 + $0x1c] sm:$0xf]
      %v375 = vld [vmem:[%s1 + $0x20] sm:$0xf]
      %v376 = vld [vmem:[%s1 + $0x24] sm:$0xf]
      %v377 = vld [vmem:[%s2] sm:$0x1]
      %v379 = vlaneseq
      %v380 = vshrl.u32 %v379, 7
      %v381 = vsub.s32 0, %v380
      %v382 = vrot.slane %v377, %v381
      %v576 = vunpack.c.l.b16 %v175
      %v577 = vunpack.c.l.b16 %v176
      %v578 = vunpack.c.l.b16 %v177
      %v579 = vunpack.c.l.b16 %v178
      %v580 = vunpack.c.l.b16 %v179
      %v581 = vunpack.c.l.b16 %v180
      %v582 = vunpack.c.l.b16 %v181
      %v583 = vunpack.c.l.b16 %v182
      %v584 = vunpack.c.l.b16 %v183
      %v585 = vunpack.c.l.b16 %v184
      %v586 = vunpack.c.l.b16 %v185
      %v587 = vunpack.c.l.b16 %v186
      %v588 = vunpack.c.l.b16 %v187
      %v589 = vunpack.c.l.b16 %v188
      %v590 = vunpack.c.l.b16 %v189
      %v591 = vunpack.c.l.b16 %v190
      %v592 = vunpack.c.l.b16 %v191
      %v593 = vunpack.c.l.b16 %v192
      %v594 = vunpack.c.l.b16 %v193
      %v595 = vunpack.c.l.b16 %v194
      %v596 = vunpack.c.l.b16 %v195
      %v597 = vunpack.c.l.b16 %v196
      %v598 = vunpack.c.l.b16 %v197
      %v599 = vunpack.c.l.b16 %v198
      %v600 = vunpack.c.l.b16 %v199
      %v601 = vunpack.c.l.b16 %v200
      %v602 = vunpack.c.l.b16 %v201
      %v603 = vunpack.c.l.b16 %v202
      %v604 = vunpack.c.l.b16 %v203
      %v605 = vunpack.c.l.b16 %v204
      %v606 = vunpack.c.l.b16 %v205
      %v607 = vunpack.c.l.b16 %v206
      %v608 = vunpack.c.l.b16 %v207
      %v609 = vunpack.c.l.b16 %v208
      %v610 = vunpack.c.l.b16 %v209
      %v611 = vunpack.c.l.b16 %v210
      %v612 = vunpack.c.l.b16 %v211
      %v613 = vunpack.c.l.b16 %v212
      %v614 = vunpack.c.l.b16 %v213
      %v615 = vunpack.c.l.b16 %v214
      %v616 = vunpack.c.l.b16 %v215
      %v617 = vunpack.c.l.b16 %v216
      %v618 = vunpack.c.l.b16 %v217
      %v619 = vunpack.c.l.b16 %v218
      %v620 = vunpack.c.l.b16 %v219
      %v621 = vunpack.c.l.b16 %v220
      %v622 = vunpack.c.l.b16 %v221
      %v623 = vunpack.c.l.b16 %v222
      %v624 = vunpack.c.l.b16 %v223
      %v625 = vunpack.c.l.b16 %v224
      %v626 = vunpack.c.l.b16 %v225
      %v627 = vunpack.c.l.b16 %v226
      %v628 = vunpack.c.l.b16 %v227
      %v629 = vunpack.c.l.b16 %v228
      %v630 = vunpack.c.l.b16 %v229
      %v631 = vunpack.c.l.b16 %v230
      %v632 = vunpack.c.l.b16 %v231
      %v633 = vunpack.c.l.b16 %v232
      %v634 = vunpack.c.l.b16 %v233
      %v635 = vunpack.c.l.b16 %v234
      %v636 = vunpack.c.l.b16 %v235
      %v637 = vunpack.c.l.b16 %v236
      %v638 = vunpack.c.l.b16 %v237
      %v639 = vunpack.c.l.b16 %v238
      %v640 = vunpack.c.l.b16 %v239
      %v641 = vunpack.c.l.b16 %v240
      %v642 = vunpack.c.l.b16 %v241
      %v643 = vunpack.c.l.b16 %v242
      %v644 = vunpack.c.l.b16 %v243
      %v645 = vunpack.c.l.b16 %v244
      %v646 = vunpack.c.l.b16 %v245
      %v647 = vunpack.c.l.b16 %v246
      %v648 = vunpack.c.l.b16 %v247
      %v649 = vunpack.c.l.b16 %v248
      %v650 = vunpack.c.l.b16 %v249
      %v651 = vunpack.c.l.b16 %v250
      %v652 = vunpack.c.l.b16 %v251
      %v653 = vunpack.c.l.b16 %v252
      %v654 = vunpack.c.l.b16 %v253
      %v655 = vunpack.c.l.b16 %v254
      %v656 = vunpack.c.l.b16 %v255
      %v657 = vunpack.c.l.b16 %v256
      %v658 = vunpack.c.l.b16 %v257
      %v659 = vunpack.c.l.b16 %v258
      %v660 = vunpack.c.l.b16 %v259
      %v661 = vunpack.c.l.b16 %v260
      %v662 = vunpack.c.l.b16 %v261
      %v663 = vunpack.c.l.b16 %v262
      %v664 = vunpack.c.l.b16 %v263
      %v665 = vunpack.c.l.b16 %v264
      %v666 = vunpack.c.l.b16 %v265
      %v667 = vunpack.c.l.b16 %v266
      %v668 = vunpack.c.l.b16 %v267
      %v669 = vunpack.c.l.b16 %v268
      %v670 = vunpack.c.l.b16 %v269
      %v671 = vunpack.c.l.b16 %v270
      %v672 = vunpack.c.l.b16 %v271
      %v673 = vunpack.c.l.b16 %v272
      %v674 = vunpack.c.l.b16 %v273
      %v675 = vunpack.c.l.b16 %v274
      %v676 = vunpack.c.l.b16 %v275
      %v677 = vunpack.c.l.b16 %v276
      %v678 = vunpack.c.l.b16 %v277
      %v679 = vunpack.c.l.b16 %v278
      %v680 = vunpack.c.l.b16 %v279
      %v681 = vunpack.c.l.b16 %v280
      %v682 = vunpack.c.l.b16 %v281
      %v683 = vunpack.c.l.b16 %v282
      %v684 = vunpack.c.l.b16 %v283
      %v685 = vunpack.c.l.b16 %v284
      %v686 = vunpack.c.l.b16 %v285
      %v687 = vunpack.c.l.b16 %v286
      %v688 = vunpack.c.l.b16 %v287
      %v689 = vunpack.c.l.b16 %v288
      %v690 = vunpack.c.l.b16 %v289
      %v691 = vunpack.c.l.b16 %v290
      %v692 = vunpack.c.l.b16 %v291
      %v693 = vunpack.c.l.b16 %v292
      %v694 = vunpack.c.l.b16 %v293
      %v695 = vunpack.c.l.b16 %v294
      %v696 = vunpack.c.l.b16 %v295
      %v697 = vunpack.c.l.b16 %v296
      %v698 = vunpack.c.l.b16 %v297
      %v699 = vunpack.c.l.b16 %v298
      %v700 = vunpack.c.l.b16 %v299
      %v701 = vunpack.c.l.b16 %v300
      %v702 = vunpack.c.l.b16 %v301
      %v703 = vunpack.c.l.b16 %v302
      %v704 = vunpack.c.l.b16 %v303
      %v705 = vunpack.c.l.b16 %v304
      %v706 = vunpack.c.l.b16 %v305
      %v707 = vunpack.c.l.b16 %v306
      %v708 = vunpack.c.l.b16 %v307
      %v709 = vunpack.c.l.b16 %v308
      %v710 = vunpack.c.l.b16 %v309
      %v711 = vunpack.c.l.b16 %v310
      %v712 = vunpack.c.l.b16 %v311
      %v713 = vunpack.c.l.b16 %v312
      %v714 = vunpack.c.l.b16 %v313
      %v715 = vunpack.c.l.b16 %v314
      %v716 = vunpack.c.l.b16 %v315
      %v717 = vunpack.c.l.b16 %v316
      %v718 = vunpack.c.l.b16 %v317
      %v719 = vunpack.c.l.b16 %v318
      %v720 = vunpack.c.l.b16 %v319
      %v721 = vunpack.c.l.b16 %v320
      %v722 = vunpack.c.l.b16 %v321
      %v723 = vunpack.c.l.b16 %v322
      %v724 = vunpack.c.l.b16 %v323
      %v725 = vunpack.c.l.b16 %v324
      %v726 = vunpack.c.l.b16 %v325
      %v727 = vunpack.c.l.b16 %v326
      %v728 = vunpack.c.l.b16 %v327
      %v729 = vunpack.c.l.b16 %v328
      %v730 = vunpack.c.l.b16 %v329
      %v731 = vunpack.c.l.b16 %v330
      %v732 = vunpack.c.l.b16 %v331
      %v733 = vunpack.c.l.b16 %v332
      %v734 = vunpack.c.l.b16 %v333
      %v735 = vunpack.c.l.b16 %v334
      %v736 = vunpack.c.l.b16 %v335
      %v737 = vunpack.c.l.b16 %v336
      %v738 = vunpack.c.l.b16 %v337
      %v739 = vunpack.c.l.b16 %v338
      %v740 = vunpack.c.l.b16 %v339
      %v741 = vunpack.c.l.b16 %v340
      %v742 = vunpack.c.l.b16 %v341
      %v743 = vunpack.c.l.b16 %v342
      %v744 = vunpack.c.l.b16 %v343
      %v745 = vunpack.c.l.b16 %v344
      %v746 = vunpack.c.l.b16 %v345
      %v747 = vunpack.c.l.b16 %v346
      %v748 = vunpack.c.l.b16 %v347
      %v749 = vunpack.c.l.b16 %v348
      %v750 = vunpack.c.l.b16 %v349
      %v751 = vunpack.c.l.b16 %v350
      %v752 = vunpack.c.l.b16 %v351
      %v753 = vunpack.c.l.b16 %v352
      %v754 = vunpack.c.l.b16 %v353
      %v755 = vunpack.c.l.b16 %v354
      %v756 = vunpack.c.l.b16 %v355
      %v757 = vunpack.c.l.b16 %v356
      %v758 = vunpack.c.l.b16 %v357
      %v759 = vunpack.c.l.b16 %v358
      %v760 = vunpack.c.l.b16 %v359
      %v761 = vunpack.c.l.b16 %v360
      %v762 = vunpack.c.l.b16 %v361
      %v763 = vunpack.c.l.b16 %v362
      %v764 = vunpack.c.l.b16 %v363
      %v765 = vunpack.c.l.b16 %v364
      %v766 = vunpack.c.l.b16 %v365
      %v767 = vunpack.c.l.b16 %v366
      %v768 = vpack.c.b16 %v577, %v576
      %v769 = vpack.c.b16 %v579, %v578
      %v770 = vpack.c.b16 %v581, %v580
      %v771 = vpack.c.b16 %v583, %v582
      %v772 = vpack.c.b16 %v585, %v584
      %v773 = vpack.c.b16 %v587, %v586
      %v774 = vpack.c.b16 %v589, %v588
      %v775 = vpack.c.b16 %v591, %v590
      %v776 = vpack.c.b16 %v593, %v592
      %v777 = vpack.c.b16 %v595, %v594
      %v778 = vpack.c.b16 %v597, %v596
      %v779 = vpack.c.b16 %v599, %v598
      %v780 = vpack.c.b16 %v601, %v600
      %v781 = vpack.c.b16 %v603, %v602
      %v782 = vpack.c.b16 %v605, %v604
      %v783 = vpack.c.b16 %v607, %v606
      %v784 = vpack.c.b16 %v609, %v608
      %v785 = vpack.c.b16 %v611, %v610
      %v786 = vpack.c.b16 %v613, %v612
      %v787 = vpack.c.b16 %v615, %v614
      %v788 = vpack.c.b16 %v617, %v616
      %v789 = vpack.c.b16 %v619, %v618
      %v790 = vpack.c.b16 %v621, %v620
      %v791 = vpack.c.b16 %v623, %v622
      %v792 = vpack.c.b16 %v625, %v624
      %v793 = vpack.c.b16 %v627, %v626
      %v794 = vpack.c.b16 %v629, %v628
      %v795 = vpack.c.b16 %v631, %v630
      %v796 = vpack.c.b16 %v633, %v632
      %v797 = vpack.c.b16 %v635, %v634
      %v798 = vpack.c.b16 %v637, %v636
      %v799 = vpack.c.b16 %v639, %v638
      %v800 = vpack.c.b16 %v641, %v640
      %v801 = vpack.c.b16 %v643, %v642
      %v802 = vpack.c.b16 %v645, %v644
      %v803 = vpack.c.b16 %v647, %v646
      %v804 = vpack.c.b16 %v649, %v648
      %v805 = vpack.c.b16 %v651, %v650
      %v806 = vpack.c.b16 %v653, %v652
      %v807 = vpack.c.b16 %v655, %v654
      %v808 = vpack.c.b16 %v657, %v656
      %v809 = vpack.c.b16 %v659, %v658
      %v810 = vpack.c.b16 %v661, %v660
      %v811 = vpack.c.b16 %v663, %v662
      %v812 = vpack.c.b16 %v665, %v664
      %v813 = vpack.c.b16 %v667, %v666
      %v814 = vpack.c.b16 %v669, %v668
      %v815 = vpack.c.b16 %v671, %v670
      %v816 = vpack.c.b16 %v673, %v672
      %v817 = vpack.c.b16 %v675, %v674
      %v818 = vpack.c.b16 %v677, %v676
      %v819 = vpack.c.b16 %v679, %v678
      %v820 = vpack.c.b16 %v681, %v680
      %v821 = vpack.c.b16 %v683, %v682
      %v822 = vpack.c.b16 %v685, %v684
      %v823 = vpack.c.b16 %v687, %v686
      %v824 = vpack.c.b16 %v689, %v688
      %v825 = vpack.c.b16 %v691, %v690
      %v826 = vpack.c.b16 %v693, %v692
      %v827 = vpack.c.b16 %v695, %v694
      %v828 = vpack.c.b16 %v697, %v696
      %v829 = vpack.c.b16 %v699, %v698
      %v830 = vpack.c.b16 %v701, %v700
      %v831 = vpack.c.b16 %v703, %v702
      %v832 = vpack.c.b16 %v705, %v704
      %v833 = vpack.c.b16 %v707, %v706
      %v834 = vpack.c.b16 %v709, %v708
      %v835 = vpack.c.b16 %v711, %v710
      %v836 = vpack.c.b16 %v713, %v712
      %v837 = vpack.c.b16 %v715, %v714
      %v838 = vpack.c.b16 %v717, %v716
      %v839 = vpack.c.b16 %v719, %v718
      %v840 = vpack.c.b16 %v721, %v720
      %v841 = vpack.c.b16 %v723, %v722
      %v842 = vpack.c.b16 %v725, %v724
      %v843 = vpack.c.b16 %v727, %v726
      %v844 = vpack.c.b16 %v729, %v728
      %v845 = vpack.c.b16 %v731, %v730
      %v846 = vpack.c.b16 %v733, %v732
      %v847 = vpack.c.b16 %v735, %v734
      %v848 = vpack.c.b16 %v737, %v736
      %v849 = vpack.c.b16 %v739, %v738
      %v850 = vpack.c.b16 %v741, %v740
      %v851 = vpack.c.b16 %v743, %v742
      %v852 = vpack.c.b16 %v745, %v744
      %v853 = vpack.c.b16 %v747, %v746
      %v854 = vpack.c.b16 %v749, %v748
      %v855 = vpack.c.b16 %v751, %v750
      %v856 = vpack.c.b16 %v753, %v752
      %v857 = vpack.c.b16 %v755, %v754
      %v858 = vpack.c.b16 %v757, %v756
      %v859 = vpack.c.b16 %v759, %v758
      %v860 = vpack.c.b16 %v761, %v760
      %v861 = vpack.c.b16 %v763, %v762
      %v862 = vpack.c.b16 %v765, %v764
      %v863 = vpack.c.b16 %v767, %v766
      %v874 = vunpack.c.l.b16 %v367
      %v875 = vunpack.c.l.b16 %v368
      %v876 = vunpack.c.l.b16 %v369
      %v877 = vunpack.c.l.b16 %v370
      %v878 = vunpack.c.l.b16 %v371
      %v879 = vunpack.c.l.b16 %v372
      %v880 = vunpack.c.l.b16 %v373
      %v881 = vunpack.c.l.b16 %v374
      %v882 = vunpack.c.l.b16 %v375
      %v883 = vunpack.c.l.b16 %v376
      %v884 = vpack.c.b16 %v875, %v874
      %v885 = vpack.c.b16 %v877, %v876
      %v886 = vpack.c.b16 %v879, %v878
      %v887 = vpack.c.b16 %v881, %v880
      %v888 = vpack.c.b16 %v883, %v882
      %vm894 = vcmask 654336
      %v896 = vsel %vm894, %v768, 0
      %v899 = vsel %vm894, %v769, 0
      %v902 = vsel %vm894, %v770, 0
      %v905 = vsel %vm894, %v771, 0
      %v908 = vsel %vm894, %v772, 0
      %v911 = vsel %vm894, %v773, 0
      %v914 = vsel %vm894, %v774, 0
      %v917 = vsel %vm894, %v775, 0
      %v920 = vsel %vm894, %v776, 0
      %v923 = vsel %vm894, %v777, 0
      %v926 = vsel %vm894, %v778, 0
      %v929 = vsel %vm894, %v779, 0
      %v932 = vsel %vm894, %v780, 0
      %v935 = vsel %vm894, %v781, 0
      %v938 = vsel %vm894, %v782, 0
      %v941 = vsel %vm894, %v783, 0
      %v944 = vsel %vm894, %v784, 0
      %v947 = vsel %vm894, %v785, 0
      %v950 = vsel %vm894, %v786, 0
      %v953 = vsel %vm894, %v787, 0
      %v956 = vsel %vm894, %v788, 0
      %v959 = vsel %vm894, %v789, 0
      %v962 = vsel %vm894, %v790, 0
      %v965 = vsel %vm894, %v791, 0
      %v968 = vsel %vm894, %v792, 0
      %v971 = vsel %vm894, %v793, 0
      %v974 = vsel %vm894, %v794, 0
      %v977 = vsel %vm894, %v795, 0
      %v980 = vsel %vm894, %v796, 0
      %v983 = vsel %vm894, %v797, 0
      %v986 = vsel %vm894, %v798, 0
      %v989 = vsel %vm894, %v799, 0
      %v992 = vsel %vm894, %v800, 0
      %v995 = vsel %vm894, %v801, 0
      %v998 = vsel %vm894, %v802, 0
      %v1001 = vsel %vm894, %v803, 0
      %v1004 = vsel %vm894, %v804, 0
      %v1007 = vsel %vm894, %v805, 0
      %v1010 = vsel %vm894, %v806, 0
      %v1013 = vsel %vm894, %v807, 0
      %v1016 = vsel %vm894, %v808, 0
      %v1019 = vsel %vm894, %v809, 0
      %v1022 = vsel %vm894, %v810, 0
      %v1025 = vsel %vm894, %v811, 0
      %v1028 = vsel %vm894, %v812, 0
      %v1031 = vsel %vm894, %v813, 0
      %v1034 = vsel %vm894, %v814, 0
      %v1037 = vsel %vm894, %v815, 0
      %v1040 = vsel %vm894, %v816, 0
      %v1043 = vsel %vm894, %v817, 0
      %v1046 = vsel %vm894, %v818, 0
      %v1049 = vsel %vm894, %v819, 0
      %v1052 = vsel %vm894, %v820, 0
      %v1055 = vsel %vm894, %v821, 0
      %v1058 = vsel %vm894, %v822, 0
      %v1061 = vsel %vm894, %v823, 0
      %v1064 = vsel %vm894, %v824, 0
      %v1067 = vsel %vm894, %v825, 0
      %v1070 = vsel %vm894, %v826, 0
      %v1073 = vsel %vm894, %v827, 0
      %v1076 = vsel %vm894, %v828, 0
      %v1079 = vsel %vm894, %v829, 0
      %v1082 = vsel %vm894, %v830, 0
      %v1085 = vsel %vm894, %v831, 0
      %v1088 = vsel %vm894, %v832, 0
      %v1091 = vsel %vm894, %v833, 0
      %v1094 = vsel %vm894, %v834, 0
      %v1097 = vsel %vm894, %v835, 0
      %v1100 = vsel %vm894, %v836, 0
      %v1103 = vsel %vm894, %v837, 0
      %v1106 = vsel %vm894, %v838, 0
      %v1109 = vsel %vm894, %v839, 0
      %v1112 = vsel %vm894, %v840, 0
      %v1115 = vsel %vm894, %v841, 0
      %v1118 = vsel %vm894, %v842, 0
      %v1121 = vsel %vm894, %v843, 0
      %v1124 = vsel %vm894, %v844, 0
      %v1127 = vsel %vm894, %v845, 0
      %v1130 = vsel %vm894, %v846, 0
      %v1133 = vsel %vm894, %v847, 0
      %v1136 = vsel %vm894, %v848, 0
      %v1139 = vsel %vm894, %v849, 0
      %v1142 = vsel %vm894, %v850, 0
      %v1145 = vsel %vm894, %v851, 0
      %v1148 = vsel %vm894, %v852, 0
      %v1151 = vsel %vm894, %v853, 0
      %v1154 = vsel %vm894, %v854, 0
      %v1157 = vsel %vm894, %v855, 0
      %v1160 = vsel %vm894, %v856, 0
      %v1163 = vsel %vm894, %v857, 0
      %v1166 = vsel %vm894, %v858, 0
      %v1169 = vsel %vm894, %v859, 0
      %v1172 = vsel %vm894, %v860, 0
      %v1175 = vsel %vm894, %v861, 0
      %v1178 = vsel %vm894, %v862, 0
      %v1181 = vsel %vm894, %v863, 0
      %1183 = vmatprep.subr.bf16.mxu0 0
      %1184 = vmatpush1.bf16.msra.mxu0 %v884
      %1185 = vmatprep.subr.bf16.mxu0 0
      %1186 = vmatpush1.bf16.msra.mxu0 %v885
      %1187 = vmatprep.subr.bf16.mxu0 0
      %1188 = vmatpush1.bf16.msra.mxu0 %v886
      %1189 = vmatprep.subr.bf16.mxu0 0
      %1190 = vmatpush1.bf16.msra.mxu0 %v887
      %1191 = vmatprep.subr.bf16.mxu0 0
      %1192 = vmatpush1.bf16.msra.mxu0 %v888
      %1193 = vmatprep.subr.bf16.mxu0 0
      %1194 = vmatpush1.bf16.msra.mxu0 0
      %1195 = vmatprep.subr.bf16.mxu0 0
      %1196 = vmatpush1.bf16.msra.mxu0 0
      %1197 = vmatprep.subr.bf16.mxu0 0
      %1198 = vmatpush1.bf16.msra.mxu0 0
      %1199 = vmatprep.subr.bf16.mxu0 0
      %1200 = vmatpush1.bf16.msra.mxu0 0
      %1201 = vmatprep.subr.bf16.mxu0 0
      %1202 = vmatpush1.bf16.msra.mxu0 0
      %1203 = vmatprep.subr.bf16.mxu0 0
      %1204 = vmatpush1.bf16.msra.mxu0 0
      %1205 = vmatprep.subr.bf16.mxu0 0
      %1206 = vmatpush1.bf16.msra.mxu0 0
      %1207 = vmatprep.subr.bf16.mxu0 0
      %1208 = vmatpush1.bf16.msra.mxu0 0
      %1209 = vmatprep.subr.bf16.mxu0 0
      %1210 = vmatpush1.bf16.msra.mxu0 0
      %1211 = vmatprep.subr.bf16.mxu0 0
      %1212 = vmatpush1.bf16.msra.mxu0 0
      %1213 = vmatprep.subr.bf16.mxu0 0
      %1214 = vmatpush1.bf16.msra.mxu0 0
      %1215 = vmatprep.mubr.bf16.mxu0 0
      %1216 = vmatmul.mubr.bf16.gmra.mrb[0].mxu0 %v896
      %v1217 = vpop.f32.mrb[0].mxu0
      %v1218 = vadd.f32 %v382, %v1217
      %v1219 = vpop.f32.mrb[0].mxu0
      %v1220 = vpop.f32.mrb[0].mxu0
      %v1221 = vadd.f32 %v382, %v1220
      %v1222 = vpop.f32.mrb[0].mxu0
      %1223 = vmatprep.mubr.bf16.mxu0 0
      %1224 = vmatmul.mubr.bf16.gmra.mrb[0].mxu0 %v899
      %v1225 = vpop.f32.mrb[0].mxu0
      %v1226 = vadd.f32 %v382, %v1225
      %v1227 = vpop.f32.mrb[0].mxu0
      %v1228 = vpop.f32.mrb[0].mxu0
      %v1229 = vadd.f32 %v382, %v1228
      %v1230 = vpop.f32.mrb[0].mxu0
      %1231 = vmatprep.mubr.bf16.mxu0 0
      %1232 = vmatmul.mubr.bf16.gmra.mrb[0].mxu0 %v902
      %v1233 = vpop.f32.mrb[0].mxu0
      %v1234 = vadd.f32 %v382, %v1233
      %v1235 = vpop.f32.mrb[0].mxu0
      %v1236 = vpop.f32.mrb[0].mxu0
      %v1237 = vadd.f32 %v382, %v1236
      %v1238 = vpop.f32.mrb[0].mxu0
      %1239 = vmatprep.mubr.bf16.mxu0 0
      %1240 = vmatmul.mubr.bf16.gmra.mrb[0].mxu0 %v905
      %v1241 = vpop.f32.mrb[0].mxu0
      %v1242 = vadd.f32 %v382, %v1241
      %v1243 = vpop.f32.mrb[0].mxu0
      %v1244 = vpop.f32.mrb[0].mxu0
      %v1245 = vadd.f32 %v382, %v1244
      %v1246 = vpop.f32.mrb[0].mxu0
      %1247 = vmatprep.mubr.bf16.mxu0 0
      %1248 = vmatmul.mubr.bf16.gmra.mrb[0].mxu0 %v908
      %v1249 = vpop.f32.mrb[0].mxu0
      %v1250 = vadd.f32 %v382, %v1249
      %v1251 = vpop.f32.mrb[0].mxu0
      %v1252 = vpop.f32.mrb[0].mxu0
      %v1253 = vadd.f32 %v382, %v1252
      %v1254 = vpop.f32.mrb[0].mxu0
      %1255 = vmatprep.mubr.bf16.mxu0 0
      %1256 = vmatmul.mubr.bf16.gmra.mrb[0].mxu0 %v911
      %v1257 = vpop.f32.mrb[0].mxu0
      %v1258 = vadd.f32 %v382, %v1257
      %v1259 = vpop.f32.mrb[0].mxu0
      %v1260 = vpop.f32.mrb[0].mxu0
      %v1261 = vadd.f32 %v382, %v1260
      %v1262 = vpop.f32.mrb[0].mxu0
      %1263 = vmatprep.mubr.bf16.mxu0 0
      %1264 = vmatmul.mubr.bf16.gmra.mrb[0].mxu0 %v914
      %v1265 = vpop.f32.mrb[0].mxu0
      %v1266 = vadd.f32 %v382, %v1265
      %v1267 = vpop.f32.mrb[0].mxu0
      %v1268 = vpop.f32.mrb[0].mxu0
      %v1269 = vadd.f32 %v382, %v1268
      %v1270 = vpop.f32.mrb[0].mxu0
      %1271 = vmatprep.mubr.bf16.mxu0 0
      %1272 = vmatmul.mubr.bf16.gmra.mrb[0].mxu0 %v917
      %v1273 = vpop.f32.mrb[0].mxu0
      %v1274 = vadd.f32 %v382, %v1273
      %v1275 = vpop.f32.mrb[0].mxu0
      %v1276 = vpop.f32.mrb[0].mxu0
      %v1277 = vadd.f32 %v382, %v1276
      %v1278 = vpop.f32.mrb[0].mxu0
      %1279 = vmatprep.mubr.bf16.mxu0 0
      %1280 = vmatmul.mubr.bf16.gmra.mrb[0].mxu0 %v920
      %v1281 = vpop.f32.mrb[0].mxu0
      %v1282 = vadd.f32 %v382, %v1281
      %v1283 = vpop.f32.mrb[0].mxu0
      %v1284 = vpop.f32.mrb[0].mxu0
      %v1285 = vadd.f32 %v382, %v1284
      %v1286 = vpop.f32.mrb[0].mxu0
      %1287 = vmatprep.mubr.bf16.mxu0 0
      %1288 = vmatmul.mubr.bf16.gmra.mrb[0].mxu0 %v923
      %v1289 = vpop.f32.mrb[0].mxu0
      %v1290 = vadd.f32 %v382, %v1289
      %v1291 = vpop.f32.mrb[0].mxu0
      %v1292 = vpop.f32.mrb[0].mxu0
      %v1293 = vadd.f32 %v382, %v1292
      %v1294 = vpop.f32.mrb[0].mxu0
      %1295 = vmatprep.mubr.bf16.mxu0 0
      %1296 = vmatmul.mubr.bf16.gmra.mrb[0].mxu0 %v926
      %v1297 = vpop.f32.mrb[0].mxu0
      %v1298 = vadd.f32 %v382, %v1297
      %v1299 = vpop.f32.mrb[0].mxu0
      %v1300 = vpop.f32.mrb[0].mxu0
      %v1301 = vadd.f32 %v382, %v1300
      %v1302 = vpop.f32.mrb[0].mxu0
      %1303 = vmatprep.mubr.bf16.mxu0 0
      %1304 = vmatmul.mubr.bf16.gmra.mrb[0].mxu0 %v929
      %v1305 = vpop.f32.mrb[0].mxu0
      %v1306 = vadd.f32 %v382, %v1305
      %v1307 = vpop.f32.mrb[0].mxu0
      %v1308 = vpop.f32.mrb[0].mxu0
      %v1309 = vadd.f32 %v382, %v1308
      %v1310 = vpop.f32.mrb[0].mxu0
      %1311 = vmatprep.mubr.bf16.mxu0 0
      %1312 = vmatmul.mubr.bf16.gmra.mrb[0].mxu0 %v932
      %v1313 = vpop.f32.mrb[0].mxu0
      %v1314 = vadd.f32 %v382, %v1313
      %v1315 = vpop.f32.mrb[0].mxu0
      %v1316 = vpop.f32.mrb[0].mxu0
      %v1317 = vadd.f32 %v382, %v1316
      %v1318 = vpop.f32.mrb[0].mxu0
      %1319 = vmatprep.mubr.bf16.mxu0 0
      %1320 = vmatmul.mubr.bf16.gmra.mrb[0].mxu0 %v935
      %v1321 = vpop.f32.mrb[0].mxu0
      %v1322 = vadd.f32 %v382, %v1321
      %v1323 = vpop.f32.mrb[0].mxu0
      %v1324 = vpop.f32.mrb[0].mxu0
      %v1325 = vadd.f32 %v382, %v1324
      %v1326 = vpop.f32.mrb[0].mxu0
      %1327 = vmatprep.mubr.bf16.mxu0 0
      %1328 = vmatmul.mubr.bf16.gmra.mrb[0].mxu0 %v938
      %v1329 = vpop.f32.mrb[0].mxu0
      %v1330 = vadd.f32 %v382, %v1329
      %v1331 = vpop.f32.mrb[0].mxu0
      %v1332 = vpop.f32.mrb[0].mxu0
      %v1333 = vadd.f32 %v382, %v1332
      %v1334 = vpop.f32.mrb[0].mxu0
      %1335 = vmatprep.mubr.bf16.mxu0 0
      %1336 = vmatmul.mubr.bf16.gmra.mrb[0].mxu0 %v941
      %v1337 = vpop.f32.mrb[0].mxu0
      %v1338 = vadd.f32 %v382, %v1337
      %v1339 = vpop.f32.mrb[0].mxu0
      %v1340 = vpop.f32.mrb[0].mxu0
      %v1341 = vadd.f32 %v382, %v1340
      %v1342 = vpop.f32.mrb[0].mxu0
      %1343 = vmatprep.mubr.bf16.mxu0 0
      %1344 = vmatmul.mubr.bf16.gmra.mrb[0].mxu0 %v944
      %v1345 = vpop.f32.mrb[0].mxu0
      %v1346 = vadd.f32 %v382, %v1345
      %v1347 = vpop.f32.mrb[0].mxu0
      %v1348 = vpop.f32.mrb[0].mxu0
      %v1349 = vadd.f32 %v382, %v1348
      %v1350 = vpop.f32.mrb[0].mxu0
      %1351 = vmatprep.mubr.bf16.mxu0 0
      %1352 = vmatmul.mubr.bf16.gmra.mrb[0].mxu0 %v947
      %v1353 = vpop.f32.mrb[0].mxu0
      %v1354 = vadd.f32 %v382, %v1353
      %v1355 = vpop.f32.mrb[0].mxu0
      %v1356 = vpop.f32.mrb[0].mxu0
      %v1357 = vadd.f32 %v382, %v1356
      %v1358 = vpop.f32.mrb[0].mxu0
      %1359 = vmatprep.mubr.bf16.mxu0 0
      %1360 = vmatmul.mubr.bf16.gmra.mrb[0].mxu0 %v950
      %v1361 = vpop.f32.mrb[0].mxu0
      %v1362 = vadd.f32 %v382, %v1361
      %v1363 = vpop.f32.mrb[0].mxu0
      %v1364 = vpop.f32.mrb[0].mxu0
      %v1365 = vadd.f32 %v382, %v1364
      %v1366 = vpop.f32.mrb[0].mxu0
      %1367 = vmatprep.mubr.bf16.mxu0 0
      %1368 = vmatmul.mubr.bf16.gmra.mrb[0].mxu0 %v953
      %v1369 = vpop.f32.mrb[0].mxu0
      %v1370 = vadd.f32 %v382, %v1369
      %v1371 = vpop.f32.mrb[0].mxu0
      %v1372 = vpop.f32.mrb[0].mxu0
      %v1373 = vadd.f32 %v382, %v1372
      %v1374 = vpop.f32.mrb[0].mxu0
      %1375 = vmatprep.mubr.bf16.mxu0 0
      %1376 = vmatmul.mubr.bf16.gmra.mrb[0].mxu0 %v956
      %v1377 = vpop.f32.mrb[0].mxu0
      %v1378 = vadd.f32 %v382, %v1377
      %v1379 = vpop.f32.mrb[0].mxu0
      %v1380 = vpop.f32.mrb[0].mxu0
      %v1381 = vadd.f32 %v382, %v1380
      %v1382 = vpop.f32.mrb[0].mxu0
      %1383 = vmatprep.mubr.bf16.mxu0 0
      %1384 = vmatmul.mubr.bf16.gmra.mrb[0].mxu0 %v959
      %v1385 = vpop.f32.mrb[0].mxu0
      %v1386 = vadd.f32 %v382, %v1385
      %v1387 = vpop.f32.mrb[0].mxu0
      %v1388 = vpop.f32.mrb[0].mxu0
      %v1389 = vadd.f32 %v382, %v1388
      %v1390 = vpop.f32.mrb[0].mxu0
      %1391 = vmatprep.mubr.bf16.mxu0 0
      %1392 = vmatmul.mubr.bf16.gmra.mrb[0].mxu0 %v962
      %v1393 = vpop.f32.mrb[0].mxu0
      %v1394 = vadd.f32 %v382, %v1393
      %v1395 = vpop.f32.mrb[0].mxu0
      %v1396 = vpop.f32.mrb[0].mxu0
      %v1397 = vadd.f32 %v382, %v1396
      %v1398 = vpop.f32.mrb[0].mxu0
      %1399 = vmatprep.mubr.bf16.mxu0 0
      %1400 = vmatmul.mubr.bf16.gmra.mrb[0].mxu0 %v965
      %v1401 = vpop.f32.mrb[0].mxu0
      %v1402 = vadd.f32 %v382, %v1401
      %v1403 = vpop.f32.mrb[0].mxu0
      %v1404 = vpop.f32.mrb[0].mxu0
      %v1405 = vadd.f32 %v382, %v1404
      %v1406 = vpop.f32.mrb[0].mxu0
      %1407 = vmatprep.mubr.bf16.mxu0 0
      %1408 = vmatmul.mubr.bf16.gmra.mrb[0].mxu0 %v968
      %v1409 = vpop.f32.mrb[0].mxu0
      %v1410 = vadd.f32 %v382, %v1409
      %v1411 = vpop.f32.mrb[0].mxu0
      %v1412 = vpop.f32.mrb[0].mxu0
      %v1413 = vadd.f32 %v382, %v1412
      %v1414 = vpop.f32.mrb[0].mxu0
      %1415 = vmatprep.mubr.bf16.mxu0 0
      %1416 = vmatmul.mubr.bf16.gmra.mrb[0].mxu0 %v971
      %v1417 = vpop.f32.mrb[0].mxu0
      %v1418 = vadd.f32 %v382, %v1417
      %v1419 = vpop.f32.mrb[0].mxu0
      %v1420 = vpop.f32.mrb[0].mxu0
      %v1421 = vadd.f32 %v382, %v1420
      %v1422 = vpop.f32.mrb[0].mxu0
      %1423 = vmatprep.mubr.bf16.mxu0 0
      %1424 = vmatmul.mubr.bf16.gmra.mrb[0].mxu0 %v974
      %v1425 = vpop.f32.mrb[0].mxu0
      %v1426 = vadd.f32 %v382, %v1425
      %v1427 = vpop.f32.mrb[0].mxu0
      %v1428 = vpop.f32.mrb[0].mxu0
      %v1429 = vadd.f32 %v382, %v1428
      %v1430 = vpop.f32.mrb[0].mxu0
      %1431 = vmatprep.mubr.bf16.mxu0 0
      %1432 = vmatmul.mubr.bf16.gmra.mrb[0].mxu0 %v977
      %v1433 = vpop.f32.mrb[0].mxu0
      %v1434 = vadd.f32 %v382, %v1433
      %v1435 = vpop.f32.mrb[0].mxu0
      %v1436 = vpop.f32.mrb[0].mxu0
      %v1437 = vadd.f32 %v382, %v1436
      %v1438 = vpop.f32.mrb[0].mxu0
      %1439 = vmatprep.mubr.bf16.mxu0 0
      %1440 = vmatmul.mubr.bf16.gmra.mrb[0].mxu0 %v980
      %v1441 = vpop.f32.mrb[0].mxu0
      %v1442 = vadd.f32 %v382, %v1441
      %v1443 = vpop.f32.mrb[0].mxu0
      %v1444 = vpop.f32.mrb[0].mxu0
      %v1445 = vadd.f32 %v382, %v1444
      %v1446 = vpop.f32.mrb[0].mxu0
      %1447 = vmatprep.mubr.bf16.mxu0 0
      %1448 = vmatmul.mubr.bf16.gmra.mrb[0].mxu0 %v983
      %v1449 = vpop.f32.mrb[0].mxu0
      %v1450 = vadd.f32 %v382, %v1449
      %v1451 = vpop.f32.mrb[0].mxu0
      %v1452 = vpop.f32.mrb[0].mxu0
      %v1453 = vadd.f32 %v382, %v1452
      %v1454 = vpop.f32.mrb[0].mxu0
      %1455 = vmatprep.mubr.bf16.mxu0 0
      %1456 = vmatmul.mubr.bf16.gmra.mrb[0].mxu0 %v986
      %v1457 = vpop.f32.mrb[0].mxu0
      %v1458 = vadd.f32 %v382, %v1457
      %v1459 = vpop.f32.mrb[0].mxu0
      %v1460 = vpop.f32.mrb[0].mxu0
      %v1461 = vadd.f32 %v382, %v1460
      %v1462 = vpop.f32.mrb[0].mxu0
      %1463 = vmatprep.mubr.bf16.mxu0 0
      %1464 = vmatmul.mubr.bf16.gmra.mrb[0].mxu0 %v989
      %v1465 = vpop.f32.mrb[0].mxu0
      %v1466 = vadd.f32 %v382, %v1465
      %v1467 = vpop.f32.mrb[0].mxu0
      %v1468 = vpop.f32.mrb[0].mxu0
      %v1469 = vadd.f32 %v382, %v1468
      %v1470 = vpop.f32.mrb[0].mxu0
      %1471 = vmatprep.mubr.bf16.mxu0 0
      %1472 = vmatmul.mubr.bf16.gmra.mrb[0].mxu0 %v992
      %v1473 = vpop.f32.mrb[0].mxu0
      %v1474 = vadd.f32 %v382, %v1473
      %v1475 = vpop.f32.mrb[0].mxu0
      %v1476 = vpop.f32.mrb[0].mxu0
      %v1477 = vadd.f32 %v382, %v1476
      %v1478 = vpop.f32.mrb[0].mxu0
      %1479 = vmatprep.mubr.bf16.mxu0 0
      %1480 = vmatmul.mubr.bf16.gmra.mrb[0].mxu0 %v995
      %v1481 = vpop.f32.mrb[0].mxu0
      %v1482 = vadd.f32 %v382, %v1481
      %v1483 = vpop.f32.mrb[0].mxu0
      %v1484 = vpop.f32.mrb[0].mxu0
      %v1485 = vadd.f32 %v382, %v1484
      %v1486 = vpop.f32.mrb[0].mxu0
      %1487 = vmatprep.mubr.bf16.mxu0 0
      %1488 = vmatmul.mubr.bf16.gmra.mrb[0].mxu0 %v998
      %v1489 = vpop.f32.mrb[0].mxu0
      %v1490 = vadd.f32 %v382, %v1489
      %v1491 = vpop.f32.mrb[0].mxu0
      %v1492 = vpop.f32.mrb[0].mxu0
      %v1493 = vadd.f32 %v382, %v1492
      %v1494 = vpop.f32.mrb[0].mxu0
      %1495 = vmatprep.mubr.bf16.mxu0 0
      %1496 = vmatmul.mubr.bf16.gmra.mrb[0].mxu0 %v1001
      %v1497 = vpop.f32.mrb[0].mxu0
      %v1498 = vadd.f32 %v382, %v1497
      %v1499 = vpop.f32.mrb[0].mxu0
      %v1500 = vpop.f32.mrb[0].mxu0
      %v1501 = vadd.f32 %v382, %v1500
      %v1502 = vpop.f32.mrb[0].mxu0
      %1503 = vmatprep.mubr.bf16.mxu0 0
      %1504 = vmatmul.mubr.bf16.gmra.mrb[0].mxu0 %v1004
      %v1505 = vpop.f32.mrb[0].mxu0
      %v1506 = vadd.f32 %v382, %v1505
      %v1507 = vpop.f32.mrb[0].mxu0
      %v1508 = vpop.f32.mrb[0].mxu0
      %v1509 = vadd.f32 %v382, %v1508
      %v1510 = vpop.f32.mrb[0].mxu0
      %1511 = vmatprep.mubr.bf16.mxu0 0
      %1512 = vmatmul.mubr.bf16.gmra.mrb[0].mxu0 %v1007
      %v1513 = vpop.f32.mrb[0].mxu0
      %v1514 = vadd.f32 %v382, %v1513
      %v1515 = vpop.f32.mrb[0].mxu0
      %v1516 = vpop.f32.mrb[0].mxu0
      %v1517 = vadd.f32 %v382, %v1516
      %v1518 = vpop.f32.mrb[0].mxu0
      %1519 = vmatprep.mubr.bf16.mxu0 0
      %1520 = vmatmul.mubr.bf16.gmra.mrb[0].mxu0 %v1010
      %v1521 = vpop.f32.mrb[0].mxu0
      %v1522 = vadd.f32 %v382, %v1521
      %v1523 = vpop.f32.mrb[0].mxu0
      %v1524 = vpop.f32.mrb[0].mxu0
      %v1525 = vadd.f32 %v382, %v1524
      %v1526 = vpop.f32.mrb[0].mxu0
      %1527 = vmatprep.mubr.bf16.mxu0 0
      %1528 = vmatmul.mubr.bf16.gmra.mrb[0].mxu0 %v1013
      %v1529 = vpop.f32.mrb[0].mxu0
      %v1530 = vadd.f32 %v382, %v1529
      %v1531 = vpop.f32.mrb[0].mxu0
      %v1532 = vpop.f32.mrb[0].mxu0
      %v1533 = vadd.f32 %v382, %v1532
      %v1534 = vpop.f32.mrb[0].mxu0
      %1535 = vmatprep.mubr.bf16.mxu0 0
      %1536 = vmatmul.mubr.bf16.gmra.mrb[0].mxu0 %v1016
      %v1537 = vpop.f32.mrb[0].mxu0
      %v1538 = vadd.f32 %v382, %v1537
      %v1539 = vpop.f32.mrb[0].mxu0
      %v1540 = vpop.f32.mrb[0].mxu0
      %v1541 = vadd.f32 %v382, %v1540
      %v1542 = vpop.f32.mrb[0].mxu0
      %1543 = vmatprep.mubr.bf16.mxu0 0
      %1544 = vmatmul.mubr.bf16.gmra.mrb[0].mxu0 %v1019
      %v1545 = vpop.f32.mrb[0].mxu0
      %v1546 = vadd.f32 %v382, %v1545
      %v1547 = vpop.f32.mrb[0].mxu0
      %v1548 = vpop.f32.mrb[0].mxu0
      %v1549 = vadd.f32 %v382, %v1548
      %v1550 = vpop.f32.mrb[0].mxu0
      %1551 = vmatprep.mubr.bf16.mxu0 0
      %1552 = vmatmul.mubr.bf16.gmra.mrb[0].mxu0 %v1022
      %v1553 = vpop.f32.mrb[0].mxu0
      %v1554 = vadd.f32 %v382, %v1553
      %v1555 = vpop.f32.mrb[0].mxu0
      %v1556 = vpop.f32.mrb[0].mxu0
      %v1557 = vadd.f32 %v382, %v1556
      %v1558 = vpop.f32.mrb[0].mxu0
      %1559 = vmatprep.mubr.bf16.mxu0 0
      %1560 = vmatmul.mubr.bf16.gmra.mrb[0].mxu0 %v1025
      %v1561 = vpop.f32.mrb[0].mxu0
      %v1562 = vadd.f32 %v382, %v1561
      %v1563 = vpop.f32.mrb[0].mxu0
      %v1564 = vpop.f32.mrb[0].mxu0
      %v1565 = vadd.f32 %v382, %v1564
      %v1566 = vpop.f32.mrb[0].mxu0
      %1567 = vmatprep.mubr.bf16.mxu0 0
      %1568 = vmatmul.mubr.bf16.gmra.mrb[0].mxu0 %v1028
      %v1569 = vpop.f32.mrb[0].mxu0
      %v1570 = vadd.f32 %v382, %v1569
      %v1571 = vpop.f32.mrb[0].mxu0
      %v1572 = vpop.f32.mrb[0].mxu0
      %v1573 = vadd.f32 %v382, %v1572
      %v1574 = vpop.f32.mrb[0].mxu0
      %1575 = vmatprep.mubr.bf16.mxu0 0
      %1576 = vmatmul.mubr.bf16.gmra.mrb[0].mxu0 %v1031
      %v1577 = vpop.f32.mrb[0].mxu0
      %v1578 = vadd.f32 %v382, %v1577
      %v1579 = vpop.f32.mrb[0].mxu0
      %v1580 = vpop.f32.mrb[0].mxu0
      %v1581 = vadd.f32 %v382, %v1580
      %v1582 = vpop.f32.mrb[0].mxu0
      %1583 = vmatprep.mubr.bf16.mxu0 0
      %1584 = vmatmul.mubr.bf16.gmra.mrb[0].mxu0 %v1034
      %v1585 = vpop.f32.mrb[0].mxu0
      %v1586 = vadd.f32 %v382, %v1585
      %v1587 = vpop.f32.mrb[0].mxu0
      %v1588 = vpop.f32.mrb[0].mxu0
      %v1589 = vadd.f32 %v382, %v1588
      %v1590 = vpop.f32.mrb[0].mxu0
      %1591 = vmatprep.mubr.bf16.mxu0 0
      %1592 = vmatmul.mubr.bf16.gmra.mrb[0].mxu0 %v1037
      %v1593 = vpop.f32.mrb[0].mxu0
      %v1594 = vadd.f32 %v382, %v1593
      %v1595 = vpop.f32.mrb[0].mxu0
      %v1596 = vpop.f32.mrb[0].mxu0
      %v1597 = vadd.f32 %v382, %v1596
      %v1598 = vpop.f32.mrb[0].mxu0
      %1599 = vmatprep.mubr.bf16.mxu0 0
      %1600 = vmatmul.mubr.bf16.gmra.mrb[0].mxu0 %v1040
      %v1601 = vpop.f32.mrb[0].mxu0
      %v1602 = vadd.f32 %v382, %v1601
      %v1603 = vpop.f32.mrb[0].mxu0
      %v1604 = vpop.f32.mrb[0].mxu0
      %v1605 = vadd.f32 %v382, %v1604
      %v1606 = vpop.f32.mrb[0].mxu0
      %1607 = vmatprep.mubr.bf16.mxu0 0
      %1608 = vmatmul.mubr.bf16.gmra.mrb[0].mxu0 %v1043
      %v1609 = vpop.f32.mrb[0].mxu0
      %v1610 = vadd.f32 %v382, %v1609
      %v1611 = vpop.f32.mrb[0].mxu0
      %v1612 = vpop.f32.mrb[0].mxu0
      %v1613 = vadd.f32 %v382, %v1612
      %v1614 = vpop.f32.mrb[0].mxu0
      %1615 = vmatprep.mubr.bf16.mxu0 0
      %1616 = vmatmul.mubr.bf16.gmra.mrb[0].mxu0 %v1046
      %v1617 = vpop.f32.mrb[0].mxu0
      %v1618 = vadd.f32 %v382, %v1617
      %v1619 = vpop.f32.mrb[0].mxu0
      %v1620 = vpop.f32.mrb[0].mxu0
      %v1621 = vadd.f32 %v382, %v1620
      %v1622 = vpop.f32.mrb[0].mxu0
      %1623 = vmatprep.mubr.bf16.mxu0 0
      %1624 = vmatmul.mubr.bf16.gmra.mrb[0].mxu0 %v1049
      %v1625 = vpop.f32.mrb[0].mxu0
      %v1626 = vadd.f32 %v382, %v1625
      %v1627 = vpop.f32.mrb[0].mxu0
      %v1628 = vpop.f32.mrb[0].mxu0
      %v1629 = vadd.f32 %v382, %v1628
      %v1630 = vpop.f32.mrb[0].mxu0
      %1631 = vmatprep.mubr.bf16.mxu0 0
      %1632 = vmatmul.mubr.bf16.gmra.mrb[0].mxu0 %v1052
      %v1633 = vpop.f32.mrb[0].mxu0
      %v1634 = vadd.f32 %v382, %v1633
      %v1635 = vpop.f32.mrb[0].mxu0
      %v1636 = vpop.f32.mrb[0].mxu0
      %v1637 = vadd.f32 %v382, %v1636
      %v1638 = vpop.f32.mrb[0].mxu0
      %1639 = vmatprep.mubr.bf16.mxu0 0
      %1640 = vmatmul.mubr.bf16.gmra.mrb[0].mxu0 %v1055
      %v1641 = vpop.f32.mrb[0].mxu0
      %v1642 = vadd.f32 %v382, %v1641
      %v1643 = vpop.f32.mrb[0].mxu0
      %v1644 = vpop.f32.mrb[0].mxu0
      %v1645 = vadd.f32 %v382, %v1644
      %v1646 = vpop.f32.mrb[0].mxu0
      %1647 = vmatprep.mubr.bf16.mxu0 0
      %1648 = vmatmul.mubr.bf16.gmra.mrb[0].mxu0 %v1058
      %v1649 = vpop.f32.mrb[0].mxu0
      %v1650 = vadd.f32 %v382, %v1649
      %v1651 = vpop.f32.mrb[0].mxu0
      %v1652 = vpop.f32.mrb[0].mxu0
      %v1653 = vadd.f32 %v382, %v1652
      %v1654 = vpop.f32.mrb[0].mxu0
      %1655 = vmatprep.mubr.bf16.mxu0 0
      %1656 = vmatmul.mubr.bf16.gmra.mrb[0].mxu0 %v1061
      %v1657 = vpop.f32.mrb[0].mxu0
      %v1658 = vadd.f32 %v382, %v1657
      %v1659 = vpop.f32.mrb[0].mxu0
      %v1660 = vpop.f32.mrb[0].mxu0
      %v1661 = vadd.f32 %v382, %v1660
      %v1662 = vpop.f32.mrb[0].mxu0
      %1663 = vmatprep.mubr.bf16.mxu0 0
      %1664 = vmatmul.mubr.bf16.gmra.mrb[0].mxu0 %v1064
      %v1665 = vpop.f32.mrb[0].mxu0
      %v1666 = vadd.f32 %v382, %v1665
      %v1667 = vpop.f32.mrb[0].mxu0
      %v1668 = vpop.f32.mrb[0].mxu0
      %v1669 = vadd.f32 %v382, %v1668
      %v1670 = vpop.f32.mrb[0].mxu0
      %1671 = vmatprep.mubr.bf16.mxu0 0
      %1672 = vmatmul.mubr.bf16.gmra.mrb[0].mxu0 %v1067
      %v1673 = vpop.f32.mrb[0].mxu0
      %v1674 = vadd.f32 %v382, %v1673
      %v1675 = vpop.f32.mrb[0].mxu0
      %v1676 = vpop.f32.mrb[0].mxu0
      %v1677 = vadd.f32 %v382, %v1676
      %v1678 = vpop.f32.mrb[0].mxu0
      %1679 = vmatprep.mubr.bf16.mxu0 0
      %1680 = vmatmul.mubr.bf16.gmra.mrb[0].mxu0 %v1070
      %v1681 = vpop.f32.mrb[0].mxu0
      %v1682 = vadd.f32 %v382, %v1681
      %v1683 = vpop.f32.mrb[0].mxu0
      %v1684 = vpop.f32.mrb[0].mxu0
      %v1685 = vadd.f32 %v382, %v1684
      %v1686 = vpop.f32.mrb[0].mxu0
      %1687 = vmatprep.mubr.bf16.mxu0 0
      %1688 = vmatmul.mubr.bf16.gmra.mrb[0].mxu0 %v1073
      %v1689 = vpop.f32.mrb[0].mxu0
      %v1690 = vadd.f32 %v382, %v1689
      %v1691 = vpop.f32.mrb[0].mxu0
      %v1692 = vpop.f32.mrb[0].mxu0
      %v1693 = vadd.f32 %v382, %v1692
      %v1694 = vpop.f32.mrb[0].mxu0
      %1695 = vmatprep.mubr.bf16.mxu0 0
      %1696 = vmatmul.mubr.bf16.gmra.mrb[0].mxu0 %v1076
      %v1697 = vpop.f32.mrb[0].mxu0
      %v1698 = vadd.f32 %v382, %v1697
      %v1699 = vpop.f32.mrb[0].mxu0
      %v1700 = vpop.f32.mrb[0].mxu0
      %v1701 = vadd.f32 %v382, %v1700
      %v1702 = vpop.f32.mrb[0].mxu0
      %1703 = vmatprep.mubr.bf16.mxu0 0
      %1704 = vmatmul.mubr.bf16.gmra.mrb[0].mxu0 %v1079
      %v1705 = vpop.f32.mrb[0].mxu0
      %v1706 = vadd.f32 %v382, %v1705
      %v1707 = vpop.f32.mrb[0].mxu0
      %v1708 = vpop.f32.mrb[0].mxu0
      %v1709 = vadd.f32 %v382, %v1708
      %v1710 = vpop.f32.mrb[0].mxu0
      %1711 = vmatprep.mubr.bf16.mxu0 0
      %1712 = vmatmul.mubr.bf16.gmra.mrb[0].mxu0 %v1082
      %v1713 = vpop.f32.mrb[0].mxu0
      %v1714 = vadd.f32 %v382, %v1713
      %v1715 = vpop.f32.mrb[0].mxu0
      %v1716 = vpop.f32.mrb[0].mxu0
      %v1717 = vadd.f32 %v382, %v1716
      %v1718 = vpop.f32.mrb[0].mxu0
      %1719 = vmatprep.mubr.bf16.mxu0 0
      %1720 = vmatmul.mubr.bf16.gmra.mrb[0].mxu0 %v1085
      %v1721 = vpop.f32.mrb[0].mxu0
      %v1722 = vadd.f32 %v382, %v1721
      %v1723 = vpop.f32.mrb[0].mxu0
      %v1724 = vpop.f32.mrb[0].mxu0
      %v1725 = vadd.f32 %v382, %v1724
      %v1726 = vpop.f32.mrb[0].mxu0
      %1727 = vmatprep.mubr.bf16.mxu0 0
      %1728 = vmatmul.mubr.bf16.gmra.mrb[0].mxu0 %v1088
      %v1729 = vpop.f32.mrb[0].mxu0
      %v1730 = vadd.f32 %v382, %v1729
      %v1731 = vpop.f32.mrb[0].mxu0
      %v1732 = vpop.f32.mrb[0].mxu0
      %v1733 = vadd.f32 %v382, %v1732
      %v1734 = vpop.f32.mrb[0].mxu0
      %1735 = vmatprep.mubr.bf16.mxu0 0
      %1736 = vmatmul.mubr.bf16.gmra.mrb[0].mxu0 %v1091
      %v1737 = vpop.f32.mrb[0].mxu0
      %v1738 = vadd.f32 %v382, %v1737
      %v1739 = vpop.f32.mrb[0].mxu0
      %v1740 = vpop.f32.mrb[0].mxu0
      %v1741 = vadd.f32 %v382, %v1740
      %v1742 = vpop.f32.mrb[0].mxu0
      %1743 = vmatprep.mubr.bf16.mxu0 0
      %1744 = vmatmul.mubr.bf16.gmra.mrb[0].mxu0 %v1094
      %v1745 = vpop.f32.mrb[0].mxu0
      %v1746 = vadd.f32 %v382, %v1745
      %v1747 = vpop.f32.mrb[0].mxu0
      %v1748 = vpop.f32.mrb[0].mxu0
      %v1749 = vadd.f32 %v382, %v1748
      %v1750 = vpop.f32.mrb[0].mxu0
      %1751 = vmatprep.mubr.bf16.mxu0 0
      %1752 = vmatmul.mubr.bf16.gmra.mrb[0].mxu0 %v1097
      %v1753 = vpop.f32.mrb[0].mxu0
      %v1754 = vadd.f32 %v382, %v1753
      %v1755 = vpop.f32.mrb[0].mxu0
      %v1756 = vpop.f32.mrb[0].mxu0
      %v1757 = vadd.f32 %v382, %v1756
      %v1758 = vpop.f32.mrb[0].mxu0
      %1759 = vmatprep.mubr.bf16.mxu0 0
      %1760 = vmatmul.mubr.bf16.gmra.mrb[0].mxu0 %v1100
      %v1761 = vpop.f32.mrb[0].mxu0
      %v1762 = vadd.f32 %v382, %v1761
      %v1763 = vpop.f32.mrb[0].mxu0
      %v1764 = vpop.f32.mrb[0].mxu0
      %v1765 = vadd.f32 %v382, %v1764
      %v1766 = vpop.f32.mrb[0].mxu0
      %1767 = vmatprep.mubr.bf16.mxu0 0
      %1768 = vmatmul.mubr.bf16.gmra.mrb[0].mxu0 %v1103
      %v1769 = vpop.f32.mrb[0].mxu0
      %v1770 = vadd.f32 %v382, %v1769
      %v1771 = vpop.f32.mrb[0].mxu0
      %v1772 = vpop.f32.mrb[0].mxu0
      %v1773 = vadd.f32 %v382, %v1772
      %v1774 = vpop.f32.mrb[0].mxu0
      %1775 = vmatprep.mubr.bf16.mxu0 0
      %1776 = vmatmul.mubr.bf16.gmra.mrb[0].mxu0 %v1106
      %v1777 = vpop.f32.mrb[0].mxu0
      %v1778 = vadd.f32 %v382, %v1777
      %v1779 = vpop.f32.mrb[0].mxu0
      %v1780 = vpop.f32.mrb[0].mxu0
      %v1781 = vadd.f32 %v382, %v1780
      %v1782 = vpop.f32.mrb[0].mxu0
      %1783 = vmatprep.mubr.bf16.mxu0 0
      %1784 = vmatmul.mubr.bf16.gmra.mrb[0].mxu0 %v1109
      %v1785 = vpop.f32.mrb[0].mxu0
      %v1786 = vadd.f32 %v382, %v1785
      %v1787 = vpop.f32.mrb[0].mxu0
      %v1788 = vpop.f32.mrb[0].mxu0
      %v1789 = vadd.f32 %v382, %v1788
      %v1790 = vpop.f32.mrb[0].mxu0
      %1791 = vmatprep.mubr.bf16.mxu0 0
      %1792 = vmatmul.mubr.bf16.gmra.mrb[0].mxu0 %v1112
      %v1793 = vpop.f32.mrb[0].mxu0
      %v1794 = vadd.f32 %v382, %v1793
      %v1795 = vpop.f32.mrb[0].mxu0
      %v1796 = vpop.f32.mrb[0].mxu0
      %v1797 = vadd.f32 %v382, %v1796
      %v1798 = vpop.f32.mrb[0].mxu0
      %1799 = vmatprep.mubr.bf16.mxu0 0
      %1800 = vmatmul.mubr.bf16.gmra.mrb[0].mxu0 %v1115
      %v1801 = vpop.f32.mrb[0].mxu0
      %v1802 = vadd.f32 %v382, %v1801
      %v1803 = vpop.f32.mrb[0].mxu0
      %v1804 = vpop.f32.mrb[0].mxu0
      %v1805 = vadd.f32 %v382, %v1804
      %v1806 = vpop.f32.mrb[0].mxu0
      %1807 = vmatprep.mubr.bf16.mxu0 0
      %1808 = vmatmul.mubr.bf16.gmra.mrb[0].mxu0 %v1118
      %v1809 = vpop.f32.mrb[0].mxu0
      %v1810 = vadd.f32 %v382, %v1809
      %v1811 = vpop.f32.mrb[0].mxu0
      %v1812 = vpop.f32.mrb[0].mxu0
      %v1813 = vadd.f32 %v382, %v1812
      %v1814 = vpop.f32.mrb[0].mxu0
      %1815 = vmatprep.mubr.bf16.mxu0 0
      %1816 = vmatmul.mubr.bf16.gmra.mrb[0].mxu0 %v1121
      %v1817 = vpop.f32.mrb[0].mxu0
      %v1818 = vadd.f32 %v382, %v1817
      %v1819 = vpop.f32.mrb[0].mxu0
      %v1820 = vpop.f32.mrb[0].mxu0
      %v1821 = vadd.f32 %v382, %v1820
      %v1822 = vpop.f32.mrb[0].mxu0
      %1823 = vmatprep.mubr.bf16.mxu0 0
      %1824 = vmatmul.mubr.bf16.gmra.mrb[0].mxu0 %v1124
      %v1825 = vpop.f32.mrb[0].mxu0
      %v1826 = vadd.f32 %v382, %v1825
      %v1827 = vpop.f32.mrb[0].mxu0
      %v1828 = vpop.f32.mrb[0].mxu0
      %v1829 = vadd.f32 %v382, %v1828
      %v1830 = vpop.f32.mrb[0].mxu0
      %1831 = vmatprep.mubr.bf16.mxu0 0
      %1832 = vmatmul.mubr.bf16.gmra.mrb[0].mxu0 %v1127
      %v1833 = vpop.f32.mrb[0].mxu0
      %v1834 = vadd.f32 %v382, %v1833
      %v1835 = vpop.f32.mrb[0].mxu0
      %v1836 = vpop.f32.mrb[0].mxu0
      %v1837 = vadd.f32 %v382, %v1836
      %v1838 = vpop.f32.mrb[0].mxu0
      %1839 = vmatprep.mubr.bf16.mxu0 0
      %1840 = vmatmul.mubr.bf16.gmra.mrb[0].mxu0 %v1130
      %v1841 = vpop.f32.mrb[0].mxu0
      %v1842 = vadd.f32 %v382, %v1841
      %v1843 = vpop.f32.mrb[0].mxu0
      %v1844 = vpop.f32.mrb[0].mxu0
      %v1845 = vadd.f32 %v382, %v1844
      %v1846 = vpop.f32.mrb[0].mxu0
      %1847 = vmatprep.mubr.bf16.mxu0 0
      %1848 = vmatmul.mubr.bf16.gmra.mrb[0].mxu0 %v1133
      %v1849 = vpop.f32.mrb[0].mxu0
      %v1850 = vadd.f32 %v382, %v1849
      %v1851 = vpop.f32.mrb[0].mxu0
      %v1852 = vpop.f32.mrb[0].mxu0
      %v1853 = vadd.f32 %v382, %v1852
      %v1854 = vpop.f32.mrb[0].mxu0
      %1855 = vmatprep.mubr.bf16.mxu0 0
      %1856 = vmatmul.mubr.bf16.gmra.mrb[0].mxu0 %v1136
      %v1857 = vpop.f32.mrb[0].mxu0
      %v1858 = vadd.f32 %v382, %v1857
      %v1859 = vpop.f32.mrb[0].mxu0
      %v1860 = vpop.f32.mrb[0].mxu0
      %v1861 = vadd.f32 %v382, %v1860
      %v1862 = vpop.f32.mrb[0].mxu0
      %1863 = vmatprep.mubr.bf16.mxu0 0
      %1864 = vmatmul.mubr.bf16.gmra.mrb[0].mxu0 %v1139
      %v1865 = vpop.f32.mrb[0].mxu0
      %v1866 = vadd.f32 %v382, %v1865
      %v1867 = vpop.f32.mrb[0].mxu0
      %v1868 = vpop.f32.mrb[0].mxu0
      %v1869 = vadd.f32 %v382, %v1868
      %v1870 = vpop.f32.mrb[0].mxu0
      %1871 = vmatprep.mubr.bf16.mxu0 0
      %1872 = vmatmul.mubr.bf16.gmra.mrb[0].mxu0 %v1142
      %v1873 = vpop.f32.mrb[0].mxu0
      %v1874 = vadd.f32 %v382, %v1873
      %v1875 = vpop.f32.mrb[0].mxu0
      %v1876 = vpop.f32.mrb[0].mxu0
      %v1877 = vadd.f32 %v382, %v1876
      %v1878 = vpop.f32.mrb[0].mxu0
      %1879 = vmatprep.mubr.bf16.mxu0 0
      %1880 = vmatmul.mubr.bf16.gmra.mrb[0].mxu0 %v1145
      %v1881 = vpop.f32.mrb[0].mxu0
      %v1882 = vadd.f32 %v382, %v1881
      %v1883 = vpop.f32.mrb[0].mxu0
      %v1884 = vpop.f32.mrb[0].mxu0
      %v1885 = vadd.f32 %v382, %v1884
      %v1886 = vpop.f32.mrb[0].mxu0
      %1887 = vmatprep.mubr.bf16.mxu0 0
      %1888 = vmatmul.mubr.bf16.gmra.mrb[0].mxu0 %v1148
      %v1889 = vpop.f32.mrb[0].mxu0
      %v1890 = vadd.f32 %v382, %v1889
      %v1891 = vpop.f32.mrb[0].mxu0
      %v1892 = vpop.f32.mrb[0].mxu0
      %v1893 = vadd.f32 %v382, %v1892
      %v1894 = vpop.f32.mrb[0].mxu0
      %1895 = vmatprep.mubr.bf16.mxu0 0
      %1896 = vmatmul.mubr.bf16.gmra.mrb[0].mxu0 %v1151
      %v1897 = vpop.f32.mrb[0].mxu0
      %v1898 = vadd.f32 %v382, %v1897
      %v1899 = vpop.f32.mrb[0].mxu0
      %v1900 = vpop.f32.mrb[0].mxu0
      %v1901 = vadd.f32 %v382, %v1900
      %v1902 = vpop.f32.mrb[0].mxu0
      %1903 = vmatprep.mubr.bf16.mxu0 0
      %1904 = vmatmul.mubr.bf16.gmra.mrb[0].mxu0 %v1154
      %v1905 = vpop.f32.mrb[0].mxu0
      %v1906 = vadd.f32 %v382, %v1905
      %v1907 = vpop.f32.mrb[0].mxu0
      %v1908 = vpop.f32.mrb[0].mxu0
      %v1909 = vadd.f32 %v382, %v1908
      %v1910 = vpop.f32.mrb[0].mxu0
      %1911 = vmatprep.mubr.bf16.mxu0 0
      %1912 = vmatmul.mubr.bf16.gmra.mrb[0].mxu0 %v1157
      %v1913 = vpop.f32.mrb[0].mxu0
      %v1914 = vadd.f32 %v382, %v1913
      %v1915 = vpop.f32.mrb[0].mxu0
      %v1916 = vpop.f32.mrb[0].mxu0
      %v1917 = vadd.f32 %v382, %v1916
      %v1918 = vpop.f32.mrb[0].mxu0
      %1919 = vmatprep.mubr.bf16.mxu0 0
      %1920 = vmatmul.mubr.bf16.gmra.mrb[0].mxu0 %v1160
      %v1921 = vpop.f32.mrb[0].mxu0
      %v1922 = vadd.f32 %v382, %v1921
      %v1923 = vpop.f32.mrb[0].mxu0
      %v1924 = vpop.f32.mrb[0].mxu0
      %v1925 = vadd.f32 %v382, %v1924
      %v1926 = vpop.f32.mrb[0].mxu0
      %1927 = vmatprep.mubr.bf16.mxu0 0
      %1928 = vmatmul.mubr.bf16.gmra.mrb[0].mxu0 %v1163
      %v1929 = vpop.f32.mrb[0].mxu0
      %v1930 = vadd.f32 %v382, %v1929
      %v1931 = vpop.f32.mrb[0].mxu0
      %v1932 = vpop.f32.mrb[0].mxu0
      %v1933 = vadd.f32 %v382, %v1932
      %v1934 = vpop.f32.mrb[0].mxu0
      %1935 = vmatprep.mubr.bf16.mxu0 0
      %1936 = vmatmul.mubr.bf16.gmra.mrb[0].mxu0 %v1166
      %v1937 = vpop.f32.mrb[0].mxu0
      %v1938 = vadd.f32 %v382, %v1937
      %v1939 = vpop.f32.mrb[0].mxu0
      %v1940 = vpop.f32.mrb[0].mxu0
      %v1941 = vadd.f32 %v382, %v1940
      %v1942 = vpop.f32.mrb[0].mxu0
      %1943 = vmatprep.mubr.bf16.mxu0 0
      %1944 = vmatmul.mubr.bf16.gmra.mrb[0].mxu0 %v1169
      %v1945 = vpop.f32.mrb[0].mxu0
      %v1946 = vadd.f32 %v382, %v1945
      %v1947 = vpop.f32.mrb[0].mxu0
      %v1948 = vpop.f32.mrb[0].mxu0
      %v1949 = vadd.f32 %v382, %v1948
      %v1950 = vpop.f32.mrb[0].mxu0
      %1951 = vmatprep.mubr.bf16.mxu0 0
      %1952 = vmatmul.mubr.bf16.gmra.mrb[0].mxu0 %v1172
      %v1953 = vpop.f32.mrb[0].mxu0
      %v1954 = vadd.f32 %v382, %v1953
      %v1955 = vpop.f32.mrb[0].mxu0
      %v1956 = vpop.f32.mrb[0].mxu0
      %v1957 = vadd.f32 %v382, %v1956
      %v1958 = vpop.f32.mrb[0].mxu0
      %1959 = vmatprep.mubr.bf16.mxu0 0
      %1960 = vmatmul.mubr.bf16.gmra.mrb[0].mxu0 %v1175
      %v1961 = vpop.f32.mrb[0].mxu0
      %v1962 = vadd.f32 %v382, %v1961
      %v1963 = vpop.f32.mrb[0].mxu0
      %v1964 = vpop.f32.mrb[0].mxu0
      %v1965 = vadd.f32 %v382, %v1964
      %v1966 = vpop.f32.mrb[0].mxu0
      %1967 = vmatprep.mubr.bf16.mxu0 0
      %1968 = vmatmul.mubr.bf16.gmra.mrb[0].mxu0 %v1178
      %v1969 = vpop.f32.mrb[0].mxu0
      %v1970 = vadd.f32 %v382, %v1969
      %v1971 = vpop.f32.mrb[0].mxu0
      %v1972 = vpop.f32.mrb[0].mxu0
      %v1973 = vadd.f32 %v382, %v1972
      %v1974 = vpop.f32.mrb[0].mxu0
      %1975 = vmatprep.mubr.bf16.mxu0 0
      %1976 = vmatmul.mubr.bf16.gmra.mrb[0].mxu0 %v1181
      %v1977 = vpop.f32.mrb[0].mxu0
      %v1978 = vadd.f32 %v382, %v1977
      %v1979 = vpop.f32.mrb[0].mxu0
      %v1980 = vpop.f32.mrb[0].mxu0
      %v1981 = vadd.f32 %v382, %v1980
      %v1982 = vpop.f32.mrb[0].mxu0
      %1983 = vdwg.mxu0
      %v1984 = vmax.f32 %v1218, 0.0
      %v1985 = vmax.f32 %v1221, 0.0
      %v1986 = vmax.f32 %v1226, 0.0
      %v1987 = vmax.f32 %v1229, 0.0
      %v1988 = vmax.f32 %v1234, 0.0
      %v1989 = vmax.f32 %v1237, 0.0
      %v1990 = vmax.f32 %v1242, 0.0
      %v1991 = vmax.f32 %v1245, 0.0
      %v1992 = vmax.f32 %v1250, 0.0
      %v1993 = vmax.f32 %v1253, 0.0
      %v1994 = vmax.f32 %v1258, 0.0
      %v1995 = vmax.f32 %v1261, 0.0
      %v1996 = vmax.f32 %v1266, 0.0
      %v1997 = vmax.f32 %v1269, 0.0
      %v1998 = vmax.f32 %v1274, 0.0
      %v1999 = vmax.f32 %v1277, 0.0
      %v2000 = vmax.f32 %v1282, 0.0
      %v2001 = vmax.f32 %v1285, 0.0
      %v2002 = vmax.f32 %v1290, 0.0
      %v2003 = vmax.f32 %v1293, 0.0
      %v2004 = vmax.f32 %v1298, 0.0
      %v2005 = vmax.f32 %v1301, 0.0
      %v2006 = vmax.f32 %v1306, 0.0
      %v2007 = vmax.f32 %v1309, 0.0
      %v2008 = vmax.f32 %v1314, 0.0
      %v2009 = vmax.f32 %v1317, 0.0
      %v2010 = vmax.f32 %v1322, 0.0
      %v2011 = vmax.f32 %v1325, 0.0
      %v2012 = vmax.f32 %v1330, 0.0
      %v2013 = vmax.f32 %v1333, 0.0
      %v2014 = vmax.f32 %v1338, 0.0
      %v2015 = vmax.f32 %v1341, 0.0
      %v2016 = vmax.f32 %v1346, 0.0
      %v2017 = vmax.f32 %v1349, 0.0
      %v2018 = vmax.f32 %v1354, 0.0
      %v2019 = vmax.f32 %v1357, 0.0
      %v2020 = vmax.f32 %v1362, 0.0
      %v2021 = vmax.f32 %v1365, 0.0
      %v2022 = vmax.f32 %v1370, 0.0
      %v2023 = vmax.f32 %v1373, 0.0
      %v2024 = vmax.f32 %v1378, 0.0
      %v2025 = vmax.f32 %v1381, 0.0
      %v2026 = vmax.f32 %v1386, 0.0
      %v2027 = vmax.f32 %v1389, 0.0
      %v2028 = vmax.f32 %v1394, 0.0
      %v2029 = vmax.f32 %v1397, 0.0
      %v2030 = vmax.f32 %v1402, 0.0
      %v2031 = vmax.f32 %v1405, 0.0
      %v2032 = vmax.f32 %v1410, 0.0
      %v2033 = vmax.f32 %v1413, 0.0
      %v2034 = vmax.f32 %v1418, 0.0
      %v2035 = vmax.f32 %v1421, 0.0
      %v2036 = vmax.f32 %v1426, 0.0
      %v2037 = vmax.f32 %v1429, 0.0
      %v2038 = vmax.f32 %v1434, 0.0
      %v2039 = vmax.f32 %v1437, 0.0
      %v2040 = vmax.f32 %v1442, 0.0
      %v2041 = vmax.f32 %v1445, 0.0
      %v2042 = vmax.f32 %v1450, 0.0
      %v2043 = vmax.f32 %v1453, 0.0
      %v2044 = vmax.f32 %v1458, 0.0
      %v2045 = vmax.f32 %v1461, 0.0
      %v2046 = vmax.f32 %v1466, 0.0
      %v2047 = vmax.f32 %v1469, 0.0
      %v2048 = vmax.f32 %v1474, 0.0
      %v2049 = vmax.f32 %v1477, 0.0
      %v2050 = vmax.f32 %v1482, 0.0
      %v2051 = vmax.f32 %v1485, 0.0
      %v2052 = vmax.f32 %v1490, 0.0
      %v2053 = vmax.f32 %v1493, 0.0
      %v2054 = vmax.f32 %v1498, 0.0
      %v2055 = vmax.f32 %v1501, 0.0
      %v2056 = vmax.f32 %v1506, 0.0
      %v2057 = vmax.f32 %v1509, 0.0
      %v2058 = vmax.f32 %v1514, 0.0
      %v2059 = vmax.f32 %v1517, 0.0
      %v2060 = vmax.f32 %v1522, 0.0
      %v2061 = vmax.f32 %v1525, 0.0
      %v2062 = vmax.f32 %v1530, 0.0
      %v2063 = vmax.f32 %v1533, 0.0
      %v2064 = vmax.f32 %v1538, 0.0
      %v2065 = vmax.f32 %v1541, 0.0
      %v2066 = vmax.f32 %v1546, 0.0
      %v2067 = vmax.f32 %v1549, 0.0
      %v2068 = vmax.f32 %v1554, 0.0
      %v2069 = vmax.f32 %v1557, 0.0
      %v2070 = vmax.f32 %v1562, 0.0
      %v2071 = vmax.f32 %v1565, 0.0
      %v2072 = vmax.f32 %v1570, 0.0
      %v2073 = vmax.f32 %v1573, 0.0
      %v2074 = vmax.f32 %v1578, 0.0
      %v2075 = vmax.f32 %v1581, 0.0
      %v2076 = vmax.f32 %v1586, 0.0
      %v2077 = vmax.f32 %v1589, 0.0
      %v2078 = vmax.f32 %v1594, 0.0
      %v2079 = vmax.f32 %v1597, 0.0
      %v2080 = vmax.f32 %v1602, 0.0
      %v2081 = vmax.f32 %v1605, 0.0
      %v2082 = vmax.f32 %v1610, 0.0
      %v2083 = vmax.f32 %v1613, 0.0
      %v2084 = vmax.f32 %v1618, 0.0
      %v2085 = vmax.f32 %v1621, 0.0
      %v2086 = vmax.f32 %v1626, 0.0
      %v2087 = vmax.f32 %v1629, 0.0
      %v2088 = vmax.f32 %v1634, 0.0
      %v2089 = vmax.f32 %v1637, 0.0
      %v2090 = vmax.f32 %v1642, 0.0
      %v2091 = vmax.f32 %v1645, 0.0
      %v2092 = vmax.f32 %v1650, 0.0
      %v2093 = vmax.f32 %v1653, 0.0
      %v2094 = vmax.f32 %v1658, 0.0
      %v2095 = vmax.f32 %v1661, 0.0
      %v2096 = vmax.f32 %v1666, 0.0
      %v2097 = vmax.f32 %v1669, 0.0
      %v2098 = vmax.f32 %v1674, 0.0
      %v2099 = vmax.f32 %v1677, 0.0
      %v2100 = vmax.f32 %v1682, 0.0
      %v2101 = vmax.f32 %v1685, 0.0
      %v2102 = vmax.f32 %v1690, 0.0
      %v2103 = vmax.f32 %v1693, 0.0
      %v2104 = vmax.f32 %v1698, 0.0
      %v2105 = vmax.f32 %v1701, 0.0
      %v2106 = vmax.f32 %v1706, 0.0
      %v2107 = vmax.f32 %v1709, 0.0
      %v2108 = vmax.f32 %v1714, 0.0
      %v2109 = vmax.f32 %v1717, 0.0
      %v2110 = vmax.f32 %v1722, 0.0
      %v2111 = vmax.f32 %v1725, 0.0
      %v2112 = vmax.f32 %v1730, 0.0
      %v2113 = vmax.f32 %v1733, 0.0
      %v2114 = vmax.f32 %v1738, 0.0
      %v2115 = vmax.f32 %v1741, 0.0
      %v2116 = vmax.f32 %v1746, 0.0
      %v2117 = vmax.f32 %v1749, 0.0
      %v2118 = vmax.f32 %v1754, 0.0
      %v2119 = vmax.f32 %v1757, 0.0
      %v2120 = vmax.f32 %v1762, 0.0
      %v2121 = vmax.f32 %v1765, 0.0
      %v2122 = vmax.f32 %v1770, 0.0
      %v2123 = vmax.f32 %v1773, 0.0
      %v2124 = vmax.f32 %v1778, 0.0
      %v2125 = vmax.f32 %v1781, 0.0
      %v2126 = vmax.f32 %v1786, 0.0
      %v2127 = vmax.f32 %v1789, 0.0
      %v2128 = vmax.f32 %v1794, 0.0
      %v2129 = vmax.f32 %v1797, 0.0
      %v2130 = vmax.f32 %v1802, 0.0
      %v2131 = vmax.f32 %v1805, 0.0
      %v2132 = vmax.f32 %v1810, 0.0
      %v2133 = vmax.f32 %v1813, 0.0
      %v2134 = vmax.f32 %v1818, 0.0
      %v2135 = vmax.f32 %v1821, 0.0
      %v2136 = vmax.f32 %v1826, 0.0
      %v2137 = vmax.f32 %v1829, 0.0
      %v2138 = vmax.f32 %v1834, 0.0
      %v2139 = vmax.f32 %v1837, 0.0
      %v2140 = vmax.f32 %v1842, 0.0
      %v2141 = vmax.f32 %v1845, 0.0
      %v2142 = vmax.f32 %v1850, 0.0
      %v2143 = vmax.f32 %v1853, 0.0
      %v2144 = vmax.f32 %v1858, 0.0
      %v2145 = vmax.f32 %v1861, 0.0
      %v2146 = vmax.f32 %v1866, 0.0
      %v2147 = vmax.f32 %v1869, 0.0
      %v2148 = vmax.f32 %v1874, 0.0
      %v2149 = vmax.f32 %v1877, 0.0
      %v2150 = vmax.f32 %v1882, 0.0
      %v2151 = vmax.f32 %v1885, 0.0
      %v2152 = vmax.f32 %v1890, 0.0
      %v2153 = vmax.f32 %v1893, 0.0
      %v2154 = vmax.f32 %v1898, 0.0
      %v2155 = vmax.f32 %v1901, 0.0
      %v2156 = vmax.f32 %v1906, 0.0
      %v2157 = vmax.f32 %v1909, 0.0
      %v2158 = vmax.f32 %v1914, 0.0
      %v2159 = vmax.f32 %v1917, 0.0
      %v2160 = vmax.f32 %v1922, 0.0
      %v2161 = vmax.f32 %v1925, 0.0
      %v2162 = vmax.f32 %v1930, 0.0
      %v2163 = vmax.f32 %v1933, 0.0
      %v2164 = vmax.f32 %v1938, 0.0
      %v2165 = vmax.f32 %v1941, 0.0
      %v2166 = vmax.f32 %v1946, 0.0
      %v2167 = vmax.f32 %v1949, 0.0
      %v2168 = vmax.f32 %v1954, 0.0
      %v2169 = vmax.f32 %v1957, 0.0
      %v2170 = vmax.f32 %v1962, 0.0
      %v2171 = vmax.f32 %v1965, 0.0
      %v2172 = vmax.f32 %v1970, 0.0
      %v2173 = vmax.f32 %v1973, 0.0
      %v2174 = vmax.f32 %v1978, 0.0
      %v2175 = vmax.f32 %v1981, 0.0
      %v2176 = vpack.c.bf16 %v1985, %v1984
      %v2177 = vpack.c.bf16 %v1987, %v1986
      %v2178 = vpack.c.bf16 %v1989, %v1988
      %v2179 = vpack.c.bf16 %v1991, %v1990
      %v2180 = vpack.c.bf16 %v1993, %v1992
      %v2181 = vpack.c.bf16 %v1995, %v1994
      %v2182 = vpack.c.bf16 %v1997, %v1996
      %v2183 = vpack.c.bf16 %v1999, %v1998
      %v2184 = vpack.c.bf16 %v2001, %v2000
      %v2185 = vpack.c.bf16 %v2003, %v2002
      %v2186 = vpack.c.bf16 %v2005, %v2004
      %v2187 = vpack.c.bf16 %v2007, %v2006
      %v2188 = vpack.c.bf16 %v2009, %v2008
      %v2189 = vpack.c.bf16 %v2011, %v2010
      %v2190 = vpack.c.bf16 %v2013, %v2012
      %v2191 = vpack.c.bf16 %v2015, %v2014
      %v2192 = vpack.c.bf16 %v2017, %v2016
      %v2193 = vpack.c.bf16 %v2019, %v2018
      %v2194 = vpack.c.bf16 %v2021, %v2020
      %v2195 = vpack.c.bf16 %v2023, %v2022
      %v2196 = vpack.c.bf16 %v2025, %v2024
      %v2197 = vpack.c.bf16 %v2027, %v2026
      %v2198 = vpack.c.bf16 %v2029, %v2028
      %v2199 = vpack.c.bf16 %v2031, %v2030
      %v2200 = vpack.c.bf16 %v2033, %v2032
      %v2201 = vpack.c.bf16 %v2035, %v2034
      %v2202 = vpack.c.bf16 %v2037, %v2036
      %v2203 = vpack.c.bf16 %v2039, %v2038
      %v2204 = vpack.c.bf16 %v2041, %v2040
      %v2205 = vpack.c.bf16 %v2043, %v2042
      %v2206 = vpack.c.bf16 %v2045, %v2044
      %v2207 = vpack.c.bf16 %v2047, %v2046
      %v2208 = vpack.c.bf16 %v2049, %v2048
      %v2209 = vpack.c.bf16 %v2051, %v2050
      %v2210 = vpack.c.bf16 %v2053, %v2052
      %v2211 = vpack.c.bf16 %v2055, %v2054
      %v2212 = vpack.c.bf16 %v2057, %v2056
      %v2213 = vpack.c.bf16 %v2059, %v2058
      %v2214 = vpack.c.bf16 %v2061, %v2060
      %v2215 = vpack.c.bf16 %v2063, %v2062
      %v2216 = vpack.c.bf16 %v2065, %v2064
      %v2217 = vpack.c.bf16 %v2067, %v2066
      %v2218 = vpack.c.bf16 %v2069, %v2068
      %v2219 = vpack.c.bf16 %v2071, %v2070
      %v2220 = vpack.c.bf16 %v2073, %v2072
      %v2221 = vpack.c.bf16 %v2075, %v2074
      %v2222 = vpack.c.bf16 %v2077, %v2076
      %v2223 = vpack.c.bf16 %v2079, %v2078
      %v2224 = vpack.c.bf16 %v2081, %v2080
      %v2225 = vpack.c.bf16 %v2083, %v2082
      %v2226 = vpack.c.bf16 %v2085, %v2084
      %v2227 = vpack.c.bf16 %v2087, %v2086
      %v2228 = vpack.c.bf16 %v2089, %v2088
      %v2229 = vpack.c.bf16 %v2091, %v2090
      %v2230 = vpack.c.bf16 %v2093, %v2092
      %v2231 = vpack.c.bf16 %v2095, %v2094
      %v2232 = vpack.c.bf16 %v2097, %v2096
      %v2233 = vpack.c.bf16 %v2099, %v2098
      %v2234 = vpack.c.bf16 %v2101, %v2100
      %v2235 = vpack.c.bf16 %v2103, %v2102
      %v2236 = vpack.c.bf16 %v2105, %v2104
      %v2237 = vpack.c.bf16 %v2107, %v2106
      %v2238 = vpack.c.bf16 %v2109, %v2108
      %v2239 = vpack.c.bf16 %v2111, %v2110
      %v2240 = vpack.c.bf16 %v2113, %v2112
      %v2241 = vpack.c.bf16 %v2115, %v2114
      %v2242 = vpack.c.bf16 %v2117, %v2116
      %v2243 = vpack.c.bf16 %v2119, %v2118
      %v2244 = vpack.c.bf16 %v2121, %v2120
      %v2245 = vpack.c.bf16 %v2123, %v2122
      %v2246 = vpack.c.bf16 %v2125, %v2124
      %v2247 = vpack.c.bf16 %v2127, %v2126
      %v2248 = vpack.c.bf16 %v2129, %v2128
      %v2249 = vpack.c.bf16 %v2131, %v2130
      %v2250 = vpack.c.bf16 %v2133, %v2132
      %v2251 = vpack.c.bf16 %v2135, %v2134
      %v2252 = vpack.c.bf16 %v2137, %v2136
      %v2253 = vpack.c.bf16 %v2139, %v2138
      %v2254 = vpack.c.bf16 %v2141, %v2140
      %v2255 = vpack.c.bf16 %v2143, %v2142
      %v2256 = vpack.c.bf16 %v2145, %v2144
      %v2257 = vpack.c.bf16 %v2147, %v2146
      %v2258 = vpack.c.bf16 %v2149, %v2148
      %v2259 = vpack.c.bf16 %v2151, %v2150
      %v2260 = vpack.c.bf16 %v2153, %v2152
      %v2261 = vpack.c.bf16 %v2155, %v2154
      %v2262 = vpack.c.bf16 %v2157, %v2156
      %v2263 = vpack.c.bf16 %v2159, %v2158
      %v2264 = vpack.c.bf16 %v2161, %v2160
      %v2265 = vpack.c.bf16 %v2163, %v2162
      %v2266 = vpack.c.bf16 %v2165, %v2164
      %v2267 = vpack.c.bf16 %v2167, %v2166
      %v2268 = vpack.c.bf16 %v2169, %v2168
      %v2269 = vpack.c.bf16 %v2171, %v2170
      %v2270 = vpack.c.bf16 %v2173, %v2172
      %v2271 = vpack.c.bf16 %v2175, %v2174
      %v2368 = vunpack.c.l.b16 %v2176
      %v2369 = vunpack.c.h.b16 %v2176
      %v2370 = vunpack.c.l.b16 %v2177
      %v2371 = vunpack.c.h.b16 %v2177
      %v2372 = vunpack.c.l.b16 %v2178
      %v2373 = vunpack.c.h.b16 %v2178
      %v2374 = vunpack.c.l.b16 %v2179
      %v2375 = vunpack.c.h.b16 %v2179
      %v2376 = vunpack.c.l.b16 %v2180
      %v2377 = vunpack.c.h.b16 %v2180
      %v2378 = vunpack.c.l.b16 %v2181
      %v2379 = vunpack.c.h.b16 %v2181
      %v2380 = vunpack.c.l.b16 %v2182
      %v2381 = vunpack.c.h.b16 %v2182
      %v2382 = vunpack.c.l.b16 %v2183
      %v2383 = vunpack.c.h.b16 %v2183
      %v2384 = vunpack.c.l.b16 %v2184
      %v2385 = vunpack.c.h.b16 %v2184
      %v2386 = vunpack.c.l.b16 %v2185
      %v2387 = vunpack.c.h.b16 %v2185
      %v2388 = vunpack.c.l.b16 %v2186
      %v2389 = vunpack.c.h.b16 %v2186
      %v2390 = vunpack.c.l.b16 %v2187
      %v2391 = vunpack.c.h.b16 %v2187
      %v2392 = vunpack.c.l.b16 %v2188
      %v2393 = vunpack.c.h.b16 %v2188
      %v2394 = vunpack.c.l.b16 %v2189
      %v2395 = vunpack.c.h.b16 %v2189
      %v2396 = vunpack.c.l.b16 %v2190
      %v2397 = vunpack.c.h.b16 %v2190
      %v2398 = vunpack.c.l.b16 %v2191
      %v2399 = vunpack.c.h.b16 %v2191
      %v2400 = vunpack.c.l.b16 %v2192
      %v2401 = vunpack.c.h.b16 %v2192
      %v2402 = vunpack.c.l.b16 %v2193
      %v2403 = vunpack.c.h.b16 %v2193
      %v2404 = vunpack.c.l.b16 %v2194
      %v2405 = vunpack.c.h.b16 %v2194
      %v2406 = vunpack.c.l.b16 %v2195
      %v2407 = vunpack.c.h.b16 %v2195
      %v2408 = vunpack.c.l.b16 %v2196
      %v2409 = vunpack.c.h.b16 %v2196
      %v2410 = vunpack.c.l.b16 %v2197
      %v2411 = vunpack.c.h.b16 %v2197
      %v2412 = vunpack.c.l.b16 %v2198
      %v2413 = vunpack.c.h.b16 %v2198
      %v2414 = vunpack.c.l.b16 %v2199
      %v2415 = vunpack.c.h.b16 %v2199
      %v2416 = vunpack.c.l.b16 %v2200
      %v2417 = vunpack.c.h.b16 %v2200
      %v2418 = vunpack.c.l.b16 %v2201
      %v2419 = vunpack.c.h.b16 %v2201
      %v2420 = vunpack.c.l.b16 %v2202
      %v2421 = vunpack.c.h.b16 %v2202
      %v2422 = vunpack.c.l.b16 %v2203
      %v2423 = vunpack.c.h.b16 %v2203
      %v2424 = vunpack.c.l.b16 %v2204
      %v2425 = vunpack.c.h.b16 %v2204
      %v2426 = vunpack.c.l.b16 %v2205
      %v2427 = vunpack.c.h.b16 %v2205
      %v2428 = vunpack.c.l.b16 %v2206
      %v2429 = vunpack.c.h.b16 %v2206
      %v2430 = vunpack.c.l.b16 %v2207
      %v2431 = vunpack.c.h.b16 %v2207
      %v2432 = vunpack.c.l.b16 %v2208
      %v2433 = vunpack.c.h.b16 %v2208
      %v2434 = vunpack.c.l.b16 %v2209
      %v2435 = vunpack.c.h.b16 %v2209
      %v2436 = vunpack.c.l.b16 %v2210
      %v2437 = vunpack.c.h.b16 %v2210
      %v2438 = vunpack.c.l.b16 %v2211
      %v2439 = vunpack.c.h.b16 %v2211
      %v2440 = vunpack.c.l.b16 %v2212
      %v2441 = vunpack.c.h.b16 %v2212
      %v2442 = vunpack.c.l.b16 %v2213
      %v2443 = vunpack.c.h.b16 %v2213
      %v2444 = vunpack.c.l.b16 %v2214
      %v2445 = vunpack.c.h.b16 %v2214
      %v2446 = vunpack.c.l.b16 %v2215
      %v2447 = vunpack.c.h.b16 %v2215
      %v2448 = vunpack.c.l.b16 %v2216
      %v2449 = vunpack.c.h.b16 %v2216
      %v2450 = vunpack.c.l.b16 %v2217
      %v2451 = vunpack.c.h.b16 %v2217
      %v2452 = vunpack.c.l.b16 %v2218
      %v2453 = vunpack.c.h.b16 %v2218
      %v2454 = vunpack.c.l.b16 %v2219
      %v2455 = vunpack.c.h.b16 %v2219
      %v2456 = vunpack.c.l.b16 %v2220
      %v2457 = vunpack.c.h.b16 %v2220
      %v2458 = vunpack.c.l.b16 %v2221
      %v2459 = vunpack.c.h.b16 %v2221
      %v2460 = vunpack.c.l.b16 %v2222
      %v2461 = vunpack.c.h.b16 %v2222
      %v2462 = vunpack.c.l.b16 %v2223
      %v2463 = vunpack.c.h.b16 %v2223
      %v2464 = vunpack.c.l.b16 %v2224
      %v2465 = vunpack.c.h.b16 %v2224
      %v2466 = vunpack.c.l.b16 %v2225
      %v2467 = vunpack.c.h.b16 %v2225
      %v2468 = vunpack.c.l.b16 %v2226
      %v2469 = vunpack.c.h.b16 %v2226
      %v2470 = vunpack.c.l.b16 %v2227
      %v2471 = vunpack.c.h.b16 %v2227
      %v2472 = vunpack.c.l.b16 %v2228
      %v2473 = vunpack.c.h.b16 %v2228
      %v2474 = vunpack.c.l.b16 %v2229
      %v2475 = vunpack.c.h.b16 %v2229
      %v2476 = vunpack.c.l.b16 %v2230
      %v2477 = vunpack.c.h.b16 %v2230
      %v2478 = vunpack.c.l.b16 %v2231
      %v2479 = vunpack.c.h.b16 %v2231
      %v2480 = vunpack.c.l.b16 %v2232
      %v2481 = vunpack.c.h.b16 %v2232
      %v2482 = vunpack.c.l.b16 %v2233
      %v2483 = vunpack.c.h.b16 %v2233
      %v2484 = vunpack.c.l.b16 %v2234
      %v2485 = vunpack.c.h.b16 %v2234
      %v2486 = vunpack.c.l.b16 %v2235
      %v2487 = vunpack.c.h.b16 %v2235
      %v2488 = vunpack.c.l.b16 %v2236
      %v2489 = vunpack.c.h.b16 %v2236
      %v2490 = vunpack.c.l.b16 %v2237
      %v2491 = vunpack.c.h.b16 %v2237
      %v2492 = vunpack.c.l.b16 %v2238
      %v2493 = vunpack.c.h.b16 %v2238
      %v2494 = vunpack.c.l.b16 %v2239
      %v2495 = vunpack.c.h.b16 %v2239
      %v2496 = vunpack.c.l.b16 %v2240
      %v2497 = vunpack.c.h.b16 %v2240
      %v2498 = vunpack.c.l.b16 %v2241
      %v2499 = vunpack.c.h.b16 %v2241
      %v2500 = vunpack.c.l.b16 %v2242
      %v2501 = vunpack.c.h.b16 %v2242
      %v2502 = vunpack.c.l.b16 %v2243
      %v2503 = vunpack.c.h.b16 %v2243
      %v2504 = vunpack.c.l.b16 %v2244
      %v2505 = vunpack.c.h.b16 %v2244
      %v2506 = vunpack.c.l.b16 %v2245
      %v2507 = vunpack.c.h.b16 %v2245
      %v2508 = vunpack.c.l.b16 %v2246
      %v2509 = vunpack.c.h.b16 %v2246
      %v2510 = vunpack.c.l.b16 %v2247
      %v2511 = vunpack.c.h.b16 %v2247
      %v2512 = vunpack.c.l.b16 %v2248
      %v2513 = vunpack.c.h.b16 %v2248
      %v2514 = vunpack.c.l.b16 %v2249
      %v2515 = vunpack.c.h.b16 %v2249
      %v2516 = vunpack.c.l.b16 %v2250
      %v2517 = vunpack.c.h.b16 %v2250
      %v2518 = vunpack.c.l.b16 %v2251
      %v2519 = vunpack.c.h.b16 %v2251
      %v2520 = vunpack.c.l.b16 %v2252
      %v2521 = vunpack.c.h.b16 %v2252
      %v2522 = vunpack.c.l.b16 %v2253
      %v2523 = vunpack.c.h.b16 %v2253
      %v2524 = vunpack.c.l.b16 %v2254
      %v2525 = vunpack.c.h.b16 %v2254
      %v2526 = vunpack.c.l.b16 %v2255
      %v2527 = vunpack.c.h.b16 %v2255
      %v2528 = vunpack.c.l.b16 %v2256
      %v2529 = vunpack.c.h.b16 %v2256
      %v2530 = vunpack.c.l.b16 %v2257
      %v2531 = vunpack.c.h.b16 %v2257
      %v2532 = vunpack.c.l.b16 %v2258
      %v2533 = vunpack.c.h.b16 %v2258
      %v2534 = vunpack.c.l.b16 %v2259
      %v2535 = vunpack.c.h.b16 %v2259
      %v2536 = vunpack.c.l.b16 %v2260
      %v2537 = vunpack.c.h.b16 %v2260
      %v2538 = vunpack.c.l.b16 %v2261
      %v2539 = vunpack.c.h.b16 %v2261
      %v2540 = vunpack.c.l.b16 %v2262
      %v2541 = vunpack.c.h.b16 %v2262
      %v2542 = vunpack.c.l.b16 %v2263
      %v2543 = vunpack.c.h.b16 %v2263
      %v2544 = vunpack.c.l.b16 %v2264
      %v2545 = vunpack.c.h.b16 %v2264
      %v2546 = vunpack.c.l.b16 %v2265
      %v2547 = vunpack.c.h.b16 %v2265
      %v2548 = vunpack.c.l.b16 %v2266
      %v2549 = vunpack.c.h.b16 %v2266
      %v2550 = vunpack.c.l.b16 %v2267
      %v2551 = vunpack.c.h.b16 %v2267
      %v2552 = vunpack.c.l.b16 %v2268
      %v2553 = vunpack.c.h.b16 %v2268
      %v2554 = vunpack.c.l.b16 %v2269
      %v2555 = vunpack.c.h.b16 %v2269
      %v2556 = vunpack.c.l.b16 %v2270
      %v2557 = vunpack.c.h.b16 %v2270
      %v2558 = vunpack.c.l.b16 %v2271
      %v2559 = vunpack.c.h.b16 %v2271
      %v2560 = vpack.c.b16 %v2368, %v2368
      %v2561 = vpack.c.b16 %v2369, %v2369
      %v2562 = vpack.c.b16 %v2370, %v2370
      %v2563 = vpack.c.b16 %v2371, %v2371
      %v2564 = vpack.c.b16 %v2372, %v2372
      %v2565 = vpack.c.b16 %v2373, %v2373
      %v2566 = vpack.c.b16 %v2374, %v2374
      %v2567 = vpack.c.b16 %v2375, %v2375
      %v2568 = vpack.c.b16 %v2376, %v2376
      %v2569 = vpack.c.b16 %v2377, %v2377
      %v2570 = vpack.c.b16 %v2378, %v2378
      %v2571 = vpack.c.b16 %v2379, %v2379
      %v2572 = vpack.c.b16 %v2380, %v2380
      %v2573 = vpack.c.b16 %v2381, %v2381
      %v2574 = vpack.c.b16 %v2382, %v2382
      %v2575 = vpack.c.b16 %v2383, %v2383
      %v2576 = vpack.c.b16 %v2384, %v2384
      %v2577 = vpack.c.b16 %v2385, %v2385
      %v2578 = vpack.c.b16 %v2386, %v2386
      %v2579 = vpack.c.b16 %v2387, %v2387
      %v2580 = vpack.c.b16 %v2388, %v2388
      %v2581 = vpack.c.b16 %v2389, %v2389
      %v2582 = vpack.c.b16 %v2390, %v2390
      %v2583 = vpack.c.b16 %v2391, %v2391
      %v2584 = vpack.c.b16 %v2392, %v2392
      %v2585 = vpack.c.b16 %v2393, %v2393
      %v2586 = vpack.c.b16 %v2394, %v2394
      %v2587 = vpack.c.b16 %v2395, %v2395
      %v2588 = vpack.c.b16 %v2396, %v2396
      %v2589 = vpack.c.b16 %v2397, %v2397
      %v2590 = vpack.c.b16 %v2398, %v2398
      %v2591 = vpack.c.b16 %v2399, %v2399
      %v2592 = vpack.c.b16 %v2400, %v2400
      %v2593 = vpack.c.b16 %v2401, %v2401
      %v2594 = vpack.c.b16 %v2402, %v2402
      %v2595 = vpack.c.b16 %v2403, %v2403
      %v2596 = vpack.c.b16 %v2404, %v2404
      %v2597 = vpack.c.b16 %v2405, %v2405
      %v2598 = vpack.c.b16 %v2406, %v2406
      %v2599 = vpack.c.b16 %v2407, %v2407
      %v2600 = vpack.c.b16 %v2408, %v2408
      %v2601 = vpack.c.b16 %v2409, %v2409
      %v2602 = vpack.c.b16 %v2410, %v2410
      %v2603 = vpack.c.b16 %v2411, %v2411
      %v2604 = vpack.c.b16 %v2412, %v2412
      %v2605 = vpack.c.b16 %v2413, %v2413
      %v2606 = vpack.c.b16 %v2414, %v2414
      %v2607 = vpack.c.b16 %v2415, %v2415
      %v2608 = vpack.c.b16 %v2416, %v2416
      %v2609 = vpack.c.b16 %v2417, %v2417
      %v2610 = vpack.c.b16 %v2418, %v2418
      %v2611 = vpack.c.b16 %v2419, %v2419
      %v2612 = vpack.c.b16 %v2420, %v2420
      %v2613 = vpack.c.b16 %v2421, %v2421
      %v2614 = vpack.c.b16 %v2422, %v2422
      %v2615 = vpack.c.b16 %v2423, %v2423
      %v2616 = vpack.c.b16 %v2424, %v2424
      %v2617 = vpack.c.b16 %v2425, %v2425
      %v2618 = vpack.c.b16 %v2426, %v2426
      %v2619 = vpack.c.b16 %v2427, %v2427
      %v2620 = vpack.c.b16 %v2428, %v2428
      %v2621 = vpack.c.b16 %v2429, %v2429
      %v2622 = vpack.c.b16 %v2430, %v2430
      %v2623 = vpack.c.b16 %v2431, %v2431
      %v2624 = vpack.c.b16 %v2432, %v2432
      %v2625 = vpack.c.b16 %v2433, %v2433
      %v2626 = vpack.c.b16 %v2434, %v2434
      %v2627 = vpack.c.b16 %v2435, %v2435
      %v2628 = vpack.c.b16 %v2436, %v2436
      %v2629 = vpack.c.b16 %v2437, %v2437
      %v2630 = vpack.c.b16 %v2438, %v2438
      %v2631 = vpack.c.b16 %v2439, %v2439
      %v2632 = vpack.c.b16 %v2440, %v2440
      %v2633 = vpack.c.b16 %v2441, %v2441
      %v2634 = vpack.c.b16 %v2442, %v2442
      %v2635 = vpack.c.b16 %v2443, %v2443
      %v2636 = vpack.c.b16 %v2444, %v2444
      %v2637 = vpack.c.b16 %v2445, %v2445
      %v2638 = vpack.c.b16 %v2446, %v2446
      %v2639 = vpack.c.b16 %v2447, %v2447
      %v2640 = vpack.c.b16 %v2448, %v2448
      %v2641 = vpack.c.b16 %v2449, %v2449
      %v2642 = vpack.c.b16 %v2450, %v2450
      %v2643 = vpack.c.b16 %v2451, %v2451
      %v2644 = vpack.c.b16 %v2452, %v2452
      %v2645 = vpack.c.b16 %v2453, %v2453
      %v2646 = vpack.c.b16 %v2454, %v2454
      %v2647 = vpack.c.b16 %v2455, %v2455
      %v2648 = vpack.c.b16 %v2456, %v2456
      %v2649 = vpack.c.b16 %v2457, %v2457
      %v2650 = vpack.c.b16 %v2458, %v2458
      %v2651 = vpack.c.b16 %v2459, %v2459
      %v2652 = vpack.c.b16 %v2460, %v2460
      %v2653 = vpack.c.b16 %v2461, %v2461
      %v2654 = vpack.c.b16 %v2462, %v2462
      %v2655 = vpack.c.b16 %v2463, %v2463
      %v2656 = vpack.c.b16 %v2464, %v2464
      %v2657 = vpack.c.b16 %v2465, %v2465
      %v2658 = vpack.c.b16 %v2466, %v2466
      %v2659 = vpack.c.b16 %v2467, %v2467
      %v2660 = vpack.c.b16 %v2468, %v2468
      %v2661 = vpack.c.b16 %v2469, %v2469
      %v2662 = vpack.c.b16 %v2470, %v2470
      %v2663 = vpack.c.b16 %v2471, %v2471
      %v2664 = vpack.c.b16 %v2472, %v2472
      %v2665 = vpack.c.b16 %v2473, %v2473
      %v2666 = vpack.c.b16 %v2474, %v2474
      %v2667 = vpack.c.b16 %v2475, %v2475
      %v2668 = vpack.c.b16 %v2476, %v2476
      %v2669 = vpack.c.b16 %v2477, %v2477
      %v2670 = vpack.c.b16 %v2478, %v2478
      %v2671 = vpack.c.b16 %v2479, %v2479
      %v2672 = vpack.c.b16 %v2480, %v2480
      %v2673 = vpack.c.b16 %v2481, %v2481
      %v2674 = vpack.c.b16 %v2482, %v2482
      %v2675 = vpack.c.b16 %v2483, %v2483
      %v2676 = vpack.c.b16 %v2484, %v2484
      %v2677 = vpack.c.b16 %v2485, %v2485
      %v2678 = vpack.c.b16 %v2486, %v2486
      %v2679 = vpack.c.b16 %v2487, %v2487
      %v2680 = vpack.c.b16 %v2488, %v2488
      %v2681 = vpack.c.b16 %v2489, %v2489
      %v2682 = vpack.c.b16 %v2490, %v2490
      %v2683 = vpack.c.b16 %v2491, %v2491
      %v2684 = vpack.c.b16 %v2492, %v2492
      %v2685 = vpack.c.b16 %v2493, %v2493
      %v2686 = vpack.c.b16 %v2494, %v2494
      %v2687 = vpack.c.b16 %v2495, %v2495
      %v2688 = vpack.c.b16 %v2496, %v2496
      %v2689 = vpack.c.b16 %v2497, %v2497
      %v2690 = vpack.c.b16 %v2498, %v2498
      %v2691 = vpack.c.b16 %v2499, %v2499
      %v2692 = vpack.c.b16 %v2500, %v2500
      %v2693 = vpack.c.b16 %v2501, %v2501
      %v2694 = vpack.c.b16 %v2502, %v2502
      %v2695 = vpack.c.b16 %v2503, %v2503
      %v2696 = vpack.c.b16 %v2504, %v2504
      %v2697 = vpack.c.b16 %v2505, %v2505
      %v2698 = vpack.c.b16 %v2506, %v2506
      %v2699 = vpack.c.b16 %v2507, %v2507
      %v2700 = vpack.c.b16 %v2508, %v2508
      %v2701 = vpack.c.b16 %v2509, %v2509
      %v2702 = vpack.c.b16 %v2510, %v2510
      %v2703 = vpack.c.b16 %v2511, %v2511
      %v2704 = vpack.c.b16 %v2512, %v2512
      %v2705 = vpack.c.b16 %v2513, %v2513
      %v2706 = vpack.c.b16 %v2514, %v2514
      %v2707 = vpack.c.b16 %v2515, %v2515
      %v2708 = vpack.c.b16 %v2516, %v2516
      %v2709 = vpack.c.b16 %v2517, %v2517
      %v2710 = vpack.c.b16 %v2518, %v2518
      %v2711 = vpack.c.b16 %v2519, %v2519
      %v2712 = vpack.c.b16 %v2520, %v2520
      %v2713 = vpack.c.b16 %v2521, %v2521
      %v2714 = vpack.c.b16 %v2522, %v2522
      %v2715 = vpack.c.b16 %v2523, %v2523
      %v2716 = vpack.c.b16 %v2524, %v2524
      %v2717 = vpack.c.b16 %v2525, %v2525
      %v2718 = vpack.c.b16 %v2526, %v2526
      %v2719 = vpack.c.b16 %v2527, %v2527
      %v2720 = vpack.c.b16 %v2528, %v2528
      %v2721 = vpack.c.b16 %v2529, %v2529
      %v2722 = vpack.c.b16 %v2530, %v2530
      %v2723 = vpack.c.b16 %v2531, %v2531
      %v2724 = vpack.c.b16 %v2532, %v2532
      %v2725 = vpack.c.b16 %v2533, %v2533
      %v2726 = vpack.c.b16 %v2534, %v2534
      %v2727 = vpack.c.b16 %v2535, %v2535
      %v2728 = vpack.c.b16 %v2536, %v2536
      %v2729 = vpack.c.b16 %v2537, %v2537
      %v2730 = vpack.c.b16 %v2538, %v2538
      %v2731 = vpack.c.b16 %v2539, %v2539
      %v2732 = vpack.c.b16 %v2540, %v2540
      %v2733 = vpack.c.b16 %v2541, %v2541
      %v2734 = vpack.c.b16 %v2542, %v2542
      %v2735 = vpack.c.b16 %v2543, %v2543
      %v2736 = vpack.c.b16 %v2544, %v2544
      %v2737 = vpack.c.b16 %v2545, %v2545
      %v2738 = vpack.c.b16 %v2546, %v2546
      %v2739 = vpack.c.b16 %v2547, %v2547
      %v2740 = vpack.c.b16 %v2548, %v2548
      %v2741 = vpack.c.b16 %v2549, %v2549
      %v2742 = vpack.c.b16 %v2550, %v2550
      %v2743 = vpack.c.b16 %v2551, %v2551
      %v2744 = vpack.c.b16 %v2552, %v2552
      %v2745 = vpack.c.b16 %v2553, %v2553
      %v2746 = vpack.c.b16 %v2554, %v2554
      %v2747 = vpack.c.b16 %v2555, %v2555
      %v2748 = vpack.c.b16 %v2556, %v2556
      %v2749 = vpack.c.b16 %v2557, %v2557
      %v2750 = vpack.c.b16 %v2558, %v2558
      %v2751 = vpack.c.b16 %v2559, %v2559
      %vm2944 = vcmask 257024
      %2945 = vst.msk [vmem:[%s172] sm:$0xf] %vm2944, %v2560
      %2946 = vst.msk [vmem:[%s172 + $0x4] sm:$0xf] %vm2944, %v2561
      %2947 = vst.msk [vmem:[%s172 + $0x8] sm:$0xf] %vm2944, %v2562
      %2948 = vst.msk [vmem:[%s172 + $0xc] sm:$0xf] %vm2944, %v2563
      %2949 = vst.msk [vmem:[%s172 + $0x10] sm:$0xf] %vm2944, %v2564
      %2950 = vst.msk [vmem:[%s172 + $0x14] sm:$0xf] %vm2944, %v2565
      %2951 = vst.msk [vmem:[%s172 + $0x18] sm:$0xf] %vm2944, %v2566
      %2952 = vst.msk [vmem:[%s172 + $0x1c] sm:$0xf] %vm2944, %v2567
      %2953 = vst.msk [vmem:[%s172 + $0x20] sm:$0xf] %vm2944, %v2568
      %2954 = vst.msk [vmem:[%s172 + $0x24] sm:$0xf] %vm2944, %v2569
      %2955 = vst.msk [vmem:[%s172 + $0x28] sm:$0xf] %vm2944, %v2570
      %2956 = vst.msk [vmem:[%s172 + $0x2c] sm:$0xf] %vm2944, %v2571
      %2957 = vst.msk [vmem:[%s172 + $0x30] sm:$0xf] %vm2944, %v2572
      %2958 = vst.msk [vmem:[%s172 + $0x34] sm:$0xf] %vm2944, %v2573
      %2959 = vst.msk [vmem:[%s172 + $0x38] sm:$0xf] %vm2944, %v2574
      %2960 = vst.msk [vmem:[%s172 + $0x3c] sm:$0xf] %vm2944, %v2575
      %2961 = vst.msk [vmem:[%s172 + $0x40] sm:$0xf] %vm2944, %v2576
      %2962 = vst.msk [vmem:[%s172 + $0x44] sm:$0xf] %vm2944, %v2577
      %2963 = vst.msk [vmem:[%s172 + $0x48] sm:$0xf] %vm2944, %v2578
      %2964 = vst.msk [vmem:[%s172 + $0x4c] sm:$0xf] %vm2944, %v2579
      %2965 = vst.msk [vmem:[%s172 + $0x50] sm:$0xf] %vm2944, %v2580
      %2966 = vst.msk [vmem:[%s172 + $0x54] sm:$0xf] %vm2944, %v2581
      %2967 = vst.msk [vmem:[%s172 + $0x58] sm:$0xf] %vm2944, %v2582
      %2968 = vst.msk [vmem:[%s172 + $0x5c] sm:$0xf] %vm2944, %v2583
      %2969 = vst.msk [vmem:[%s172 + $0x60] sm:$0xf] %vm2944, %v2584
      %2970 = vst.msk [vmem:[%s172 + $0x64] sm:$0xf] %vm2944, %v2585
      %2971 = vst.msk [vmem:[%s172 + $0x68] sm:$0xf] %vm2944, %v2586
      %2972 = vst.msk [vmem:[%s172 + $0x6c] sm:$0xf] %vm2944, %v2587
      %2973 = vst.msk [vmem:[%s172 + $0x70] sm:$0xf] %vm2944, %v2588
      %2974 = vst.msk [vmem:[%s172 + $0x74] sm:$0xf] %vm2944, %v2589
      %2975 = vst.msk [vmem:[%s172 + $0x78] sm:$0xf] %vm2944, %v2590
      %2976 = vst.msk [vmem:[%s172 + $0x7c] sm:$0xf] %vm2944, %v2591
      %2977 = vst.msk [vmem:[%s172 + $0x80] sm:$0xf] %vm2944, %v2592
      %2978 = vst.msk [vmem:[%s172 + $0x84] sm:$0xf] %vm2944, %v2593
      %2979 = vst.msk [vmem:[%s172 + $0x88] sm:$0xf] %vm2944, %v2594
      %2980 = vst.msk [vmem:[%s172 + $0x8c] sm:$0xf] %vm2944, %v2595
      %2981 = vst.msk [vmem:[%s172 + $0x90] sm:$0xf] %vm2944, %v2596
      %2982 = vst.msk [vmem:[%s172 + $0x94] sm:$0xf] %vm2944, %v2597
      %2983 = vst.msk [vmem:[%s172 + $0x98] sm:$0xf] %vm2944, %v2598
      %2984 = vst.msk [vmem:[%s172 + $0x9c] sm:$0xf] %vm2944, %v2599
      %2985 = vst.msk [vmem:[%s172 + $0xa0] sm:$0xf] %vm2944, %v2600
      %2986 = vst.msk [vmem:[%s172 + $0xa4] sm:$0xf] %vm2944, %v2601
      %2987 = vst.msk [vmem:[%s172 + $0xa8] sm:$0xf] %vm2944, %v2602
      %2988 = vst.msk [vmem:[%s172 + $0xac] sm:$0xf] %vm2944, %v2603
      %2989 = vst.msk [vmem:[%s172 + $0xb0] sm:$0xf] %vm2944, %v2604
      %2990 = vst.msk [vmem:[%s172 + $0xb4] sm:$0xf] %vm2944, %v2605
      %2991 = vst.msk [vmem:[%s172 + $0xb8] sm:$0xf] %vm2944, %v2606
      %2992 = vst.msk [vmem:[%s172 + $0xbc] sm:$0xf] %vm2944, %v2607
      %2993 = vst.msk [vmem:[%s172 + $0xc0] sm:$0xf] %vm2944, %v2608
      %2994 = vst.msk [vmem:[%s172 + $0xc4] sm:$0xf] %vm2944, %v2609
      %2995 = vst.msk [vmem:[%s172 + $0xc8] sm:$0xf] %vm2944, %v2610
      %2996 = vst.msk [vmem:[%s172 + $0xcc] sm:$0xf] %vm2944, %v2611
      %2997 = vst.msk [vmem:[%s172 + $0xd0] sm:$0xf] %vm2944, %v2612
      %2998 = vst.msk [vmem:[%s172 + $0xd4] sm:$0xf] %vm2944, %v2613
      %2999 = vst.msk [vmem:[%s172 + $0xd8] sm:$0xf] %vm2944, %v2614
      %3000 = vst.msk [vmem:[%s172 + $0xdc] sm:$0xf] %vm2944, %v2615
      %3001 = vst.msk [vmem:[%s172 + $0xe0] sm:$0xf] %vm2944, %v2616
      %3002 = vst.msk [vmem:[%s172 + $0xe4] sm:$0xf] %vm2944, %v2617
      %3003 = vst.msk [vmem:[%s172 + $0xe8] sm:$0xf] %vm2944, %v2618
      %3004 = vst.msk [vmem:[%s172 + $0xec] sm:$0xf] %vm2944, %v2619
      %3005 = vst.msk [vmem:[%s172 + $0xf0] sm:$0xf] %vm2944, %v2620
      %3006 = vst.msk [vmem:[%s172 + $0xf4] sm:$0xf] %vm2944, %v2621
      %3007 = vst.msk [vmem:[%s172 + $0xf8] sm:$0xf] %vm2944, %v2622
      %3008 = vst.msk [vmem:[%s172 + $0xfc] sm:$0xf] %vm2944, %v2623
      %3009 = vst.msk [vmem:[%s172 + $0x100] sm:$0xf] %vm2944, %v2624
      %3010 = vst.msk [vmem:[%s172 + $0x104] sm:$0xf] %vm2944, %v2625
      %3011 = vst.msk [vmem:[%s172 + $0x108] sm:$0xf] %vm2944, %v2626
      %3012 = vst.msk [vmem:[%s172 + $0x10c] sm:$0xf] %vm2944, %v2627
      %3013 = vst.msk [vmem:[%s172 + $0x110] sm:$0xf] %vm2944, %v2628
      %3014 = vst.msk [vmem:[%s172 + $0x114] sm:$0xf] %vm2944, %v2629
      %3015 = vst.msk [vmem:[%s172 + $0x118] sm:$0xf] %vm2944, %v2630
      %3016 = vst.msk [vmem:[%s172 + $0x11c] sm:$0xf] %vm2944, %v2631
      %3017 = vst.msk [vmem:[%s172 + $0x120] sm:$0xf] %vm2944, %v2632
      %3018 = vst.msk [vmem:[%s172 + $0x124] sm:$0xf] %vm2944, %v2633
      %3019 = vst.msk [vmem:[%s172 + $0x128] sm:$0xf] %vm2944, %v2634
      %3020 = vst.msk [vmem:[%s172 + $0x12c] sm:$0xf] %vm2944, %v2635
      %3021 = vst.msk [vmem:[%s172 + $0x130] sm:$0xf] %vm2944, %v2636
      %3022 = vst.msk [vmem:[%s172 + $0x134] sm:$0xf] %vm2944, %v2637
      %3023 = vst.msk [vmem:[%s172 + $0x138] sm:$0xf] %vm2944, %v2638
      %3024 = vst.msk [vmem:[%s172 + $0x13c] sm:$0xf] %vm2944, %v2639
      %3025 = vst.msk [vmem:[%s172 + $0x140] sm:$0xf] %vm2944, %v2640
      %3026 = vst.msk [vmem:[%s172 + $0x144] sm:$0xf] %vm2944, %v2641
      %3027 = vst.msk [vmem:[%s172 + $0x148] sm:$0xf] %vm2944, %v2642
      %3028 = vst.msk [vmem:[%s172 + $0x14c] sm:$0xf] %vm2944, %v2643
      %3029 = vst.msk [vmem:[%s172 + $0x150] sm:$0xf] %vm2944, %v2644
      %3030 = vst.msk [vmem:[%s172 + $0x154] sm:$0xf] %vm2944, %v2645
      %3031 = vst.msk [vmem:[%s172 + $0x158] sm:$0xf] %vm2944, %v2646
      %3032 = vst.msk [vmem:[%s172 + $0x15c] sm:$0xf] %vm2944, %v2647
      %3033 = vst.msk [vmem:[%s172 + $0x160] sm:$0xf] %vm2944, %v2648
      %3034 = vst.msk [vmem:[%s172 + $0x164] sm:$0xf] %vm2944, %v2649
      %3035 = vst.msk [vmem:[%s172 + $0x168] sm:$0xf] %vm2944, %v2650
      %3036 = vst.msk [vmem:[%s172 + $0x16c] sm:$0xf] %vm2944, %v2651
      %3037 = vst.msk [vmem:[%s172 + $0x170] sm:$0xf] %vm2944, %v2652
      %3038 = vst.msk [vmem:[%s172 + $0x174] sm:$0xf] %vm2944, %v2653
      %3039 = vst.msk [vmem:[%s172 + $0x178] sm:$0xf] %vm2944, %v2654
      %3040 = vst.msk [vmem:[%s172 + $0x17c] sm:$0xf] %vm2944, %v2655
      %3041 = vst.msk [vmem:[%s172 + $0x180] sm:$0xf] %vm2944, %v2656
      %3042 = vst.msk [vmem:[%s172 + $0x184] sm:$0xf] %vm2944, %v2657
      %3043 = vst.msk [vmem:[%s172 + $0x188] sm:$0xf] %vm2944, %v2658
      %3044 = vst.msk [vmem:[%s172 + $0x18c] sm:$0xf] %vm2944, %v2659
      %3045 = vst.msk [vmem:[%s172 + $0x190] sm:$0xf] %vm2944, %v2660
      %3046 = vst.msk [vmem:[%s172 + $0x194] sm:$0xf] %vm2944, %v2661
      %3047 = vst.msk [vmem:[%s172 + $0x198] sm:$0xf] %vm2944, %v2662
      %3048 = vst.msk [vmem:[%s172 + $0x19c] sm:$0xf] %vm2944, %v2663
      %3049 = vst.msk [vmem:[%s172 + $0x1a0] sm:$0xf] %vm2944, %v2664
      %3050 = vst.msk [vmem:[%s172 + $0x1a4] sm:$0xf] %vm2944, %v2665
      %3051 = vst.msk [vmem:[%s172 + $0x1a8] sm:$0xf] %vm2944, %v2666
      %3052 = vst.msk [vmem:[%s172 + $0x1ac] sm:$0xf] %vm2944, %v2667
      %3053 = vst.msk [vmem:[%s172 + $0x1b0] sm:$0xf] %vm2944, %v2668
      %3054 = vst.msk [vmem:[%s172 + $0x1b4] sm:$0xf] %vm2944, %v2669
      %3055 = vst.msk [vmem:[%s172 + $0x1b8] sm:$0xf] %vm2944, %v2670
      %3056 = vst.msk [vmem:[%s172 + $0x1bc] sm:$0xf] %vm2944, %v2671
      %3057 = vst.msk [vmem:[%s172 + $0x1c0] sm:$0xf] %vm2944, %v2672
      %3058 = vst.msk [vmem:[%s172 + $0x1c4] sm:$0xf] %vm2944, %v2673
      %3059 = vst.msk [vmem:[%s172 + $0x1c8] sm:$0xf] %vm2944, %v2674
      %3060 = vst.msk [vmem:[%s172 + $0x1cc] sm:$0xf] %vm2944, %v2675
      %3061 = vst.msk [vmem:[%s172 + $0x1d0] sm:$0xf] %vm2944, %v2676
      %3062 = vst.msk [vmem:[%s172 + $0x1d4] sm:$0xf] %vm2944, %v2677
      %3063 = vst.msk [vmem:[%s172 + $0x1d8] sm:$0xf] %vm2944, %v2678
      %3064 = vst.msk [vmem:[%s172 + $0x1dc] sm:$0xf] %vm2944, %v2679
      %3065 = vst.msk [vmem:[%s172 + $0x1e0] sm:$0xf] %vm2944, %v2680
      %3066 = vst.msk [vmem:[%s172 + $0x1e4] sm:$0xf] %vm2944, %v2681
      %3067 = vst.msk [vmem:[%s172 + $0x1e8] sm:$0xf] %vm2944, %v2682
      %3068 = vst.msk [vmem:[%s172 + $0x1ec] sm:$0xf] %vm2944, %v2683
      %3069 = vst.msk [vmem:[%s172 + $0x1f0] sm:$0xf] %vm2944, %v2684
      %3070 = vst.msk [vmem:[%s172 + $0x1f4] sm:$0xf] %vm2944, %v2685
      %3071 = vst.msk [vmem:[%s172 + $0x1f8] sm:$0xf] %vm2944, %v2686
      %3072 = vst.msk [vmem:[%s172 + $0x1fc] sm:$0xf] %vm2944, %v2687
      %3073 = vst.msk [vmem:[%s172 + $0x200] sm:$0xf] %vm2944, %v2688
      %3074 = vst.msk [vmem:[%s172 + $0x204] sm:$0xf] %vm2944, %v2689
      %3075 = vst.msk [vmem:[%s172 + $0x208] sm:$0xf] %vm2944, %v2690
      %3076 = vst.msk [vmem:[%s172 + $0x20c] sm:$0xf] %vm2944, %v2691
      %3077 = vst.msk [vmem:[%s172 + $0x210] sm:$0xf] %vm2944, %v2692
      %3078 = vst.msk [vmem:[%s172 + $0x214] sm:$0xf] %vm2944, %v2693
      %3079 = vst.msk [vmem:[%s172 + $0x218] sm:$0xf] %vm2944, %v2694
      %3080 = vst.msk [vmem:[%s172 + $0x21c] sm:$0xf] %vm2944, %v2695
      %3081 = vst.msk [vmem:[%s172 + $0x220] sm:$0xf] %vm2944, %v2696
      %3082 = vst.msk [vmem:[%s172 + $0x224] sm:$0xf] %vm2944, %v2697
      %3083 = vst.msk [vmem:[%s172 + $0x228] sm:$0xf] %vm2944, %v2698
      %3084 = vst.msk [vmem:[%s172 + $0x22c] sm:$0xf] %vm2944, %v2699
      %3085 = vst.msk [vmem:[%s172 + $0x230] sm:$0xf] %vm2944, %v2700
      %3086 = vst.msk [vmem:[%s172 + $0x234] sm:$0xf] %vm2944, %v2701
      %3087 = vst.msk [vmem:[%s172 + $0x238] sm:$0xf] %vm2944, %v2702
      %3088 = vst.msk [vmem:[%s172 + $0x23c] sm:$0xf] %vm2944, %v2703
      %3089 = vst.msk [vmem:[%s172 + $0x240] sm:$0xf] %vm2944, %v2704
      %3090 = vst.msk [vmem:[%s172 + $0x244] sm:$0xf] %vm2944, %v2705
      %3091 = vst.msk [vmem:[%s172 + $0x248] sm:$0xf] %vm2944, %v2706
      %3092 = vst.msk [vmem:[%s172 + $0x24c] sm:$0xf] %vm2944, %v2707
      %3093 = vst.msk [vmem:[%s172 + $0x250] sm:$0xf] %vm2944, %v2708
      %3094 = vst.msk [vmem:[%s172 + $0x254] sm:$0xf] %vm2944, %v2709
      %3095 = vst.msk [vmem:[%s172 + $0x258] sm:$0xf] %vm2944, %v2710
      %3096 = vst.msk [vmem:[%s172 + $0x25c] sm:$0xf] %vm2944, %v2711
      %3097 = vst.msk [vmem:[%s172 + $0x260] sm:$0xf] %vm2944, %v2712
      %3098 = vst.msk [vmem:[%s172 + $0x264] sm:$0xf] %vm2944, %v2713
      %3099 = vst.msk [vmem:[%s172 + $0x268] sm:$0xf] %vm2944, %v2714
      %3100 = vst.msk [vmem:[%s172 + $0x26c] sm:$0xf] %vm2944, %v2715
      %3101 = vst.msk [vmem:[%s172 + $0x270] sm:$0xf] %vm2944, %v2716
      %3102 = vst.msk [vmem:[%s172 + $0x274] sm:$0xf] %vm2944, %v2717
      %3103 = vst.msk [vmem:[%s172 + $0x278] sm:$0xf] %vm2944, %v2718
      %3104 = vst.msk [vmem:[%s172 + $0x27c] sm:$0xf] %vm2944, %v2719
      %3105 = vst.msk [vmem:[%s172 + $0x280] sm:$0xf] %vm2944, %v2720
      %3106 = vst.msk [vmem:[%s172 + $0x284] sm:$0xf] %vm2944, %v2721
      %3107 = vst.msk [vmem:[%s172 + $0x288] sm:$0xf] %vm2944, %v2722
      %3108 = vst.msk [vmem:[%s172 + $0x28c] sm:$0xf] %vm2944, %v2723
      %3109 = vst.msk [vmem:[%s172 + $0x290] sm:$0xf] %vm2944, %v2724
      %3110 = vst.msk [vmem:[%s172 + $0x294] sm:$0xf] %vm2944, %v2725
      %3111 = vst.msk [vmem:[%s172 + $0x298] sm:$0xf] %vm2944, %v2726
      %3112 = vst.msk [vmem:[%s172 + $0x29c] sm:$0xf] %vm2944, %v2727
      %3113 = vst.msk [vmem:[%s172 + $0x2a0] sm:$0xf] %vm2944, %v2728
      %3114 = vst.msk [vmem:[%s172 + $0x2a4] sm:$0xf] %vm2944, %v2729
      %3115 = vst.msk [vmem:[%s172 + $0x2a8] sm:$0xf] %vm2944, %v2730
      %3116 = vst.msk [vmem:[%s172 + $0x2ac] sm:$0xf] %vm2944, %v2731
      %3117 = vst.msk [vmem:[%s172 + $0x2b0] sm:$0xf] %vm2944, %v2732
      %3118 = vst.msk [vmem:[%s172 + $0x2b4] sm:$0xf] %vm2944, %v2733
      %3119 = vst.msk [vmem:[%s172 + $0x2b8] sm:$0xf] %vm2944, %v2734
      %3120 = vst.msk [vmem:[%s172 + $0x2bc] sm:$0xf] %vm2944, %v2735
      %3121 = vst.msk [vmem:[%s172 + $0x2c0] sm:$0xf] %vm2944, %v2736
      %3122 = vst.msk [vmem:[%s172 + $0x2c4] sm:$0xf] %vm2944, %v2737
      %3123 = vst.msk [vmem:[%s172 + $0x2c8] sm:$0xf] %vm2944, %v2738
      %3124 = vst.msk [vmem:[%s172 + $0x2cc] sm:$0xf] %vm2944, %v2739
      %3125 = vst.msk [vmem:[%s172 + $0x2d0] sm:$0xf] %vm2944, %v2740
      %3126 = vst.msk [vmem:[%s172 + $0x2d4] sm:$0xf] %vm2944, %v2741
      %3127 = vst.msk [vmem:[%s172 + $0x2d8] sm:$0xf] %vm2944, %v2742
      %3128 = vst.msk [vmem:[%s172 + $0x2dc] sm:$0xf] %vm2944, %v2743
      %3129 = vst.msk [vmem:[%s172 + $0x2e0] sm:$0xf] %vm2944, %v2744
      %3130 = vst.msk [vmem:[%s172 + $0x2e4] sm:$0xf] %vm2944, %v2745
      %3131 = vst.msk [vmem:[%s172 + $0x2e8] sm:$0xf] %vm2944, %v2746
      %3132 = vst.msk [vmem:[%s172 + $0x2ec] sm:$0xf] %vm2944, %v2747
      %3133 = vst.msk [vmem:[%s172 + $0x2f0] sm:$0xf] %vm2944, %v2748
      %3134 = vst.msk [vmem:[%s172 + $0x2f4] sm:$0xf] %vm2944, %v2749
      %3135 = vst.msk [vmem:[%s172 + $0x2f8] sm:$0xf] %vm2944, %v2750
      %3136 = vst.msk [vmem:[%s172 + $0x2fc] sm:$0xf] %vm2944, %v2751
      %s3137 = smul.u32 192, %s14
      %p3138 = scmp.lt.s32.totalorder %s3137, 575
      %s3139 = scalar_select %p3138, %s3137, 575
      %s3140 = smul.addr %s3139, 4
      %s3141 = scalar_lea.vmem %s3, %s3140
      // Predicated region
      $region33: #{vae_encoder_forward.3} parent=31 // pred_check
        %p3142 = pneg %p100
      $region34: #{vae_encoder_forward.3} parent=31 // pred_check_branch
        %3144 = sbr.rel (%p3142) target = $region36
      $region35: #{vae_encoder_forward.3} parent=31 // pred_region
        %s3145 = smul.u32 192, %s14
      $region36: #{vae_encoder_forward.3} parent=31 // pred_fallthru
        _
    $region32: #{vae_encoder_forward.3} parent=5 // pred_fallthru
      _
    %p3146 = scmp.le.s32.totalorder 2, %s9
    // Predicated region
    $region37: #{vae_encoder_forward.3} parent=5 // pred_check
      %p3147 = pneg %p3146
    $region38: #{vae_encoder_forward.3} parent=5 // pred_check_branch
      %3149 = sbr.rel (%p3147) target = $region40
    $region39: #{vae_encoder_forward.3} parent=5 // pred_region
      %s3150 = ssub.s32 %s9, 2
      // Predicated region
      $region41: #{vae_encoder_forward.3} parent=39 // pred_check
        %p3151 = pneg %p106
      $region42: #{vae_encoder_forward.3} parent=39 // pred_check_branch
        %3153 = sbr.rel (%p3151) target = $region44
      $region43: #{vae_encoder_forward.3} parent=39 // pred_region
        %s3154 = smul.u32 192, %s15
        %p3155 = scmp.lt.s32.totalorder %s3154, 575
        %s3156 = scalar_select %p3155, %s3154, 575
        %s3157 = smul.addr %s3156, 4
        %s3158 = scalar_lea.vmem %s3, %s3157
      $region44: #{vae_encoder_forward.3} parent=39 // pred_fallthru
        _
    $region40: #{vae_encoder_forward.3} parent=5 // pred_fallthru
      _
  $region6: #{vae_encoder_forward.3} parent=0 // loop_footer
    %s13 = sadd.s32 1, %s9
  $region7: #{vae_encoder_forward.3} parent=0 // loop_footer_branch
    %8 = sbr.rel target = $region3
  $region8: #{vae_encoder_forward.3} parent=0 // loop_exit
    _

// kernel: vae_encoder_forward.4
$region0: #{vae_encoder_forward.4}
  #allocation0 [shape = 'u32[]', space=smem, size = 0x4, offset = 0x4, fixed_abs, tag = 'smem constant byte address 0x4 - core index']
  #allocation1 [shape = 'u32[144,128]{1,0:T(1,128)}', space=vmem, size = 0x12000, scoped, tag = 'internal scratch']
  %s0 = inlined_call_operand.vmem [shape: bf16[1152,512], index: 0, kind: input, shape index: {}]
  %s1 = inlined_call_operand.vmem [shape: bf16[512,64], index: 1, kind: input, shape index: {}]
  %s2 = inlined_call_operand.vmem [shape: f32[1,64], index: 2, kind: input, shape index: {}]
  %s3 = inlined_call_operand.vmem [shape: f32[64,576], index: 3, kind: input, shape index: {}]
  %s4 = inlined_call_operand.vmem [shape: f32[2,64,64], index: 4, kind: output, shape index: {}]
  %s5 = sld [smem:[#allocation0]]
  $region49: #{vae_encoder_forward.4} parent=0
    _
  %s7 = ssub.s32 1, %s5
  %s8 = scalar_select 0, %s7, %s5
  loop: start=0, step=1, limit=4
  $region2: #{vae_encoder_forward.4} parent=0 // loop_pre_header
    _
  $region3: #{vae_encoder_forward.4} parent=0 // loop_header
    %s10 = sphi 0, %s14
    %p11 = scmp.ge.s32.totalorder %s10, 4
    %s20 = sphi 0, %s22
    %s23 = sphi 0, %s20
    %s24 = sphi 0, %s23
    %s40 = sphi 0, %s24
    %s44 = sphi 0, %s44
    %s46 = sphi 0, %s44
    %s47 = sphi 0, %s46
    %s61 = sphi 0, %s47
    %s65 = sphi 0, %s65
    %s67 = sphi 0, %s65
    %s68 = sphi 0, %s67
    %s82 = sphi 0, %s68
    %s86 = sphi 0, %s86
    %s88 = sphi 0, %s86
    %s89 = sphi 0, %s88
    %s103 = sphi 0, %s89
    %s109 = sphi 0, %s111
    %s112 = sphi 0, %s109
    %s113 = sphi 0, %s112
    %s129 = sphi 0, %s113
  $region4: #{vae_encoder_forward.4} parent=0 // loop_header_branch
    %13 = sbr.rel (%p11) target = $region8
  $region5: #{vae_encoder_forward.4} parent=0 // loop_body
    %s15 = ssub.s32 %s10, 1
    %s16 = ssub.s32 %s10, 2
    %s17 = sadd.s32 %s10, 1
    %s18 = ssub.s32 %s10, %s17
    %p19 = scmp.eq.s32.totalorder %s18, 0
    %s21 = sadd.s32 %s20, 1
    %s22 = scalar_select %p19, %s20, %s21
    %p25 = pneg %p19
    %p26 = scmp.eq.s32.totalorder %s10, 1
    %p27 = por %p25, %p26
    %p28 = scmp.ne.s32.totalorder %s20, %s23
    %p29 = scmp.eq.s32.totalorder %s10, 0
    %p30 = por %p28, %p29
    %p31 = scmp.ne.s32.totalorder %s20, %s23
    %p32 = scmp.eq.s32.totalorder %s15, 1
    %p33 = por %p31, %p32
    %p34 = scmp.ne.s32.totalorder %s23, %s24
    %p35 = scmp.eq.s32.totalorder %s15, 0
    %p36 = por %p34, %p35
    %p37 = scmp.ne.s32.totalorder %s23, %s24
    %p38 = scmp.eq.s32.totalorder %s16, 1
    %p39 = por %p37, %p38
    %p41 = scmp.ne.s32.totalorder %s24, %s40
    %p42 = scmp.eq.s32.totalorder %s16, 0
    %p43 = por %p41, %p42
    %s45 = sadd.s32 %s44, 1
    %p48 = scmp.eq.s32.totalorder %s10, 1
    %p49 = scmp.ne.s32.totalorder %s44, %s46
    %p50 = scmp.eq.s32.totalorder %s10, 0
    %p51 = por %p49, %p50
    %p52 = scmp.ne.s32.totalorder %s44, %s46
    %p53 = scmp.eq.s32.totalorder %s15, 1
    %p54 = por %p52, %p53
    %p55 = scmp.ne.s32.totalorder %s46, %s47
    %p56 = scmp.eq.s32.totalorder %s15, 0
    %p57 = por %p55, %p56
    %p58 = scmp.ne.s32.totalorder %s46, %s47
    %p59 = scmp.eq.s32.totalorder %s16, 1
    %p60 = por %p58, %p59
    %p62 = scmp.ne.s32.totalorder %s47, %s61
    %p63 = scmp.eq.s32.totalorder %s16, 0
    %p64 = por %p62, %p63
    %s66 = sadd.s32 %s65, 1
    %p69 = scmp.eq.s32.totalorder %s10, 1
    %p70 = scmp.ne.s32.totalorder %s65, %s67
    %p71 = scmp.eq.s32.totalorder %s10, 0
    %p72 = por %p70, %p71
    %p73 = scmp.ne.s32.totalorder %s65, %s67
    %p74 = scmp.eq.s32.totalorder %s15, 1
    %p75 = por %p73, %p74
    %p76 = scmp.ne.s32.totalorder %s67, %s68
    %p77 = scmp.eq.s32.totalorder %s15, 0
    %p78 = por %p76, %p77
    %p79 = scmp.ne.s32.totalorder %s67, %s68
    %p80 = scmp.eq.s32.totalorder %s16, 1
    %p81 = por %p79, %p80
    %p83 = scmp.ne.s32.totalorder %s68, %s82
    %p84 = scmp.eq.s32.totalorder %s16, 0
    %p85 = por %p83, %p84
    %s87 = sadd.s32 %s86, 1
    %p90 = scmp.eq.s32.totalorder %s10, 1
    %p91 = scmp.ne.s32.totalorder %s86, %s88
    %p92 = scmp.eq.s32.totalorder %s10, 0
    %p93 = por %p91, %p92
    %p94 = scmp.ne.s32.totalorder %s86, %s88
    %p95 = scmp.eq.s32.totalorder %s15, 1
    %p96 = por %p94, %p95
    %p97 = scmp.ne.s32.totalorder %s88, %s89
    %p98 = scmp.eq.s32.totalorder %s15, 0
    %p99 = por %p97, %p98
    %p100 = scmp.ne.s32.totalorder %s88, %s89
    %p101 = scmp.eq.s32.totalorder %s16, 1
    %p102 = por %p100, %p101
    %p104 = scmp.ne.s32.totalorder %s89, %s103
    %p105 = scmp.eq.s32.totalorder %s16, 0
    %p106 = por %p104, %p105
    %s107 = ssub.s32 %s10, %s17
    %p108 = scmp.eq.s32.totalorder %s107, 0
    %s110 = sadd.s32 %s109, 1
    %s111 = scalar_select %p108, %s109, %s110
    %p114 = pneg %p108
    %p115 = scmp.eq.s32.totalorder %s10, 1
    %p116 = por %p114, %p115
    %p117 = scmp.ne.s32.totalorder %s109, %s112
    %p118 = scmp.eq.s32.totalorder %s10, 0
    %p119 = por %p117, %p118
    %p120 = scmp.ne.s32.totalorder %s109, %s112
    %p121 = scmp.eq.s32.totalorder %s15, 1
    %p122 = por %p120, %p121
    %p123 = scmp.ne.s32.totalorder %s112, %s113
    %p124 = scmp.eq.s32.totalorder %s15, 0
    %p125 = por %p123, %p124
    %p126 = scmp.ne.s32.totalorder %s112, %s113
    %p127 = scmp.eq.s32.totalorder %s16, 1
    %p128 = por %p126, %p127
    %p130 = scmp.ne.s32.totalorder %s113, %s129
    %p131 = scmp.eq.s32.totalorder %s16, 0
    %p132 = por %p130, %p131
    %p133 = scmp.le.s32.totalorder 1, %s10
    %p134 = scmp.lt.s32.totalorder %s10, 3
    %p135 = pnand %p133, %p134
    %p136 = pneg %p135
    // Predicated region
    $region9: #{vae_encoder_forward.4} parent=5 // pred_check
      _
    $region10: #{vae_encoder_forward.4} parent=5 // pred_check_branch
      %138 = sbr.rel (%p135) target = $region12
    $region11: #{vae_encoder_forward.4} parent=5 // pred_region
      %s139 = ssub.s32 %s10, 1
      // Predicated region
      $region13: #{vae_encoder_forward.4} parent=11 // pred_check
        %p140 = pneg %p57
      $region14: #{vae_encoder_forward.4} parent=11 // pred_check_branch
        %142 = sbr.rel (%p140) target = $region16
      $region15: #{vae_encoder_forward.4} parent=11 // pred_region
        _
      $region16: #{vae_encoder_forward.4} parent=11 // pred_fallthru
        _
      // Predicated region
      $region17: #{vae_encoder_forward.4} parent=11 // pred_check
        %p143 = pneg %p78
      $region18: #{vae_encoder_forward.4} parent=11 // pred_check_branch
        %145 = sbr.rel (%p143) target = $region20
      $region19: #{vae_encoder_forward.4} parent=11 // pred_region
        _
      $region20: #{vae_encoder_forward.4} parent=11 // pred_fallthru
        _
      // Predicated region
      $region21: #{vae_encoder_forward.4} parent=11 // pred_check
        %p146 = pneg %p99
      $region22: #{vae_encoder_forward.4} parent=11 // pred_check_branch
        %148 = sbr.rel (%p146) target = $region24
      $region23: #{vae_encoder_forward.4} parent=11 // pred_region
        _
      $region24: #{vae_encoder_forward.4} parent=11 // pred_fallthru
        _
    $region12: #{vae_encoder_forward.4} parent=5 // pred_fallthru
      _
    %p149 = scmp.lt.s32.totalorder %s10, 2
    // Predicated region
    $region25: #{vae_encoder_forward.4} parent=5 // pred_check
      %p150 = pneg %p149
    $region26: #{vae_encoder_forward.4} parent=5 // pred_check_branch
      %152 = sbr.rel (%p150) target = $region28
    $region27: #{vae_encoder_forward.4} parent=5 // pred_region
      // Predicated region
      $region29: #{vae_encoder_forward.4} parent=27 // pred_check
        %p153 = pneg %p30
      $region30: #{vae_encoder_forward.4} parent=27 // pred_check_branch
        %155 = sbr.rel (%p153) target = $region32
      $region31: #{vae_encoder_forward.4} parent=27 // pred_region
        %s156 = smul.u32 72, %s10
        %p157 = scmp.lt.s32.totalorder %s156, 143
        %s158 = scalar_select %p157, %s156, 143
        %s159 = smul.addr %s158, 4
        %s160 = smul.addr %s159, 4
        %s161 = scalar_lea.vmem %s0, %s160
        %s162 = smul.u32 72, %s10
      $region32: #{vae_encoder_forward.4} parent=27 // pred_fallthru
        _
    $region28: #{vae_encoder_forward.4} parent=5 // pred_fallthru
      _
    %p163 = scmp.le.s32.totalorder 1, %s10
    %p164 = scmp.lt.s32.totalorder %s10, 3
    %p165 = pnand %p163, %p164
    %p166 = pneg %p165
    // Predicated region
    $region33: #{vae_encoder_forward.4} parent=5 // pred_check
      _
    $region34: #{vae_encoder_forward.4} parent=5 // pred_check_branch
      %168 = sbr.rel (%p165) target = $region36
    $region35: #{vae_encoder_forward.4} parent=5 // pred_region
      %s169 = ssub.s32 %s10, 1
      %s170 = smul.u32 72, %s15
      %p171 = scmp.lt.s32.totalorder %s170, 143
      %s172 = scalar_select %p171, %s170, 143
      %s173 = smul.addr %s172, 4
      %s174 = smul.addr %s173, 4
      %s175 = scalar_lea.vmem %s0, %s174
      %p176 = pneg %p36
      %p177 = pneg %p33
      %p178 = pneg %p57
      %p179 = pneg %p54
      %p180 = pneg %p78
      %p181 = pneg %p75
      %p182 = pneg %p99
      %p183 = pneg %p96
      %p184 = pneg %p125
      %p185 = pneg %p122
      %p186 = scmp.lt.s32.totalorder %s15, 1
      %s187 = scalar_select %p186, %s15, 1
      %s188 = smul.addr %s187, 8
      %s189 = smul.addr %s188, 8
      %s190 = scalar_lea.vmem %s4, %s189
      %s191 = smul.u32 72, %s15
      %p192 = scmp.lt.s32.totalorder %s191, 143
      %s193 = scalar_select %p192, %s191, 143
      %s194 = smul.addr %s193, 4
      %s195 = smul.addr %s194, 4
      %s196 = scalar_lea.vmem %s0, %s195
      %s197 = smul.u32 72, %s15
      %p198 = scmp.lt.s32.totalorder %s15, 1
      %s199 = scalar_select %p198, %s15, 1
      %s200 = smul.addr %s199, 8
      %s201 = smul.addr %s200, 8
      %s202 = scalar_lea.vmem %s4, %s201
      %v204 = vld [vmem:[%s196] sm:$0xff]
      %v205 = vld [vmem:[%s196 + $0x8] sm:$0xff]
      %v206 = vld [vmem:[%s196 + $0x10] sm:$0xff]
      %v207 = vld [vmem:[%s196 + $0x18] sm:$0xff]
      %v208 = vld [vmem:[%s196 + $0x20] sm:$0xff]
      %v209 = vld [vmem:[%s196 + $0x28] sm:$0xff]
      %v210 = vld [vmem:[%s196 + $0x30] sm:$0xff]
      %v211 = vld [vmem:[%s196 + $0x38] sm:$0xff]
      %v212 = vld [vmem:[%s196 + $0x40] sm:$0xff]
      %v213 = vld [vmem:[%s196 + $0x48] sm:$0xff]
      %v214 = vld [vmem:[%s196 + $0x50] sm:$0xff]
      %v215 = vld [vmem:[%s196 + $0x58] sm:$0xff]
      %v216 = vld [vmem:[%s196 + $0x60] sm:$0xff]
      %v217 = vld [vmem:[%s196 + $0x68] sm:$0xff]
      %v218 = vld [vmem:[%s196 + $0x70] sm:$0xff]
      %v219 = vld [vmem:[%s196 + $0x78] sm:$0xff]
      %v220 = vld [vmem:[%s196 + $0x80] sm:$0xff]
      %v221 = vld [vmem:[%s196 + $0x88] sm:$0xff]
      %v222 = vld [vmem:[%s196 + $0x90] sm:$0xff]
      %v223 = vld [vmem:[%s196 + $0x98] sm:$0xff]
      %v224 = vld [vmem:[%s196 + $0xa0] sm:$0xff]
      %v225 = vld [vmem:[%s196 + $0xa8] sm:$0xff]
      %v226 = vld [vmem:[%s196 + $0xb0] sm:$0xff]
      %v227 = vld [vmem:[%s196 + $0xb8] sm:$0xff]
      %v228 = vld [vmem:[%s196 + $0xc0] sm:$0xff]
      %v229 = vld [vmem:[%s196 + $0xc8] sm:$0xff]
      %v230 = vld [vmem:[%s196 + $0xd0] sm:$0xff]
      %v231 = vld [vmem:[%s196 + $0xd8] sm:$0xff]
      %v232 = vld [vmem:[%s196 + $0xe0] sm:$0xff]
      %v233 = vld [vmem:[%s196 + $0xe8] sm:$0xff]
      %v234 = vld [vmem:[%s196 + $0xf0] sm:$0xff]
      %v235 = vld [vmem:[%s196 + $0xf8] sm:$0xff]
      %v236 = vld [vmem:[%s196 + $0x100] sm:$0xff]
      %v237 = vld [vmem:[%s196 + $0x108] sm:$0xff]
      %v238 = vld [vmem:[%s196 + $0x110] sm:$0xff]
      %v239 = vld [vmem:[%s196 + $0x118] sm:$0xff]
      %v240 = vld [vmem:[%s196 + $0x120] sm:$0xff]
      %v241 = vld [vmem:[%s196 + $0x128] sm:$0xff]
      %v242 = vld [vmem:[%s196 + $0x130] sm:$0xff]
      %v243 = vld [vmem:[%s196 + $0x138] sm:$0xff]
      %v244 = vld [vmem:[%s196 + $0x140] sm:$0xff]
      %v245 = vld [vmem:[%s196 + $0x148] sm:$0xff]
      %v246 = vld [vmem:[%s196 + $0x150] sm:$0xff]
      %v247 = vld [vmem:[%s196 + $0x158] sm:$0xff]
      %v248 = vld [vmem:[%s196 + $0x160] sm:$0xff]
      %v249 = vld [vmem:[%s196 + $0x168] sm:$0xff]
      %v250 = vld [vmem:[%s196 + $0x170] sm:$0xff]
      %v251 = vld [vmem:[%s196 + $0x178] sm:$0xff]
      %v252 = vld [vmem:[%s196 + $0x180] sm:$0xff]
      %v253 = vld [vmem:[%s196 + $0x188] sm:$0xff]
      %v254 = vld [vmem:[%s196 + $0x190] sm:$0xff]
      %v255 = vld [vmem:[%s196 + $0x198] sm:$0xff]
      %v256 = vld [vmem:[%s196 + $0x1a0] sm:$0xff]
      %v257 = vld [vmem:[%s196 + $0x1a8] sm:$0xff]
      %v258 = vld [vmem:[%s196 + $0x1b0] sm:$0xff]
      %v259 = vld [vmem:[%s196 + $0x1b8] sm:$0xff]
      %v260 = vld [vmem:[%s196 + $0x1c0] sm:$0xff]
      %v261 = vld [vmem:[%s196 + $0x1c8] sm:$0xff]
      %v262 = vld [vmem:[%s196 + $0x1d0] sm:$0xff]
      %v263 = vld [vmem:[%s196 + $0x1d8] sm:$0xff]
      %v264 = vld [vmem:[%s196 + $0x1e0] sm:$0xff]
      %v265 = vld [vmem:[%s196 + $0x1e8] sm:$0xff]
      %v266 = vld [vmem:[%s196 + $0x1f0] sm:$0xff]
      %v267 = vld [vmem:[%s196 + $0x1f8] sm:$0xff]
      %v268 = vld [vmem:[%s196 + $0x200] sm:$0xff]
      %v269 = vld [vmem:[%s196 + $0x208] sm:$0xff]
      %v270 = vld [vmem:[%s196 + $0x210] sm:$0xff]
      %v271 = vld [vmem:[%s196 + $0x218] sm:$0xff]
      %v272 = vld [vmem:[%s196 + $0x220] sm:$0xff]
      %v273 = vld [vmem:[%s196 + $0x228] sm:$0xff]
      %v274 = vld [vmem:[%s196 + $0x230] sm:$0xff]
      %v275 = vld [vmem:[%s196 + $0x238] sm:$0xff]
      %v276 = vld [vmem:[%s196 + $0x240] sm:$0xff]
      %v277 = vld [vmem:[%s196 + $0x248] sm:$0xff]
      %v278 = vld [vmem:[%s196 + $0x250] sm:$0xff]
      %v279 = vld [vmem:[%s196 + $0x258] sm:$0xff]
      %v280 = vld [vmem:[%s196 + $0x260] sm:$0xff]
      %v281 = vld [vmem:[%s196 + $0x268] sm:$0xff]
      %v282 = vld [vmem:[%s196 + $0x270] sm:$0xff]
      %v283 = vld [vmem:[%s196 + $0x278] sm:$0xff]
      %v284 = vld [vmem:[%s196 + $0x280] sm:$0xff]
      %v285 = vld [vmem:[%s196 + $0x288] sm:$0xff]
      %v286 = vld [vmem:[%s196 + $0x290] sm:$0xff]
      %v287 = vld [vmem:[%s196 + $0x298] sm:$0xff]
      %v288 = vld [vmem:[%s196 + $0x2a0] sm:$0xff]
      %v289 = vld [vmem:[%s196 + $0x2a8] sm:$0xff]
      %v290 = vld [vmem:[%s196 + $0x2b0] sm:$0xff]
      %v291 = vld [vmem:[%s196 + $0x2b8] sm:$0xff]
      %v292 = vld [vmem:[%s196 + $0x2c0] sm:$0xff]
      %v293 = vld [vmem:[%s196 + $0x2c8] sm:$0xff]
      %v294 = vld [vmem:[%s196 + $0x2d0] sm:$0xff]
      %v295 = vld [vmem:[%s196 + $0x2d8] sm:$0xff]
      %v296 = vld [vmem:[%s196 + $0x2e0] sm:$0xff]
      %v297 = vld [vmem:[%s196 + $0x2e8] sm:$0xff]
      %v298 = vld [vmem:[%s196 + $0x2f0] sm:$0xff]
      %v299 = vld [vmem:[%s196 + $0x2f8] sm:$0xff]
      %v300 = vld [vmem:[%s196 + $0x300] sm:$0xff]
      %v301 = vld [vmem:[%s196 + $0x308] sm:$0xff]
      %v302 = vld [vmem:[%s196 + $0x310] sm:$0xff]
      %v303 = vld [vmem:[%s196 + $0x318] sm:$0xff]
      %v304 = vld [vmem:[%s196 + $0x320] sm:$0xff]
      %v305 = vld [vmem:[%s196 + $0x328] sm:$0xff]
      %v306 = vld [vmem:[%s196 + $0x330] sm:$0xff]
      %v307 = vld [vmem:[%s196 + $0x338] sm:$0xff]
      %v308 = vld [vmem:[%s196 + $0x340] sm:$0xff]
      %v309 = vld [vmem:[%s196 + $0x348] sm:$0xff]
      %v310 = vld [vmem:[%s196 + $0x350] sm:$0xff]
      %v311 = vld [vmem:[%s196 + $0x358] sm:$0xff]
      %v312 = vld [vmem:[%s196 + $0x360] sm:$0xff]
      %v313 = vld [vmem:[%s196 + $0x368] sm:$0xff]
      %v314 = vld [vmem:[%s196 + $0x370] sm:$0xff]
      %v315 = vld [vmem:[%s196 + $0x378] sm:$0xff]
      %v316 = vld [vmem:[%s196 + $0x380] sm:$0xff]
      %v317 = vld [vmem:[%s196 + $0x388] sm:$0xff]
      %v318 = vld [vmem:[%s196 + $0x390] sm:$0xff]
      %v319 = vld [vmem:[%s196 + $0x398] sm:$0xff]
      %v320 = vld [vmem:[%s196 + $0x3a0] sm:$0xff]
      %v321 = vld [vmem:[%s196 + $0x3a8] sm:$0xff]
      %v322 = vld [vmem:[%s196 + $0x3b0] sm:$0xff]
      %v323 = vld [vmem:[%s196 + $0x3b8] sm:$0xff]
      %v324 = vld [vmem:[%s196 + $0x3c0] sm:$0xff]
      %v325 = vld [vmem:[%s196 + $0x3c8] sm:$0xff]
      %v326 = vld [vmem:[%s196 + $0x3d0] sm:$0xff]
      %v327 = vld [vmem:[%s196 + $0x3d8] sm:$0xff]
      %v328 = vld [vmem:[%s196 + $0x3e0] sm:$0xff]
      %v329 = vld [vmem:[%s196 + $0x3e8] sm:$0xff]
      %v330 = vld [vmem:[%s196 + $0x3f0] sm:$0xff]
      %v331 = vld [vmem:[%s196 + $0x3f8] sm:$0xff]
      %v332 = vld [vmem:[%s196 + $0x400] sm:$0xff]
      %v333 = vld [vmem:[%s196 + $0x408] sm:$0xff]
      %v334 = vld [vmem:[%s196 + $0x410] sm:$0xff]
      %v335 = vld [vmem:[%s196 + $0x418] sm:$0xff]
      %v336 = vld [vmem:[%s196 + $0x420] sm:$0xff]
      %v337 = vld [vmem:[%s196 + $0x428] sm:$0xff]
      %v338 = vld [vmem:[%s196 + $0x430] sm:$0xff]
      %v339 = vld [vmem:[%s196 + $0x438] sm:$0xff]
      %v340 = vld [vmem:[%s196 + $0x440] sm:$0xff]
      %v341 = vld [vmem:[%s196 + $0x448] sm:$0xff]
      %v342 = vld [vmem:[%s196 + $0x450] sm:$0xff]
      %v343 = vld [vmem:[%s196 + $0x458] sm:$0xff]
      %v344 = vld [vmem:[%s196 + $0x460] sm:$0xff]
      %v345 = vld [vmem:[%s196 + $0x468] sm:$0xff]
      %v346 = vld [vmem:[%s196 + $0x470] sm:$0xff]
      %v347 = vld [vmem:[%s196 + $0x478] sm:$0xff]
      %v348 = vld [vmem:[%s1] sm:$0xf]
      %v349 = vld [vmem:[%s1 + $0x4] sm:$0xf]
      %v350 = vld [vmem:[%s1 + $0x8] sm:$0xf]
      %v351 = vld [vmem:[%s1 + $0xc] sm:$0xf]
      %v352 = vld [vmem:[%s1 + $0x10] sm:$0xf]
      %v353 = vld [vmem:[%s1 + $0x14] sm:$0xf]
      %v354 = vld [vmem:[%s1 + $0x18] sm:$0xf]
      %v355 = vld [vmem:[%s1 + $0x1c] sm:$0xf]
      %v356 = vld [vmem:[%s1 + $0x20] sm:$0xf]
      %v357 = vld [vmem:[%s1 + $0x24] sm:$0xf]
      %v358 = vld [vmem:[%s1 + $0x28] sm:$0xf]
      %v359 = vld [vmem:[%s1 + $0x2c] sm:$0xf]
      %v360 = vld [vmem:[%s1 + $0x30] sm:$0xf]
      %v361 = vld [vmem:[%s1 + $0x34] sm:$0xf]
      %v362 = vld [vmem:[%s1 + $0x38] sm:$0xf]
      %v363 = vld [vmem:[%s1 + $0x3c] sm:$0xf]
      %v364 = vld [vmem:[%s1 + $0x40] sm:$0xf]
      %v365 = vld [vmem:[%s1 + $0x44] sm:$0xf]
      %v366 = vld [vmem:[%s1 + $0x48] sm:$0xf]
      %v367 = vld [vmem:[%s1 + $0x4c] sm:$0xf]
      %v368 = vld [vmem:[%s1 + $0x50] sm:$0xf]
      %v369 = vld [vmem:[%s1 + $0x54] sm:$0xf]
      %v370 = vld [vmem:[%s1 + $0x58] sm:$0xf]
      %v371 = vld [vmem:[%s1 + $0x5c] sm:$0xf]
      %v372 = vld [vmem:[%s1 + $0x60] sm:$0xf]
      %v373 = vld [vmem:[%s1 + $0x64] sm:$0xf]
      %v374 = vld [vmem:[%s1 + $0x68] sm:$0xf]
      %v375 = vld [vmem:[%s1 + $0x6c] sm:$0xf]
      %v376 = vld [vmem:[%s1 + $0x70] sm:$0xf]
      %v377 = vld [vmem:[%s1 + $0x74] sm:$0xf]
      %v378 = vld [vmem:[%s1 + $0x78] sm:$0xf]
      %v379 = vld [vmem:[%s1 + $0x7c] sm:$0xf]
      %v380 = vld [vmem:[%s1 + $0x80] sm:$0xf]
      %v381 = vld [vmem:[%s1 + $0x84] sm:$0xf]
      %v382 = vld [vmem:[%s1 + $0x88] sm:$0xf]
      %v383 = vld [vmem:[%s1 + $0x8c] sm:$0xf]
      %v384 = vld [vmem:[%s1 + $0x90] sm:$0xf]
      %v385 = vld [vmem:[%s1 + $0x94] sm:$0xf]
      %v386 = vld [vmem:[%s1 + $0x98] sm:$0xf]
      %v387 = vld [vmem:[%s1 + $0x9c] sm:$0xf]
      %v388 = vld [vmem:[%s1 + $0xa0] sm:$0xf]
      %v389 = vld [vmem:[%s1 + $0xa4] sm:$0xf]
      %v390 = vld [vmem:[%s1 + $0xa8] sm:$0xf]
      %v391 = vld [vmem:[%s1 + $0xac] sm:$0xf]
      %v392 = vld [vmem:[%s1 + $0xb0] sm:$0xf]
      %v393 = vld [vmem:[%s1 + $0xb4] sm:$0xf]
      %v394 = vld [vmem:[%s1 + $0xb8] sm:$0xf]
      %v395 = vld [vmem:[%s1 + $0xbc] sm:$0xf]
      %v396 = vld [vmem:[%s1 + $0xc0] sm:$0xf]
      %v397 = vld [vmem:[%s1 + $0xc4] sm:$0xf]
      %v398 = vld [vmem:[%s1 + $0xc8] sm:$0xf]
      %v399 = vld [vmem:[%s1 + $0xcc] sm:$0xf]
      %v400 = vld [vmem:[%s1 + $0xd0] sm:$0xf]
      %v401 = vld [vmem:[%s1 + $0xd4] sm:$0xf]
      %v402 = vld [vmem:[%s1 + $0xd8] sm:$0xf]
      %v403 = vld [vmem:[%s1 + $0xdc] sm:$0xf]
      %v404 = vld [vmem:[%s1 + $0xe0] sm:$0xf]
      %v405 = vld [vmem:[%s1 + $0xe4] sm:$0xf]
      %v406 = vld [vmem:[%s1 + $0xe8] sm:$0xf]
      %v407 = vld [vmem:[%s1 + $0xec] sm:$0xf]
      %v408 = vld [vmem:[%s1 + $0xf0] sm:$0xf]
      %v409 = vld [vmem:[%s1 + $0xf4] sm:$0xf]
      %v410 = vld [vmem:[%s1 + $0xf8] sm:$0xf]
      %v411 = vld [vmem:[%s1 + $0xfc] sm:$0xf]
      %v412 = vld [vmem:[%s2] sm:$0x1]
      %v414 = vlaneseq
      %v415 = vshrl.u32 %v414, 7
      %v416 = vsub.s32 0, %v415
      %v417 = vrot.slane %v412, %v416
      %v563 = vunpack.c.l.b16 %v204
      %v564 = vunpack.c.h.b16 %v204
      %v565 = vunpack.c.l.b16 %v205
      %v566 = vunpack.c.h.b16 %v205
      %v567 = vunpack.c.l.b16 %v206
      %v568 = vunpack.c.h.b16 %v206
      %v569 = vunpack.c.l.b16 %v207
      %v570 = vunpack.c.h.b16 %v207
      %v571 = vunpack.c.l.b16 %v208
      %v572 = vunpack.c.h.b16 %v208
      %v573 = vunpack.c.l.b16 %v209
      %v574 = vunpack.c.h.b16 %v209
      %v575 = vunpack.c.l.b16 %v210
      %v576 = vunpack.c.h.b16 %v210
      %v577 = vunpack.c.l.b16 %v211
      %v578 = vunpack.c.h.b16 %v211
      %v579 = vunpack.c.l.b16 %v212
      %v580 = vunpack.c.h.b16 %v212
      %v581 = vunpack.c.l.b16 %v213
      %v582 = vunpack.c.h.b16 %v213
      %v583 = vunpack.c.l.b16 %v214
      %v584 = vunpack.c.h.b16 %v214
      %v585 = vunpack.c.l.b16 %v215
      %v586 = vunpack.c.h.b16 %v215
      %v587 = vunpack.c.l.b16 %v216
      %v588 = vunpack.c.h.b16 %v216
      %v589 = vunpack.c.l.b16 %v217
      %v590 = vunpack.c.h.b16 %v217
      %v591 = vunpack.c.l.b16 %v218
      %v592 = vunpack.c.h.b16 %v218
      %v593 = vunpack.c.l.b16 %v219
      %v594 = vunpack.c.h.b16 %v219
      %v595 = vunpack.c.l.b16 %v220
      %v596 = vunpack.c.h.b16 %v220
      %v597 = vunpack.c.l.b16 %v221
      %v598 = vunpack.c.h.b16 %v221
      %v599 = vunpack.c.l.b16 %v222
      %v600 = vunpack.c.h.b16 %v222
      %v601 = vunpack.c.l.b16 %v223
      %v602 = vunpack.c.h.b16 %v223
      %v603 = vunpack.c.l.b16 %v224
      %v604 = vunpack.c.h.b16 %v224
      %v605 = vunpack.c.l.b16 %v225
      %v606 = vunpack.c.h.b16 %v225
      %v607 = vunpack.c.l.b16 %v226
      %v608 = vunpack.c.h.b16 %v226
      %v609 = vunpack.c.l.b16 %v227
      %v610 = vunpack.c.h.b16 %v227
      %v611 = vunpack.c.l.b16 %v228
      %v612 = vunpack.c.h.b16 %v228
      %v613 = vunpack.c.l.b16 %v229
      %v614 = vunpack.c.h.b16 %v229
      %v615 = vunpack.c.l.b16 %v230
      %v616 = vunpack.c.h.b16 %v230
      %v617 = vunpack.c.l.b16 %v231
      %v618 = vunpack.c.h.b16 %v231
      %v619 = vunpack.c.l.b16 %v232
      %v620 = vunpack.c.h.b16 %v232
      %v621 = vunpack.c.l.b16 %v233
      %v622 = vunpack.c.h.b16 %v233
      %v623 = vunpack.c.l.b16 %v234
      %v624 = vunpack.c.h.b16 %v234
      %v625 = vunpack.c.l.b16 %v235
      %v626 = vunpack.c.h.b16 %v235
      %v627 = vunpack.c.l.b16 %v236
      %v628 = vunpack.c.h.b16 %v236
      %v629 = vunpack.c.l.b16 %v237
      %v630 = vunpack.c.h.b16 %v237
      %v631 = vunpack.c.l.b16 %v238
      %v632 = vunpack.c.h.b16 %v238
      %v633 = vunpack.c.l.b16 %v239
      %v634 = vunpack.c.h.b16 %v239
      %v635 = vunpack.c.l.b16 %v240
      %v636 = vunpack.c.h.b16 %v240
      %v637 = vunpack.c.l.b16 %v241
      %v638 = vunpack.c.h.b16 %v241
      %v639 = vunpack.c.l.b16 %v242
      %v640 = vunpack.c.h.b16 %v242
      %v641 = vunpack.c.l.b16 %v243
      %v642 = vunpack.c.h.b16 %v243
      %v643 = vunpack.c.l.b16 %v244
      %v644 = vunpack.c.h.b16 %v244
      %v645 = vunpack.c.l.b16 %v245
      %v646 = vunpack.c.h.b16 %v245
      %v647 = vunpack.c.l.b16 %v246
      %v648 = vunpack.c.h.b16 %v246
      %v649 = vunpack.c.l.b16 %v247
      %v650 = vunpack.c.h.b16 %v247
      %v651 = vunpack.c.l.b16 %v248
      %v652 = vunpack.c.h.b16 %v248
      %v653 = vunpack.c.l.b16 %v249
      %v654 = vunpack.c.h.b16 %v249
      %v655 = vunpack.c.l.b16 %v250
      %v656 = vunpack.c.h.b16 %v250
      %v657 = vunpack.c.l.b16 %v251
      %v658 = vunpack.c.h.b16 %v251
      %v659 = vunpack.c.l.b16 %v252
      %v660 = vunpack.c.h.b16 %v252
      %v661 = vunpack.c.l.b16 %v253
      %v662 = vunpack.c.h.b16 %v253
      %v663 = vunpack.c.l.b16 %v254
      %v664 = vunpack.c.h.b16 %v254
      %v665 = vunpack.c.l.b16 %v255
      %v666 = vunpack.c.h.b16 %v255
      %v667 = vunpack.c.l.b16 %v256
      %v668 = vunpack.c.h.b16 %v256
      %v669 = vunpack.c.l.b16 %v257
      %v670 = vunpack.c.h.b16 %v257
      %v671 = vunpack.c.l.b16 %v258
      %v672 = vunpack.c.h.b16 %v258
      %v673 = vunpack.c.l.b16 %v259
      %v674 = vunpack.c.h.b16 %v259
      %v675 = vunpack.c.l.b16 %v260
      %v676 = vunpack.c.h.b16 %v260
      %v677 = vunpack.c.l.b16 %v261
      %v678 = vunpack.c.h.b16 %v261
      %v679 = vunpack.c.l.b16 %v262
      %v680 = vunpack.c.h.b16 %v262
      %v681 = vunpack.c.l.b16 %v263
      %v682 = vunpack.c.h.b16 %v263
      %v683 = vunpack.c.l.b16 %v264
      %v684 = vunpack.c.h.b16 %v264
      %v685 = vunpack.c.l.b16 %v265
      %v686 = vunpack.c.h.b16 %v265
      %v687 = vunpack.c.l.b16 %v266
      %v688 = vunpack.c.h.b16 %v266
      %v689 = vunpack.c.l.b16 %v267
      %v690 = vunpack.c.h.b16 %v267
      %v691 = vunpack.c.l.b16 %v268
      %v692 = vunpack.c.h.b16 %v268
      %v693 = vunpack.c.l.b16 %v269
      %v694 = vunpack.c.h.b16 %v269
      %v695 = vunpack.c.l.b16 %v270
      %v696 = vunpack.c.h.b16 %v270
      %v697 = vunpack.c.l.b16 %v271
      %v698 = vunpack.c.h.b16 %v271
      %v699 = vunpack.c.l.b16 %v272
      %v700 = vunpack.c.h.b16 %v272
      %v701 = vunpack.c.l.b16 %v273
      %v702 = vunpack.c.h.b16 %v273
      %v703 = vunpack.c.l.b16 %v274
      %v704 = vunpack.c.h.b16 %v274
      %v705 = vunpack.c.l.b16 %v275
      %v706 = vunpack.c.h.b16 %v275
      %v707 = vunpack.c.l.b16 %v276
      %v708 = vunpack.c.h.b16 %v276
      %v709 = vunpack.c.l.b16 %v277
      %v710 = vunpack.c.h.b16 %v277
      %v711 = vunpack.c.l.b16 %v278
      %v712 = vunpack.c.h.b16 %v278
      %v713 = vunpack.c.l.b16 %v279
      %v714 = vunpack.c.h.b16 %v279
      %v715 = vunpack.c.l.b16 %v280
      %v716 = vunpack.c.h.b16 %v280
      %v717 = vunpack.c.l.b16 %v281
      %v718 = vunpack.c.h.b16 %v281
      %v719 = vunpack.c.l.b16 %v282
      %v720 = vunpack.c.h.b16 %v282
      %v721 = vunpack.c.l.b16 %v283
      %v722 = vunpack.c.h.b16 %v283
      %v723 = vunpack.c.l.b16 %v284
      %v724 = vunpack.c.h.b16 %v284
      %v725 = vunpack.c.l.b16 %v285
      %v726 = vunpack.c.h.b16 %v285
      %v727 = vunpack.c.l.b16 %v286
      %v728 = vunpack.c.h.b16 %v286
      %v729 = vunpack.c.l.b16 %v287
      %v730 = vunpack.c.h.b16 %v287
      %v731 = vunpack.c.l.b16 %v288
      %v732 = vunpack.c.h.b16 %v288
      %v733 = vunpack.c.l.b16 %v289
      %v734 = vunpack.c.h.b16 %v289
      %v735 = vunpack.c.l.b16 %v290
      %v736 = vunpack.c.h.b16 %v290
      %v737 = vunpack.c.l.b16 %v291
      %v738 = vunpack.c.h.b16 %v291
      %v739 = vunpack.c.l.b16 %v292
      %v740 = vunpack.c.h.b16 %v292
      %v741 = vunpack.c.l.b16 %v293
      %v742 = vunpack.c.h.b16 %v293
      %v743 = vunpack.c.l.b16 %v294
      %v744 = vunpack.c.h.b16 %v294
      %v745 = vunpack.c.l.b16 %v295
      %v746 = vunpack.c.h.b16 %v295
      %v747 = vunpack.c.l.b16 %v296
      %v748 = vunpack.c.h.b16 %v296
      %v749 = vunpack.c.l.b16 %v297
      %v750 = vunpack.c.h.b16 %v297
      %v751 = vunpack.c.l.b16 %v298
      %v752 = vunpack.c.h.b16 %v298
      %v753 = vunpack.c.l.b16 %v299
      %v754 = vunpack.c.h.b16 %v299
      %v755 = vunpack.c.l.b16 %v300
      %v756 = vunpack.c.h.b16 %v300
      %v757 = vunpack.c.l.b16 %v301
      %v758 = vunpack.c.h.b16 %v301
      %v759 = vunpack.c.l.b16 %v302
      %v760 = vunpack.c.h.b16 %v302
      %v761 = vunpack.c.l.b16 %v303
      %v762 = vunpack.c.h.b16 %v303
      %v763 = vunpack.c.l.b16 %v304
      %v764 = vunpack.c.h.b16 %v304
      %v765 = vunpack.c.l.b16 %v305
      %v766 = vunpack.c.h.b16 %v305
      %v767 = vunpack.c.l.b16 %v306
      %v768 = vunpack.c.h.b16 %v306
      %v769 = vunpack.c.l.b16 %v307
      %v770 = vunpack.c.h.b16 %v307
      %v771 = vunpack.c.l.b16 %v308
      %v772 = vunpack.c.h.b16 %v308
      %v773 = vunpack.c.l.b16 %v309
      %v774 = vunpack.c.h.b16 %v309
      %v775 = vunpack.c.l.b16 %v310
      %v776 = vunpack.c.h.b16 %v310
      %v777 = vunpack.c.l.b16 %v311
      %v778 = vunpack.c.h.b16 %v311
      %v779 = vunpack.c.l.b16 %v312
      %v780 = vunpack.c.h.b16 %v312
      %v781 = vunpack.c.l.b16 %v313
      %v782 = vunpack.c.h.b16 %v313
      %v783 = vunpack.c.l.b16 %v314
      %v784 = vunpack.c.h.b16 %v314
      %v785 = vunpack.c.l.b16 %v315
      %v786 = vunpack.c.h.b16 %v315
      %v787 = vunpack.c.l.b16 %v316
      %v788 = vunpack.c.h.b16 %v316
      %v789 = vunpack.c.l.b16 %v317
      %v790 = vunpack.c.h.b16 %v317
      %v791 = vunpack.c.l.b16 %v318
      %v792 = vunpack.c.h.b16 %v318
      %v793 = vunpack.c.l.b16 %v319
      %v794 = vunpack.c.h.b16 %v319
      %v795 = vunpack.c.l.b16 %v320
      %v796 = vunpack.c.h.b16 %v320
      %v797 = vunpack.c.l.b16 %v321
      %v798 = vunpack.c.h.b16 %v321
      %v799 = vunpack.c.l.b16 %v322
      %v800 = vunpack.c.h.b16 %v322
      %v801 = vunpack.c.l.b16 %v323
      %v802 = vunpack.c.h.b16 %v323
      %v803 = vunpack.c.l.b16 %v324
      %v804 = vunpack.c.h.b16 %v324
      %v805 = vunpack.c.l.b16 %v325
      %v806 = vunpack.c.h.b16 %v325
      %v807 = vunpack.c.l.b16 %v326
      %v808 = vunpack.c.h.b16 %v326
      %v809 = vunpack.c.l.b16 %v327
      %v810 = vunpack.c.h.b16 %v327
      %v811 = vunpack.c.l.b16 %v328
      %v812 = vunpack.c.h.b16 %v328
      %v813 = vunpack.c.l.b16 %v329
      %v814 = vunpack.c.h.b16 %v329
      %v815 = vunpack.c.l.b16 %v330
      %v816 = vunpack.c.h.b16 %v330
      %v817 = vunpack.c.l.b16 %v331
      %v818 = vunpack.c.h.b16 %v331
      %v819 = vunpack.c.l.b16 %v332
      %v820 = vunpack.c.h.b16 %v332
      %v821 = vunpack.c.l.b16 %v333
      %v822 = vunpack.c.h.b16 %v333
      %v823 = vunpack.c.l.b16 %v334
      %v824 = vunpack.c.h.b16 %v334
      %v825 = vunpack.c.l.b16 %v335
      %v826 = vunpack.c.h.b16 %v335
      %v827 = vunpack.c.l.b16 %v336
      %v828 = vunpack.c.h.b16 %v336
      %v829 = vunpack.c.l.b16 %v337
      %v830 = vunpack.c.h.b16 %v337
      %v831 = vunpack.c.l.b16 %v338
      %v832 = vunpack.c.h.b16 %v338
      %v833 = vunpack.c.l.b16 %v339
      %v834 = vunpack.c.h.b16 %v339
      %v835 = vunpack.c.l.b16 %v340
      %v836 = vunpack.c.h.b16 %v340
      %v837 = vunpack.c.l.b16 %v341
      %v838 = vunpack.c.h.b16 %v341
      %v839 = vunpack.c.l.b16 %v342
      %v840 = vunpack.c.h.b16 %v342
      %v841 = vunpack.c.l.b16 %v343
      %v842 = vunpack.c.h.b16 %v343
      %v843 = vunpack.c.l.b16 %v344
      %v844 = vunpack.c.h.b16 %v344
      %v845 = vunpack.c.l.b16 %v345
      %v846 = vunpack.c.h.b16 %v345
      %v847 = vunpack.c.l.b16 %v346
      %v848 = vunpack.c.h.b16 %v346
      %v849 = vunpack.c.l.b16 %v347
      %v850 = vunpack.c.h.b16 %v347
      %v851 = vpack.c.b16 %v567, %v563
      %v852 = vpack.c.b16 %v568, %v564
      %v853 = vpack.c.b16 %v569, %v565
      %v854 = vpack.c.b16 %v570, %v566
      %v855 = vpack.c.b16 %v575, %v571
      %v856 = vpack.c.b16 %v576, %v572
      %v857 = vpack.c.b16 %v577, %v573
      %v858 = vpack.c.b16 %v578, %v574
      %v859 = vpack.c.b16 %v583, %v579
      %v860 = vpack.c.b16 %v584, %v580
      %v861 = vpack.c.b16 %v585, %v581
      %v862 = vpack.c.b16 %v586, %v582
      %v863 = vpack.c.b16 %v591, %v587
      %v864 = vpack.c.b16 %v592, %v588
      %v865 = vpack.c.b16 %v593, %v589
      %v866 = vpack.c.b16 %v594, %v590
      %v867 = vpack.c.b16 %v599, %v595
      %v868 = vpack.c.b16 %v600, %v596
      %v869 = vpack.c.b16 %v601, %v597
      %v870 = vpack.c.b16 %v602, %v598
      %v871 = vpack.c.b16 %v607, %v603
      %v872 = vpack.c.b16 %v608, %v604
      %v873 = vpack.c.b16 %v609, %v605
      %v874 = vpack.c.b16 %v610, %v606
      %v875 = vpack.c.b16 %v615, %v611
      %v876 = vpack.c.b16 %v616, %v612
      %v877 = vpack.c.b16 %v617, %v613
      %v878 = vpack.c.b16 %v618, %v614
      %v879 = vpack.c.b16 %v623, %v619
      %v880 = vpack.c.b16 %v624, %v620
      %v881 = vpack.c.b16 %v625, %v621
      %v882 = vpack.c.b16 %v626, %v622
      %v883 = vpack.c.b16 %v631, %v627
      %v884 = vpack.c.b16 %v632, %v628
      %v885 = vpack.c.b16 %v633, %v629
      %v886 = vpack.c.b16 %v634, %v630
      %v887 = vpack.c.b16 %v639, %v635
      %v888 = vpack.c.b16 %v640, %v636
      %v889 = vpack.c.b16 %v641, %v637
      %v890 = vpack.c.b16 %v642, %v638
      %v891 = vpack.c.b16 %v647, %v643
      %v892 = vpack.c.b16 %v648, %v644
      %v893 = vpack.c.b16 %v649, %v645
      %v894 = vpack.c.b16 %v650, %v646
      %v895 = vpack.c.b16 %v655, %v651
      %v896 = vpack.c.b16 %v656, %v652
      %v897 = vpack.c.b16 %v657, %v653
      %v898 = vpack.c.b16 %v658, %v654
      %v899 = vpack.c.b16 %v663, %v659
      %v900 = vpack.c.b16 %v664, %v660
      %v901 = vpack.c.b16 %v665, %v661
      %v902 = vpack.c.b16 %v666, %v662
      %v903 = vpack.c.b16 %v671, %v667
      %v904 = vpack.c.b16 %v672, %v668
      %v905 = vpack.c.b16 %v673, %v669
      %v906 = vpack.c.b16 %v674, %v670
      %v907 = vpack.c.b16 %v679, %v675
      %v908 = vpack.c.b16 %v680, %v676
      %v909 = vpack.c.b16 %v681, %v677
      %v910 = vpack.c.b16 %v682, %v678
      %v911 = vpack.c.b16 %v687, %v683
      %v912 = vpack.c.b16 %v688, %v684
      %v913 = vpack.c.b16 %v689, %v685
      %v914 = vpack.c.b16 %v690, %v686
      %v915 = vpack.c.b16 %v695, %v691
      %v916 = vpack.c.b16 %v696, %v692
      %v917 = vpack.c.b16 %v697, %v693
      %v918 = vpack.c.b16 %v698, %v694
      %v919 = vpack.c.b16 %v703, %v699
      %v920 = vpack.c.b16 %v704, %v700
      %v921 = vpack.c.b16 %v705, %v701
      %v922 = vpack.c.b16 %v706, %v702
      %v923 = vpack.c.b16 %v711, %v707
      %v924 = vpack.c.b16 %v712, %v708
      %v925 = vpack.c.b16 %v713, %v709
      %v926 = vpack.c.b16 %v714, %v710
      %v927 = vpack.c.b16 %v719, %v715
      %v928 = vpack.c.b16 %v720, %v716
      %v929 = vpack.c.b16 %v721, %v717
      %v930 = vpack.c.b16 %v722, %v718
      %v931 = vpack.c.b16 %v727, %v723
      %v932 = vpack.c.b16 %v728, %v724
      %v933 = vpack.c.b16 %v729, %v725
      %v934 = vpack.c.b16 %v730, %v726
      %v935 = vpack.c.b16 %v735, %v731
      %v936 = vpack.c.b16 %v736, %v732
      %v937 = vpack.c.b16 %v737, %v733
      %v938 = vpack.c.b16 %v738, %v734
      %v939 = vpack.c.b16 %v743, %v739
      %v940 = vpack.c.b16 %v744, %v740
      %v941 = vpack.c.b16 %v745, %v741
      %v942 = vpack.c.b16 %v746, %v742
      %v943 = vpack.c.b16 %v751, %v747
      %v944 = vpack.c.b16 %v752, %v748
      %v945 = vpack.c.b16 %v753, %v749
      %v946 = vpack.c.b16 %v754, %v750
      %v947 = vpack.c.b16 %v759, %v755
      %v948 = vpack.c.b16 %v760, %v756
      %v949 = vpack.c.b16 %v761, %v757
      %v950 = vpack.c.b16 %v762, %v758
      %v951 = vpack.c.b16 %v767, %v763
      %v952 = vpack.c.b16 %v768, %v764
      %v953 = vpack.c.b16 %v769, %v765
      %v954 = vpack.c.b16 %v770, %v766
      %v955 = vpack.c.b16 %v775, %v771
      %v956 = vpack.c.b16 %v776, %v772
      %v957 = vpack.c.b16 %v777, %v773
      %v958 = vpack.c.b16 %v778, %v774
      %v959 = vpack.c.b16 %v783, %v779
      %v960 = vpack.c.b16 %v784, %v780
      %v961 = vpack.c.b16 %v785, %v781
      %v962 = vpack.c.b16 %v786, %v782
      %v963 = vpack.c.b16 %v791, %v787
      %v964 = vpack.c.b16 %v792, %v788
      %v965 = vpack.c.b16 %v793, %v789
      %v966 = vpack.c.b16 %v794, %v790
      %v967 = vpack.c.b16 %v799, %v795
      %v968 = vpack.c.b16 %v800, %v796
      %v969 = vpack.c.b16 %v801, %v797
      %v970 = vpack.c.b16 %v802, %v798
      %v971 = vpack.c.b16 %v807, %v803
      %v972 = vpack.c.b16 %v808, %v804
      %v973 = vpack.c.b16 %v809, %v805
      %v974 = vpack.c.b16 %v810, %v806
      %v975 = vpack.c.b16 %v815, %v811
      %v976 = vpack.c.b16 %v816, %v812
      %v977 = vpack.c.b16 %v817, %v813
      %v978 = vpack.c.b16 %v818, %v814
      %v979 = vpack.c.b16 %v823, %v819
      %v980 = vpack.c.b16 %v824, %v820
      %v981 = vpack.c.b16 %v825, %v821
      %v982 = vpack.c.b16 %v826, %v822
      %v983 = vpack.c.b16 %v831, %v827
      %v984 = vpack.c.b16 %v832, %v828
      %v985 = vpack.c.b16 %v833, %v829
      %v986 = vpack.c.b16 %v834, %v830
      %v987 = vpack.c.b16 %v839, %v835
      %v988 = vpack.c.b16 %v840, %v836
      %v989 = vpack.c.b16 %v841, %v837
      %v990 = vpack.c.b16 %v842, %v838
      %v991 = vpack.c.b16 %v847, %v843
      %v992 = vpack.c.b16 %v848, %v844
      %v993 = vpack.c.b16 %v849, %v845
      %v994 = vpack.c.b16 %v850, %v846
      %v1203 = vunpack.c.l.b16 %v348
      %v1204 = vunpack.c.l.b16 %v349
      %v1205 = vunpack.c.l.b16 %v350
      %v1206 = vunpack.c.l.b16 %v351
      %v1207 = vunpack.c.l.b16 %v352
      %v1208 = vunpack.c.l.b16 %v353
      %v1209 = vunpack.c.l.b16 %v354
      %v1210 = vunpack.c.l.b16 %v355
      %v1211 = vunpack.c.l.b16 %v356
      %v1212 = vunpack.c.l.b16 %v357
      %v1213 = vunpack.c.l.b16 %v358
      %v1214 = vunpack.c.l.b16 %v359
      %v1215 = vunpack.c.l.b16 %v360
      %v1216 = vunpack.c.l.b16 %v361
      %v1217 = vunpack.c.l.b16 %v362
      %v1218 = vunpack.c.l.b16 %v363
      %v1219 = vunpack.c.l.b16 %v364
      %v1220 = vunpack.c.l.b16 %v365
      %v1221 = vunpack.c.l.b16 %v366
      %v1222 = vunpack.c.l.b16 %v367
      %v1223 = vunpack.c.l.b16 %v368
      %v1224 = vunpack.c.l.b16 %v369
      %v1225 = vunpack.c.l.b16 %v370
      %v1226 = vunpack.c.l.b16 %v371
      %v1227 = vunpack.c.l.b16 %v372
      %v1228 = vunpack.c.l.b16 %v373
      %v1229 = vunpack.c.l.b16 %v374
      %v1230 = vunpack.c.l.b16 %v375
      %v1231 = vunpack.c.l.b16 %v376
      %v1232 = vunpack.c.l.b16 %v377
      %v1233 = vunpack.c.l.b16 %v378
      %v1234 = vunpack.c.l.b16 %v379
      %v1235 = vunpack.c.l.b16 %v380
      %v1236 = vunpack.c.l.b16 %v381
      %v1237 = vunpack.c.l.b16 %v382
      %v1238 = vunpack.c.l.b16 %v383
      %v1239 = vunpack.c.l.b16 %v384
      %v1240 = vunpack.c.l.b16 %v385
      %v1241 = vunpack.c.l.b16 %v386
      %v1242 = vunpack.c.l.b16 %v387
      %v1243 = vunpack.c.l.b16 %v388
      %v1244 = vunpack.c.l.b16 %v389
      %v1245 = vunpack.c.l.b16 %v390
      %v1246 = vunpack.c.l.b16 %v391
      %v1247 = vunpack.c.l.b16 %v392
      %v1248 = vunpack.c.l.b16 %v393
      %v1249 = vunpack.c.l.b16 %v394
      %v1250 = vunpack.c.l.b16 %v395
      %v1251 = vunpack.c.l.b16 %v396
      %v1252 = vunpack.c.l.b16 %v397
      %v1253 = vunpack.c.l.b16 %v398
      %v1254 = vunpack.c.l.b16 %v399
      %v1255 = vunpack.c.l.b16 %v400
      %v1256 = vunpack.c.l.b16 %v401
      %v1257 = vunpack.c.l.b16 %v402
      %v1258 = vunpack.c.l.b16 %v403
      %v1259 = vunpack.c.l.b16 %v404
      %v1260 = vunpack.c.l.b16 %v405
      %v1261 = vunpack.c.l.b16 %v406
      %v1262 = vunpack.c.l.b16 %v407
      %v1263 = vunpack.c.l.b16 %v408
      %v1264 = vunpack.c.l.b16 %v409
      %v1265 = vunpack.c.l.b16 %v410
      %v1266 = vunpack.c.l.b16 %v411
      %v1267 = vpack.c.b16 %v1204, %v1203
      %v1268 = vpack.c.b16 %v1206, %v1205
      %v1269 = vpack.c.b16 %v1208, %v1207
      %v1270 = vpack.c.b16 %v1210, %v1209
      %v1271 = vpack.c.b16 %v1212, %v1211
      %v1272 = vpack.c.b16 %v1214, %v1213
      %v1273 = vpack.c.b16 %v1216, %v1215
      %v1274 = vpack.c.b16 %v1218, %v1217
      %v1275 = vpack.c.b16 %v1220, %v1219
      %v1276 = vpack.c.b16 %v1222, %v1221
      %v1277 = vpack.c.b16 %v1224, %v1223
      %v1278 = vpack.c.b16 %v1226, %v1225
      %v1279 = vpack.c.b16 %v1228, %v1227
      %v1280 = vpack.c.b16 %v1230, %v1229
      %v1281 = vpack.c.b16 %v1232, %v1231
      %v1282 = vpack.c.b16 %v1234, %v1233
      %v1283 = vpack.c.b16 %v1236, %v1235
      %v1284 = vpack.c.b16 %v1238, %v1237
      %v1285 = vpack.c.b16 %v1240, %v1239
      %v1286 = vpack.c.b16 %v1242, %v1241
      %v1287 = vpack.c.b16 %v1244, %v1243
      %v1288 = vpack.c.b16 %v1246, %v1245
      %v1289 = vpack.c.b16 %v1248, %v1247
      %v1290 = vpack.c.b16 %v1250, %v1249
      %v1291 = vpack.c.b16 %v1252, %v1251
      %v1292 = vpack.c.b16 %v1254, %v1253
      %v1293 = vpack.c.b16 %v1256, %v1255
      %v1294 = vpack.c.b16 %v1258, %v1257
      %v1295 = vpack.c.b16 %v1260, %v1259
      %v1296 = vpack.c.b16 %v1262, %v1261
      %v1297 = vpack.c.b16 %v1264, %v1263
      %v1298 = vpack.c.b16 %v1266, %v1265
      %1331 = vmatprep.subr.bf16.mxu0 0
      %1332 = vmatpush1.bf16.msra.mxu0 %v1267
      %1333 = vmatprep.subr.bf16.mxu0 0
      %1334 = vmatpush1.bf16.msra.mxu0 %v1268
      %1335 = vmatprep.subr.bf16.mxu0 0
      %1336 = vmatpush1.bf16.msra.mxu0 %v1269
      %1337 = vmatprep.subr.bf16.mxu0 0
      %1338 = vmatpush1.bf16.msra.mxu0 %v1270
      %1339 = vmatprep.subr.bf16.mxu0 0
      %1340 = vmatpush1.bf16.msra.mxu0 %v1271
      %1341 = vmatprep.subr.bf16.mxu0 0
      %1342 = vmatpush1.bf16.msra.mxu0 %v1272
      %1343 = vmatprep.subr.bf16.mxu0 0
      %1344 = vmatpush1.bf16.msra.mxu0 %v1273
      %1345 = vmatprep.subr.bf16.mxu0 0
      %1346 = vmatpush1.bf16.msra.mxu0 %v1274
      %1347 = vmatprep.subr.bf16.mxu0 0
      %1348 = vmatpush1.bf16.msra.mxu0 %v1275
      %1349 = vmatprep.subr.bf16.mxu0 0
      %1350 = vmatpush1.bf16.msra.mxu0 %v1276
      %1351 = vmatprep.subr.bf16.mxu0 0
      %1352 = vmatpush1.bf16.msra.mxu0 %v1277
      %1353 = vmatprep.subr.bf16.mxu0 0
      %1354 = vmatpush1.bf16.msra.mxu0 %v1278
      %1355 = vmatprep.subr.bf16.mxu0 0
      %1356 = vmatpush1.bf16.msra.mxu0 %v1279
      %1357 = vmatprep.subr.bf16.mxu0 0
      %1358 = vmatpush1.bf16.msra.mxu0 %v1280
      %1359 = vmatprep.subr.bf16.mxu0 0
      %1360 = vmatpush1.bf16.msra.mxu0 %v1281
      %1361 = vmatprep.subr.bf16.mxu0 0
      %1362 = vmatpush1.bf16.msra.mxu0 %v1282
      %1363 = vmatprep.mubr.bf16.mxu0 %v852
      %1364 = vmatmul.mubr.bf16.gmra.mrb[0].mxu0 %v851
      %v1365 = vpop.f32.mrb[0].mxu0
      %v1366 = vadd.f32 %v417, %v1365
      %v1367 = vpop.f32.mrb[0].mxu0
      %v1368 = vpop.f32.mrb[0].mxu0
      %v1369 = vadd.f32 %v417, %v1368
      %v1370 = vpop.f32.mrb[0].mxu0
      %1371 = vmatprep.mubr.bf16.mxu0 %v856
      %1372 = vmatmul.mubr.bf16.gmra.mrb[0].mxu0 %v855
      %v1373 = vpop.f32.mrb[0].mxu0
      %v1374 = vadd.f32 %v417, %v1373
      %v1375 = vpop.f32.mrb[0].mxu0
      %v1376 = vpop.f32.mrb[0].mxu0
      %v1377 = vadd.f32 %v417, %v1376
      %v1378 = vpop.f32.mrb[0].mxu0
      %1379 = vmatprep.mubr.bf16.mxu0 %v860
      %1380 = vmatmul.mubr.bf16.gmra.mrb[0].mxu0 %v859
      %v1381 = vpop.f32.mrb[0].mxu0
      %v1382 = vadd.f32 %v417, %v1381
      %v1383 = vpop.f32.mrb[0].mxu0
      %v1384 = vpop.f32.mrb[0].mxu0
      %v1385 = vadd.f32 %v417, %v1384
      %v1386 = vpop.f32.mrb[0].mxu0
      %1387 = vmatprep.mubr.bf16.mxu0 %v864
      %1388 = vmatmul.mubr.bf16.gmra.mrb[0].mxu0 %v863
      %v1389 = vpop.f32.mrb[0].mxu0
      %v1390 = vadd.f32 %v417, %v1389
      %v1391 = vpop.f32.mrb[0].mxu0
      %v1392 = vpop.f32.mrb[0].mxu0
      %v1393 = vadd.f32 %v417, %v1392
      %v1394 = vpop.f32.mrb[0].mxu0
      %1395 = vmatprep.mubr.bf16.mxu0 %v868
      %1396 = vmatmul.mubr.bf16.gmra.mrb[0].mxu0 %v867
      %v1397 = vpop.f32.mrb[0].mxu0
      %v1398 = vadd.f32 %v417, %v1397
      %v1399 = vpop.f32.mrb[0].mxu0
      %v1400 = vpop.f32.mrb[0].mxu0
      %v1401 = vadd.f32 %v417, %v1400
      %v1402 = vpop.f32.mrb[0].mxu0
      %1403 = vmatprep.mubr.bf16.mxu0 %v872
      %1404 = vmatmul.mubr.bf16.gmra.mrb[0].mxu0 %v871
      %v1405 = vpop.f32.mrb[0].mxu0
      %v1406 = vadd.f32 %v417, %v1405
      %v1407 = vpop.f32.mrb[0].mxu0
      %v1408 = vpop.f32.mrb[0].mxu0
      %v1409 = vadd.f32 %v417, %v1408
      %v1410 = vpop.f32.mrb[0].mxu0
      %1411 = vmatprep.mubr.bf16.mxu0 %v876
      %1412 = vmatmul.mubr.bf16.gmra.mrb[0].mxu0 %v875
      %v1413 = vpop.f32.mrb[0].mxu0
      %v1414 = vadd.f32 %v417, %v1413
      %v1415 = vpop.f32.mrb[0].mxu0
      %v1416 = vpop.f32.mrb[0].mxu0
      %v1417 = vadd.f32 %v417, %v1416
      %v1418 = vpop.f32.mrb[0].mxu0
      %1419 = vmatprep.mubr.bf16.mxu0 %v880
      %1420 = vmatmul.mubr.bf16.gmra.mrb[0].mxu0 %v879
      %v1421 = vpop.f32.mrb[0].mxu0
      %v1422 = vadd.f32 %v417, %v1421
      %v1423 = vpop.f32.mrb[0].mxu0
      %v1424 = vpop.f32.mrb[0].mxu0
      %v1425 = vadd.f32 %v417, %v1424
      %v1426 = vpop.f32.mrb[0].mxu0
      %1427 = vmatprep.mubr.bf16.mxu0 %v884
      %1428 = vmatmul.mubr.bf16.gmra.mrb[0].mxu0 %v883
      %v1429 = vpop.f32.mrb[0].mxu0
      %v1430 = vadd.f32 %v417, %v1429
      %v1431 = vpop.f32.mrb[0].mxu0
      %v1432 = vpop.f32.mrb[0].mxu0
      %v1433 = vadd.f32 %v417, %v1432
      %v1434 = vpop.f32.mrb[0].mxu0
      %1435 = vmatprep.mubr.bf16.mxu0 %v888
      %1436 = vmatmul.mubr.bf16.gmra.mrb[0].mxu0 %v887
      %v1437 = vpop.f32.mrb[0].mxu0
      %v1438 = vadd.f32 %v417, %v1437
      %v1439 = vpop.f32.mrb[0].mxu0
      %v1440 = vpop.f32.mrb[0].mxu0
      %v1441 = vadd.f32 %v417, %v1440
      %v1442 = vpop.f32.mrb[0].mxu0
      %1443 = vmatprep.mubr.bf16.mxu0 %v892
      %1444 = vmatmul.mubr.bf16.gmra.mrb[0].mxu0 %v891
      %v1445 = vpop.f32.mrb[0].mxu0
      %v1446 = vadd.f32 %v417, %v1445
      %v1447 = vpop.f32.mrb[0].mxu0
      %v1448 = vpop.f32.mrb[0].mxu0
      %v1449 = vadd.f32 %v417, %v1448
      %v1450 = vpop.f32.mrb[0].mxu0
      %1451 = vmatprep.mubr.bf16.mxu0 %v896
      %1452 = vmatmul.mubr.bf16.gmra.mrb[0].mxu0 %v895
      %v1453 = vpop.f32.mrb[0].mxu0
      %v1454 = vadd.f32 %v417, %v1453
      %v1455 = vpop.f32.mrb[0].mxu0
      %v1456 = vpop.f32.mrb[0].mxu0
      %v1457 = vadd.f32 %v417, %v1456
      %v1458 = vpop.f32.mrb[0].mxu0
      %1459 = vmatprep.mubr.bf16.mxu0 %v900
      %1460 = vmatmul.mubr.bf16.gmra.mrb[0].mxu0 %v899
      %v1461 = vpop.f32.mrb[0].mxu0
      %v1462 = vadd.f32 %v417, %v1461
      %v1463 = vpop.f32.mrb[0].mxu0
      %v1464 = vpop.f32.mrb[0].mxu0
      %v1465 = vadd.f32 %v417, %v1464
      %v1466 = vpop.f32.mrb[0].mxu0
      %1467 = vmatprep.mubr.bf16.mxu0 %v904
      %1468 = vmatmul.mubr.bf16.gmra.mrb[0].mxu0 %v903
      %v1469 = vpop.f32.mrb[0].mxu0
      %v1470 = vadd.f32 %v417, %v1469
      %v1471 = vpop.f32.mrb[0].mxu0
      %v1472 = vpop.f32.mrb[0].mxu0
      %v1473 = vadd.f32 %v417, %v1472
      %v1474 = vpop.f32.mrb[0].mxu0
      %1475 = vmatprep.mubr.bf16.mxu0 %v908
      %1476 = vmatmul.mubr.bf16.gmra.mrb[0].mxu0 %v907
      %v1477 = vpop.f32.mrb[0].mxu0
      %v1478 = vadd.f32 %v417, %v1477
      %v1479 = vpop.f32.mrb[0].mxu0
      %v1480 = vpop.f32.mrb[0].mxu0
      %v1481 = vadd.f32 %v417, %v1480
      %v1482 = vpop.f32.mrb[0].mxu0
      %1483 = vmatprep.mubr.bf16.mxu0 %v912
      %1484 = vmatmul.mubr.bf16.gmra.mrb[0].mxu0 %v911
      %v1485 = vpop.f32.mrb[0].mxu0
      %v1486 = vadd.f32 %v417, %v1485
      %v1487 = vpop.f32.mrb[0].mxu0
      %v1488 = vpop.f32.mrb[0].mxu0
      %v1489 = vadd.f32 %v417, %v1488
      %v1490 = vpop.f32.mrb[0].mxu0
      %1491 = vmatprep.mubr.bf16.mxu0 %v916
      %1492 = vmatmul.mubr.bf16.gmra.mrb[0].mxu0 %v915
      %v1493 = vpop.f32.mrb[0].mxu0
      %v1494 = vadd.f32 %v417, %v1493
      %v1495 = vpop.f32.mrb[0].mxu0
      %v1496 = vpop.f32.mrb[0].mxu0
      %v1497 = vadd.f32 %v417, %v1496
      %v1498 = vpop.f32.mrb[0].mxu0
      %1499 = vmatprep.mubr.bf16.mxu0 %v920
      %1500 = vmatmul.mubr.bf16.gmra.mrb[0].mxu0 %v919
      %v1501 = vpop.f32.mrb[0].mxu0
      %v1502 = vadd.f32 %v417, %v1501
      %v1503 = vpop.f32.mrb[0].mxu0
      %v1504 = vpop.f32.mrb[0].mxu0
      %v1505 = vadd.f32 %v417, %v1504
      %v1506 = vpop.f32.mrb[0].mxu0
      %1507 = vmatprep.mubr.bf16.mxu0 %v924
      %1508 = vmatmul.mubr.bf16.gmra.mrb[0].mxu0 %v923
      %v1509 = vpop.f32.mrb[0].mxu0
      %v1510 = vadd.f32 %v417, %v1509
      %v1511 = vpop.f32.mrb[0].mxu0
      %v1512 = vpop.f32.mrb[0].mxu0
      %v1513 = vadd.f32 %v417, %v1512
      %v1514 = vpop.f32.mrb[0].mxu0
      %1515 = vmatprep.mubr.bf16.mxu0 %v928
      %1516 = vmatmul.mubr.bf16.gmra.mrb[0].mxu0 %v927
      %v1517 = vpop.f32.mrb[0].mxu0
      %v1518 = vadd.f32 %v417, %v1517
      %v1519 = vpop.f32.mrb[0].mxu0
      %v1520 = vpop.f32.mrb[0].mxu0
      %v1521 = vadd.f32 %v417, %v1520
      %v1522 = vpop.f32.mrb[0].mxu0
      %1523 = vmatprep.mubr.bf16.mxu0 %v932
      %1524 = vmatmul.mubr.bf16.gmra.mrb[0].mxu0 %v931
      %v1525 = vpop.f32.mrb[0].mxu0
      %v1526 = vadd.f32 %v417, %v1525
      %v1527 = vpop.f32.mrb[0].mxu0
      %v1528 = vpop.f32.mrb[0].mxu0
      %v1529 = vadd.f32 %v417, %v1528
      %v1530 = vpop.f32.mrb[0].mxu0
      %1531 = vmatprep.mubr.bf16.mxu0 %v936
      %1532 = vmatmul.mubr.bf16.gmra.mrb[0].mxu0 %v935
      %v1533 = vpop.f32.mrb[0].mxu0
      %v1534 = vadd.f32 %v417, %v1533
      %v1535 = vpop.f32.mrb[0].mxu0
      %v1536 = vpop.f32.mrb[0].mxu0
      %v1537 = vadd.f32 %v417, %v1536
      %v1538 = vpop.f32.mrb[0].mxu0
      %1539 = vmatprep.mubr.bf16.mxu0 %v940
      %1540 = vmatmul.mubr.bf16.gmra.mrb[0].mxu0 %v939
      %v1541 = vpop.f32.mrb[0].mxu0
      %v1542 = vadd.f32 %v417, %v1541
      %v1543 = vpop.f32.mrb[0].mxu0
      %v1544 = vpop.f32.mrb[0].mxu0
      %v1545 = vadd.f32 %v417, %v1544
      %v1546 = vpop.f32.mrb[0].mxu0
      %1547 = vmatprep.mubr.bf16.mxu0 %v944
      %1548 = vmatmul.mubr.bf16.gmra.mrb[0].mxu0 %v943
      %v1549 = vpop.f32.mrb[0].mxu0
      %v1550 = vadd.f32 %v417, %v1549
      %v1551 = vpop.f32.mrb[0].mxu0
      %v1552 = vpop.f32.mrb[0].mxu0
      %v1553 = vadd.f32 %v417, %v1552
      %v1554 = vpop.f32.mrb[0].mxu0
      %1555 = vmatprep.mubr.bf16.mxu0 %v948
      %1556 = vmatmul.mubr.bf16.gmra.mrb[0].mxu0 %v947
      %v1557 = vpop.f32.mrb[0].mxu0
      %v1558 = vadd.f32 %v417, %v1557
      %v1559 = vpop.f32.mrb[0].mxu0
      %v1560 = vpop.f32.mrb[0].mxu0
      %v1561 = vadd.f32 %v417, %v1560
      %v1562 = vpop.f32.mrb[0].mxu0
      %1563 = vmatprep.mubr.bf16.mxu0 %v952
      %1564 = vmatmul.mubr.bf16.gmra.mrb[0].mxu0 %v951
      %v1565 = vpop.f32.mrb[0].mxu0
      %v1566 = vadd.f32 %v417, %v1565
      %v1567 = vpop.f32.mrb[0].mxu0
      %v1568 = vpop.f32.mrb[0].mxu0
      %v1569 = vadd.f32 %v417, %v1568
      %v1570 = vpop.f32.mrb[0].mxu0
      %1571 = vmatprep.mubr.bf16.mxu0 %v956
      %1572 = vmatmul.mubr.bf16.gmra.mrb[0].mxu0 %v955
      %v1573 = vpop.f32.mrb[0].mxu0
      %v1574 = vadd.f32 %v417, %v1573
      %v1575 = vpop.f32.mrb[0].mxu0
      %v1576 = vpop.f32.mrb[0].mxu0
      %v1577 = vadd.f32 %v417, %v1576
      %v1578 = vpop.f32.mrb[0].mxu0
      %1579 = vmatprep.mubr.bf16.mxu0 %v960
      %1580 = vmatmul.mubr.bf16.gmra.mrb[0].mxu0 %v959
      %v1581 = vpop.f32.mrb[0].mxu0
      %v1582 = vadd.f32 %v417, %v1581
      %v1583 = vpop.f32.mrb[0].mxu0
      %v1584 = vpop.f32.mrb[0].mxu0
      %v1585 = vadd.f32 %v417, %v1584
      %v1586 = vpop.f32.mrb[0].mxu0
      %1587 = vmatprep.mubr.bf16.mxu0 %v964
      %1588 = vmatmul.mubr.bf16.gmra.mrb[0].mxu0 %v963
      %v1589 = vpop.f32.mrb[0].mxu0
      %v1590 = vadd.f32 %v417, %v1589
      %v1591 = vpop.f32.mrb[0].mxu0
      %v1592 = vpop.f32.mrb[0].mxu0
      %v1593 = vadd.f32 %v417, %v1592
      %v1594 = vpop.f32.mrb[0].mxu0
      %1595 = vmatprep.mubr.bf16.mxu0 %v968
      %1596 = vmatmul.mubr.bf16.gmra.mrb[0].mxu0 %v967
      %v1597 = vpop.f32.mrb[0].mxu0
      %v1598 = vadd.f32 %v417, %v1597
      %v1599 = vpop.f32.mrb[0].mxu0
      %v1600 = vpop.f32.mrb[0].mxu0
      %v1601 = vadd.f32 %v417, %v1600
      %v1602 = vpop.f32.mrb[0].mxu0
      %1603 = vmatprep.mubr.bf16.mxu0 %v972
      %1604 = vmatmul.mubr.bf16.gmra.mrb[0].mxu0 %v971
      %v1605 = vpop.f32.mrb[0].mxu0
      %v1606 = vadd.f32 %v417, %v1605
      %v1607 = vpop.f32.mrb[0].mxu0
      %v1608 = vpop.f32.mrb[0].mxu0
      %v1609 = vadd.f32 %v417, %v1608
      %v1610 = vpop.f32.mrb[0].mxu0
      %1611 = vmatprep.mubr.bf16.mxu0 %v976
      %1612 = vmatmul.mubr.bf16.gmra.mrb[0].mxu0 %v975
      %v1613 = vpop.f32.mrb[0].mxu0
      %v1614 = vadd.f32 %v417, %v1613
      %v1615 = vpop.f32.mrb[0].mxu0
      %v1616 = vpop.f32.mrb[0].mxu0
      %v1617 = vadd.f32 %v417, %v1616
      %v1618 = vpop.f32.mrb[0].mxu0
      %1619 = vmatprep.mubr.bf16.mxu0 %v980
      %1620 = vmatmul.mubr.bf16.gmra.mrb[0].mxu0 %v979
      %v1621 = vpop.f32.mrb[0].mxu0
      %v1622 = vadd.f32 %v417, %v1621
      %v1623 = vpop.f32.mrb[0].mxu0
      %v1624 = vpop.f32.mrb[0].mxu0
      %v1625 = vadd.f32 %v417, %v1624
      %v1626 = vpop.f32.mrb[0].mxu0
      %1627 = vmatprep.mubr.bf16.mxu0 %v984
      %1628 = vmatmul.mubr.bf16.gmra.mrb[0].mxu0 %v983
      %v1629 = vpop.f32.mrb[0].mxu0
      %v1630 = vadd.f32 %v417, %v1629
      %v1631 = vpop.f32.mrb[0].mxu0
      %v1632 = vpop.f32.mrb[0].mxu0
      %v1633 = vadd.f32 %v417, %v1632
      %v1634 = vpop.f32.mrb[0].mxu0
      %1635 = vmatprep.mubr.bf16.mxu0 %v988
      %1636 = vmatmul.mubr.bf16.gmra.mrb[0].mxu0 %v987
      %v1637 = vpop.f32.mrb[0].mxu0
      %v1638 = vadd.f32 %v417, %v1637
      %v1639 = vpop.f32.mrb[0].mxu0
      %v1640 = vpop.f32.mrb[0].mxu0
      %v1641 = vadd.f32 %v417, %v1640
      %v1642 = vpop.f32.mrb[0].mxu0
      %1643 = vmatprep.mubr.bf16.mxu0 %v992
      %1644 = vmatmul.mubr.bf16.gmra.mrb[0].mxu0 %v991
      %v1645 = vpop.f32.mrb[0].mxu0
      %v1646 = vadd.f32 %v417, %v1645
      %v1647 = vpop.f32.mrb[0].mxu0
      %v1648 = vpop.f32.mrb[0].mxu0
      %v1649 = vadd.f32 %v417, %v1648
      %v1650 = vpop.f32.mrb[0].mxu0
      %1651 = vdwg.mxu0
      %1652 = vmatprep.subr.bf16.mxu0 0
      %1653 = vmatpush1.bf16.msra.mxu0 %v1283
      %1654 = vmatprep.subr.bf16.mxu0 0
      %1655 = vmatpush1.bf16.msra.mxu0 %v1284
      %1656 = vmatprep.subr.bf16.mxu0 0
      %1657 = vmatpush1.bf16.msra.mxu0 %v1285
      %1658 = vmatprep.subr.bf16.mxu0 0
      %1659 = vmatpush1.bf16.msra.mxu0 %v1286
      %1660 = vmatprep.subr.bf16.mxu0 0
      %1661 = vmatpush1.bf16.msra.mxu0 %v1287
      %1662 = vmatprep.subr.bf16.mxu0 0
      %1663 = vmatpush1.bf16.msra.mxu0 %v1288
      %1664 = vmatprep.subr.bf16.mxu0 0
      %1665 = vmatpush1.bf16.msra.mxu0 %v1289
      %1666 = vmatprep.subr.bf16.mxu0 0
      %1667 = vmatpush1.bf16.msra.mxu0 %v1290
      %1668 = vmatprep.subr.bf16.mxu0 0
      %1669 = vmatpush1.bf16.msra.mxu0 %v1291
      %1670 = vmatprep.subr.bf16.mxu0 0
      %1671 = vmatpush1.bf16.msra.mxu0 %v1292
      %1672 = vmatprep.subr.bf16.mxu0 0
      %1673 = vmatpush1.bf16.msra.mxu0 %v1293
      %1674 = vmatprep.subr.bf16.mxu0 0
      %1675 = vmatpush1.bf16.msra.mxu0 %v1294
      %1676 = vmatprep.subr.bf16.mxu0 0
      %1677 = vmatpush1.bf16.msra.mxu0 %v1295
      %1678 = vmatprep.subr.bf16.mxu0 0
      %1679 = vmatpush1.bf16.msra.mxu0 %v1296
      %1680 = vmatprep.subr.bf16.mxu0 0
      %1681 = vmatpush1.bf16.msra.mxu0 %v1297
      %1682 = vmatprep.subr.bf16.mxu0 0
      %1683 = vmatpush1.bf16.msra.mxu0 %v1298
      %1684 = vmatprep.mubr.bf16.mxu0 %v854
      %1685 = vmatmul.mubr.bf16.gmra.mrb[0].mxu0 %v853
      %v1686 = vpop.f32.mrb[0].mxu0
      %v1687 = vadd.f32 %v1366, %v1686
      %v1688 = vpop.f32.mrb[0].mxu0
      %v1689 = vpop.f32.mrb[0].mxu0
      %v1690 = vadd.f32 %v1369, %v1689
      %v1691 = vpop.f32.mrb[0].mxu0
      %1692 = vmatprep.mubr.bf16.mxu0 %v858
      %1693 = vmatmul.mubr.bf16.gmra.mrb[0].mxu0 %v857
      %v1694 = vpop.f32.mrb[0].mxu0
      %v1695 = vadd.f32 %v1374, %v1694
      %v1696 = vpop.f32.mrb[0].mxu0
      %v1697 = vpop.f32.mrb[0].mxu0
      %v1698 = vadd.f32 %v1377, %v1697
      %v1699 = vpop.f32.mrb[0].mxu0
      %1700 = vmatprep.mubr.bf16.mxu0 %v862
      %1701 = vmatmul.mubr.bf16.gmra.mrb[0].mxu0 %v861
      %v1702 = vpop.f32.mrb[0].mxu0
      %v1703 = vadd.f32 %v1382, %v1702
      %v1704 = vpop.f32.mrb[0].mxu0
      %v1705 = vpop.f32.mrb[0].mxu0
      %v1706 = vadd.f32 %v1385, %v1705
      %v1707 = vpop.f32.mrb[0].mxu0
      %1708 = vmatprep.mubr.bf16.mxu0 %v866
      %1709 = vmatmul.mubr.bf16.gmra.mrb[0].mxu0 %v865
      %v1710 = vpop.f32.mrb[0].mxu0
      %v1711 = vadd.f32 %v1390, %v1710
      %v1712 = vpop.f32.mrb[0].mxu0
      %v1713 = vpop.f32.mrb[0].mxu0
      %v1714 = vadd.f32 %v1393, %v1713
      %v1715 = vpop.f32.mrb[0].mxu0
      %1716 = vmatprep.mubr.bf16.mxu0 %v870
      %1717 = vmatmul.mubr.bf16.gmra.mrb[0].mxu0 %v869
      %v1718 = vpop.f32.mrb[0].mxu0
      %v1719 = vadd.f32 %v1398, %v1718
      %v1720 = vpop.f32.mrb[0].mxu0
      %v1721 = vpop.f32.mrb[0].mxu0
      %v1722 = vadd.f32 %v1401, %v1721
      %v1723 = vpop.f32.mrb[0].mxu0
      %1724 = vmatprep.mubr.bf16.mxu0 %v874
      %1725 = vmatmul.mubr.bf16.gmra.mrb[0].mxu0 %v873
      %v1726 = vpop.f32.mrb[0].mxu0
      %v1727 = vadd.f32 %v1406, %v1726
      %v1728 = vpop.f32.mrb[0].mxu0
      %v1729 = vpop.f32.mrb[0].mxu0
      %v1730 = vadd.f32 %v1409, %v1729
      %v1731 = vpop.f32.mrb[0].mxu0
      %1732 = vmatprep.mubr.bf16.mxu0 %v878
      %1733 = vmatmul.mubr.bf16.gmra.mrb[0].mxu0 %v877
      %v1734 = vpop.f32.mrb[0].mxu0
      %v1735 = vadd.f32 %v1414, %v1734
      %v1736 = vpop.f32.mrb[0].mxu0
      %v1737 = vpop.f32.mrb[0].mxu0
      %v1738 = vadd.f32 %v1417, %v1737
      %v1739 = vpop.f32.mrb[0].mxu0
      %1740 = vmatprep.mubr.bf16.mxu0 %v882
      %1741 = vmatmul.mubr.bf16.gmra.mrb[0].mxu0 %v881
      %v1742 = vpop.f32.mrb[0].mxu0
      %v1743 = vadd.f32 %v1422, %v1742
      %v1744 = vpop.f32.mrb[0].mxu0
      %v1745 = vpop.f32.mrb[0].mxu0
      %v1746 = vadd.f32 %v1425, %v1745
      %v1747 = vpop.f32.mrb[0].mxu0
      %1748 = vmatprep.mubr.bf16.mxu0 %v886
      %1749 = vmatmul.mubr.bf16.gmra.mrb[0].mxu0 %v885
      %v1750 = vpop.f32.mrb[0].mxu0
      %v1751 = vadd.f32 %v1430, %v1750
      %v1752 = vpop.f32.mrb[0].mxu0
      %v1753 = vpop.f32.mrb[0].mxu0
      %v1754 = vadd.f32 %v1433, %v1753
      %v1755 = vpop.f32.mrb[0].mxu0
      %1756 = vmatprep.mubr.bf16.mxu0 %v890
      %1757 = vmatmul.mubr.bf16.gmra.mrb[0].mxu0 %v889
      %v1758 = vpop.f32.mrb[0].mxu0
      %v1759 = vadd.f32 %v1438, %v1758
      %v1760 = vpop.f32.mrb[0].mxu0
      %v1761 = vpop.f32.mrb[0].mxu0
      %v1762 = vadd.f32 %v1441, %v1761
      %v1763 = vpop.f32.mrb[0].mxu0
      %1764 = vmatprep.mubr.bf16.mxu0 %v894
      %1765 = vmatmul.mubr.bf16.gmra.mrb[0].mxu0 %v893
      %v1766 = vpop.f32.mrb[0].mxu0
      %v1767 = vadd.f32 %v1446, %v1766
      %v1768 = vpop.f32.mrb[0].mxu0
      %v1769 = vpop.f32.mrb[0].mxu0
      %v1770 = vadd.f32 %v1449, %v1769
      %v1771 = vpop.f32.mrb[0].mxu0
      %1772 = vmatprep.mubr.bf16.mxu0 %v898
      %1773 = vmatmul.mubr.bf16.gmra.mrb[0].mxu0 %v897
      %v1774 = vpop.f32.mrb[0].mxu0
      %v1775 = vadd.f32 %v1454, %v1774
      %v1776 = vpop.f32.mrb[0].mxu0
      %v1777 = vpop.f32.mrb[0].mxu0
      %v1778 = vadd.f32 %v1457, %v1777
      %v1779 = vpop.f32.mrb[0].mxu0
      %1780 = vmatprep.mubr.bf16.mxu0 %v902
      %1781 = vmatmul.mubr.bf16.gmra.mrb[0].mxu0 %v901
      %v1782 = vpop.f32.mrb[0].mxu0
      %v1783 = vadd.f32 %v1462, %v1782
      %v1784 = vpop.f32.mrb[0].mxu0
      %v1785 = vpop.f32.mrb[0].mxu0
      %v1786 = vadd.f32 %v1465, %v1785
      %v1787 = vpop.f32.mrb[0].mxu0
      %1788 = vmatprep.mubr.bf16.mxu0 %v906
      %1789 = vmatmul.mubr.bf16.gmra.mrb[0].mxu0 %v905
      %v1790 = vpop.f32.mrb[0].mxu0
      %v1791 = vadd.f32 %v1470, %v1790
      %v1792 = vpop.f32.mrb[0].mxu0
      %v1793 = vpop.f32.mrb[0].mxu0
      %v1794 = vadd.f32 %v1473, %v1793
      %v1795 = vpop.f32.mrb[0].mxu0
      %1796 = vmatprep.mubr.bf16.mxu0 %v910
      %1797 = vmatmul.mubr.bf16.gmra.mrb[0].mxu0 %v909
      %v1798 = vpop.f32.mrb[0].mxu0
      %v1799 = vadd.f32 %v1478, %v1798
      %v1800 = vpop.f32.mrb[0].mxu0
      %v1801 = vpop.f32.mrb[0].mxu0
      %v1802 = vadd.f32 %v1481, %v1801
      %v1803 = vpop.f32.mrb[0].mxu0
      %1804 = vmatprep.mubr.bf16.mxu0 %v914
      %1805 = vmatmul.mubr.bf16.gmra.mrb[0].mxu0 %v913
      %v1806 = vpop.f32.mrb[0].mxu0
      %v1807 = vadd.f32 %v1486, %v1806
      %v1808 = vpop.f32.mrb[0].mxu0
      %v1809 = vpop.f32.mrb[0].mxu0
      %v1810 = vadd.f32 %v1489, %v1809
      %v1811 = vpop.f32.mrb[0].mxu0
      %1812 = vmatprep.mubr.bf16.mxu0 %v918
      %1813 = vmatmul.mubr.bf16.gmra.mrb[0].mxu0 %v917
      %v1814 = vpop.f32.mrb[0].mxu0
      %v1815 = vadd.f32 %v1494, %v1814
      %v1816 = vpop.f32.mrb[0].mxu0
      %v1817 = vpop.f32.mrb[0].mxu0
      %v1818 = vadd.f32 %v1497, %v1817
      %v1819 = vpop.f32.mrb[0].mxu0
      %1820 = vmatprep.mubr.bf16.mxu0 %v922
      %1821 = vmatmul.mubr.bf16.gmra.mrb[0].mxu0 %v921
      %v1822 = vpop.f32.mrb[0].mxu0
      %v1823 = vadd.f32 %v1502, %v1822
      %v1824 = vpop.f32.mrb[0].mxu0
      %v1825 = vpop.f32.mrb[0].mxu0
      %v1826 = vadd.f32 %v1505, %v1825
      %v1827 = vpop.f32.mrb[0].mxu0
      %1828 = vmatprep.mubr.bf16.mxu0 %v926
      %1829 = vmatmul.mubr.bf16.gmra.mrb[0].mxu0 %v925
      %v1830 = vpop.f32.mrb[0].mxu0
      %v1831 = vadd.f32 %v1510, %v1830
      %v1832 = vpop.f32.mrb[0].mxu0
      %v1833 = vpop.f32.mrb[0].mxu0
      %v1834 = vadd.f32 %v1513, %v1833
      %v1835 = vpop.f32.mrb[0].mxu0
      %1836 = vmatprep.mubr.bf16.mxu0 %v930
      %1837 = vmatmul.mubr.bf16.gmra.mrb[0].mxu0 %v929
      %v1838 = vpop.f32.mrb[0].mxu0
      %v1839 = vadd.f32 %v1518, %v1838
      %v1840 = vpop.f32.mrb[0].mxu0
      %v1841 = vpop.f32.mrb[0].mxu0
      %v1842 = vadd.f32 %v1521, %v1841
      %v1843 = vpop.f32.mrb[0].mxu0
      %1844 = vmatprep.mubr.bf16.mxu0 %v934
      %1845 = vmatmul.mubr.bf16.gmra.mrb[0].mxu0 %v933
      %v1846 = vpop.f32.mrb[0].mxu0
      %v1847 = vadd.f32 %v1526, %v1846
      %v1848 = vpop.f32.mrb[0].mxu0
      %v1849 = vpop.f32.mrb[0].mxu0
      %v1850 = vadd.f32 %v1529, %v1849
      %v1851 = vpop.f32.mrb[0].mxu0
      %1852 = vmatprep.mubr.bf16.mxu0 %v938
      %1853 = vmatmul.mubr.bf16.gmra.mrb[0].mxu0 %v937
      %v1854 = vpop.f32.mrb[0].mxu0
      %v1855 = vadd.f32 %v1534, %v1854
      %v1856 = vpop.f32.mrb[0].mxu0
      %v1857 = vpop.f32.mrb[0].mxu0
      %v1858 = vadd.f32 %v1537, %v1857
      %v1859 = vpop.f32.mrb[0].mxu0
      %1860 = vmatprep.mubr.bf16.mxu0 %v942
      %1861 = vmatmul.mubr.bf16.gmra.mrb[0].mxu0 %v941
      %v1862 = vpop.f32.mrb[0].mxu0
      %v1863 = vadd.f32 %v1542, %v1862
      %v1864 = vpop.f32.mrb[0].mxu0
      %v1865 = vpop.f32.mrb[0].mxu0
      %v1866 = vadd.f32 %v1545, %v1865
      %v1867 = vpop.f32.mrb[0].mxu0
      %1868 = vmatprep.mubr.bf16.mxu0 %v946
      %1869 = vmatmul.mubr.bf16.gmra.mrb[0].mxu0 %v945
      %v1870 = vpop.f32.mrb[0].mxu0
      %v1871 = vadd.f32 %v1550, %v1870
      %v1872 = vpop.f32.mrb[0].mxu0
      %v1873 = vpop.f32.mrb[0].mxu0
      %v1874 = vadd.f32 %v1553, %v1873
      %v1875 = vpop.f32.mrb[0].mxu0
      %1876 = vmatprep.mubr.bf16.mxu0 %v950
      %1877 = vmatmul.mubr.bf16.gmra.mrb[0].mxu0 %v949
      %v1878 = vpop.f32.mrb[0].mxu0
      %v1879 = vadd.f32 %v1558, %v1878
      %v1880 = vpop.f32.mrb[0].mxu0
      %v1881 = vpop.f32.mrb[0].mxu0
      %v1882 = vadd.f32 %v1561, %v1881
      %v1883 = vpop.f32.mrb[0].mxu0
      %1884 = vmatprep.mubr.bf16.mxu0 %v954
      %1885 = vmatmul.mubr.bf16.gmra.mrb[0].mxu0 %v953
      %v1886 = vpop.f32.mrb[0].mxu0
      %v1887 = vadd.f32 %v1566, %v1886
      %v1888 = vpop.f32.mrb[0].mxu0
      %v1889 = vpop.f32.mrb[0].mxu0
      %v1890 = vadd.f32 %v1569, %v1889
      %v1891 = vpop.f32.mrb[0].mxu0
      %1892 = vmatprep.mubr.bf16.mxu0 %v958
      %1893 = vmatmul.mubr.bf16.gmra.mrb[0].mxu0 %v957
      %v1894 = vpop.f32.mrb[0].mxu0
      %v1895 = vadd.f32 %v1574, %v1894
      %v1896 = vpop.f32.mrb[0].mxu0
      %v1897 = vpop.f32.mrb[0].mxu0
      %v1898 = vadd.f32 %v1577, %v1897
      %v1899 = vpop.f32.mrb[0].mxu0
      %1900 = vmatprep.mubr.bf16.mxu0 %v962
      %1901 = vmatmul.mubr.bf16.gmra.mrb[0].mxu0 %v961
      %v1902 = vpop.f32.mrb[0].mxu0
      %v1903 = vadd.f32 %v1582, %v1902
      %v1904 = vpop.f32.mrb[0].mxu0
      %v1905 = vpop.f32.mrb[0].mxu0
      %v1906 = vadd.f32 %v1585, %v1905
      %v1907 = vpop.f32.mrb[0].mxu0
      %1908 = vmatprep.mubr.bf16.mxu0 %v966
      %1909 = vmatmul.mubr.bf16.gmra.mrb[0].mxu0 %v965
      %v1910 = vpop.f32.mrb[0].mxu0
      %v1911 = vadd.f32 %v1590, %v1910
      %v1912 = vpop.f32.mrb[0].mxu0
      %v1913 = vpop.f32.mrb[0].mxu0
      %v1914 = vadd.f32 %v1593, %v1913
      %v1915 = vpop.f32.mrb[0].mxu0
      %1916 = vmatprep.mubr.bf16.mxu0 %v970
      %1917 = vmatmul.mubr.bf16.gmra.mrb[0].mxu0 %v969
      %v1918 = vpop.f32.mrb[0].mxu0
      %v1919 = vadd.f32 %v1598, %v1918
      %v1920 = vpop.f32.mrb[0].mxu0
      %v1921 = vpop.f32.mrb[0].mxu0
      %v1922 = vadd.f32 %v1601, %v1921
      %v1923 = vpop.f32.mrb[0].mxu0
      %1924 = vmatprep.mubr.bf16.mxu0 %v974
      %1925 = vmatmul.mubr.bf16.gmra.mrb[0].mxu0 %v973
      %v1926 = vpop.f32.mrb[0].mxu0
      %v1927 = vadd.f32 %v1606, %v1926
      %v1928 = vpop.f32.mrb[0].mxu0
      %v1929 = vpop.f32.mrb[0].mxu0
      %v1930 = vadd.f32 %v1609, %v1929
      %v1931 = vpop.f32.mrb[0].mxu0
      %1932 = vmatprep.mubr.bf16.mxu0 %v978
      %1933 = vmatmul.mubr.bf16.gmra.mrb[0].mxu0 %v977
      %v1934 = vpop.f32.mrb[0].mxu0
      %v1935 = vadd.f32 %v1614, %v1934
      %v1936 = vpop.f32.mrb[0].mxu0
      %v1937 = vpop.f32.mrb[0].mxu0
      %v1938 = vadd.f32 %v1617, %v1937
      %v1939 = vpop.f32.mrb[0].mxu0
      %1940 = vmatprep.mubr.bf16.mxu0 %v982
      %1941 = vmatmul.mubr.bf16.gmra.mrb[0].mxu0 %v981
      %v1942 = vpop.f32.mrb[0].mxu0
      %v1943 = vadd.f32 %v1622, %v1942
      %v1944 = vpop.f32.mrb[0].mxu0
      %v1945 = vpop.f32.mrb[0].mxu0
      %v1946 = vadd.f32 %v1625, %v1945
      %v1947 = vpop.f32.mrb[0].mxu0
      %1948 = vmatprep.mubr.bf16.mxu0 %v986
      %1949 = vmatmul.mubr.bf16.gmra.mrb[0].mxu0 %v985
      %v1950 = vpop.f32.mrb[0].mxu0
      %v1951 = vadd.f32 %v1630, %v1950
      %v1952 = vpop.f32.mrb[0].mxu0
      %v1953 = vpop.f32.mrb[0].mxu0
      %v1954 = vadd.f32 %v1633, %v1953
      %v1955 = vpop.f32.mrb[0].mxu0
      %1956 = vmatprep.mubr.bf16.mxu0 %v990
      %1957 = vmatmul.mubr.bf16.gmra.mrb[0].mxu0 %v989
      %v1958 = vpop.f32.mrb[0].mxu0
      %v1959 = vadd.f32 %v1638, %v1958
      %v1960 = vpop.f32.mrb[0].mxu0
      %v1961 = vpop.f32.mrb[0].mxu0
      %v1962 = vadd.f32 %v1641, %v1961
      %v1963 = vpop.f32.mrb[0].mxu0
      %1964 = vmatprep.mubr.bf16.mxu0 %v994
      %1965 = vmatmul.mubr.bf16.gmra.mrb[0].mxu0 %v993
      %v1966 = vpop.f32.mrb[0].mxu0
      %v1967 = vadd.f32 %v1646, %v1966
      %v1968 = vpop.f32.mrb[0].mxu0
      %v1969 = vpop.f32.mrb[0].mxu0
      %v1970 = vadd.f32 %v1649, %v1969
      %v1971 = vpop.f32.mrb[0].mxu0
      %1972 = vdwg.mxu0
      %v1973 = vmax.f32 %v1687, 0.0
      %v1974 = vmax.f32 %v1690, 0.0
      %v1975 = vmax.f32 %v1695, 0.0
      %v1976 = vmax.f32 %v1698, 0.0
      %v1977 = vmax.f32 %v1703, 0.0
      %v1978 = vmax.f32 %v1706, 0.0
      %v1979 = vmax.f32 %v1711, 0.0
      %v1980 = vmax.f32 %v1714, 0.0
      %v1981 = vmax.f32 %v1719, 0.0
      %v1982 = vmax.f32 %v1722, 0.0
      %v1983 = vmax.f32 %v1727, 0.0
      %v1984 = vmax.f32 %v1730, 0.0
      %v1985 = vmax.f32 %v1735, 0.0
      %v1986 = vmax.f32 %v1738, 0.0
      %v1987 = vmax.f32 %v1743, 0.0
      %v1988 = vmax.f32 %v1746, 0.0
      %v1989 = vmax.f32 %v1751, 0.0
      %v1990 = vmax.f32 %v1754, 0.0
      %v1991 = vmax.f32 %v1759, 0.0
      %v1992 = vmax.f32 %v1762, 0.0
      %v1993 = vmax.f32 %v1767, 0.0
      %v1994 = vmax.f32 %v1770, 0.0
      %v1995 = vmax.f32 %v1775, 0.0
      %v1996 = vmax.f32 %v1778, 0.0
      %v1997 = vmax.f32 %v1783, 0.0
      %v1998 = vmax.f32 %v1786, 0.0
      %v1999 = vmax.f32 %v1791, 0.0
      %v2000 = vmax.f32 %v1794, 0.0
      %v2001 = vmax.f32 %v1799, 0.0
      %v2002 = vmax.f32 %v1802, 0.0
      %v2003 = vmax.f32 %v1807, 0.0
      %v2004 = vmax.f32 %v1810, 0.0
      %v2005 = vmax.f32 %v1815, 0.0
      %v2006 = vmax.f32 %v1818, 0.0
      %v2007 = vmax.f32 %v1823, 0.0
      %v2008 = vmax.f32 %v1826, 0.0
      %v2009 = vmax.f32 %v1831, 0.0
      %v2010 = vmax.f32 %v1834, 0.0
      %v2011 = vmax.f32 %v1839, 0.0
      %v2012 = vmax.f32 %v1842, 0.0
      %v2013 = vmax.f32 %v1847, 0.0
      %v2014 = vmax.f32 %v1850, 0.0
      %v2015 = vmax.f32 %v1855, 0.0
      %v2016 = vmax.f32 %v1858, 0.0
      %v2017 = vmax.f32 %v1863, 0.0
      %v2018 = vmax.f32 %v1866, 0.0
      %v2019 = vmax.f32 %v1871, 0.0
      %v2020 = vmax.f32 %v1874, 0.0
      %v2021 = vmax.f32 %v1879, 0.0
      %v2022 = vmax.f32 %v1882, 0.0
      %v2023 = vmax.f32 %v1887, 0.0
      %v2024 = vmax.f32 %v1890, 0.0
      %v2025 = vmax.f32 %v1895, 0.0
      %v2026 = vmax.f32 %v1898, 0.0
      %v2027 = vmax.f32 %v1903, 0.0
      %v2028 = vmax.f32 %v1906, 0.0
      %v2029 = vmax.f32 %v1911, 0.0
      %v2030 = vmax.f32 %v1914, 0.0
      %v2031 = vmax.f32 %v1919, 0.0
      %v2032 = vmax.f32 %v1922, 0.0
      %v2033 = vmax.f32 %v1927, 0.0
      %v2034 = vmax.f32 %v1930, 0.0
      %v2035 = vmax.f32 %v1935, 0.0
      %v2036 = vmax.f32 %v1938, 0.0
      %v2037 = vmax.f32 %v1943, 0.0
      %v2038 = vmax.f32 %v1946, 0.0
      %v2039 = vmax.f32 %v1951, 0.0
      %v2040 = vmax.f32 %v1954, 0.0
      %v2041 = vmax.f32 %v1959, 0.0
      %v2042 = vmax.f32 %v1962, 0.0
      %v2043 = vmax.f32 %v1967, 0.0
      %v2044 = vmax.f32 %v1970, 0.0
      %v2045 = vld [vmem:[%s3] sm:$0xff]
      %v2046 = vld [vmem:[%s3 + $0x8] sm:$0xff]
      %v2047 = vld [vmem:[%s3 + $0x10] sm:$0xff]
      %v2048 = vld [vmem:[%s3 + $0x18] sm:$0xff]
      %v2049 = vld [vmem:[%s3 + $0x20] sm:$0xff]
      %v2050 = vld [vmem:[%s3 + $0x28] sm:$0xff]
      %v2051 = vld [vmem:[%s3 + $0x30] sm:$0xff]
      %v2052 = vld [vmem:[%s3 + $0x38] sm:$0xff]
      %v2053 = vld [vmem:[%s3 + $0x40] sm:$0xff]
      %v2054 = vld [vmem:[%s3 + $0x48] sm:$0xff]
      %v2055 = vld [vmem:[%s3 + $0x50] sm:$0xff]
      %v2056 = vld [vmem:[%s3 + $0x58] sm:$0xff]
      %v2057 = vld [vmem:[%s3 + $0x60] sm:$0xff]
      %v2058 = vld [vmem:[%s3 + $0x68] sm:$0xff]
      %v2059 = vld [vmem:[%s3 + $0x70] sm:$0xff]
      %v2060 = vld [vmem:[%s3 + $0x78] sm:$0xff]
      %v2061 = vld [vmem:[%s3 + $0x80] sm:$0xff]
      %v2062 = vld [vmem:[%s3 + $0x88] sm:$0xff]
      %v2063 = vld [vmem:[%s3 + $0x90] sm:$0xff]
      %v2064 = vld [vmem:[%s3 + $0x98] sm:$0xff]
      %v2065 = vld [vmem:[%s3 + $0xa0] sm:$0xff]
      %v2066 = vld [vmem:[%s3 + $0xa8] sm:$0xff]
      %v2067 = vld [vmem:[%s3 + $0xb0] sm:$0xff]
      %v2068 = vld [vmem:[%s3 + $0xb8] sm:$0xff]
      %v2069 = vld [vmem:[%s3 + $0xc0] sm:$0xff]
      %v2070 = vld [vmem:[%s3 + $0xc8] sm:$0xff]
      %v2071 = vld [vmem:[%s3 + $0xd0] sm:$0xff]
      %v2072 = vld [vmem:[%s3 + $0xd8] sm:$0xff]
      %v2073 = vld [vmem:[%s3 + $0xe0] sm:$0xff]
      %v2074 = vld [vmem:[%s3 + $0xe8] sm:$0xff]
      %v2075 = vld [vmem:[%s3 + $0xf0] sm:$0xff]
      %v2076 = vld [vmem:[%s3 + $0xf8] sm:$0xff]
      %v2077 = vld [vmem:[%s3 + $0x100] sm:$0xff]
      %v2078 = vld [vmem:[%s3 + $0x108] sm:$0xff]
      %v2079 = vld [vmem:[%s3 + $0x110] sm:$0xff]
      %v2080 = vld [vmem:[%s3 + $0x118] sm:$0xff]
      %v2081 = vld [vmem:[%s3 + $0x120] sm:$0xff]
      %v2082 = vld [vmem:[%s3 + $0x128] sm:$0xff]
      %v2083 = vld [vmem:[%s3 + $0x130] sm:$0xff]
      %v2084 = vld [vmem:[%s3 + $0x138] sm:$0xff]
      %vm2085 = vcmask 523264
      %v2087 = vsel %vm2085, %v2049, 0
      %v2090 = vsel %vm2085, %v2054, 0
      %v2093 = vsel %vm2085, %v2059, 0
      %v2096 = vsel %vm2085, %v2064, 0
      %v2099 = vsel %vm2085, %v2069, 0
      %v2102 = vsel %vm2085, %v2074, 0
      %v2105 = vsel %vm2085, %v2079, 0
      %v2108 = vsel %vm2085, %v2084, 0
      %2110 = vmatprep.subr.mxu0 0.0
      %2111 = vmatpush1.msra.mxu0 %v1973
      %2112 = vmatprep.subr.mxu0 0.0
      %2113 = vmatpush1.msra.mxu0 %v1974
      %2114 = vmatprep.subr.mxu0 0.0
      %2115 = vmatpush1.msra.mxu0 %v1975
      %2116 = vmatprep.subr.mxu0 0.0
      %2117 = vmatpush1.msra.mxu0 %v1976
      %2118 = vmatprep.subr.mxu0 0.0
      %2119 = vmatpush1.msra.mxu0 %v1977
      %2120 = vmatprep.subr.mxu0 0.0
      %2121 = vmatpush1.msra.mxu0 %v1978
      %2122 = vmatprep.subr.mxu0 0.0
      %2123 = vmatpush1.msra.mxu0 %v1979
      %2124 = vmatprep.subr.mxu0 0.0
      %2125 = vmatpush1.msra.mxu0 %v1980
      %2126 = vmatprep.subr.mxu0 0.0
      %2127 = vmatpush1.msra.mxu0 %v1981
      %2128 = vmatprep.subr.mxu0 0.0
      %2129 = vmatpush1.msra.mxu0 %v1982
      %2130 = vmatprep.subr.mxu0 0.0
      %2131 = vmatpush1.msra.mxu0 %v1983
      %2132 = vmatprep.subr.mxu0 0.0
      %2133 = vmatpush1.msra.mxu0 %v1984
      %2134 = vmatprep.subr.mxu0 0.0
      %2135 = vmatpush1.msra.mxu0 %v1985
      %2136 = vmatprep.subr.mxu0 0.0
      %2137 = vmatpush1.msra.mxu0 %v1986
      %2138 = vmatprep.subr.mxu0 0.0
      %2139 = vmatpush1.msra.mxu0 %v1987
      %2140 = vmatprep.subr.mxu0 0.0
      %2141 = vmatpush1.msra.mxu0 %v1988
      %2142 = vmatprep.subr.mxu0 0.0
      %2143 = vmatpush1.msra.mxu0 %v1989
      %2144 = vmatprep.subr.mxu0 0.0
      %2145 = vmatpush1.msra.mxu0 %v1990
      %2146 = vmatprep.subr.mxu0 0.0
      %2147 = vmatpush1.msra.mxu0 %v1991
      %2148 = vmatprep.subr.mxu0 0.0
      %2149 = vmatpush1.msra.mxu0 %v1992
      %2150 = vmatprep.subr.mxu0 0.0
      %2151 = vmatpush1.msra.mxu0 %v1993
      %2152 = vmatprep.subr.mxu0 0.0
      %2153 = vmatpush1.msra.mxu0 %v1994
      %2154 = vmatprep.subr.mxu0 0.0
      %2155 = vmatpush1.msra.mxu0 %v1995
      %2156 = vmatprep.subr.mxu0 0.0
      %2157 = vmatpush1.msra.mxu0 %v1996
      %2158 = vmatprep.subr.mxu0 0.0
      %2159 = vmatpush1.msra.mxu0 %v1997
      %2160 = vmatprep.subr.mxu0 0.0
      %2161 = vmatpush1.msra.mxu0 %v1998
      %2162 = vmatprep.subr.mxu0 0.0
      %2163 = vmatpush1.msra.mxu0 %v1999
      %2164 = vmatprep.subr.mxu0 0.0
      %2165 = vmatpush1.msra.mxu0 %v2000
      %2166 = vmatprep.subr.mxu0 0.0
      %2167 = vmatpush1.msra.mxu0 %v2001
      %2168 = vmatprep.subr.mxu0 0.0
      %2169 = vmatpush1.msra.mxu0 %v2002
      %2170 = vmatprep.subr.mxu0 0.0
      %2171 = vmatpush1.msra.mxu0 %v2003
      %2172 = vmatprep.subr.mxu0 0.0
      %2173 = vmatpush1.msra.mxu0 %v2004
      %2174 = vmatprep.mubr.f32.mxu0 %v2046
      %2175 = vmatmul.mubr.f32.gmra.mrb[0].mxu0 %v2045
      %v2176 = vpop.f32.mrb[0].mxu0
      %v2177 = vadd.f32 0.0, %v2176
      %v2178 = vpop.f32.mrb[0].mxu0
      %2179 = vmatprep.mubr.f32.mxu0 %v2051
      %2180 = vmatmul.mubr.f32.gmra.mrb[0].mxu0 %v2050
      %v2181 = vpop.f32.mrb[0].mxu0
      %v2182 = vadd.f32 0.0, %v2181
      %v2183 = vpop.f32.mrb[0].mxu0
      %2184 = vmatprep.mubr.f32.mxu0 %v2056
      %2185 = vmatmul.mubr.f32.gmra.mrb[0].mxu0 %v2055
      %v2186 = vpop.f32.mrb[0].mxu0
      %v2187 = vadd.f32 0.0, %v2186
      %v2188 = vpop.f32.mrb[0].mxu0
      %2189 = vmatprep.mubr.f32.mxu0 %v2061
      %2190 = vmatmul.mubr.f32.gmra.mrb[0].mxu0 %v2060
      %v2191 = vpop.f32.mrb[0].mxu0
      %v2192 = vadd.f32 0.0, %v2191
      %v2193 = vpop.f32.mrb[0].mxu0
      %2194 = vmatprep.mubr.f32.mxu0 %v2066
      %2195 = vmatmul.mubr.f32.gmra.mrb[0].mxu0 %v2065
      %v2196 = vpop.f32.mrb[0].mxu0
      %v2197 = vadd.f32 0.0, %v2196
      %v2198 = vpop.f32.mrb[0].mxu0
      %2199 = vmatprep.mubr.f32.mxu0 %v2071
      %2200 = vmatmul.mubr.f32.gmra.mrb[0].mxu0 %v2070
      %v2201 = vpop.f32.mrb[0].mxu0
      %v2202 = vadd.f32 0.0, %v2201
      %v2203 = vpop.f32.mrb[0].mxu0
      %2204 = vmatprep.mubr.f32.mxu0 %v2076
      %2205 = vmatmul.mubr.f32.gmra.mrb[0].mxu0 %v2075
      %v2206 = vpop.f32.mrb[0].mxu0
      %v2207 = vadd.f32 0.0, %v2206
      %v2208 = vpop.f32.mrb[0].mxu0
      %2209 = vmatprep.mubr.f32.mxu0 %v2081
      %2210 = vmatmul.mubr.f32.gmra.mrb[0].mxu0 %v2080
      %v2211 = vpop.f32.mrb[0].mxu0
      %v2212 = vadd.f32 0.0, %v2211
      %v2213 = vpop.f32.mrb[0].mxu0
      %2214 = vdwg.mxu0
      %2215 = vmatprep.subr.mxu0 0.0
      %2216 = vmatpush1.msra.mxu0 %v2005
      %2217 = vmatprep.subr.mxu0 0.0
      %2218 = vmatpush1.msra.mxu0 %v2006
      %2219 = vmatprep.subr.mxu0 0.0
      %2220 = vmatpush1.msra.mxu0 %v2007
      %2221 = vmatprep.subr.mxu0 0.0
      %2222 = vmatpush1.msra.mxu0 %v2008
      %2223 = vmatprep.subr.mxu0 0.0
      %2224 = vmatpush1.msra.mxu0 %v2009
      %2225 = vmatprep.subr.mxu0 0.0
      %2226 = vmatpush1.msra.mxu0 %v2010
      %2227 = vmatprep.subr.mxu0 0.0
      %2228 = vmatpush1.msra.mxu0 %v2011
      %2229 = vmatprep.subr.mxu0 0.0
      %2230 = vmatpush1.msra.mxu0 %v2012
      %2231 = vmatprep.subr.mxu0 0.0
      %2232 = vmatpush1.msra.mxu0 %v2013
      %2233 = vmatprep.subr.mxu0 0.0
      %2234 = vmatpush1.msra.mxu0 %v2014
      %2235 = vmatprep.subr.mxu0 0.0
      %2236 = vmatpush1.msra.mxu0 %v2015
      %2237 = vmatprep.subr.mxu0 0.0
      %2238 = vmatpush1.msra.mxu0 %v2016
      %2239 = vmatprep.subr.mxu0 0.0
      %2240 = vmatpush1.msra.mxu0 %v2017
      %2241 = vmatprep.subr.mxu0 0.0
      %2242 = vmatpush1.msra.mxu0 %v2018
      %2243 = vmatprep.subr.mxu0 0.0
      %2244 = vmatpush1.msra.mxu0 %v2019
      %2245 = vmatprep.subr.mxu0 0.0
      %2246 = vmatpush1.msra.mxu0 %v2020
      %2247 = vmatprep.subr.mxu0 0.0
      %2248 = vmatpush1.msra.mxu0 %v2021
      %2249 = vmatprep.subr.mxu0 0.0
      %2250 = vmatpush1.msra.mxu0 %v2022
      %2251 = vmatprep.subr.mxu0 0.0
      %2252 = vmatpush1.msra.mxu0 %v2023
      %2253 = vmatprep.subr.mxu0 0.0
      %2254 = vmatpush1.msra.mxu0 %v2024
      %2255 = vmatprep.subr.mxu0 0.0
      %2256 = vmatpush1.msra.mxu0 %v2025
      %2257 = vmatprep.subr.mxu0 0.0
      %2258 = vmatpush1.msra.mxu0 %v2026
      %2259 = vmatprep.subr.mxu0 0.0
      %2260 = vmatpush1.msra.mxu0 %v2027
      %2261 = vmatprep.subr.mxu0 0.0
      %2262 = vmatpush1.msra.mxu0 %v2028
      %2263 = vmatprep.subr.mxu0 0.0
      %2264 = vmatpush1.msra.mxu0 %v2029
      %2265 = vmatprep.subr.mxu0 0.0
      %2266 = vmatpush1.msra.mxu0 %v2030
      %2267 = vmatprep.subr.mxu0 0.0
      %2268 = vmatpush1.msra.mxu0 %v2031
      %2269 = vmatprep.subr.mxu0 0.0
      %2270 = vmatpush1.msra.mxu0 %v2032
      %2271 = vmatprep.subr.mxu0 0.0
      %2272 = vmatpush1.msra.mxu0 %v2033
      %2273 = vmatprep.subr.mxu0 0.0
      %2274 = vmatpush1.msra.mxu0 %v2034
      %2275 = vmatprep.subr.mxu0 0.0
      %2276 = vmatpush1.msra.mxu0 %v2035
      %2277 = vmatprep.subr.mxu0 0.0
      %2278 = vmatpush1.msra.mxu0 %v2036
      %2279 = vmatprep.mubr.f32.mxu0 %v2048
      %2280 = vmatmul.mubr.f32.gmra.mrb[0].mxu0 %v2047
      %v2281 = vpop.f32.mrb[0].mxu0
      %v2282 = vadd.f32 %v2177, %v2281
      %v2283 = vpop.f32.mrb[0].mxu0
      %2284 = vmatprep.mubr.f32.mxu0 %v2053
      %2285 = vmatmul.mubr.f32.gmra.mrb[0].mxu0 %v2052
      %v2286 = vpop.f32.mrb[0].mxu0
      %v2287 = vadd.f32 %v2182, %v2286
      %v2288 = vpop.f32.mrb[0].mxu0
      %2289 = vmatprep.mubr.f32.mxu0 %v2058
      %2290 = vmatmul.mubr.f32.gmra.mrb[0].mxu0 %v2057
      %v2291 = vpop.f32.mrb[0].mxu0
      %v2292 = vadd.f32 %v2187, %v2291
      %v2293 = vpop.f32.mrb[0].mxu0
      %2294 = vmatprep.mubr.f32.mxu0 %v2063
      %2295 = vmatmul.mubr.f32.gmra.mrb[0].mxu0 %v2062
      %v2296 = vpop.f32.mrb[0].mxu0
      %v2297 = vadd.f32 %v2192, %v2296
      %v2298 = vpop.f32.mrb[0].mxu0
      %2299 = vmatprep.mubr.f32.mxu0 %v2068
      %2300 = vmatmul.mubr.f32.gmra.mrb[0].mxu0 %v2067
      %v2301 = vpop.f32.mrb[0].mxu0
      %v2302 = vadd.f32 %v2197, %v2301
      %v2303 = vpop.f32.mrb[0].mxu0
      %2304 = vmatprep.mubr.f32.mxu0 %v2073
      %2305 = vmatmul.mubr.f32.gmra.mrb[0].mxu0 %v2072
      %v2306 = vpop.f32.mrb[0].mxu0
      %v2307 = vadd.f32 %v2202, %v2306
      %v2308 = vpop.f32.mrb[0].mxu0
      %2309 = vmatprep.mubr.f32.mxu0 %v2078
      %2310 = vmatmul.mubr.f32.gmra.mrb[0].mxu0 %v2077
      %v2311 = vpop.f32.mrb[0].mxu0
      %v2312 = vadd.f32 %v2207, %v2311
      %v2313 = vpop.f32.mrb[0].mxu0
      %2314 = vmatprep.mubr.f32.mxu0 %v2083
      %2315 = vmatmul.mubr.f32.gmra.mrb[0].mxu0 %v2082
      %v2316 = vpop.f32.mrb[0].mxu0
      %v2317 = vadd.f32 %v2212, %v2316
      %v2318 = vpop.f32.mrb[0].mxu0
      %2319 = vdwg.mxu0
      %2320 = vmatprep.subr.mxu0 0.0
      %2321 = vmatpush1.msra.mxu0 %v2037
      %2322 = vmatprep.subr.mxu0 0.0
      %2323 = vmatpush1.msra.mxu0 %v2038
      %2324 = vmatprep.subr.mxu0 0.0
      %2325 = vmatpush1.msra.mxu0 %v2039
      %2326 = vmatprep.subr.mxu0 0.0
      %2327 = vmatpush1.msra.mxu0 %v2040
      %2328 = vmatprep.subr.mxu0 0.0
      %2329 = vmatpush1.msra.mxu0 %v2041
      %2330 = vmatprep.subr.mxu0 0.0
      %2331 = vmatpush1.msra.mxu0 %v2042
      %2332 = vmatprep.subr.mxu0 0.0
      %2333 = vmatpush1.msra.mxu0 %v2043
      %2334 = vmatprep.subr.mxu0 0.0
      %2335 = vmatpush1.msra.mxu0 %v2044
      %2336 = vmatprep.subr.mxu0 0.0
      %2337 = vmatpush1.msra.mxu0 0.0
      %2338 = vmatprep.subr.mxu0 0.0
      %2339 = vmatpush1.msra.mxu0 0.0
      %2340 = vmatprep.subr.mxu0 0.0
      %2341 = vmatpush1.msra.mxu0 0.0
      %2342 = vmatprep.subr.mxu0 0.0
      %2343 = vmatpush1.msra.mxu0 0.0
      %2344 = vmatprep.subr.mxu0 0.0
      %2345 = vmatpush1.msra.mxu0 0.0
      %2346 = vmatprep.subr.mxu0 0.0
      %2347 = vmatpush1.msra.mxu0 0.0
      %2348 = vmatprep.subr.mxu0 0.0
      %2349 = vmatpush1.msra.mxu0 0.0
      %2350 = vmatprep.subr.mxu0 0.0
      %2351 = vmatpush1.msra.mxu0 0.0
      %2352 = vmatprep.subr.mxu0 0.0
      %2353 = vmatpush1.msra.mxu0 0.0
      %2354 = vmatprep.subr.mxu0 0.0
      %2355 = vmatpush1.msra.mxu0 0.0
      %2356 = vmatprep.subr.mxu0 0.0
      %2357 = vmatpush1.msra.mxu0 0.0
      %2358 = vmatprep.subr.mxu0 0.0
      %2359 = vmatpush1.msra.mxu0 0.0
      %2360 = vmatprep.subr.mxu0 0.0
      %2361 = vmatpush1.msra.mxu0 0.0
      %2362 = vmatprep.subr.mxu0 0.0
      %2363 = vmatpush1.msra.mxu0 0.0
      %2364 = vmatprep.subr.mxu0 0.0
      %2365 = vmatpush1.msra.mxu0 0.0
      %2366 = vmatprep.subr.mxu0 0.0
      %2367 = vmatpush1.msra.mxu0 0.0
      %2368 = vmatprep.subr.mxu0 0.0
      %2369 = vmatpush1.msra.mxu0 0.0
      %2370 = vmatprep.subr.mxu0 0.0
      %2371 = vmatpush1.msra.mxu0 0.0
      %2372 = vmatprep.subr.mxu0 0.0
      %2373 = vmatpush1.msra.mxu0 0.0
      %2374 = vmatprep.subr.mxu0 0.0
      %2375 = vmatpush1.msra.mxu0 0.0
      %2376 = vmatprep.subr.mxu0 0.0
      %2377 = vmatpush1.msra.mxu0 0.0
      %2378 = vmatprep.subr.mxu0 0.0
      %2379 = vmatpush1.msra.mxu0 0.0
      %2380 = vmatprep.subr.mxu0 0.0
      %2381 = vmatpush1.msra.mxu0 0.0
      %2382 = vmatprep.subr.mxu0 0.0
      %2383 = vmatpush1.msra.mxu0 0.0
      %2384 = vmatprep.mubr.f32.mxu0 0.0
      %2385 = vmatmul.mubr.f32.gmra.mrb[0].mxu0 %v2087
      %v2386 = vpop.f32.mrb[0].mxu0
      %v2387 = vadd.f32 %v2282, %v2386
      %v2388 = vpop.f32.mrb[0].mxu0
      %2389 = vmatprep.mubr.f32.mxu0 0.0
      %2390 = vmatmul.mubr.f32.gmra.mrb[0].mxu0 %v2090
      %v2391 = vpop.f32.mrb[0].mxu0
      %v2392 = vadd.f32 %v2287, %v2391
      %v2393 = vpop.f32.mrb[0].mxu0
      %2394 = vmatprep.mubr.f32.mxu0 0.0
      %2395 = vmatmul.mubr.f32.gmra.mrb[0].mxu0 %v2093
      %v2396 = vpop.f32.mrb[0].mxu0
      %v2397 = vadd.f32 %v2292, %v2396
      %v2398 = vpop.f32.mrb[0].mxu0
      %2399 = vmatprep.mubr.f32.mxu0 0.0
      %2400 = vmatmul.mubr.f32.gmra.mrb[0].mxu0 %v2096
      %v2401 = vpop.f32.mrb[0].mxu0
      %v2402 = vadd.f32 %v2297, %v2401
      %v2403 = vpop.f32.mrb[0].mxu0
      %2404 = vmatprep.mubr.f32.mxu0 0.0
      %2405 = vmatmul.mubr.f32.gmra.mrb[0].mxu0 %v2099
      %v2406 = vpop.f32.mrb[0].mxu0
      %v2407 = vadd.f32 %v2302, %v2406
      %v2408 = vpop.f32.mrb[0].mxu0
      %2409 = vmatprep.mubr.f32.mxu0 0.0
      %2410 = vmatmul.mubr.f32.gmra.mrb[0].mxu0 %v2102
      %v2411 = vpop.f32.mrb[0].mxu0
      %v2412 = vadd.f32 %v2307, %v2411
      %v2413 = vpop.f32.mrb[0].mxu0
      %2414 = vmatprep.mubr.f32.mxu0 0.0
      %2415 = vmatmul.mubr.f32.gmra.mrb[0].mxu0 %v2105
      %v2416 = vpop.f32.mrb[0].mxu0
      %v2417 = vadd.f32 %v2312, %v2416
      %v2418 = vpop.f32.mrb[0].mxu0
      %2419 = vmatprep.mubr.f32.mxu0 0.0
      %2420 = vmatmul.mubr.f32.gmra.mrb[0].mxu0 %v2108
      %v2421 = vpop.f32.mrb[0].mxu0
      %v2422 = vadd.f32 %v2317, %v2421
      %v2423 = vpop.f32.mrb[0].mxu0
      %2424 = vdwg.mxu0
      %2425 = vst.msk [vmem:[%s202] sm:$0xff] %vm2085, %v2387
      %2426 = vst.msk [vmem:[%s202 + $0x8] sm:$0xff] %vm2085, %v2392
      %2427 = vst.msk [vmem:[%s202 + $0x10] sm:$0xff] %vm2085, %v2397
      %2428 = vst.msk [vmem:[%s202 + $0x18] sm:$0xff] %vm2085, %v2402
      %2429 = vst.msk [vmem:[%s202 + $0x20] sm:$0xff] %vm2085, %v2407
      %2430 = vst.msk [vmem:[%s202 + $0x28] sm:$0xff] %vm2085, %v2412
      %2431 = vst.msk [vmem:[%s202 + $0x30] sm:$0xff] %vm2085, %v2417
      %2432 = vst.msk [vmem:[%s202 + $0x38] sm:$0xff] %vm2085, %v2422
      %p2433 = scmp.lt.s32.totalorder %s15, 1
      %s2434 = scalar_select %p2433, %s15, 1
      %s2435 = smul.addr %s2434, 8
      %s2436 = smul.addr %s2435, 8
      %s2437 = scalar_lea.vmem %s4, %s2436
      // Predicated region
      $region37: #{vae_encoder_forward.4} parent=35 // pred_check
        %p2438 = pneg %p122
      $region38: #{vae_encoder_forward.4} parent=35 // pred_check_branch
        %2440 = sbr.rel (%p2438) target = $region40
      $region39: #{vae_encoder_forward.4} parent=35 // pred_region
        _
      $region40: #{vae_encoder_forward.4} parent=35 // pred_fallthru
        _
    $region36: #{vae_encoder_forward.4} parent=5 // pred_fallthru
      _
    %p2441 = scmp.le.s32.totalorder 2, %s10
    // Predicated region
    $region41: #{vae_encoder_forward.4} parent=5 // pred_check
      %p2442 = pneg %p2441
    $region42: #{vae_encoder_forward.4} parent=5 // pred_check_branch
      %2444 = sbr.rel (%p2442) target = $region44
    $region43: #{vae_encoder_forward.4} parent=5 // pred_region
      %s2445 = ssub.s32 %s10, 2
      // Predicated region
      $region45: #{vae_encoder_forward.4} parent=43 // pred_check
        %p2446 = pneg %p128
      $region46: #{vae_encoder_forward.4} parent=43 // pred_check_branch
        %2448 = sbr.rel (%p2446) target = $region48
      $region47: #{vae_encoder_forward.4} parent=43 // pred_region
        %p2449 = scmp.lt.s32.totalorder %s16, 1
        %s2450 = scalar_select %p2449, %s16, 1
        %s2451 = smul.addr %s2450, 8
        %s2452 = smul.addr %s2451, 8
        %s2453 = scalar_lea.vmem %s4, %s2452
      $region48: #{vae_encoder_forward.4} parent=43 // pred_fallthru
        _
    $region44: #{vae_encoder_forward.4} parent=5 // pred_fallthru
      _
  $region6: #{vae_encoder_forward.4} parent=0 // loop_footer
    %s14 = sadd.s32 1, %s10
  $region7: #{vae_encoder_forward.4} parent=0 // loop_footer_branch
    %9 = sbr.rel target = $region3
  $region8: #{vae_encoder_forward.4} parent=0 // loop_exit
    _

// kernel: vae_encoder_forward.5
$region0: #{vae_encoder_forward.5}
  #allocation0 [shape = 'u32[]', space=smem, size = 0x4, offset = 0x4, fixed_abs, tag = 'smem constant byte address 0x4 - core index']
  #allocation1 [shape = 'u32[144,128]{1,0:T(1,128)}', space=vmem, size = 0x12000, scoped, tag = 'internal scratch']
  %s0 = inlined_call_operand.vmem [shape: bf16[2,4096], index: 0, kind: input, shape index: {}]
  %s1 = inlined_call_operand.vmem [shape: bf16[4096,64], index: 1, kind: input, shape index: {}]
  %s2 = inlined_call_operand.vmem [shape: f32[1,64], index: 2, kind: input, shape index: {}]
  %s3 = inlined_call_operand.vmem [shape: f32[2,64], index: 3, kind: output, shape index: {}]
  %s4 = sld [smem:[#allocation0]]
  $region22: #{vae_encoder_forward.5} parent=0
    _
  %s6 = ssub.s32 1, %s4
  %s7 = scalar_select 0, %s6, %s4
  // Predicated region
  $region2: #{vae_encoder_forward.5} parent=0 // pred_check
    _
  $region3: #{vae_encoder_forward.5} parent=0 // pred_check_branch
    %9 = sbr.rel (0) target = $region5
  $region4: #{vae_encoder_forward.5} parent=0 // pred_region
    _
  $region5: #{vae_encoder_forward.5} parent=0 // pred_fallthru
    _
  // Predicated region
  $region6: #{vae_encoder_forward.5} parent=0 // pred_check
    _
  $region7: #{vae_encoder_forward.5} parent=0 // pred_check_branch
    %11 = sbr.rel (0) target = $region9
  $region8: #{vae_encoder_forward.5} parent=0 // pred_region
    _
  $region9: #{vae_encoder_forward.5} parent=0 // pred_fallthru
    _
  // Predicated region
  $region10: #{vae_encoder_forward.5} parent=0 // pred_check
    _
  $region11: #{vae_encoder_forward.5} parent=0 // pred_check_branch
    %13 = sbr.rel (0) target = $region13
  $region12: #{vae_encoder_forward.5} parent=0 // pred_region
    _
  $region13: #{vae_encoder_forward.5} parent=0 // pred_fallthru
    _
  %v15 = vld [vmem:[%s0] sm:$0xff]
  %v16 = vld [vmem:[%s0 + $0x8] sm:$0xff]
  %v17 = vld [vmem:[%s0 + $0x10] sm:$0xff]
  %v18 = vld [vmem:[%s0 + $0x18] sm:$0xff]
  %v19 = vld [vmem:[%s1] sm:$0xf]
  %v20 = vld [vmem:[%s1 + $0x4] sm:$0xf]
  %v21 = vld [vmem:[%s1 + $0x8] sm:$0xf]
  %v22 = vld [vmem:[%s1 + $0xc] sm:$0xf]
  %v23 = vld [vmem:[%s1 + $0x10] sm:$0xf]
  %v24 = vld [vmem:[%s1 + $0x14] sm:$0xf]
  %v25 = vld [vmem:[%s1 + $0x18] sm:$0xf]
  %v26 = vld [vmem:[%s1 + $0x1c] sm:$0xf]
  %v27 = vld [vmem:[%s1 + $0x20] sm:$0xf]
  %v28 = vld [vmem:[%s1 + $0x24] sm:$0xf]
  %v29 = vld [vmem:[%s1 + $0x28] sm:$0xf]
  %v30 = vld [vmem:[%s1 + $0x2c] sm:$0xf]
  %v31 = vld [vmem:[%s1 + $0x30] sm:$0xf]
  %v32 = vld [vmem:[%s1 + $0x34] sm:$0xf]
  %v33 = vld [vmem:[%s1 + $0x38] sm:$0xf]
  %v34 = vld [vmem:[%s1 + $0x3c] sm:$0xf]
  %v35 = vld [vmem:[%s1 + $0x40] sm:$0xf]
  %v36 = vld [vmem:[%s1 + $0x44] sm:$0xf]
  %v37 = vld [vmem:[%s1 + $0x48] sm:$0xf]
  %v38 = vld [vmem:[%s1 + $0x4c] sm:$0xf]
  %v39 = vld [vmem:[%s1 + $0x50] sm:$0xf]
  %v40 = vld [vmem:[%s1 + $0x54] sm:$0xf]
  %v41 = vld [vmem:[%s1 + $0x58] sm:$0xf]
  %v42 = vld [vmem:[%s1 + $0x5c] sm:$0xf]
  %v43 = vld [vmem:[%s1 + $0x60] sm:$0xf]
  %v44 = vld [vmem:[%s1 + $0x64] sm:$0xf]
  %v45 = vld [vmem:[%s1 + $0x68] sm:$0xf]
  %v46 = vld [vmem:[%s1 + $0x6c] sm:$0xf]
  %v47 = vld [vmem:[%s1 + $0x70] sm:$0xf]
  %v48 = vld [vmem:[%s1 + $0x74] sm:$0xf]
  %v49 = vld [vmem:[%s1 + $0x78] sm:$0xf]
  %v50 = vld [vmem:[%s1 + $0x7c] sm:$0xf]
  %v51 = vld [vmem:[%s1 + $0x80] sm:$0xf]
  %v52 = vld [vmem:[%s1 + $0x84] sm:$0xf]
  %v53 = vld [vmem:[%s1 + $0x88] sm:$0xf]
  %v54 = vld [vmem:[%s1 + $0x8c] sm:$0xf]
  %v55 = vld [vmem:[%s1 + $0x90] sm:$0xf]
  %v56 = vld [vmem:[%s1 + $0x94] sm:$0xf]
  %v57 = vld [vmem:[%s1 + $0x98] sm:$0xf]
  %v58 = vld [vmem:[%s1 + $0x9c] sm:$0xf]
  %v59 = vld [vmem:[%s1 + $0xa0] sm:$0xf]
  %v60 = vld [vmem:[%s1 + $0xa4] sm:$0xf]
  %v61 = vld [vmem:[%s1 + $0xa8] sm:$0xf]
  %v62 = vld [vmem:[%s1 + $0xac] sm:$0xf]
  %v63 = vld [vmem:[%s1 + $0xb0] sm:$0xf]
  %v64 = vld [vmem:[%s1 + $0xb4] sm:$0xf]
  %v65 = vld [vmem:[%s1 + $0xb8] sm:$0xf]
  %v66 = vld [vmem:[%s1 + $0xbc] sm:$0xf]
  %v67 = vld [vmem:[%s1 + $0xc0] sm:$0xf]
  %v68 = vld [vmem:[%s1 + $0xc4] sm:$0xf]
  %v69 = vld [vmem:[%s1 + $0xc8] sm:$0xf]
  %v70 = vld [vmem:[%s1 + $0xcc] sm:$0xf]
  %v71 = vld [vmem:[%s1 + $0xd0] sm:$0xf]
  %v72 = vld [vmem:[%s1 + $0xd4] sm:$0xf]
  %v73 = vld [vmem:[%s1 + $0xd8] sm:$0xf]
  %v74 = vld [vmem:[%s1 + $0xdc] sm:$0xf]
  %v75 = vld [vmem:[%s1 + $0xe0] sm:$0xf]
  %v76 = vld [vmem:[%s1 + $0xe4] sm:$0xf]
  %v77 = vld [vmem:[%s1 + $0xe8] sm:$0xf]
  %v78 = vld [vmem:[%s1 + $0xec] sm:$0xf]
  %v79 = vld [vmem:[%s1 + $0xf0] sm:$0xf]
  %v80 = vld [vmem:[%s1 + $0xf4] sm:$0xf]
  %v81 = vld [vmem:[%s1 + $0xf8] sm:$0xf]
  %v82 = vld [vmem:[%s1 + $0xfc] sm:$0xf]
  %v83 = vld [vmem:[%s1 + $0x100] sm:$0xf]
  %v84 = vld [vmem:[%s1 + $0x104] sm:$0xf]
  %v85 = vld [vmem:[%s1 + $0x108] sm:$0xf]
  %v86 = vld [vmem:[%s1 + $0x10c] sm:$0xf]
  %v87 = vld [vmem:[%s1 + $0x110] sm:$0xf]
  %v88 = vld [vmem:[%s1 + $0x114] sm:$0xf]
  %v89 = vld [vmem:[%s1 + $0x118] sm:$0xf]
  %v90 = vld [vmem:[%s1 + $0x11c] sm:$0xf]
  %v91 = vld [vmem:[%s1 + $0x120] sm:$0xf]
  %v92 = vld [vmem:[%s1 + $0x124] sm:$0xf]
  %v93 = vld [vmem:[%s1 + $0x128] sm:$0xf]
  %v94 = vld [vmem:[%s1 + $0x12c] sm:$0xf]
  %v95 = vld [vmem:[%s1 + $0x130] sm:$0xf]
  %v96 = vld [vmem:[%s1 + $0x134] sm:$0xf]
  %v97 = vld [vmem:[%s1 + $0x138] sm:$0xf]
  %v98 = vld [vmem:[%s1 + $0x13c] sm:$0xf]
  %v99 = vld [vmem:[%s1 + $0x140] sm:$0xf]
  %v100 = vld [vmem:[%s1 + $0x144] sm:$0xf]
  %v101 = vld [vmem:[%s1 + $0x148] sm:$0xf]
  %v102 = vld [vmem:[%s1 + $0x14c] sm:$0xf]
  %v103 = vld [vmem:[%s1 + $0x150] sm:$0xf]
  %v104 = vld [vmem:[%s1 + $0x154] sm:$0xf]
  %v105 = vld [vmem:[%s1 + $0x158] sm:$0xf]
  %v106 = vld [vmem:[%s1 + $0x15c] sm:$0xf]
  %v107 = vld [vmem:[%s1 + $0x160] sm:$0xf]
  %v108 = vld [vmem:[%s1 + $0x164] sm:$0xf]
  %v109 = vld [vmem:[%s1 + $0x168] sm:$0xf]
  %v110 = vld [vmem:[%s1 + $0x16c] sm:$0xf]
  %v111 = vld [vmem:[%s1 + $0x170] sm:$0xf]
  %v112 = vld [vmem:[%s1 + $0x174] sm:$0xf]
  %v113 = vld [vmem:[%s1 + $0x178] sm:$0xf]
  %v114 = vld [vmem:[%s1 + $0x17c] sm:$0xf]
  %v115 = vld [vmem:[%s1 + $0x180] sm:$0xf]
  %v116 = vld [vmem:[%s1 + $0x184] sm:$0xf]
  %v117 = vld [vmem:[%s1 + $0x188] sm:$0xf]
  %v118 = vld [vmem:[%s1 + $0x18c] sm:$0xf]
  %v119 = vld [vmem:[%s1 + $0x190] sm:$0xf]
  %v120 = vld [vmem:[%s1 + $0x194] sm:$0xf]
  %v121 = vld [vmem:[%s1 + $0x198] sm:$0xf]
  %v122 = vld [vmem:[%s1 + $0x19c] sm:$0xf]
  %v123 = vld [vmem:[%s1 + $0x1a0] sm:$0xf]
  %v124 = vld [vmem:[%s1 + $0x1a4] sm:$0xf]
  %v125 = vld [vmem:[%s1 + $0x1a8] sm:$0xf]
  %v126 = vld [vmem:[%s1 + $0x1ac] sm:$0xf]
  %v127 = vld [vmem:[%s1 + $0x1b0] sm:$0xf]
  %v128 = vld [vmem:[%s1 + $0x1b4] sm:$0xf]
  %v129 = vld [vmem:[%s1 + $0x1b8] sm:$0xf]
  %v130 = vld [vmem:[%s1 + $0x1bc] sm:$0xf]
  %v131 = vld [vmem:[%s1 + $0x1c0] sm:$0xf]
  %v132 = vld [vmem:[%s1 + $0x1c4] sm:$0xf]
  %v133 = vld [vmem:[%s1 + $0x1c8] sm:$0xf]
  %v134 = vld [vmem:[%s1 + $0x1cc] sm:$0xf]
  %v135 = vld [vmem:[%s1 + $0x1d0] sm:$0xf]
  %v136 = vld [vmem:[%s1 + $0x1d4] sm:$0xf]
  %v137 = vld [vmem:[%s1 + $0x1d8] sm:$0xf]
  %v138 = vld [vmem:[%s1 + $0x1dc] sm:$0xf]
  %v139 = vld [vmem:[%s1 + $0x1e0] sm:$0xf]
  %v140 = vld [vmem:[%s1 + $0x1e4] sm:$0xf]
  %v141 = vld [vmem:[%s1 + $0x1e8] sm:$0xf]
  %v142 = vld [vmem:[%s1 + $0x1ec] sm:$0xf]
  %v143 = vld [vmem:[%s1 + $0x1f0] sm:$0xf]
  %v144 = vld [vmem:[%s1 + $0x1f4] sm:$0xf]
  %v145 = vld [vmem:[%s1 + $0x1f8] sm:$0xf]
  %v146 = vld [vmem:[%s1 + $0x1fc] sm:$0xf]
  %v147 = vld [vmem:[%s1 + $0x200] sm:$0xf]
  %v148 = vld [vmem:[%s1 + $0x204] sm:$0xf]
  %v149 = vld [vmem:[%s1 + $0x208] sm:$0xf]
  %v150 = vld [vmem:[%s1 + $0x20c] sm:$0xf]
  %v151 = vld [vmem:[%s1 + $0x210] sm:$0xf]
  %v152 = vld [vmem:[%s1 + $0x214] sm:$0xf]
  %v153 = vld [vmem:[%s1 + $0x218] sm:$0xf]
  %v154 = vld [vmem:[%s1 + $0x21c] sm:$0xf]
  %v155 = vld [vmem:[%s1 + $0x220] sm:$0xf]
  %v156 = vld [vmem:[%s1 + $0x224] sm:$0xf]
  %v157 = vld [vmem:[%s1 + $0x228] sm:$0xf]
  %v158 = vld [vmem:[%s1 + $0x22c] sm:$0xf]
  %v159 = vld [vmem:[%s1 + $0x230] sm:$0xf]
  %v160 = vld [vmem:[%s1 + $0x234] sm:$0xf]
  %v161 = vld [vmem:[%s1 + $0x238] sm:$0xf]
  %v162 = vld [vmem:[%s1 + $0x23c] sm:$0xf]
  %v163 = vld [vmem:[%s1 + $0x240] sm:$0xf]
  %v164 = vld [vmem:[%s1 + $0x244] sm:$0xf]
  %v165 = vld [vmem:[%s1 + $0x248] sm:$0xf]
  %v166 = vld [vmem:[%s1 + $0x24c] sm:$0xf]
  %v167 = vld [vmem:[%s1 + $0x250] sm:$0xf]
  %v168 = vld [vmem:[%s1 + $0x254] sm:$0xf]
  %v169 = vld [vmem:[%s1 + $0x258] sm:$0xf]
  %v170 = vld [vmem:[%s1 + $0x25c] sm:$0xf]
  %v171 = vld [vmem:[%s1 + $0x260] sm:$0xf]
  %v172 = vld [vmem:[%s1 + $0x264] sm:$0xf]
  %v173 = vld [vmem:[%s1 + $0x268] sm:$0xf]
  %v174 = vld [vmem:[%s1 + $0x26c] sm:$0xf]
  %v175 = vld [vmem:[%s1 + $0x270] sm:$0xf]
  %v176 = vld [vmem:[%s1 + $0x274] sm:$0xf]
  %v177 = vld [vmem:[%s1 + $0x278] sm:$0xf]
  %v178 = vld [vmem:[%s1 + $0x27c] sm:$0xf]
  %v179 = vld [vmem:[%s1 + $0x280] sm:$0xf]
  %v180 = vld [vmem:[%s1 + $0x284] sm:$0xf]
  %v181 = vld [vmem:[%s1 + $0x288] sm:$0xf]
  %v182 = vld [vmem:[%s1 + $0x28c] sm:$0xf]
  %v183 = vld [vmem:[%s1 + $0x290] sm:$0xf]
  %v184 = vld [vmem:[%s1 + $0x294] sm:$0xf]
  %v185 = vld [vmem:[%s1 + $0x298] sm:$0xf]
  %v186 = vld [vmem:[%s1 + $0x29c] sm:$0xf]
  %v187 = vld [vmem:[%s1 + $0x2a0] sm:$0xf]
  %v188 = vld [vmem:[%s1 + $0x2a4] sm:$0xf]
  %v189 = vld [vmem:[%s1 + $0x2a8] sm:$0xf]
  %v190 = vld [vmem:[%s1 + $0x2ac] sm:$0xf]
  %v191 = vld [vmem:[%s1 + $0x2b0] sm:$0xf]
  %v192 = vld [vmem:[%s1 + $0x2b4] sm:$0xf]
  %v193 = vld [vmem:[%s1 + $0x2b8] sm:$0xf]
  %v194 = vld [vmem:[%s1 + $0x2bc] sm:$0xf]
  %v195 = vld [vmem:[%s1 + $0x2c0] sm:$0xf]
  %v196 = vld [vmem:[%s1 + $0x2c4] sm:$0xf]
  %v197 = vld [vmem:[%s1 + $0x2c8] sm:$0xf]
  %v198 = vld [vmem:[%s1 + $0x2cc] sm:$0xf]
  %v199 = vld [vmem:[%s1 + $0x2d0] sm:$0xf]
  %v200 = vld [vmem:[%s1 + $0x2d4] sm:$0xf]
  %v201 = vld [vmem:[%s1 + $0x2d8] sm:$0xf]
  %v202 = vld [vmem:[%s1 + $0x2dc] sm:$0xf]
  %v203 = vld [vmem:[%s1 + $0x2e0] sm:$0xf]
  %v204 = vld [vmem:[%s1 + $0x2e4] sm:$0xf]
  %v205 = vld [vmem:[%s1 + $0x2e8] sm:$0xf]
  %v206 = vld [vmem:[%s1 + $0x2ec] sm:$0xf]
  %v207 = vld [vmem:[%s1 + $0x2f0] sm:$0xf]
  %v208 = vld [vmem:[%s1 + $0x2f4] sm:$0xf]
  %v209 = vld [vmem:[%s1 + $0x2f8] sm:$0xf]
  %v210 = vld [vmem:[%s1 + $0x2fc] sm:$0xf]
  %v211 = vld [vmem:[%s1 + $0x300] sm:$0xf]
  %v212 = vld [vmem:[%s1 + $0x304] sm:$0xf]
  %v213 = vld [vmem:[%s1 + $0x308] sm:$0xf]
  %v214 = vld [vmem:[%s1 + $0x30c] sm:$0xf]
  %v215 = vld [vmem:[%s1 + $0x310] sm:$0xf]
  %v216 = vld [vmem:[%s1 + $0x314] sm:$0xf]
  %v217 = vld [vmem:[%s1 + $0x318] sm:$0xf]
  %v218 = vld [vmem:[%s1 + $0x31c] sm:$0xf]
  %v219 = vld [vmem:[%s1 + $0x320] sm:$0xf]
  %v220 = vld [vmem:[%s1 + $0x324] sm:$0xf]
  %v221 = vld [vmem:[%s1 + $0x328] sm:$0xf]
  %v222 = vld [vmem:[%s1 + $0x32c] sm:$0xf]
  %v223 = vld [vmem:[%s1 + $0x330] sm:$0xf]
  %v224 = vld [vmem:[%s1 + $0x334] sm:$0xf]
  %v225 = vld [vmem:[%s1 + $0x338] sm:$0xf]
  %v226 = vld [vmem:[%s1 + $0x33c] sm:$0xf]
  %v227 = vld [vmem:[%s1 + $0x340] sm:$0xf]
  %v228 = vld [vmem:[%s1 + $0x344] sm:$0xf]
  %v229 = vld [vmem:[%s1 + $0x348] sm:$0xf]
  %v230 = vld [vmem:[%s1 + $0x34c] sm:$0xf]
  %v231 = vld [vmem:[%s1 + $0x350] sm:$0xf]
  %v232 = vld [vmem:[%s1 + $0x354] sm:$0xf]
  %v233 = vld [vmem:[%s1 + $0x358] sm:$0xf]
  %v234 = vld [vmem:[%s1 + $0x35c] sm:$0xf]
  %v235 = vld [vmem:[%s1 + $0x360] sm:$0xf]
  %v236 = vld [vmem:[%s1 + $0x364] sm:$0xf]
  %v237 = vld [vmem:[%s1 + $0x368] sm:$0xf]
  %v238 = vld [vmem:[%s1 + $0x36c] sm:$0xf]
  %v239 = vld [vmem:[%s1 + $0x370] sm:$0xf]
  %v240 = vld [vmem:[%s1 + $0x374] sm:$0xf]
  %v241 = vld [vmem:[%s1 + $0x378] sm:$0xf]
  %v242 = vld [vmem:[%s1 + $0x37c] sm:$0xf]
  %v243 = vld [vmem:[%s1 + $0x380] sm:$0xf]
  %v244 = vld [vmem:[%s1 + $0x384] sm:$0xf]
  %v245 = vld [vmem:[%s1 + $0x388] sm:$0xf]
  %v246 = vld [vmem:[%s1 + $0x38c] sm:$0xf]
  %v247 = vld [vmem:[%s1 + $0x390] sm:$0xf]
  %v248 = vld [vmem:[%s1 + $0x394] sm:$0xf]
  %v249 = vld [vmem:[%s1 + $0x398] sm:$0xf]
  %v250 = vld [vmem:[%s1 + $0x39c] sm:$0xf]
  %v251 = vld [vmem:[%s1 + $0x3a0] sm:$0xf]
  %v252 = vld [vmem:[%s1 + $0x3a4] sm:$0xf]
  %v253 = vld [vmem:[%s1 + $0x3a8] sm:$0xf]
  %v254 = vld [vmem:[%s1 + $0x3ac] sm:$0xf]
  %v255 = vld [vmem:[%s1 + $0x3b0] sm:$0xf]
  %v256 = vld [vmem:[%s1 + $0x3b4] sm:$0xf]
  %v257 = vld [vmem:[%s1 + $0x3b8] sm:$0xf]
  %v258 = vld [vmem:[%s1 + $0x3bc] sm:$0xf]
  %v259 = vld [vmem:[%s1 + $0x3c0] sm:$0xf]
  %v260 = vld [vmem:[%s1 + $0x3c4] sm:$0xf]
  %v261 = vld [vmem:[%s1 + $0x3c8] sm:$0xf]
  %v262 = vld [vmem:[%s1 + $0x3cc] sm:$0xf]
  %v263 = vld [vmem:[%s1 + $0x3d0] sm:$0xf]
  %v264 = vld [vmem:[%s1 + $0x3d4] sm:$0xf]
  %v265 = vld [vmem:[%s1 + $0x3d8] sm:$0xf]
  %v266 = vld [vmem:[%s1 + $0x3dc] sm:$0xf]
  %v267 = vld [vmem:[%s1 + $0x3e0] sm:$0xf]
  %v268 = vld [vmem:[%s1 + $0x3e4] sm:$0xf]
  %v269 = vld [vmem:[%s1 + $0x3e8] sm:$0xf]
  %v270 = vld [vmem:[%s1 + $0x3ec] sm:$0xf]
  %v271 = vld [vmem:[%s1 + $0x3f0] sm:$0xf]
  %v272 = vld [vmem:[%s1 + $0x3f4] sm:$0xf]
  %v273 = vld [vmem:[%s1 + $0x3f8] sm:$0xf]
  %v274 = vld [vmem:[%s1 + $0x3fc] sm:$0xf]
  %v275 = vld [vmem:[%s1 + $0x400] sm:$0xf]
  %v276 = vld [vmem:[%s1 + $0x404] sm:$0xf]
  %v277 = vld [vmem:[%s1 + $0x408] sm:$0xf]
  %v278 = vld [vmem:[%s1 + $0x40c] sm:$0xf]
  %v279 = vld [vmem:[%s1 + $0x410] sm:$0xf]
  %v280 = vld [vmem:[%s1 + $0x414] sm:$0xf]
  %v281 = vld [vmem:[%s1 + $0x418] sm:$0xf]
  %v282 = vld [vmem:[%s1 + $0x41c] sm:$0xf]
  %v283 = vld [vmem:[%s1 + $0x420] sm:$0xf]
  %v284 = vld [vmem:[%s1 + $0x424] sm:$0xf]
  %v285 = vld [vmem:[%s1 + $0x428] sm:$0xf]
  %v286 = vld [vmem:[%s1 + $0x42c] sm:$0xf]
  %v287 = vld [vmem:[%s1 + $0x430] sm:$0xf]
  %v288 = vld [vmem:[%s1 + $0x434] sm:$0xf]
  %v289 = vld [vmem:[%s1 + $0x438] sm:$0xf]
  %v290 = vld [vmem:[%s1 + $0x43c] sm:$0xf]
  %v291 = vld [vmem:[%s1 + $0x440] sm:$0xf]
  %v292 = vld [vmem:[%s1 + $0x444] sm:$0xf]
  %v293 = vld [vmem:[%s1 + $0x448] sm:$0xf]
  %v294 = vld [vmem:[%s1 + $0x44c] sm:$0xf]
  %v295 = vld [vmem:[%s1 + $0x450] sm:$0xf]
  %v296 = vld [vmem:[%s1 + $0x454] sm:$0xf]
  %v297 = vld [vmem:[%s1 + $0x458] sm:$0xf]
  %v298 = vld [vmem:[%s1 + $0x45c] sm:$0xf]
  %v299 = vld [vmem:[%s1 + $0x460] sm:$0xf]
  %v300 = vld [vmem:[%s1 + $0x464] sm:$0xf]
  %v301 = vld [vmem:[%s1 + $0x468] sm:$0xf]
  %v302 = vld [vmem:[%s1 + $0x46c] sm:$0xf]
  %v303 = vld [vmem:[%s1 + $0x470] sm:$0xf]
  %v304 = vld [vmem:[%s1 + $0x474] sm:$0xf]
  %v305 = vld [vmem:[%s1 + $0x478] sm:$0xf]
  %v306 = vld [vmem:[%s1 + $0x47c] sm:$0xf]
  %v307 = vld [vmem:[%s1 + $0x480] sm:$0xf]
  %v308 = vld [vmem:[%s1 + $0x484] sm:$0xf]
  %v309 = vld [vmem:[%s1 + $0x488] sm:$0xf]
  %v310 = vld [vmem:[%s1 + $0x48c] sm:$0xf]
  %v311 = vld [vmem:[%s1 + $0x490] sm:$0xf]
  %v312 = vld [vmem:[%s1 + $0x494] sm:$0xf]
  %v313 = vld [vmem:[%s1 + $0x498] sm:$0xf]
  %v314 = vld [vmem:[%s1 + $0x49c] sm:$0xf]
  %v315 = vld [vmem:[%s1 + $0x4a0] sm:$0xf]
  %v316 = vld [vmem:[%s1 + $0x4a4] sm:$0xf]
  %v317 = vld [vmem:[%s1 + $0x4a8] sm:$0xf]
  %v318 = vld [vmem:[%s1 + $0x4ac] sm:$0xf]
  %v319 = vld [vmem:[%s1 + $0x4b0] sm:$0xf]
  %v320 = vld [vmem:[%s1 + $0x4b4] sm:$0xf]
  %v321 = vld [vmem:[%s1 + $0x4b8] sm:$0xf]
  %v322 = vld [vmem:[%s1 + $0x4bc] sm:$0xf]
  %v323 = vld [vmem:[%s1 + $0x4c0] sm:$0xf]
  %v324 = vld [vmem:[%s1 + $0x4c4] sm:$0xf]
  %v325 = vld [vmem:[%s1 + $0x4c8] sm:$0xf]
  %v326 = vld [vmem:[%s1 + $0x4cc] sm:$0xf]
  %v327 = vld [vmem:[%s1 + $0x4d0] sm:$0xf]
  %v328 = vld [vmem:[%s1 + $0x4d4] sm:$0xf]
  %v329 = vld [vmem:[%s1 + $0x4d8] sm:$0xf]
  %v330 = vld [vmem:[%s1 + $0x4dc] sm:$0xf]
  %v331 = vld [vmem:[%s1 + $0x4e0] sm:$0xf]
  %v332 = vld [vmem:[%s1 + $0x4e4] sm:$0xf]
  %v333 = vld [vmem:[%s1 + $0x4e8] sm:$0xf]
  %v334 = vld [vmem:[%s1 + $0x4ec] sm:$0xf]
  %v335 = vld [vmem:[%s1 + $0x4f0] sm:$0xf]
  %v336 = vld [vmem:[%s1 + $0x4f4] sm:$0xf]
  %v337 = vld [vmem:[%s1 + $0x4f8] sm:$0xf]
  %v338 = vld [vmem:[%s1 + $0x4fc] sm:$0xf]
  %v339 = vld [vmem:[%s1 + $0x500] sm:$0xf]
  %v340 = vld [vmem:[%s1 + $0x504] sm:$0xf]
  %v341 = vld [vmem:[%s1 + $0x508] sm:$0xf]
  %v342 = vld [vmem:[%s1 + $0x50c] sm:$0xf]
  %v343 = vld [vmem:[%s1 + $0x510] sm:$0xf]
  %v344 = vld [vmem:[%s1 + $0x514] sm:$0xf]
  %v345 = vld [vmem:[%s1 + $0x518] sm:$0xf]
  %v346 = vld [vmem:[%s1 + $0x51c] sm:$0xf]
  %v347 = vld [vmem:[%s1 + $0x520] sm:$0xf]
  %v348 = vld [vmem:[%s1 + $0x524] sm:$0xf]
  %v349 = vld [vmem:[%s1 + $0x528] sm:$0xf]
  %v350 = vld [vmem:[%s1 + $0x52c] sm:$0xf]
  %v351 = vld [vmem:[%s1 + $0x530] sm:$0xf]
  %v352 = vld [vmem:[%s1 + $0x534] sm:$0xf]
  %v353 = vld [vmem:[%s1 + $0x538] sm:$0xf]
  %v354 = vld [vmem:[%s1 + $0x53c] sm:$0xf]
  %v355 = vld [vmem:[%s1 + $0x540] sm:$0xf]
  %v356 = vld [vmem:[%s1 + $0x544] sm:$0xf]
  %v357 = vld [vmem:[%s1 + $0x548] sm:$0xf]
  %v358 = vld [vmem:[%s1 + $0x54c] sm:$0xf]
  %v359 = vld [vmem:[%s1 + $0x550] sm:$0xf]
  %v360 = vld [vmem:[%s1 + $0x554] sm:$0xf]
  %v361 = vld [vmem:[%s1 + $0x558] sm:$0xf]
  %v362 = vld [vmem:[%s1 + $0x55c] sm:$0xf]
  %v363 = vld [vmem:[%s1 + $0x560] sm:$0xf]
  %v364 = vld [vmem:[%s1 + $0x564] sm:$0xf]
  %v365 = vld [vmem:[%s1 + $0x568] sm:$0xf]
  %v366 = vld [vmem:[%s1 + $0x56c] sm:$0xf]
  %v367 = vld [vmem:[%s1 + $0x570] sm:$0xf]
  %v368 = vld [vmem:[%s1 + $0x574] sm:$0xf]
  %v369 = vld [vmem:[%s1 + $0x578] sm:$0xf]
  %v370 = vld [vmem:[%s1 + $0x57c] sm:$0xf]
  %v371 = vld [vmem:[%s1 + $0x580] sm:$0xf]
  %v372 = vld [vmem:[%s1 + $0x584] sm:$0xf]
  %v373 = vld [vmem:[%s1 + $0x588] sm:$0xf]
  %v374 = vld [vmem:[%s1 + $0x58c] sm:$0xf]
  %v375 = vld [vmem:[%s1 + $0x590] sm:$0xf]
  %v376 = vld [vmem:[%s1 + $0x594] sm:$0xf]
  %v377 = vld [vmem:[%s1 + $0x598] sm:$0xf]
  %v378 = vld [vmem:[%s1 + $0x59c] sm:$0xf]
  %v379 = vld [vmem:[%s1 + $0x5a0] sm:$0xf]
  %v380 = vld [vmem:[%s1 + $0x5a4] sm:$0xf]
  %v381 = vld [vmem:[%s1 + $0x5a8] sm:$0xf]
  %v382 = vld [vmem:[%s1 + $0x5ac] sm:$0xf]
  %v383 = vld [vmem:[%s1 + $0x5b0] sm:$0xf]
  %v384 = vld [vmem:[%s1 + $0x5b4] sm:$0xf]
  %v385 = vld [vmem:[%s1 + $0x5b8] sm:$0xf]
  %v386 = vld [vmem:[%s1 + $0x5bc] sm:$0xf]
  %v387 = vld [vmem:[%s1 + $0x5c0] sm:$0xf]
  %v388 = vld [vmem:[%s1 + $0x5c4] sm:$0xf]
  %v389 = vld [vmem:[%s1 + $0x5c8] sm:$0xf]
  %v390 = vld [vmem:[%s1 + $0x5cc] sm:$0xf]
  %v391 = vld [vmem:[%s1 + $0x5d0] sm:$0xf]
  %v392 = vld [vmem:[%s1 + $0x5d4] sm:$0xf]
  %v393 = vld [vmem:[%s1 + $0x5d8] sm:$0xf]
  %v394 = vld [vmem:[%s1 + $0x5dc] sm:$0xf]
  %v395 = vld [vmem:[%s1 + $0x5e0] sm:$0xf]
  %v396 = vld [vmem:[%s1 + $0x5e4] sm:$0xf]
  %v397 = vld [vmem:[%s1 + $0x5e8] sm:$0xf]
  %v398 = vld [vmem:[%s1 + $0x5ec] sm:$0xf]
  %v399 = vld [vmem:[%s1 + $0x5f0] sm:$0xf]
  %v400 = vld [vmem:[%s1 + $0x5f4] sm:$0xf]
  %v401 = vld [vmem:[%s1 + $0x5f8] sm:$0xf]
  %v402 = vld [vmem:[%s1 + $0x5fc] sm:$0xf]
  %v403 = vld [vmem:[%s1 + $0x600] sm:$0xf]
  %v404 = vld [vmem:[%s1 + $0x604] sm:$0xf]
  %v405 = vld [vmem:[%s1 + $0x608] sm:$0xf]
  %v406 = vld [vmem:[%s1 + $0x60c] sm:$0xf]
  %v407 = vld [vmem:[%s1 + $0x610] sm:$0xf]
  %v408 = vld [vmem:[%s1 + $0x614] sm:$0xf]
  %v409 = vld [vmem:[%s1 + $0x618] sm:$0xf]
  %v410 = vld [vmem:[%s1 + $0x61c] sm:$0xf]
  %v411 = vld [vmem:[%s1 + $0x620] sm:$0xf]
  %v412 = vld [vmem:[%s1 + $0x624] sm:$0xf]
  %v413 = vld [vmem:[%s1 + $0x628] sm:$0xf]
  %v414 = vld [vmem:[%s1 + $0x62c] sm:$0xf]
  %v415 = vld [vmem:[%s1 + $0x630] sm:$0xf]
  %v416 = vld [vmem:[%s1 + $0x634] sm:$0xf]
  %v417 = vld [vmem:[%s1 + $0x638] sm:$0xf]
  %v418 = vld [vmem:[%s1 + $0x63c] sm:$0xf]
  %v419 = vld [vmem:[%s1 + $0x640] sm:$0xf]
  %v420 = vld [vmem:[%s1 + $0x644] sm:$0xf]
  %v421 = vld [vmem:[%s1 + $0x648] sm:$0xf]
  %v422 = vld [vmem:[%s1 + $0x64c] sm:$0xf]
  %v423 = vld [vmem:[%s1 + $0x650] sm:$0xf]
  %v424 = vld [vmem:[%s1 + $0x654] sm:$0xf]
  %v425 = vld [vmem:[%s1 + $0x658] sm:$0xf]
  %v426 = vld [vmem:[%s1 + $0x65c] sm:$0xf]
  %v427 = vld [vmem:[%s1 + $0x660] sm:$0xf]
  %v428 = vld [vmem:[%s1 + $0x664] sm:$0xf]
  %v429 = vld [vmem:[%s1 + $0x668] sm:$0xf]
  %v430 = vld [vmem:[%s1 + $0x66c] sm:$0xf]
  %v431 = vld [vmem:[%s1 + $0x670] sm:$0xf]
  %v432 = vld [vmem:[%s1 + $0x674] sm:$0xf]
  %v433 = vld [vmem:[%s1 + $0x678] sm:$0xf]
  %v434 = vld [vmem:[%s1 + $0x67c] sm:$0xf]
  %v435 = vld [vmem:[%s1 + $0x680] sm:$0xf]
  %v436 = vld [vmem:[%s1 + $0x684] sm:$0xf]
  %v437 = vld [vmem:[%s1 + $0x688] sm:$0xf]
  %v438 = vld [vmem:[%s1 + $0x68c] sm:$0xf]
  %v439 = vld [vmem:[%s1 + $0x690] sm:$0xf]
  %v440 = vld [vmem:[%s1 + $0x694] sm:$0xf]
  %v441 = vld [vmem:[%s1 + $0x698] sm:$0xf]
  %v442 = vld [vmem:[%s1 + $0x69c] sm:$0xf]
  %v443 = vld [vmem:[%s1 + $0x6a0] sm:$0xf]
  %v444 = vld [vmem:[%s1 + $0x6a4] sm:$0xf]
  %v445 = vld [vmem:[%s1 + $0x6a8] sm:$0xf]
  %v446 = vld [vmem:[%s1 + $0x6ac] sm:$0xf]
  %v447 = vld [vmem:[%s1 + $0x6b0] sm:$0xf]
  %v448 = vld [vmem:[%s1 + $0x6b4] sm:$0xf]
  %v449 = vld [vmem:[%s1 + $0x6b8] sm:$0xf]
  %v450 = vld [vmem:[%s1 + $0x6bc] sm:$0xf]
  %v451 = vld [vmem:[%s1 + $0x6c0] sm:$0xf]
  %v452 = vld [vmem:[%s1 + $0x6c4] sm:$0xf]
  %v453 = vld [vmem:[%s1 + $0x6c8] sm:$0xf]
  %v454 = vld [vmem:[%s1 + $0x6cc] sm:$0xf]
  %v455 = vld [vmem:[%s1 + $0x6d0] sm:$0xf]
  %v456 = vld [vmem:[%s1 + $0x6d4] sm:$0xf]
  %v457 = vld [vmem:[%s1 + $0x6d8] sm:$0xf]
  %v458 = vld [vmem:[%s1 + $0x6dc] sm:$0xf]
  %v459 = vld [vmem:[%s1 + $0x6e0] sm:$0xf]
  %v460 = vld [vmem:[%s1 + $0x6e4] sm:$0xf]
  %v461 = vld [vmem:[%s1 + $0x6e8] sm:$0xf]
  %v462 = vld [vmem:[%s1 + $0x6ec] sm:$0xf]
  %v463 = vld [vmem:[%s1 + $0x6f0] sm:$0xf]
  %v464 = vld [vmem:[%s1 + $0x6f4] sm:$0xf]
  %v465 = vld [vmem:[%s1 + $0x6f8] sm:$0xf]
  %v466 = vld [vmem:[%s1 + $0x6fc] sm:$0xf]
  %v467 = vld [vmem:[%s1 + $0x700] sm:$0xf]
  %v468 = vld [vmem:[%s1 + $0x704] sm:$0xf]
  %v469 = vld [vmem:[%s1 + $0x708] sm:$0xf]
  %v470 = vld [vmem:[%s1 + $0x70c] sm:$0xf]
  %v471 = vld [vmem:[%s1 + $0x710] sm:$0xf]
  %v472 = vld [vmem:[%s1 + $0x714] sm:$0xf]
  %v473 = vld [vmem:[%s1 + $0x718] sm:$0xf]
  %v474 = vld [vmem:[%s1 + $0x71c] sm:$0xf]
  %v475 = vld [vmem:[%s1 + $0x720] sm:$0xf]
  %v476 = vld [vmem:[%s1 + $0x724] sm:$0xf]
  %v477 = vld [vmem:[%s1 + $0x728] sm:$0xf]
  %v478 = vld [vmem:[%s1 + $0x72c] sm:$0xf]
  %v479 = vld [vmem:[%s1 + $0x730] sm:$0xf]
  %v480 = vld [vmem:[%s1 + $0x734] sm:$0xf]
  %v481 = vld [vmem:[%s1 + $0x738] sm:$0xf]
  %v482 = vld [vmem:[%s1 + $0x73c] sm:$0xf]
  %v483 = vld [vmem:[%s1 + $0x740] sm:$0xf]
  %v484 = vld [vmem:[%s1 + $0x744] sm:$0xf]
  %v485 = vld [vmem:[%s1 + $0x748] sm:$0xf]
  %v486 = vld [vmem:[%s1 + $0x74c] sm:$0xf]
  %v487 = vld [vmem:[%s1 + $0x750] sm:$0xf]
  %v488 = vld [vmem:[%s1 + $0x754] sm:$0xf]
  %v489 = vld [vmem:[%s1 + $0x758] sm:$0xf]
  %v490 = vld [vmem:[%s1 + $0x75c] sm:$0xf]
  %v491 = vld [vmem:[%s1 + $0x760] sm:$0xf]
  %v492 = vld [vmem:[%s1 + $0x764] sm:$0xf]
  %v493 = vld [vmem:[%s1 + $0x768] sm:$0xf]
  %v494 = vld [vmem:[%s1 + $0x76c] sm:$0xf]
  %v495 = vld [vmem:[%s1 + $0x770] sm:$0xf]
  %v496 = vld [vmem:[%s1 + $0x774] sm:$0xf]
  %v497 = vld [vmem:[%s1 + $0x778] sm:$0xf]
  %v498 = vld [vmem:[%s1 + $0x77c] sm:$0xf]
  %v499 = vld [vmem:[%s1 + $0x780] sm:$0xf]
  %v500 = vld [vmem:[%s1 + $0x784] sm:$0xf]
  %v501 = vld [vmem:[%s1 + $0x788] sm:$0xf]
  %v502 = vld [vmem:[%s1 + $0x78c] sm:$0xf]
  %v503 = vld [vmem:[%s1 + $0x790] sm:$0xf]
  %v504 = vld [vmem:[%s1 + $0x794] sm:$0xf]
  %v505 = vld [vmem:[%s1 + $0x798] sm:$0xf]
  %v506 = vld [vmem:[%s1 + $0x79c] sm:$0xf]
  %v507 = vld [vmem:[%s1 + $0x7a0] sm:$0xf]
  %v508 = vld [vmem:[%s1 + $0x7a4] sm:$0xf]
  %v509 = vld [vmem:[%s1 + $0x7a8] sm:$0xf]
  %v510 = vld [vmem:[%s1 + $0x7ac] sm:$0xf]
  %v511 = vld [vmem:[%s1 + $0x7b0] sm:$0xf]
  %v512 = vld [vmem:[%s1 + $0x7b4] sm:$0xf]
  %v513 = vld [vmem:[%s1 + $0x7b8] sm:$0xf]
  %v514 = vld [vmem:[%s1 + $0x7bc] sm:$0xf]
  %v515 = vld [vmem:[%s1 + $0x7c0] sm:$0xf]
  %v516 = vld [vmem:[%s1 + $0x7c4] sm:$0xf]
  %v517 = vld [vmem:[%s1 + $0x7c8] sm:$0xf]
  %v518 = vld [vmem:[%s1 + $0x7cc] sm:$0xf]
  %v519 = vld [vmem:[%s1 + $0x7d0] sm:$0xf]
  %v520 = vld [vmem:[%s1 + $0x7d4] sm:$0xf]
  %v521 = vld [vmem:[%s1 + $0x7d8] sm:$0xf]
  %v522 = vld [vmem:[%s1 + $0x7dc] sm:$0xf]
  %v523 = vld [vmem:[%s1 + $0x7e0] sm:$0xf]
  %v524 = vld [vmem:[%s1 + $0x7e4] sm:$0xf]
  %v525 = vld [vmem:[%s1 + $0x7e8] sm:$0xf]
  %v526 = vld [vmem:[%s1 + $0x7ec] sm:$0xf]
  %v527 = vld [vmem:[%s1 + $0x7f0] sm:$0xf]
  %v528 = vld [vmem:[%s1 + $0x7f4] sm:$0xf]
  %v529 = vld [vmem:[%s1 + $0x7f8] sm:$0xf]
  %v530 = vld [vmem:[%s1 + $0x7fc] sm:$0xf]
  %v531 = vld [vmem:[%s2] sm:$0x1]
  %v533 = vlaneseq
  %v534 = vshrl.u32 %v533, 7
  %v535 = vsub.s32 0, %v534
  %v536 = vrot.slane %v531, %v535
  %v542 = vcombine.high %v15, %v15
  %v544 = vunpack.c.l.s4 1966171168
  %v545 = vunpack.c.0.s8 %v544
  %v546 = vlaneseq
  %v547 = vshrl.u32 %v546, 7
  %v548 = vsub.s32 %v545, %v547
  %v549 = vrot.slane %v15, %v548
  %v551 = vunpack.c.l.s4 1966171168
  %v552 = vunpack.c.0.s8 %v551
  %v553 = vlaneseq
  %v554 = vshrl.u32 %v553, 7
  %v555 = vsub.s32 %v552, %v554
  %v556 = vrot.slane %v542, %v555
  %v557 = vcombine.high %v549, %v549
  %v558 = vcombine.high %v556, %v556
  %v560 = vunpack.c.l.s4 1966171168
  %v561 = vunpack.c.0.s8 %v560
  %v562 = vlaneseq
  %v563 = vshrl.u32 %v562, 7
  %v564 = vsub.s32 %v561, %v563
  %v565 = vrot.slane %v549, %v564
  %v567 = vunpack.c.l.s4 1966171168
  %v568 = vunpack.c.0.s8 %v567
  %v569 = vlaneseq
  %v570 = vshrl.u32 %v569, 7
  %v571 = vsub.s32 %v568, %v570
  %v572 = vrot.slane %v556, %v571
  %v574 = vunpack.c.l.s4 1966171168
  %v575 = vunpack.c.0.s8 %v574
  %v576 = vlaneseq
  %v577 = vshrl.u32 %v576, 7
  %v578 = vsub.s32 %v575, %v577
  %v579 = vrot.slane %v557, %v578
  %v581 = vunpack.c.l.s4 1966171168
  %v582 = vunpack.c.0.s8 %v581
  %v583 = vlaneseq
  %v584 = vshrl.u32 %v583, 7
  %v585 = vsub.s32 %v582, %v584
  %v586 = vrot.slane %v558, %v585
  %v587 = vcombine.high %v565, %v565
  %v588 = vcombine.high %v572, %v572
  %v589 = vcombine.high %v579, %v579
  %v590 = vcombine.high %v586, %v586
  %v591 = vcombine.high %v16, %v16
  %v593 = vunpack.c.l.s4 1966171168
  %v594 = vunpack.c.0.s8 %v593
  %v595 = vlaneseq
  %v596 = vshrl.u32 %v595, 7
  %v597 = vsub.s32 %v594, %v596
  %v598 = vrot.slane %v16, %v597
  %v600 = vunpack.c.l.s4 1966171168
  %v601 = vunpack.c.0.s8 %v600
  %v602 = vlaneseq
  %v603 = vshrl.u32 %v602, 7
  %v604 = vsub.s32 %v601, %v603
  %v605 = vrot.slane %v591, %v604
  %v606 = vcombine.high %v598, %v598
  %v607 = vcombine.high %v605, %v605
  %v609 = vunpack.c.l.s4 1966171168
  %v610 = vunpack.c.0.s8 %v609
  %v611 = vlaneseq
  %v612 = vshrl.u32 %v611, 7
  %v613 = vsub.s32 %v610, %v612
  %v614 = vrot.slane %v598, %v613
  %v616 = vunpack.c.l.s4 1966171168
  %v617 = vunpack.c.0.s8 %v616
  %v618 = vlaneseq
  %v619 = vshrl.u32 %v618, 7
  %v620 = vsub.s32 %v617, %v619
  %v621 = vrot.slane %v605, %v620
  %v623 = vunpack.c.l.s4 1966171168
  %v624 = vunpack.c.0.s8 %v623
  %v625 = vlaneseq
  %v626 = vshrl.u32 %v625, 7
  %v627 = vsub.s32 %v624, %v626
  %v628 = vrot.slane %v606, %v627
  %v630 = vunpack.c.l.s4 1966171168
  %v631 = vunpack.c.0.s8 %v630
  %v632 = vlaneseq
  %v633 = vshrl.u32 %v632, 7
  %v634 = vsub.s32 %v631, %v633
  %v635 = vrot.slane %v607, %v634
  %v636 = vcombine.high %v614, %v614
  %v637 = vcombine.high %v621, %v621
  %v638 = vcombine.high %v628, %v628
  %v639 = vcombine.high %v635, %v635
  %v640 = vcombine.high %v17, %v17
  %v642 = vunpack.c.l.s4 1966171168
  %v643 = vunpack.c.0.s8 %v642
  %v644 = vlaneseq
  %v645 = vshrl.u32 %v644, 7
  %v646 = vsub.s32 %v643, %v645
  %v647 = vrot.slane %v17, %v646
  %v649 = vunpack.c.l.s4 1966171168
  %v650 = vunpack.c.0.s8 %v649
  %v651 = vlaneseq
  %v652 = vshrl.u32 %v651, 7
  %v653 = vsub.s32 %v650, %v652
  %v654 = vrot.slane %v640, %v653
  %v655 = vcombine.high %v647, %v647
  %v656 = vcombine.high %v654, %v654
  %v658 = vunpack.c.l.s4 1966171168
  %v659 = vunpack.c.0.s8 %v658
  %v660 = vlaneseq
  %v661 = vshrl.u32 %v660, 7
  %v662 = vsub.s32 %v659, %v661
  %v663 = vrot.slane %v647, %v662
  %v665 = vunpack.c.l.s4 1966171168
  %v666 = vunpack.c.0.s8 %v665
  %v667 = vlaneseq
  %v668 = vshrl.u32 %v667, 7
  %v669 = vsub.s32 %v666, %v668
  %v670 = vrot.slane %v654, %v669
  %v672 = vunpack.c.l.s4 1966171168
  %v673 = vunpack.c.0.s8 %v672
  %v674 = vlaneseq
  %v675 = vshrl.u32 %v674, 7
  %v676 = vsub.s32 %v673, %v675
  %v677 = vrot.slane %v655, %v676
  %v679 = vunpack.c.l.s4 1966171168
  %v680 = vunpack.c.0.s8 %v679
  %v681 = vlaneseq
  %v682 = vshrl.u32 %v681, 7
  %v683 = vsub.s32 %v680, %v682
  %v684 = vrot.slane %v656, %v683
  %v685 = vcombine.high %v663, %v663
  %v686 = vcombine.high %v670, %v670
  %v687 = vcombine.high %v677, %v677
  %v688 = vcombine.high %v684, %v684
  %v689 = vcombine.high %v18, %v18
  %v691 = vunpack.c.l.s4 1966171168
  %v692 = vunpack.c.0.s8 %v691
  %v693 = vlaneseq
  %v694 = vshrl.u32 %v693, 7
  %v695 = vsub.s32 %v692, %v694
  %v696 = vrot.slane %v18, %v695
  %v698 = vunpack.c.l.s4 1966171168
  %v699 = vunpack.c.0.s8 %v698
  %v700 = vlaneseq
  %v701 = vshrl.u32 %v700, 7
  %v702 = vsub.s32 %v699, %v701
  %v703 = vrot.slane %v689, %v702
  %v704 = vcombine.high %v696, %v696
  %v705 = vcombine.high %v703, %v703
  %v707 = vunpack.c.l.s4 1966171168
  %v708 = vunpack.c.0.s8 %v707
  %v709 = vlaneseq
  %v710 = vshrl.u32 %v709, 7
  %v711 = vsub.s32 %v708, %v710
  %v712 = vrot.slane %v696, %v711
  %v714 = vunpack.c.l.s4 1966171168
  %v715 = vunpack.c.0.s8 %v714
  %v716 = vlaneseq
  %v717 = vshrl.u32 %v716, 7
  %v718 = vsub.s32 %v715, %v717
  %v719 = vrot.slane %v703, %v718
  %v721 = vunpack.c.l.s4 1966171168
  %v722 = vunpack.c.0.s8 %v721
  %v723 = vlaneseq
  %v724 = vshrl.u32 %v723, 7
  %v725 = vsub.s32 %v722, %v724
  %v726 = vrot.slane %v704, %v725
  %v728 = vunpack.c.l.s4 1966171168
  %v729 = vunpack.c.0.s8 %v728
  %v730 = vlaneseq
  %v731 = vshrl.u32 %v730, 7
  %v732 = vsub.s32 %v729, %v731
  %v733 = vrot.slane %v705, %v732
  %v734 = vcombine.high %v712, %v712
  %v735 = vcombine.high %v719, %v719
  %v736 = vcombine.high %v726, %v726
  %v737 = vcombine.high %v733, %v733
  %v1282 = vunpack.c.l.b16 %v19
  %v1283 = vunpack.c.l.b16 %v20
  %v1284 = vunpack.c.l.b16 %v21
  %v1285 = vunpack.c.l.b16 %v22
  %v1286 = vunpack.c.l.b16 %v23
  %v1287 = vunpack.c.l.b16 %v24
  %v1288 = vunpack.c.l.b16 %v25
  %v1289 = vunpack.c.l.b16 %v26
  %v1290 = vunpack.c.l.b16 %v27
  %v1291 = vunpack.c.l.b16 %v28
  %v1292 = vunpack.c.l.b16 %v29
  %v1293 = vunpack.c.l.b16 %v30
  %v1294 = vunpack.c.l.b16 %v31
  %v1295 = vunpack.c.l.b16 %v32
  %v1296 = vunpack.c.l.b16 %v33
  %v1297 = vunpack.c.l.b16 %v34
  %v1298 = vunpack.c.l.b16 %v35
  %v1299 = vunpack.c.l.b16 %v36
  %v1300 = vunpack.c.l.b16 %v37
  %v1301 = vunpack.c.l.b16 %v38
  %v1302 = vunpack.c.l.b16 %v39
  %v1303 = vunpack.c.l.b16 %v40
  %v1304 = vunpack.c.l.b16 %v41
  %v1305 = vunpack.c.l.b16 %v42
  %v1306 = vunpack.c.l.b16 %v43
  %v1307 = vunpack.c.l.b16 %v44
  %v1308 = vunpack.c.l.b16 %v45
  %v1309 = vunpack.c.l.b16 %v46
  %v1310 = vunpack.c.l.b16 %v47
  %v1311 = vunpack.c.l.b16 %v48
  %v1312 = vunpack.c.l.b16 %v49
  %v1313 = vunpack.c.l.b16 %v50
  %v1314 = vunpack.c.l.b16 %v51
  %v1315 = vunpack.c.l.b16 %v52
  %v1316 = vunpack.c.l.b16 %v53
  %v1317 = vunpack.c.l.b16 %v54
  %v1318 = vunpack.c.l.b16 %v55
  %v1319 = vunpack.c.l.b16 %v56
  %v1320 = vunpack.c.l.b16 %v57
  %v1321 = vunpack.c.l.b16 %v58
  %v1322 = vunpack.c.l.b16 %v59
  %v1323 = vunpack.c.l.b16 %v60
  %v1324 = vunpack.c.l.b16 %v61
  %v1325 = vunpack.c.l.b16 %v62
  %v1326 = vunpack.c.l.b16 %v63
  %v1327 = vunpack.c.l.b16 %v64
  %v1328 = vunpack.c.l.b16 %v65
  %v1329 = vunpack.c.l.b16 %v66
  %v1330 = vunpack.c.l.b16 %v67
  %v1331 = vunpack.c.l.b16 %v68
  %v1332 = vunpack.c.l.b16 %v69
  %v1333 = vunpack.c.l.b16 %v70
  %v1334 = vunpack.c.l.b16 %v71
  %v1335 = vunpack.c.l.b16 %v72
  %v1336 = vunpack.c.l.b16 %v73
  %v1337 = vunpack.c.l.b16 %v74
  %v1338 = vunpack.c.l.b16 %v75
  %v1339 = vunpack.c.l.b16 %v76
  %v1340 = vunpack.c.l.b16 %v77
  %v1341 = vunpack.c.l.b16 %v78
  %v1342 = vunpack.c.l.b16 %v79
  %v1343 = vunpack.c.l.b16 %v80
  %v1344 = vunpack.c.l.b16 %v81
  %v1345 = vunpack.c.l.b16 %v82
  %v1346 = vunpack.c.l.b16 %v83
  %v1347 = vunpack.c.l.b16 %v84
  %v1348 = vunpack.c.l.b16 %v85
  %v1349 = vunpack.c.l.b16 %v86
  %v1350 = vunpack.c.l.b16 %v87
  %v1351 = vunpack.c.l.b16 %v88
  %v1352 = vunpack.c.l.b16 %v89
  %v1353 = vunpack.c.l.b16 %v90
  %v1354 = vunpack.c.l.b16 %v91
  %v1355 = vunpack.c.l.b16 %v92
  %v1356 = vunpack.c.l.b16 %v93
  %v1357 = vunpack.c.l.b16 %v94
  %v1358 = vunpack.c.l.b16 %v95
  %v1359 = vunpack.c.l.b16 %v96
  %v1360 = vunpack.c.l.b16 %v97
  %v1361 = vunpack.c.l.b16 %v98
  %v1362 = vunpack.c.l.b16 %v99
  %v1363 = vunpack.c.l.b16 %v100
  %v1364 = vunpack.c.l.b16 %v101
  %v1365 = vunpack.c.l.b16 %v102
  %v1366 = vunpack.c.l.b16 %v103
  %v1367 = vunpack.c.l.b16 %v104
  %v1368 = vunpack.c.l.b16 %v105
  %v1369 = vunpack.c.l.b16 %v106
  %v1370 = vunpack.c.l.b16 %v107
  %v1371 = vunpack.c.l.b16 %v108
  %v1372 = vunpack.c.l.b16 %v109
  %v1373 = vunpack.c.l.b16 %v110
  %v1374 = vunpack.c.l.b16 %v111
  %v1375 = vunpack.c.l.b16 %v112
  %v1376 = vunpack.c.l.b16 %v113
  %v1377 = vunpack.c.l.b16 %v114
  %v1378 = vunpack.c.l.b16 %v115
  %v1379 = vunpack.c.l.b16 %v116
  %v1380 = vunpack.c.l.b16 %v117
  %v1381 = vunpack.c.l.b16 %v118
  %v1382 = vunpack.c.l.b16 %v119
  %v1383 = vunpack.c.l.b16 %v120
  %v1384 = vunpack.c.l.b16 %v121
  %v1385 = vunpack.c.l.b16 %v122
  %v1386 = vunpack.c.l.b16 %v123
  %v1387 = vunpack.c.l.b16 %v124
  %v1388 = vunpack.c.l.b16 %v125
  %v1389 = vunpack.c.l.b16 %v126
  %v1390 = vunpack.c.l.b16 %v127
  %v1391 = vunpack.c.l.b16 %v128
  %v1392 = vunpack.c.l.b16 %v129
  %v1393 = vunpack.c.l.b16 %v130
  %v1394 = vunpack.c.l.b16 %v131
  %v1395 = vunpack.c.l.b16 %v132
  %v1396 = vunpack.c.l.b16 %v133
  %v1397 = vunpack.c.l.b16 %v134
  %v1398 = vunpack.c.l.b16 %v135
  %v1399 = vunpack.c.l.b16 %v136
  %v1400 = vunpack.c.l.b16 %v137
  %v1401 = vunpack.c.l.b16 %v138
  %v1402 = vunpack.c.l.b16 %v139
  %v1403 = vunpack.c.l.b16 %v140
  %v1404 = vunpack.c.l.b16 %v141
  %v1405 = vunpack.c.l.b16 %v142
  %v1406 = vunpack.c.l.b16 %v143
  %v1407 = vunpack.c.l.b16 %v144
  %v1408 = vunpack.c.l.b16 %v145
  %v1409 = vunpack.c.l.b16 %v146
  %v1410 = vunpack.c.l.b16 %v147
  %v1411 = vunpack.c.l.b16 %v148
  %v1412 = vunpack.c.l.b16 %v149
  %v1413 = vunpack.c.l.b16 %v150
  %v1414 = vunpack.c.l.b16 %v151
  %v1415 = vunpack.c.l.b16 %v152
  %v1416 = vunpack.c.l.b16 %v153
  %v1417 = vunpack.c.l.b16 %v154
  %v1418 = vunpack.c.l.b16 %v155
  %v1419 = vunpack.c.l.b16 %v156
  %v1420 = vunpack.c.l.b16 %v157
  %v1421 = vunpack.c.l.b16 %v158
  %v1422 = vunpack.c.l.b16 %v159
  %v1423 = vunpack.c.l.b16 %v160
  %v1424 = vunpack.c.l.b16 %v161
  %v1425 = vunpack.c.l.b16 %v162
  %v1426 = vunpack.c.l.b16 %v163
  %v1427 = vunpack.c.l.b16 %v164
  %v1428 = vunpack.c.l.b16 %v165
  %v1429 = vunpack.c.l.b16 %v166
  %v1430 = vunpack.c.l.b16 %v167
  %v1431 = vunpack.c.l.b16 %v168
  %v1432 = vunpack.c.l.b16 %v169
  %v1433 = vunpack.c.l.b16 %v170
  %v1434 = vunpack.c.l.b16 %v171
  %v1435 = vunpack.c.l.b16 %v172
  %v1436 = vunpack.c.l.b16 %v173
  %v1437 = vunpack.c.l.b16 %v174
  %v1438 = vunpack.c.l.b16 %v175
  %v1439 = vunpack.c.l.b16 %v176
  %v1440 = vunpack.c.l.b16 %v177
  %v1441 = vunpack.c.l.b16 %v178
  %v1442 = vunpack.c.l.b16 %v179
  %v1443 = vunpack.c.l.b16 %v180
  %v1444 = vunpack.c.l.b16 %v181
  %v1445 = vunpack.c.l.b16 %v182
  %v1446 = vunpack.c.l.b16 %v183
  %v1447 = vunpack.c.l.b16 %v184
  %v1448 = vunpack.c.l.b16 %v185
  %v1449 = vunpack.c.l.b16 %v186
  %v1450 = vunpack.c.l.b16 %v187
  %v1451 = vunpack.c.l.b16 %v188
  %v1452 = vunpack.c.l.b16 %v189
  %v1453 = vunpack.c.l.b16 %v190
  %v1454 = vunpack.c.l.b16 %v191
  %v1455 = vunpack.c.l.b16 %v192
  %v1456 = vunpack.c.l.b16 %v193
  %v1457 = vunpack.c.l.b16 %v194
  %v1458 = vunpack.c.l.b16 %v195
  %v1459 = vunpack.c.l.b16 %v196
  %v1460 = vunpack.c.l.b16 %v197
  %v1461 = vunpack.c.l.b16 %v198
  %v1462 = vunpack.c.l.b16 %v199
  %v1463 = vunpack.c.l.b16 %v200
  %v1464 = vunpack.c.l.b16 %v201
  %v1465 = vunpack.c.l.b16 %v202
  %v1466 = vunpack.c.l.b16 %v203
  %v1467 = vunpack.c.l.b16 %v204
  %v1468 = vunpack.c.l.b16 %v205
  %v1469 = vunpack.c.l.b16 %v206
  %v1470 = vunpack.c.l.b16 %v207
  %v1471 = vunpack.c.l.b16 %v208
  %v1472 = vunpack.c.l.b16 %v209
  %v1473 = vunpack.c.l.b16 %v210
  %v1474 = vunpack.c.l.b16 %v211
  %v1475 = vunpack.c.l.b16 %v212
  %v1476 = vunpack.c.l.b16 %v213
  %v1477 = vunpack.c.l.b16 %v214
  %v1478 = vunpack.c.l.b16 %v215
  %v1479 = vunpack.c.l.b16 %v216
  %v1480 = vunpack.c.l.b16 %v217
  %v1481 = vunpack.c.l.b16 %v218
  %v1482 = vunpack.c.l.b16 %v219
  %v1483 = vunpack.c.l.b16 %v220
  %v1484 = vunpack.c.l.b16 %v221
  %v1485 = vunpack.c.l.b16 %v222
  %v1486 = vunpack.c.l.b16 %v223
  %v1487 = vunpack.c.l.b16 %v224
  %v1488 = vunpack.c.l.b16 %v225
  %v1489 = vunpack.c.l.b16 %v226
  %v1490 = vunpack.c.l.b16 %v227
  %v1491 = vunpack.c.l.b16 %v228
  %v1492 = vunpack.c.l.b16 %v229
  %v1493 = vunpack.c.l.b16 %v230
  %v1494 = vunpack.c.l.b16 %v231
  %v1495 = vunpack.c.l.b16 %v232
  %v1496 = vunpack.c.l.b16 %v233
  %v1497 = vunpack.c.l.b16 %v234
  %v1498 = vunpack.c.l.b16 %v235
  %v1499 = vunpack.c.l.b16 %v236
  %v1500 = vunpack.c.l.b16 %v237
  %v1501 = vunpack.c.l.b16 %v238
  %v1502 = vunpack.c.l.b16 %v239
  %v1503 = vunpack.c.l.b16 %v240
  %v1504 = vunpack.c.l.b16 %v241
  %v1505 = vunpack.c.l.b16 %v242
  %v1506 = vunpack.c.l.b16 %v243
  %v1507 = vunpack.c.l.b16 %v244
  %v1508 = vunpack.c.l.b16 %v245
  %v1509 = vunpack.c.l.b16 %v246
  %v1510 = vunpack.c.l.b16 %v247
  %v1511 = vunpack.c.l.b16 %v248
  %v1512 = vunpack.c.l.b16 %v249
  %v1513 = vunpack.c.l.b16 %v250
  %v1514 = vunpack.c.l.b16 %v251
  %v1515 = vunpack.c.l.b16 %v252
  %v1516 = vunpack.c.l.b16 %v253
  %v1517 = vunpack.c.l.b16 %v254
  %v1518 = vunpack.c.l.b16 %v255
  %v1519 = vunpack.c.l.b16 %v256
  %v1520 = vunpack.c.l.b16 %v257
  %v1521 = vunpack.c.l.b16 %v258
  %v1522 = vunpack.c.l.b16 %v259
  %v1523 = vunpack.c.l.b16 %v260
  %v1524 = vunpack.c.l.b16 %v261
  %v1525 = vunpack.c.l.b16 %v262
  %v1526 = vunpack.c.l.b16 %v263
  %v1527 = vunpack.c.l.b16 %v264
  %v1528 = vunpack.c.l.b16 %v265
  %v1529 = vunpack.c.l.b16 %v266
  %v1530 = vunpack.c.l.b16 %v267
  %v1531 = vunpack.c.l.b16 %v268
  %v1532 = vunpack.c.l.b16 %v269
  %v1533 = vunpack.c.l.b16 %v270
  %v1534 = vunpack.c.l.b16 %v271
  %v1535 = vunpack.c.l.b16 %v272
  %v1536 = vunpack.c.l.b16 %v273
  %v1537 = vunpack.c.l.b16 %v274
  %v1538 = vunpack.c.l.b16 %v275
  %v1539 = vunpack.c.l.b16 %v276
  %v1540 = vunpack.c.l.b16 %v277
  %v1541 = vunpack.c.l.b16 %v278
  %v1542 = vunpack.c.l.b16 %v279
  %v1543 = vunpack.c.l.b16 %v280
  %v1544 = vunpack.c.l.b16 %v281
  %v1545 = vunpack.c.l.b16 %v282
  %v1546 = vunpack.c.l.b16 %v283
  %v1547 = vunpack.c.l.b16 %v284
  %v1548 = vunpack.c.l.b16 %v285
  %v1549 = vunpack.c.l.b16 %v286
  %v1550 = vunpack.c.l.b16 %v287
  %v1551 = vunpack.c.l.b16 %v288
  %v1552 = vunpack.c.l.b16 %v289
  %v1553 = vunpack.c.l.b16 %v290
  %v1554 = vunpack.c.l.b16 %v291
  %v1555 = vunpack.c.l.b16 %v292
  %v1556 = vunpack.c.l.b16 %v293
  %v1557 = vunpack.c.l.b16 %v294
  %v1558 = vunpack.c.l.b16 %v295
  %v1559 = vunpack.c.l.b16 %v296
  %v1560 = vunpack.c.l.b16 %v297
  %v1561 = vunpack.c.l.b16 %v298
  %v1562 = vunpack.c.l.b16 %v299
  %v1563 = vunpack.c.l.b16 %v300
  %v1564 = vunpack.c.l.b16 %v301
  %v1565 = vunpack.c.l.b16 %v302
  %v1566 = vunpack.c.l.b16 %v303
  %v1567 = vunpack.c.l.b16 %v304
  %v1568 = vunpack.c.l.b16 %v305
  %v1569 = vunpack.c.l.b16 %v306
  %v1570 = vunpack.c.l.b16 %v307
  %v1571 = vunpack.c.l.b16 %v308
  %v1572 = vunpack.c.l.b16 %v309
  %v1573 = vunpack.c.l.b16 %v310
  %v1574 = vunpack.c.l.b16 %v311
  %v1575 = vunpack.c.l.b16 %v312
  %v1576 = vunpack.c.l.b16 %v313
  %v1577 = vunpack.c.l.b16 %v314
  %v1578 = vunpack.c.l.b16 %v315
  %v1579 = vunpack.c.l.b16 %v316
  %v1580 = vunpack.c.l.b16 %v317
  %v1581 = vunpack.c.l.b16 %v318
  %v1582 = vunpack.c.l.b16 %v319
  %v1583 = vunpack.c.l.b16 %v320
  %v1584 = vunpack.c.l.b16 %v321
  %v1585 = vunpack.c.l.b16 %v322
  %v1586 = vunpack.c.l.b16 %v323
  %v1587 = vunpack.c.l.b16 %v324
  %v1588 = vunpack.c.l.b16 %v325
  %v1589 = vunpack.c.l.b16 %v326
  %v1590 = vunpack.c.l.b16 %v327
  %v1591 = vunpack.c.l.b16 %v328
  %v1592 = vunpack.c.l.b16 %v329
  %v1593 = vunpack.c.l.b16 %v330
  %v1594 = vunpack.c.l.b16 %v331
  %v1595 = vunpack.c.l.b16 %v332
  %v1596 = vunpack.c.l.b16 %v333
  %v1597 = vunpack.c.l.b16 %v334
  %v1598 = vunpack.c.l.b16 %v335
  %v1599 = vunpack.c.l.b16 %v336
  %v1600 = vunpack.c.l.b16 %v337
  %v1601 = vunpack.c.l.b16 %v338
  %v1602 = vunpack.c.l.b16 %v339
  %v1603 = vunpack.c.l.b16 %v340
  %v1604 = vunpack.c.l.b16 %v341
  %v1605 = vunpack.c.l.b16 %v342
  %v1606 = vunpack.c.l.b16 %v343
  %v1607 = vunpack.c.l.b16 %v344
  %v1608 = vunpack.c.l.b16 %v345
  %v1609 = vunpack.c.l.b16 %v346
  %v1610 = vunpack.c.l.b16 %v347
  %v1611 = vunpack.c.l.b16 %v348
  %v1612 = vunpack.c.l.b16 %v349
  %v1613 = vunpack.c.l.b16 %v350
  %v1614 = vunpack.c.l.b16 %v351
  %v1615 = vunpack.c.l.b16 %v352
  %v1616 = vunpack.c.l.b16 %v353
  %v1617 = vunpack.c.l.b16 %v354
  %v1618 = vunpack.c.l.b16 %v355
  %v1619 = vunpack.c.l.b16 %v356
  %v1620 = vunpack.c.l.b16 %v357
  %v1621 = vunpack.c.l.b16 %v358
  %v1622 = vunpack.c.l.b16 %v359
  %v1623 = vunpack.c.l.b16 %v360
  %v1624 = vunpack.c.l.b16 %v361
  %v1625 = vunpack.c.l.b16 %v362
  %v1626 = vunpack.c.l.b16 %v363
  %v1627 = vunpack.c.l.b16 %v364
  %v1628 = vunpack.c.l.b16 %v365
  %v1629 = vunpack.c.l.b16 %v366
  %v1630 = vunpack.c.l.b16 %v367
  %v1631 = vunpack.c.l.b16 %v368
  %v1632 = vunpack.c.l.b16 %v369
  %v1633 = vunpack.c.l.b16 %v370
  %v1634 = vunpack.c.l.b16 %v371
  %v1635 = vunpack.c.l.b16 %v372
  %v1636 = vunpack.c.l.b16 %v373
  %v1637 = vunpack.c.l.b16 %v374
  %v1638 = vunpack.c.l.b16 %v375
  %v1639 = vunpack.c.l.b16 %v376
  %v1640 = vunpack.c.l.b16 %v377
  %v1641 = vunpack.c.l.b16 %v378
  %v1642 = vunpack.c.l.b16 %v379
  %v1643 = vunpack.c.l.b16 %v380
  %v1644 = vunpack.c.l.b16 %v381
  %v1645 = vunpack.c.l.b16 %v382
  %v1646 = vunpack.c.l.b16 %v383
  %v1647 = vunpack.c.l.b16 %v384
  %v1648 = vunpack.c.l.b16 %v385
  %v1649 = vunpack.c.l.b16 %v386
  %v1650 = vunpack.c.l.b16 %v387
  %v1651 = vunpack.c.l.b16 %v388
  %v1652 = vunpack.c.l.b16 %v389
  %v1653 = vunpack.c.l.b16 %v390
  %v1654 = vunpack.c.l.b16 %v391
  %v1655 = vunpack.c.l.b16 %v392
  %v1656 = vunpack.c.l.b16 %v393
  %v1657 = vunpack.c.l.b16 %v394
  %v1658 = vunpack.c.l.b16 %v395
  %v1659 = vunpack.c.l.b16 %v396
  %v1660 = vunpack.c.l.b16 %v397
  %v1661 = vunpack.c.l.b16 %v398
  %v1662 = vunpack.c.l.b16 %v399
  %v1663 = vunpack.c.l.b16 %v400
  %v1664 = vunpack.c.l.b16 %v401
  %v1665 = vunpack.c.l.b16 %v402
  %v1666 = vunpack.c.l.b16 %v403
  %v1667 = vunpack.c.l.b16 %v404
  %v1668 = vunpack.c.l.b16 %v405
  %v1669 = vunpack.c.l.b16 %v406
  %v1670 = vunpack.c.l.b16 %v407
  %v1671 = vunpack.c.l.b16 %v408
  %v1672 = vunpack.c.l.b16 %v409
  %v1673 = vunpack.c.l.b16 %v410
  %v1674 = vunpack.c.l.b16 %v411
  %v1675 = vunpack.c.l.b16 %v412
  %v1676 = vunpack.c.l.b16 %v413
  %v1677 = vunpack.c.l.b16 %v414
  %v1678 = vunpack.c.l.b16 %v415
  %v1679 = vunpack.c.l.b16 %v416
  %v1680 = vunpack.c.l.b16 %v417
  %v1681 = vunpack.c.l.b16 %v418
  %v1682 = vunpack.c.l.b16 %v419
  %v1683 = vunpack.c.l.b16 %v420
  %v1684 = vunpack.c.l.b16 %v421
  %v1685 = vunpack.c.l.b16 %v422
  %v1686 = vunpack.c.l.b16 %v423
  %v1687 = vunpack.c.l.b16 %v424
  %v1688 = vunpack.c.l.b16 %v425
  %v1689 = vunpack.c.l.b16 %v426
  %v1690 = vunpack.c.l.b16 %v427
  %v1691 = vunpack.c.l.b16 %v428
  %v1692 = vunpack.c.l.b16 %v429
  %v1693 = vunpack.c.l.b16 %v430
  %v1694 = vunpack.c.l.b16 %v431
  %v1695 = vunpack.c.l.b16 %v432
  %v1696 = vunpack.c.l.b16 %v433
  %v1697 = vunpack.c.l.b16 %v434
  %v1698 = vunpack.c.l.b16 %v435
  %v1699 = vunpack.c.l.b16 %v436
  %v1700 = vunpack.c.l.b16 %v437
  %v1701 = vunpack.c.l.b16 %v438
  %v1702 = vunpack.c.l.b16 %v439
  %v1703 = vunpack.c.l.b16 %v440
  %v1704 = vunpack.c.l.b16 %v441
  %v1705 = vunpack.c.l.b16 %v442
  %v1706 = vunpack.c.l.b16 %v443
  %v1707 = vunpack.c.l.b16 %v444
  %v1708 = vunpack.c.l.b16 %v445
  %v1709 = vunpack.c.l.b16 %v446
  %v1710 = vunpack.c.l.b16 %v447
  %v1711 = vunpack.c.l.b16 %v448
  %v1712 = vunpack.c.l.b16 %v449
  %v1713 = vunpack.c.l.b16 %v450
  %v1714 = vunpack.c.l.b16 %v451
  %v1715 = vunpack.c.l.b16 %v452
  %v1716 = vunpack.c.l.b16 %v453
  %v1717 = vunpack.c.l.b16 %v454
  %v1718 = vunpack.c.l.b16 %v455
  %v1719 = vunpack.c.l.b16 %v456
  %v1720 = vunpack.c.l.b16 %v457
  %v1721 = vunpack.c.l.b16 %v458
  %v1722 = vunpack.c.l.b16 %v459
  %v1723 = vunpack.c.l.b16 %v460
  %v1724 = vunpack.c.l.b16 %v461
  %v1725 = vunpack.c.l.b16 %v462
  %v1726 = vunpack.c.l.b16 %v463
  %v1727 = vunpack.c.l.b16 %v464
  %v1728 = vunpack.c.l.b16 %v465
  %v1729 = vunpack.c.l.b16 %v466
  %v1730 = vunpack.c.l.b16 %v467
  %v1731 = vunpack.c.l.b16 %v468
  %v1732 = vunpack.c.l.b16 %v469
  %v1733 = vunpack.c.l.b16 %v470
  %v1734 = vunpack.c.l.b16 %v471
  %v1735 = vunpack.c.l.b16 %v472
  %v1736 = vunpack.c.l.b16 %v473
  %v1737 = vunpack.c.l.b16 %v474
  %v1738 = vunpack.c.l.b16 %v475
  %v1739 = vunpack.c.l.b16 %v476
  %v1740 = vunpack.c.l.b16 %v477
  %v1741 = vunpack.c.l.b16 %v478
  %v1742 = vunpack.c.l.b16 %v479
  %v1743 = vunpack.c.l.b16 %v480
  %v1744 = vunpack.c.l.b16 %v481
  %v1745 = vunpack.c.l.b16 %v482
  %v1746 = vunpack.c.l.b16 %v483
  %v1747 = vunpack.c.l.b16 %v484
  %v1748 = vunpack.c.l.b16 %v485
  %v1749 = vunpack.c.l.b16 %v486
  %v1750 = vunpack.c.l.b16 %v487
  %v1751 = vunpack.c.l.b16 %v488
  %v1752 = vunpack.c.l.b16 %v489
  %v1753 = vunpack.c.l.b16 %v490
  %v1754 = vunpack.c.l.b16 %v491
  %v1755 = vunpack.c.l.b16 %v492
  %v1756 = vunpack.c.l.b16 %v493
  %v1757 = vunpack.c.l.b16 %v494
  %v1758 = vunpack.c.l.b16 %v495
  %v1759 = vunpack.c.l.b16 %v496
  %v1760 = vunpack.c.l.b16 %v497
  %v1761 = vunpack.c.l.b16 %v498
  %v1762 = vunpack.c.l.b16 %v499
  %v1763 = vunpack.c.l.b16 %v500
  %v1764 = vunpack.c.l.b16 %v501
  %v1765 = vunpack.c.l.b16 %v502
  %v1766 = vunpack.c.l.b16 %v503
  %v1767 = vunpack.c.l.b16 %v504
  %v1768 = vunpack.c.l.b16 %v505
  %v1769 = vunpack.c.l.b16 %v506
  %v1770 = vunpack.c.l.b16 %v507
  %v1771 = vunpack.c.l.b16 %v508
  %v1772 = vunpack.c.l.b16 %v509
  %v1773 = vunpack.c.l.b16 %v510
  %v1774 = vunpack.c.l.b16 %v511
  %v1775 = vunpack.c.l.b16 %v512
  %v1776 = vunpack.c.l.b16 %v513
  %v1777 = vunpack.c.l.b16 %v514
  %v1778 = vunpack.c.l.b16 %v515
  %v1779 = vunpack.c.l.b16 %v516
  %v1780 = vunpack.c.l.b16 %v517
  %v1781 = vunpack.c.l.b16 %v518
  %v1782 = vunpack.c.l.b16 %v519
  %v1783 = vunpack.c.l.b16 %v520
  %v1784 = vunpack.c.l.b16 %v521
  %v1785 = vunpack.c.l.b16 %v522
  %v1786 = vunpack.c.l.b16 %v523
  %v1787 = vunpack.c.l.b16 %v524
  %v1788 = vunpack.c.l.b16 %v525
  %v1789 = vunpack.c.l.b16 %v526
  %v1790 = vunpack.c.l.b16 %v527
  %v1791 = vunpack.c.l.b16 %v528
  %v1792 = vunpack.c.l.b16 %v529
  %v1793 = vunpack.c.l.b16 %v530
  %v1794 = vpack.c.b16 %v1283, %v1282
  %v1795 = vpack.c.b16 %v1285, %v1284
  %v1796 = vpack.c.b16 %v1287, %v1286
  %v1797 = vpack.c.b16 %v1289, %v1288
  %v1798 = vpack.c.b16 %v1291, %v1290
  %v1799 = vpack.c.b16 %v1293, %v1292
  %v1800 = vpack.c.b16 %v1295, %v1294
  %v1801 = vpack.c.b16 %v1297, %v1296
  %v1802 = vpack.c.b16 %v1299, %v1298
  %v1803 = vpack.c.b16 %v1301, %v1300
  %v1804 = vpack.c.b16 %v1303, %v1302
  %v1805 = vpack.c.b16 %v1305, %v1304
  %v1806 = vpack.c.b16 %v1307, %v1306
  %v1807 = vpack.c.b16 %v1309, %v1308
  %v1808 = vpack.c.b16 %v1311, %v1310
  %v1809 = vpack.c.b16 %v1313, %v1312
  %v1810 = vpack.c.b16 %v1315, %v1314
  %v1811 = vpack.c.b16 %v1317, %v1316
  %v1812 = vpack.c.b16 %v1319, %v1318
  %v1813 = vpack.c.b16 %v1321, %v1320
  %v1814 = vpack.c.b16 %v1323, %v1322
  %v1815 = vpack.c.b16 %v1325, %v1324
  %v1816 = vpack.c.b16 %v1327, %v1326
  %v1817 = vpack.c.b16 %v1329, %v1328
  %v1818 = vpack.c.b16 %v1331, %v1330
  %v1819 = vpack.c.b16 %v1333, %v1332
  %v1820 = vpack.c.b16 %v1335, %v1334
  %v1821 = vpack.c.b16 %v1337, %v1336
  %v1822 = vpack.c.b16 %v1339, %v1338
  %v1823 = vpack.c.b16 %v1341, %v1340
  %v1824 = vpack.c.b16 %v1343, %v1342
  %v1825 = vpack.c.b16 %v1345, %v1344
  %v1826 = vpack.c.b16 %v1347, %v1346
  %v1827 = vpack.c.b16 %v1349, %v1348
  %v1828 = vpack.c.b16 %v1351, %v1350
  %v1829 = vpack.c.b16 %v1353, %v1352
  %v1830 = vpack.c.b16 %v1355, %v1354
  %v1831 = vpack.c.b16 %v1357, %v1356
  %v1832 = vpack.c.b16 %v1359, %v1358
  %v1833 = vpack.c.b16 %v1361, %v1360
  %v1834 = vpack.c.b16 %v1363, %v1362
  %v1835 = vpack.c.b16 %v1365, %v1364
  %v1836 = vpack.c.b16 %v1367, %v1366
  %v1837 = vpack.c.b16 %v1369, %v1368
  %v1838 = vpack.c.b16 %v1371, %v1370
  %v1839 = vpack.c.b16 %v1373, %v1372
  %v1840 = vpack.c.b16 %v1375, %v1374
  %v1841 = vpack.c.b16 %v1377, %v1376
  %v1842 = vpack.c.b16 %v1379, %v1378
  %v1843 = vpack.c.b16 %v1381, %v1380
  %v1844 = vpack.c.b16 %v1383, %v1382
  %v1845 = vpack.c.b16 %v1385, %v1384
  %v1846 = vpack.c.b16 %v1387, %v1386
  %v1847 = vpack.c.b16 %v1389, %v1388
  %v1848 = vpack.c.b16 %v1391, %v1390
  %v1849 = vpack.c.b16 %v1393, %v1392
  %v1850 = vpack.c.b16 %v1395, %v1394
  %v1851 = vpack.c.b16 %v1397, %v1396
  %v1852 = vpack.c.b16 %v1399, %v1398
  %v1853 = vpack.c.b16 %v1401, %v1400
  %v1854 = vpack.c.b16 %v1403, %v1402
  %v1855 = vpack.c.b16 %v1405, %v1404
  %v1856 = vpack.c.b16 %v1407, %v1406
  %v1857 = vpack.c.b16 %v1409, %v1408
  %v1858 = vpack.c.b16 %v1411, %v1410
  %v1859 = vpack.c.b16 %v1413, %v1412
  %v1860 = vpack.c.b16 %v1415, %v1414
  %v1861 = vpack.c.b16 %v1417, %v1416
  %v1862 = vpack.c.b16 %v1419, %v1418
  %v1863 = vpack.c.b16 %v1421, %v1420
  %v1864 = vpack.c.b16 %v1423, %v1422
  %v1865 = vpack.c.b16 %v1425, %v1424
  %v1866 = vpack.c.b16 %v1427, %v1426
  %v1867 = vpack.c.b16 %v1429, %v1428
  %v1868 = vpack.c.b16 %v1431, %v1430
  %v1869 = vpack.c.b16 %v1433, %v1432
  %v1870 = vpack.c.b16 %v1435, %v1434
  %v1871 = vpack.c.b16 %v1437, %v1436
  %v1872 = vpack.c.b16 %v1439, %v1438
  %v1873 = vpack.c.b16 %v1441, %v1440
  %v1874 = vpack.c.b16 %v1443, %v1442
  %v1875 = vpack.c.b16 %v1445, %v1444
  %v1876 = vpack.c.b16 %v1447, %v1446
  %v1877 = vpack.c.b16 %v1449, %v1448
  %v1878 = vpack.c.b16 %v1451, %v1450
  %v1879 = vpack.c.b16 %v1453, %v1452
  %v1880 = vpack.c.b16 %v1455, %v1454
  %v1881 = vpack.c.b16 %v1457, %v1456
  %v1882 = vpack.c.b16 %v1459, %v1458
  %v1883 = vpack.c.b16 %v1461, %v1460
  %v1884 = vpack.c.b16 %v1463, %v1462
  %v1885 = vpack.c.b16 %v1465, %v1464
  %v1886 = vpack.c.b16 %v1467, %v1466
  %v1887 = vpack.c.b16 %v1469, %v1468
  %v1888 = vpack.c.b16 %v1471, %v1470
  %v1889 = vpack.c.b16 %v1473, %v1472
  %v1890 = vpack.c.b16 %v1475, %v1474
  %v1891 = vpack.c.b16 %v1477, %v1476
  %v1892 = vpack.c.b16 %v1479, %v1478
  %v1893 = vpack.c.b16 %v1481, %v1480
  %v1894 = vpack.c.b16 %v1483, %v1482
  %v1895 = vpack.c.b16 %v1485, %v1484
  %v1896 = vpack.c.b16 %v1487, %v1486
  %v1897 = vpack.c.b16 %v1489, %v1488
  %v1898 = vpack.c.b16 %v1491, %v1490
  %v1899 = vpack.c.b16 %v1493, %v1492
  %v1900 = vpack.c.b16 %v1495, %v1494
  %v1901 = vpack.c.b16 %v1497, %v1496
  %v1902 = vpack.c.b16 %v1499, %v1498
  %v1903 = vpack.c.b16 %v1501, %v1500
  %v1904 = vpack.c.b16 %v1503, %v1502
  %v1905 = vpack.c.b16 %v1505, %v1504
  %v1906 = vpack.c.b16 %v1507, %v1506
  %v1907 = vpack.c.b16 %v1509, %v1508
  %v1908 = vpack.c.b16 %v1511, %v1510
  %v1909 = vpack.c.b16 %v1513, %v1512
  %v1910 = vpack.c.b16 %v1515, %v1514
  %v1911 = vpack.c.b16 %v1517, %v1516
  %v1912 = vpack.c.b16 %v1519, %v1518
  %v1913 = vpack.c.b16 %v1521, %v1520
  %v1914 = vpack.c.b16 %v1523, %v1522
  %v1915 = vpack.c.b16 %v1525, %v1524
  %v1916 = vpack.c.b16 %v1527, %v1526
  %v1917 = vpack.c.b16 %v1529, %v1528
  %v1918 = vpack.c.b16 %v1531, %v1530
  %v1919 = vpack.c.b16 %v1533, %v1532
  %v1920 = vpack.c.b16 %v1535, %v1534
  %v1921 = vpack.c.b16 %v1537, %v1536
  %v1922 = vpack.c.b16 %v1539, %v1538
  %v1923 = vpack.c.b16 %v1541, %v1540
  %v1924 = vpack.c.b16 %v1543, %v1542
  %v1925 = vpack.c.b16 %v1545, %v1544
  %v1926 = vpack.c.b16 %v1547, %v1546
  %v1927 = vpack.c.b16 %v1549, %v1548
  %v1928 = vpack.c.b16 %v1551, %v1550
  %v1929 = vpack.c.b16 %v1553, %v1552
  %v1930 = vpack.c.b16 %v1555, %v1554
  %v1931 = vpack.c.b16 %v1557, %v1556
  %v1932 = vpack.c.b16 %v1559, %v1558
  %v1933 = vpack.c.b16 %v1561, %v1560
  %v1934 = vpack.c.b16 %v1563, %v1562
  %v1935 = vpack.c.b16 %v1565, %v1564
  %v1936 = vpack.c.b16 %v1567, %v1566
  %v1937 = vpack.c.b16 %v1569, %v1568
  %v1938 = vpack.c.b16 %v1571, %v1570
  %v1939 = vpack.c.b16 %v1573, %v1572
  %v1940 = vpack.c.b16 %v1575, %v1574
  %v1941 = vpack.c.b16 %v1577, %v1576
  %v1942 = vpack.c.b16 %v1579, %v1578
  %v1943 = vpack.c.b16 %v1581, %v1580
  %v1944 = vpack.c.b16 %v1583, %v1582
  %v1945 = vpack.c.b16 %v1585, %v1584
  %v1946 = vpack.c.b16 %v1587, %v1586
  %v1947 = vpack.c.b16 %v1589, %v1588
  %v1948 = vpack.c.b16 %v1591, %v1590
  %v1949 = vpack.c.b16 %v1593, %v1592
  %v1950 = vpack.c.b16 %v1595, %v1594
  %v1951 = vpack.c.b16 %v1597, %v1596
  %v1952 = vpack.c.b16 %v1599, %v1598
  %v1953 = vpack.c.b16 %v1601, %v1600
  %v1954 = vpack.c.b16 %v1603, %v1602
  %v1955 = vpack.c.b16 %v1605, %v1604
  %v1956 = vpack.c.b16 %v1607, %v1606
  %v1957 = vpack.c.b16 %v1609, %v1608
  %v1958 = vpack.c.b16 %v1611, %v1610
  %v1959 = vpack.c.b16 %v1613, %v1612
  %v1960 = vpack.c.b16 %v1615, %v1614
  %v1961 = vpack.c.b16 %v1617, %v1616
  %v1962 = vpack.c.b16 %v1619, %v1618
  %v1963 = vpack.c.b16 %v1621, %v1620
  %v1964 = vpack.c.b16 %v1623, %v1622
  %v1965 = vpack.c.b16 %v1625, %v1624
  %v1966 = vpack.c.b16 %v1627, %v1626
  %v1967 = vpack.c.b16 %v1629, %v1628
  %v1968 = vpack.c.b16 %v1631, %v1630
  %v1969 = vpack.c.b16 %v1633, %v1632
  %v1970 = vpack.c.b16 %v1635, %v1634
  %v1971 = vpack.c.b16 %v1637, %v1636
  %v1972 = vpack.c.b16 %v1639, %v1638
  %v1973 = vpack.c.b16 %v1641, %v1640
  %v1974 = vpack.c.b16 %v1643, %v1642
  %v1975 = vpack.c.b16 %v1645, %v1644
  %v1976 = vpack.c.b16 %v1647, %v1646
  %v1977 = vpack.c.b16 %v1649, %v1648
  %v1978 = vpack.c.b16 %v1651, %v1650
  %v1979 = vpack.c.b16 %v1653, %v1652
  %v1980 = vpack.c.b16 %v1655, %v1654
  %v1981 = vpack.c.b16 %v1657, %v1656
  %v1982 = vpack.c.b16 %v1659, %v1658
  %v1983 = vpack.c.b16 %v1661, %v1660
  %v1984 = vpack.c.b16 %v1663, %v1662
  %v1985 = vpack.c.b16 %v1665, %v1664
  %v1986 = vpack.c.b16 %v1667, %v1666
  %v1987 = vpack.c.b16 %v1669, %v1668
  %v1988 = vpack.c.b16 %v1671, %v1670
  %v1989 = vpack.c.b16 %v1673, %v1672
  %v1990 = vpack.c.b16 %v1675, %v1674
  %v1991 = vpack.c.b16 %v1677, %v1676
  %v1992 = vpack.c.b16 %v1679, %v1678
  %v1993 = vpack.c.b16 %v1681, %v1680
  %v1994 = vpack.c.b16 %v1683, %v1682
  %v1995 = vpack.c.b16 %v1685, %v1684
  %v1996 = vpack.c.b16 %v1687, %v1686
  %v1997 = vpack.c.b16 %v1689, %v1688
  %v1998 = vpack.c.b16 %v1691, %v1690
  %v1999 = vpack.c.b16 %v1693, %v1692
  %v2000 = vpack.c.b16 %v1695, %v1694
  %v2001 = vpack.c.b16 %v1697, %v1696
  %v2002 = vpack.c.b16 %v1699, %v1698
  %v2003 = vpack.c.b16 %v1701, %v1700
  %v2004 = vpack.c.b16 %v1703, %v1702
  %v2005 = vpack.c.b16 %v1705, %v1704
  %v2006 = vpack.c.b16 %v1707, %v1706
  %v2007 = vpack.c.b16 %v1709, %v1708
  %v2008 = vpack.c.b16 %v1711, %v1710
  %v2009 = vpack.c.b16 %v1713, %v1712
  %v2010 = vpack.c.b16 %v1715, %v1714
  %v2011 = vpack.c.b16 %v1717, %v1716
  %v2012 = vpack.c.b16 %v1719, %v1718
  %v2013 = vpack.c.b16 %v1721, %v1720
  %v2014 = vpack.c.b16 %v1723, %v1722
  %v2015 = vpack.c.b16 %v1725, %v1724
  %v2016 = vpack.c.b16 %v1727, %v1726
  %v2017 = vpack.c.b16 %v1729, %v1728
  %v2018 = vpack.c.b16 %v1731, %v1730
  %v2019 = vpack.c.b16 %v1733, %v1732
  %v2020 = vpack.c.b16 %v1735, %v1734
  %v2021 = vpack.c.b16 %v1737, %v1736
  %v2022 = vpack.c.b16 %v1739, %v1738
  %v2023 = vpack.c.b16 %v1741, %v1740
  %v2024 = vpack.c.b16 %v1743, %v1742
  %v2025 = vpack.c.b16 %v1745, %v1744
  %v2026 = vpack.c.b16 %v1747, %v1746
  %v2027 = vpack.c.b16 %v1749, %v1748
  %v2028 = vpack.c.b16 %v1751, %v1750
  %v2029 = vpack.c.b16 %v1753, %v1752
  %v2030 = vpack.c.b16 %v1755, %v1754
  %v2031 = vpack.c.b16 %v1757, %v1756
  %v2032 = vpack.c.b16 %v1759, %v1758
  %v2033 = vpack.c.b16 %v1761, %v1760
  %v2034 = vpack.c.b16 %v1763, %v1762
  %v2035 = vpack.c.b16 %v1765, %v1764
  %v2036 = vpack.c.b16 %v1767, %v1766
  %v2037 = vpack.c.b16 %v1769, %v1768
  %v2038 = vpack.c.b16 %v1771, %v1770
  %v2039 = vpack.c.b16 %v1773, %v1772
  %v2040 = vpack.c.b16 %v1775, %v1774
  %v2041 = vpack.c.b16 %v1777, %v1776
  %v2042 = vpack.c.b16 %v1779, %v1778
  %v2043 = vpack.c.b16 %v1781, %v1780
  %v2044 = vpack.c.b16 %v1783, %v1782
  %v2045 = vpack.c.b16 %v1785, %v1784
  %v2046 = vpack.c.b16 %v1787, %v1786
  %v2047 = vpack.c.b16 %v1789, %v1788
  %v2048 = vpack.c.b16 %v1791, %v1790
  %v2049 = vpack.c.b16 %v1793, %v1792
  %2306 = vmatprep.subr.bf16.mxu0 0
  %2307 = vmatpush1.bf16.msra.mxu0 %v1794
  %2308 = vmatprep.subr.bf16.mxu0 0
  %2309 = vmatpush1.bf16.msra.mxu0 %v1795
  %2310 = vmatprep.subr.bf16.mxu0 0
  %2311 = vmatpush1.bf16.msra.mxu0 %v1796
  %2312 = vmatprep.subr.bf16.mxu0 0
  %2313 = vmatpush1.bf16.msra.mxu0 %v1797
  %2314 = vmatprep.subr.bf16.mxu0 0
  %2315 = vmatpush1.bf16.msra.mxu0 %v1798
  %2316 = vmatprep.subr.bf16.mxu0 0
  %2317 = vmatpush1.bf16.msra.mxu0 %v1799
  %2318 = vmatprep.subr.bf16.mxu0 0
  %2319 = vmatpush1.bf16.msra.mxu0 %v1800
  %2320 = vmatprep.subr.bf16.mxu0 0
  %2321 = vmatpush1.bf16.msra.mxu0 %v1801
  %2322 = vmatprep.subr.bf16.mxu0 0
  %2323 = vmatpush1.bf16.msra.mxu0 %v1802
  %2324 = vmatprep.subr.bf16.mxu0 0
  %2325 = vmatpush1.bf16.msra.mxu0 %v1803
  %2326 = vmatprep.subr.bf16.mxu0 0
  %2327 = vmatpush1.bf16.msra.mxu0 %v1804
  %2328 = vmatprep.subr.bf16.mxu0 0
  %2329 = vmatpush1.bf16.msra.mxu0 %v1805
  %2330 = vmatprep.subr.bf16.mxu0 0
  %2331 = vmatpush1.bf16.msra.mxu0 %v1806
  %2332 = vmatprep.subr.bf16.mxu0 0
  %2333 = vmatpush1.bf16.msra.mxu0 %v1807
  %2334 = vmatprep.subr.bf16.mxu0 0
  %2335 = vmatpush1.bf16.msra.mxu0 %v1808
  %2336 = vmatprep.subr.bf16.mxu0 0
  %2337 = vmatpush1.bf16.msra.mxu0 %v1809
  %2338 = vmatprep.mubr.bf16.mxu0 %v579
  %2339 = vmatmul.mubr.bf16.gmra.mrb[0].mxu0 %v565
  %v2340 = vpop.f32.mrb[0].mxu0
  %v2341 = vadd.f32 %v536, %v2340
  %v2342 = vpop.f32.mrb[0].mxu0
  %v2343 = vpop.f32.mrb[0].mxu0
  %v2344 = vpop.f32.mrb[0].mxu0
  %2345 = vdwg.mxu0
  %2346 = vmatprep.subr.bf16.mxu0 0
  %2347 = vmatpush1.bf16.msra.mxu0 %v1810
  %2348 = vmatprep.subr.bf16.mxu0 0
  %2349 = vmatpush1.bf16.msra.mxu0 %v1811
  %2350 = vmatprep.subr.bf16.mxu0 0
  %2351 = vmatpush1.bf16.msra.mxu0 %v1812
  %2352 = vmatprep.subr.bf16.mxu0 0
  %2353 = vmatpush1.bf16.msra.mxu0 %v1813
  %2354 = vmatprep.subr.bf16.mxu0 0
  %2355 = vmatpush1.bf16.msra.mxu0 %v1814
  %2356 = vmatprep.subr.bf16.mxu0 0
  %2357 = vmatpush1.bf16.msra.mxu0 %v1815
  %2358 = vmatprep.subr.bf16.mxu0 0
  %2359 = vmatpush1.bf16.msra.mxu0 %v1816
  %2360 = vmatprep.subr.bf16.mxu0 0
  %2361 = vmatpush1.bf16.msra.mxu0 %v1817
  %2362 = vmatprep.subr.bf16.mxu0 0
  %2363 = vmatpush1.bf16.msra.mxu0 %v1818
  %2364 = vmatprep.subr.bf16.mxu0 0
  %2365 = vmatpush1.bf16.msra.mxu0 %v1819
  %2366 = vmatprep.subr.bf16.mxu0 0
  %2367 = vmatpush1.bf16.msra.mxu0 %v1820
  %2368 = vmatprep.subr.bf16.mxu0 0
  %2369 = vmatpush1.bf16.msra.mxu0 %v1821
  %2370 = vmatprep.subr.bf16.mxu0 0
  %2371 = vmatpush1.bf16.msra.mxu0 %v1822
  %2372 = vmatprep.subr.bf16.mxu0 0
  %2373 = vmatpush1.bf16.msra.mxu0 %v1823
  %2374 = vmatprep.subr.bf16.mxu0 0
  %2375 = vmatpush1.bf16.msra.mxu0 %v1824
  %2376 = vmatprep.subr.bf16.mxu0 0
  %2377 = vmatpush1.bf16.msra.mxu0 %v1825
  %2378 = vmatprep.mubr.bf16.mxu0 %v589
  %2379 = vmatmul.mubr.bf16.gmra.mrb[0].mxu0 %v587
  %v2380 = vpop.f32.mrb[0].mxu0
  %v2381 = vadd.f32 %v2341, %v2380
  %v2382 = vpop.f32.mrb[0].mxu0
  %v2383 = vpop.f32.mrb[0].mxu0
  %v2384 = vpop.f32.mrb[0].mxu0
  %2385 = vdwg.mxu0
  %2386 = vmatprep.subr.bf16.mxu0 0
  %2387 = vmatpush1.bf16.msra.mxu0 %v1826
  %2388 = vmatprep.subr.bf16.mxu0 0
  %2389 = vmatpush1.bf16.msra.mxu0 %v1827
  %2390 = vmatprep.subr.bf16.mxu0 0
  %2391 = vmatpush1.bf16.msra.mxu0 %v1828
  %2392 = vmatprep.subr.bf16.mxu0 0
  %2393 = vmatpush1.bf16.msra.mxu0 %v1829
  %2394 = vmatprep.subr.bf16.mxu0 0
  %2395 = vmatpush1.bf16.msra.mxu0 %v1830
  %2396 = vmatprep.subr.bf16.mxu0 0
  %2397 = vmatpush1.bf16.msra.mxu0 %v1831
  %2398 = vmatprep.subr.bf16.mxu0 0
  %2399 = vmatpush1.bf16.msra.mxu0 %v1832
  %2400 = vmatprep.subr.bf16.mxu0 0
  %2401 = vmatpush1.bf16.msra.mxu0 %v1833
  %2402 = vmatprep.subr.bf16.mxu0 0
  %2403 = vmatpush1.bf16.msra.mxu0 %v1834
  %2404 = vmatprep.subr.bf16.mxu0 0
  %2405 = vmatpush1.bf16.msra.mxu0 %v1835
  %2406 = vmatprep.subr.bf16.mxu0 0
  %2407 = vmatpush1.bf16.msra.mxu0 %v1836
  %2408 = vmatprep.subr.bf16.mxu0 0
  %2409 = vmatpush1.bf16.msra.mxu0 %v1837
  %2410 = vmatprep.subr.bf16.mxu0 0
  %2411 = vmatpush1.bf16.msra.mxu0 %v1838
  %2412 = vmatprep.subr.bf16.mxu0 0
  %2413 = vmatpush1.bf16.msra.mxu0 %v1839
  %2414 = vmatprep.subr.bf16.mxu0 0
  %2415 = vmatpush1.bf16.msra.mxu0 %v1840
  %2416 = vmatprep.subr.bf16.mxu0 0
  %2417 = vmatpush1.bf16.msra.mxu0 %v1841
  %2418 = vmatprep.mubr.bf16.mxu0 %v586
  %2419 = vmatmul.mubr.bf16.gmra.mrb[0].mxu0 %v572
  %v2420 = vpop.f32.mrb[0].mxu0
  %v2421 = vadd.f32 %v2381, %v2420
  %v2422 = vpop.f32.mrb[0].mxu0
  %v2423 = vpop.f32.mrb[0].mxu0
  %v2424 = vpop.f32.mrb[0].mxu0
  %2425 = vdwg.mxu0
  %2426 = vmatprep.subr.bf16.mxu0 0
  %2427 = vmatpush1.bf16.msra.mxu0 %v1842
  %2428 = vmatprep.subr.bf16.mxu0 0
  %2429 = vmatpush1.bf16.msra.mxu0 %v1843
  %2430 = vmatprep.subr.bf16.mxu0 0
  %2431 = vmatpush1.bf16.msra.mxu0 %v1844
  %2432 = vmatprep.subr.bf16.mxu0 0
  %2433 = vmatpush1.bf16.msra.mxu0 %v1845
  %2434 = vmatprep.subr.bf16.mxu0 0
  %2435 = vmatpush1.bf16.msra.mxu0 %v1846
  %2436 = vmatprep.subr.bf16.mxu0 0
  %2437 = vmatpush1.bf16.msra.mxu0 %v1847
  %2438 = vmatprep.subr.bf16.mxu0 0
  %2439 = vmatpush1.bf16.msra.mxu0 %v1848
  %2440 = vmatprep.subr.bf16.mxu0 0
  %2441 = vmatpush1.bf16.msra.mxu0 %v1849
  %2442 = vmatprep.subr.bf16.mxu0 0
  %2443 = vmatpush1.bf16.msra.mxu0 %v1850
  %2444 = vmatprep.subr.bf16.mxu0 0
  %2445 = vmatpush1.bf16.msra.mxu0 %v1851
  %2446 = vmatprep.subr.bf16.mxu0 0
  %2447 = vmatpush1.bf16.msra.mxu0 %v1852
  %2448 = vmatprep.subr.bf16.mxu0 0
  %2449 = vmatpush1.bf16.msra.mxu0 %v1853
  %2450 = vmatprep.subr.bf16.mxu0 0
  %2451 = vmatpush1.bf16.msra.mxu0 %v1854
  %2452 = vmatprep.subr.bf16.mxu0 0
  %2453 = vmatpush1.bf16.msra.mxu0 %v1855
  %2454 = vmatprep.subr.bf16.mxu0 0
  %2455 = vmatpush1.bf16.msra.mxu0 %v1856
  %2456 = vmatprep.subr.bf16.mxu0 0
  %2457 = vmatpush1.bf16.msra.mxu0 %v1857
  %2458 = vmatprep.mubr.bf16.mxu0 %v590
  %2459 = vmatmul.mubr.bf16.gmra.mrb[0].mxu0 %v588
  %v2460 = vpop.f32.mrb[0].mxu0
  %v2461 = vadd.f32 %v2421, %v2460
  %v2462 = vpop.f32.mrb[0].mxu0
  %v2463 = vpop.f32.mrb[0].mxu0
  %v2464 = vpop.f32.mrb[0].mxu0
  %2465 = vdwg.mxu0
  %2466 = vmatprep.subr.bf16.mxu0 0
  %2467 = vmatpush1.bf16.msra.mxu0 %v1858
  %2468 = vmatprep.subr.bf16.mxu0 0
  %2469 = vmatpush1.bf16.msra.mxu0 %v1859
  %2470 = vmatprep.subr.bf16.mxu0 0
  %2471 = vmatpush1.bf16.msra.mxu0 %v1860
  %2472 = vmatprep.subr.bf16.mxu0 0
  %2473 = vmatpush1.bf16.msra.mxu0 %v1861
  %2474 = vmatprep.subr.bf16.mxu0 0
  %2475 = vmatpush1.bf16.msra.mxu0 %v1862
  %2476 = vmatprep.subr.bf16.mxu0 0
  %2477 = vmatpush1.bf16.msra.mxu0 %v1863
  %2478 = vmatprep.subr.bf16.mxu0 0
  %2479 = vmatpush1.bf16.msra.mxu0 %v1864
  %2480 = vmatprep.subr.bf16.mxu0 0
  %2481 = vmatpush1.bf16.msra.mxu0 %v1865
  %2482 = vmatprep.subr.bf16.mxu0 0
  %2483 = vmatpush1.bf16.msra.mxu0 %v1866
  %2484 = vmatprep.subr.bf16.mxu0 0
  %2485 = vmatpush1.bf16.msra.mxu0 %v1867
  %2486 = vmatprep.subr.bf16.mxu0 0
  %2487 = vmatpush1.bf16.msra.mxu0 %v1868
  %2488 = vmatprep.subr.bf16.mxu0 0
  %2489 = vmatpush1.bf16.msra.mxu0 %v1869
  %2490 = vmatprep.subr.bf16.mxu0 0
  %2491 = vmatpush1.bf16.msra.mxu0 %v1870
  %2492 = vmatprep.subr.bf16.mxu0 0
  %2493 = vmatpush1.bf16.msra.mxu0 %v1871
  %2494 = vmatprep.subr.bf16.mxu0 0
  %2495 = vmatpush1.bf16.msra.mxu0 %v1872
  %2496 = vmatprep.subr.bf16.mxu0 0
  %2497 = vmatpush1.bf16.msra.mxu0 %v1873
  %2498 = vmatprep.mubr.bf16.mxu0 %v628
  %2499 = vmatmul.mubr.bf16.gmra.mrb[0].mxu0 %v614
  %v2500 = vpop.f32.mrb[0].mxu0
  %v2501 = vadd.f32 %v2461, %v2500
  %v2502 = vpop.f32.mrb[0].mxu0
  %v2503 = vpop.f32.mrb[0].mxu0
  %v2504 = vpop.f32.mrb[0].mxu0
  %2505 = vdwg.mxu0
  %2506 = vmatprep.subr.bf16.mxu0 0
  %2507 = vmatpush1.bf16.msra.mxu0 %v1874
  %2508 = vmatprep.subr.bf16.mxu0 0
  %2509 = vmatpush1.bf16.msra.mxu0 %v1875
  %2510 = vmatprep.subr.bf16.mxu0 0
  %2511 = vmatpush1.bf16.msra.mxu0 %v1876
  %2512 = vmatprep.subr.bf16.mxu0 0
  %2513 = vmatpush1.bf16.msra.mxu0 %v1877
  %2514 = vmatprep.subr.bf16.mxu0 0
  %2515 = vmatpush1.bf16.msra.mxu0 %v1878
  %2516 = vmatprep.subr.bf16.mxu0 0
  %2517 = vmatpush1.bf16.msra.mxu0 %v1879
  %2518 = vmatprep.subr.bf16.mxu0 0
  %2519 = vmatpush1.bf16.msra.mxu0 %v1880
  %2520 = vmatprep.subr.bf16.mxu0 0
  %2521 = vmatpush1.bf16.msra.mxu0 %v1881
  %2522 = vmatprep.subr.bf16.mxu0 0
  %2523 = vmatpush1.bf16.msra.mxu0 %v1882
  %2524 = vmatprep.subr.bf16.mxu0 0
  %2525 = vmatpush1.bf16.msra.mxu0 %v1883
  %2526 = vmatprep.subr.bf16.mxu0 0
  %2527 = vmatpush1.bf16.msra.mxu0 %v1884
  %2528 = vmatprep.subr.bf16.mxu0 0
  %2529 = vmatpush1.bf16.msra.mxu0 %v1885
  %2530 = vmatprep.subr.bf16.mxu0 0
  %2531 = vmatpush1.bf16.msra.mxu0 %v1886
  %2532 = vmatprep.subr.bf16.mxu0 0
  %2533 = vmatpush1.bf16.msra.mxu0 %v1887
  %2534 = vmatprep.subr.bf16.mxu0 0
  %2535 = vmatpush1.bf16.msra.mxu0 %v1888
  %2536 = vmatprep.subr.bf16.mxu0 0
  %2537 = vmatpush1.bf16.msra.mxu0 %v1889
  %2538 = vmatprep.mubr.bf16.mxu0 %v638
  %2539 = vmatmul.mubr.bf16.gmra.mrb[0].mxu0 %v636
  %v2540 = vpop.f32.mrb[0].mxu0
  %v2541 = vadd.f32 %v2501, %v2540
  %v2542 = vpop.f32.mrb[0].mxu0
  %v2543 = vpop.f32.mrb[0].mxu0
  %v2544 = vpop.f32.mrb[0].mxu0
  %2545 = vdwg.mxu0
  %2546 = vmatprep.subr.bf16.mxu0 0
  %2547 = vmatpush1.bf16.msra.mxu0 %v1890
  %2548 = vmatprep.subr.bf16.mxu0 0
  %2549 = vmatpush1.bf16.msra.mxu0 %v1891
  %2550 = vmatprep.subr.bf16.mxu0 0
  %2551 = vmatpush1.bf16.msra.mxu0 %v1892
  %2552 = vmatprep.subr.bf16.mxu0 0
  %2553 = vmatpush1.bf16.msra.mxu0 %v1893
  %2554 = vmatprep.subr.bf16.mxu0 0
  %2555 = vmatpush1.bf16.msra.mxu0 %v1894
  %2556 = vmatprep.subr.bf16.mxu0 0
  %2557 = vmatpush1.bf16.msra.mxu0 %v1895
  %2558 = vmatprep.subr.bf16.mxu0 0
  %2559 = vmatpush1.bf16.msra.mxu0 %v1896
  %2560 = vmatprep.subr.bf16.mxu0 0
  %2561 = vmatpush1.bf16.msra.mxu0 %v1897
  %2562 = vmatprep.subr.bf16.mxu0 0
  %2563 = vmatpush1.bf16.msra.mxu0 %v1898
  %2564 = vmatprep.subr.bf16.mxu0 0
  %2565 = vmatpush1.bf16.msra.mxu0 %v1899
  %2566 = vmatprep.subr.bf16.mxu0 0
  %2567 = vmatpush1.bf16.msra.mxu0 %v1900
  %2568 = vmatprep.subr.bf16.mxu0 0
  %2569 = vmatpush1.bf16.msra.mxu0 %v1901
  %2570 = vmatprep.subr.bf16.mxu0 0
  %2571 = vmatpush1.bf16.msra.mxu0 %v1902
  %2572 = vmatprep.subr.bf16.mxu0 0
  %2573 = vmatpush1.bf16.msra.mxu0 %v1903
  %2574 = vmatprep.subr.bf16.mxu0 0
  %2575 = vmatpush1.bf16.msra.mxu0 %v1904
  %2576 = vmatprep.subr.bf16.mxu0 0
  %2577 = vmatpush1.bf16.msra.mxu0 %v1905
  %2578 = vmatprep.mubr.bf16.mxu0 %v635
  %2579 = vmatmul.mubr.bf16.gmra.mrb[0].mxu0 %v621
  %v2580 = vpop.f32.mrb[0].mxu0
  %v2581 = vadd.f32 %v2541, %v2580
  %v2582 = vpop.f32.mrb[0].mxu0
  %v2583 = vpop.f32.mrb[0].mxu0
  %v2584 = vpop.f32.mrb[0].mxu0
  %2585 = vdwg.mxu0
  %2586 = vmatprep.subr.bf16.mxu0 0
  %2587 = vmatpush1.bf16.msra.mxu0 %v1906
  %2588 = vmatprep.subr.bf16.mxu0 0
  %2589 = vmatpush1.bf16.msra.mxu0 %v1907
  %2590 = vmatprep.subr.bf16.mxu0 0
  %2591 = vmatpush1.bf16.msra.mxu0 %v1908
  %2592 = vmatprep.subr.bf16.mxu0 0
  %2593 = vmatpush1.bf16.msra.mxu0 %v1909
  %2594 = vmatprep.subr.bf16.mxu0 0
  %2595 = vmatpush1.bf16.msra.mxu0 %v1910
  %2596 = vmatprep.subr.bf16.mxu0 0
  %2597 = vmatpush1.bf16.msra.mxu0 %v1911
  %2598 = vmatprep.subr.bf16.mxu0 0
  %2599 = vmatpush1.bf16.msra.mxu0 %v1912
  %2600 = vmatprep.subr.bf16.mxu0 0
  %2601 = vmatpush1.bf16.msra.mxu0 %v1913
  %2602 = vmatprep.subr.bf16.mxu0 0
  %2603 = vmatpush1.bf16.msra.mxu0 %v1914
  %2604 = vmatprep.subr.bf16.mxu0 0
  %2605 = vmatpush1.bf16.msra.mxu0 %v1915
  %2606 = vmatprep.subr.bf16.mxu0 0
  %2607 = vmatpush1.bf16.msra.mxu0 %v1916
  %2608 = vmatprep.subr.bf16.mxu0 0
  %2609 = vmatpush1.bf16.msra.mxu0 %v1917
  %2610 = vmatprep.subr.bf16.mxu0 0
  %2611 = vmatpush1.bf16.msra.mxu0 %v1918
  %2612 = vmatprep.subr.bf16.mxu0 0
  %2613 = vmatpush1.bf16.msra.mxu0 %v1919
  %2614 = vmatprep.subr.bf16.mxu0 0
  %2615 = vmatpush1.bf16.msra.mxu0 %v1920
  %2616 = vmatprep.subr.bf16.mxu0 0
  %2617 = vmatpush1.bf16.msra.mxu0 %v1921
  %2618 = vmatprep.mubr.bf16.mxu0 %v639
  %2619 = vmatmul.mubr.bf16.gmra.mrb[0].mxu0 %v637
  %v2620 = vpop.f32.mrb[0].mxu0
  %v2621 = vadd.f32 %v2581, %v2620
  %v2622 = vpop.f32.mrb[0].mxu0
  %v2623 = vpop.f32.mrb[0].mxu0
  %v2624 = vpop.f32.mrb[0].mxu0
  %2625 = vdwg.mxu0
  %2626 = vmatprep.subr.bf16.mxu0 0
  %2627 = vmatpush1.bf16.msra.mxu0 %v1922
  %2628 = vmatprep.subr.bf16.mxu0 0
  %2629 = vmatpush1.bf16.msra.mxu0 %v1923
  %2630 = vmatprep.subr.bf16.mxu0 0
  %2631 = vmatpush1.bf16.msra.mxu0 %v1924
  %2632 = vmatprep.subr.bf16.mxu0 0
  %2633 = vmatpush1.bf16.msra.mxu0 %v1925
  %2634 = vmatprep.subr.bf16.mxu0 0
  %2635 = vmatpush1.bf16.msra.mxu0 %v1926
  %2636 = vmatprep.subr.bf16.mxu0 0
  %2637 = vmatpush1.bf16.msra.mxu0 %v1927
  %2638 = vmatprep.subr.bf16.mxu0 0
  %2639 = vmatpush1.bf16.msra.mxu0 %v1928
  %2640 = vmatprep.subr.bf16.mxu0 0
  %2641 = vmatpush1.bf16.msra.mxu0 %v1929
  %2642 = vmatprep.subr.bf16.mxu0 0
  %2643 = vmatpush1.bf16.msra.mxu0 %v1930
  %2644 = vmatprep.subr.bf16.mxu0 0
  %2645 = vmatpush1.bf16.msra.mxu0 %v1931
  %2646 = vmatprep.subr.bf16.mxu0 0
  %2647 = vmatpush1.bf16.msra.mxu0 %v1932
  %2648 = vmatprep.subr.bf16.mxu0 0
  %2649 = vmatpush1.bf16.msra.mxu0 %v1933
  %2650 = vmatprep.subr.bf16.mxu0 0
  %2651 = vmatpush1.bf16.msra.mxu0 %v1934
  %2652 = vmatprep.subr.bf16.mxu0 0
  %2653 = vmatpush1.bf16.msra.mxu0 %v1935
  %2654 = vmatprep.subr.bf16.mxu0 0
  %2655 = vmatpush1.bf16.msra.mxu0 %v1936
  %2656 = vmatprep.subr.bf16.mxu0 0
  %2657 = vmatpush1.bf16.msra.mxu0 %v1937
  %2658 = vmatprep.mubr.bf16.mxu0 %v677
  %2659 = vmatmul.mubr.bf16.gmra.mrb[0].mxu0 %v663
  %v2660 = vpop.f32.mrb[0].mxu0
  %v2661 = vadd.f32 %v2621, %v2660
  %v2662 = vpop.f32.mrb[0].mxu0
  %v2663 = vpop.f32.mrb[0].mxu0
  %v2664 = vpop.f32.mrb[0].mxu0
  %2665 = vdwg.mxu0
  %2666 = vmatprep.subr.bf16.mxu0 0
  %2667 = vmatpush1.bf16.msra.mxu0 %v1938
  %2668 = vmatprep.subr.bf16.mxu0 0
  %2669 = vmatpush1.bf16.msra.mxu0 %v1939
  %2670 = vmatprep.subr.bf16.mxu0 0
  %2671 = vmatpush1.bf16.msra.mxu0 %v1940
  %2672 = vmatprep.subr.bf16.mxu0 0
  %2673 = vmatpush1.bf16.msra.mxu0 %v1941
  %2674 = vmatprep.subr.bf16.mxu0 0
  %2675 = vmatpush1.bf16.msra.mxu0 %v1942
  %2676 = vmatprep.subr.bf16.mxu0 0
  %2677 = vmatpush1.bf16.msra.mxu0 %v1943
  %2678 = vmatprep.subr.bf16.mxu0 0
  %2679 = vmatpush1.bf16.msra.mxu0 %v1944
  %2680 = vmatprep.subr.bf16.mxu0 0
  %2681 = vmatpush1.bf16.msra.mxu0 %v1945
  %2682 = vmatprep.subr.bf16.mxu0 0
  %2683 = vmatpush1.bf16.msra.mxu0 %v1946
  %2684 = vmatprep.subr.bf16.mxu0 0
  %2685 = vmatpush1.bf16.msra.mxu0 %v1947
  %2686 = vmatprep.subr.bf16.mxu0 0
  %2687 = vmatpush1.bf16.msra.mxu0 %v1948
  %2688 = vmatprep.subr.bf16.mxu0 0
  %2689 = vmatpush1.bf16.msra.mxu0 %v1949
  %2690 = vmatprep.subr.bf16.mxu0 0
  %2691 = vmatpush1.bf16.msra.mxu0 %v1950
  %2692 = vmatprep.subr.bf16.mxu0 0
  %2693 = vmatpush1.bf16.msra.mxu0 %v1951
  %2694 = vmatprep.subr.bf16.mxu0 0
  %2695 = vmatpush1.bf16.msra.mxu0 %v1952
  %2696 = vmatprep.subr.bf16.mxu0 0
  %2697 = vmatpush1.bf16.msra.mxu0 %v1953
  %2698 = vmatprep.mubr.bf16.mxu0 %v687
  %2699 = vmatmul.mubr.bf16.gmra.mrb[0].mxu0 %v685
  %v2700 = vpop.f32.mrb[0].mxu0
  %v2701 = vadd.f32 %v2661, %v2700
  %v2702 = vpop.f32.mrb[0].mxu0
  %v2703 = vpop.f32.mrb[0].mxu0
  %v2704 = vpop.f32.mrb[0].mxu0
  %2705 = vdwg.mxu0
  %2706 = vmatprep.subr.bf16.mxu0 0
  %2707 = vmatpush1.bf16.msra.mxu0 %v1954
  %2708 = vmatprep.subr.bf16.mxu0 0
  %2709 = vmatpush1.bf16.msra.mxu0 %v1955
  %2710 = vmatprep.subr.bf16.mxu0 0
  %2711 = vmatpush1.bf16.msra.mxu0 %v1956
  %2712 = vmatprep.subr.bf16.mxu0 0
  %2713 = vmatpush1.bf16.msra.mxu0 %v1957
  %2714 = vmatprep.subr.bf16.mxu0 0
  %2715 = vmatpush1.bf16.msra.mxu0 %v1958
  %2716 = vmatprep.subr.bf16.mxu0 0
  %2717 = vmatpush1.bf16.msra.mxu0 %v1959
  %2718 = vmatprep.subr.bf16.mxu0 0
  %2719 = vmatpush1.bf16.msra.mxu0 %v1960
  %2720 = vmatprep.subr.bf16.mxu0 0
  %2721 = vmatpush1.bf16.msra.mxu0 %v1961
  %2722 = vmatprep.subr.bf16.mxu0 0
  %2723 = vmatpush1.bf16.msra.mxu0 %v1962
  %2724 = vmatprep.subr.bf16.mxu0 0
  %2725 = vmatpush1.bf16.msra.mxu0 %v1963
  %2726 = vmatprep.subr.bf16.mxu0 0
  %2727 = vmatpush1.bf16.msra.mxu0 %v1964
  %2728 = vmatprep.subr.bf16.mxu0 0
  %2729 = vmatpush1.bf16.msra.mxu0 %v1965
  %2730 = vmatprep.subr.bf16.mxu0 0
  %2731 = vmatpush1.bf16.msra.mxu0 %v1966
  %2732 = vmatprep.subr.bf16.mxu0 0
  %2733 = vmatpush1.bf16.msra.mxu0 %v1967
  %2734 = vmatprep.subr.bf16.mxu0 0
  %2735 = vmatpush1.bf16.msra.mxu0 %v1968
  %2736 = vmatprep.subr.bf16.mxu0 0
  %2737 = vmatpush1.bf16.msra.mxu0 %v1969
  %2738 = vmatprep.mubr.bf16.mxu0 %v684
  %2739 = vmatmul.mubr.bf16.gmra.mrb[0].mxu0 %v670
  %v2740 = vpop.f32.mrb[0].mxu0
  %v2741 = vadd.f32 %v2701, %v2740
  %v2742 = vpop.f32.mrb[0].mxu0
  %v2743 = vpop.f32.mrb[0].mxu0
  %v2744 = vpop.f32.mrb[0].mxu0
  %2745 = vdwg.mxu0
  %2746 = vmatprep.subr.bf16.mxu0 0
  %2747 = vmatpush1.bf16.msra.mxu0 %v1970
  %2748 = vmatprep.subr.bf16.mxu0 0
  %2749 = vmatpush1.bf16.msra.mxu0 %v1971
  %2750 = vmatprep.subr.bf16.mxu0 0
  %2751 = vmatpush1.bf16.msra.mxu0 %v1972
  %2752 = vmatprep.subr.bf16.mxu0 0
  %2753 = vmatpush1.bf16.msra.mxu0 %v1973
  %2754 = vmatprep.subr.bf16.mxu0 0
  %2755 = vmatpush1.bf16.msra.mxu0 %v1974
  %2756 = vmatprep.subr.bf16.mxu0 0
  %2757 = vmatpush1.bf16.msra.mxu0 %v1975
  %2758 = vmatprep.subr.bf16.mxu0 0
  %2759 = vmatpush1.bf16.msra.mxu0 %v1976
  %2760 = vmatprep.subr.bf16.mxu0 0
  %2761 = vmatpush1.bf16.msra.mxu0 %v1977
  %2762 = vmatprep.subr.bf16.mxu0 0
  %2763 = vmatpush1.bf16.msra.mxu0 %v1978
  %2764 = vmatprep.subr.bf16.mxu0 0
  %2765 = vmatpush1.bf16.msra.mxu0 %v1979
  %2766 = vmatprep.subr.bf16.mxu0 0
  %2767 = vmatpush1.bf16.msra.mxu0 %v1980
  %2768 = vmatprep.subr.bf16.mxu0 0
  %2769 = vmatpush1.bf16.msra.mxu0 %v1981
  %2770 = vmatprep.subr.bf16.mxu0 0
  %2771 = vmatpush1.bf16.msra.mxu0 %v1982
  %2772 = vmatprep.subr.bf16.mxu0 0
  %2773 = vmatpush1.bf16.msra.mxu0 %v1983
  %2774 = vmatprep.subr.bf16.mxu0 0
  %2775 = vmatpush1.bf16.msra.mxu0 %v1984
  %2776 = vmatprep.subr.bf16.mxu0 0
  %2777 = vmatpush1.bf16.msra.mxu0 %v1985
  %2778 = vmatprep.mubr.bf16.mxu0 %v688
  %2779 = vmatmul.mubr.bf16.gmra.mrb[0].mxu0 %v686
  %v2780 = vpop.f32.mrb[0].mxu0
  %v2781 = vadd.f32 %v2741, %v2780
  %v2782 = vpop.f32.mrb[0].mxu0
  %v2783 = vpop.f32.mrb[0].mxu0
  %v2784 = vpop.f32.mrb[0].mxu0
  %2785 = vdwg.mxu0
  %2786 = vmatprep.subr.bf16.mxu0 0
  %2787 = vmatpush1.bf16.msra.mxu0 %v1986
  %2788 = vmatprep.subr.bf16.mxu0 0
  %2789 = vmatpush1.bf16.msra.mxu0 %v1987
  %2790 = vmatprep.subr.bf16.mxu0 0
  %2791 = vmatpush1.bf16.msra.mxu0 %v1988
  %2792 = vmatprep.subr.bf16.mxu0 0
  %2793 = vmatpush1.bf16.msra.mxu0 %v1989
  %2794 = vmatprep.subr.bf16.mxu0 0
  %2795 = vmatpush1.bf16.msra.mxu0 %v1990
  %2796 = vmatprep.subr.bf16.mxu0 0
  %2797 = vmatpush1.bf16.msra.mxu0 %v1991
  %2798 = vmatprep.subr.bf16.mxu0 0
  %2799 = vmatpush1.bf16.msra.mxu0 %v1992
  %2800 = vmatprep.subr.bf16.mxu0 0
  %2801 = vmatpush1.bf16.msra.mxu0 %v1993
  %2802 = vmatprep.subr.bf16.mxu0 0
  %2803 = vmatpush1.bf16.msra.mxu0 %v1994
  %2804 = vmatprep.subr.bf16.mxu0 0
  %2805 = vmatpush1.bf16.msra.mxu0 %v1995
  %2806 = vmatprep.subr.bf16.mxu0 0
  %2807 = vmatpush1.bf16.msra.mxu0 %v1996
  %2808 = vmatprep.subr.bf16.mxu0 0
  %2809 = vmatpush1.bf16.msra.mxu0 %v1997
  %2810 = vmatprep.subr.bf16.mxu0 0
  %2811 = vmatpush1.bf16.msra.mxu0 %v1998
  %2812 = vmatprep.subr.bf16.mxu0 0
  %2813 = vmatpush1.bf16.msra.mxu0 %v1999
  %2814 = vmatprep.subr.bf16.mxu0 0
  %2815 = vmatpush1.bf16.msra.mxu0 %v2000
  %2816 = vmatprep.subr.bf16.mxu0 0
  %2817 = vmatpush1.bf16.msra.mxu0 %v2001
  %2818 = vmatprep.mubr.bf16.mxu0 %v726
  %2819 = vmatmul.mubr.bf16.gmra.mrb[0].mxu0 %v712
  %v2820 = vpop.f32.mrb[0].mxu0
  %v2821 = vadd.f32 %v2781, %v2820
  %v2822 = vpop.f32.mrb[0].mxu0
  %v2823 = vpop.f32.mrb[0].mxu0
  %v2824 = vpop.f32.mrb[0].mxu0
  %2825 = vdwg.mxu0
  %2826 = vmatprep.subr.bf16.mxu0 0
  %2827 = vmatpush1.bf16.msra.mxu0 %v2002
  %2828 = vmatprep.subr.bf16.mxu0 0
  %2829 = vmatpush1.bf16.msra.mxu0 %v2003
  %2830 = vmatprep.subr.bf16.mxu0 0
  %2831 = vmatpush1.bf16.msra.mxu0 %v2004
  %2832 = vmatprep.subr.bf16.mxu0 0
  %2833 = vmatpush1.bf16.msra.mxu0 %v2005
  %2834 = vmatprep.subr.bf16.mxu0 0
  %2835 = vmatpush1.bf16.msra.mxu0 %v2006
  %2836 = vmatprep.subr.bf16.mxu0 0
  %2837 = vmatpush1.bf16.msra.mxu0 %v2007
  %2838 = vmatprep.subr.bf16.mxu0 0
  %2839 = vmatpush1.bf16.msra.mxu0 %v2008
  %2840 = vmatprep.subr.bf16.mxu0 0
  %2841 = vmatpush1.bf16.msra.mxu0 %v2009
  %2842 = vmatprep.subr.bf16.mxu0 0
  %2843 = vmatpush1.bf16.msra.mxu0 %v2010
  %2844 = vmatprep.subr.bf16.mxu0 0
  %2845 = vmatpush1.bf16.msra.mxu0 %v2011
  %2846 = vmatprep.subr.bf16.mxu0 0
  %2847 = vmatpush1.bf16.msra.mxu0 %v2012
  %2848 = vmatprep.subr.bf16.mxu0 0
  %2849 = vmatpush1.bf16.msra.mxu0 %v2013
  %2850 = vmatprep.subr.bf16.mxu0 0
  %2851 = vmatpush1.bf16.msra.mxu0 %v2014
  %2852 = vmatprep.subr.bf16.mxu0 0
  %2853 = vmatpush1.bf16.msra.mxu0 %v2015
  %2854 = vmatprep.subr.bf16.mxu0 0
  %2855 = vmatpush1.bf16.msra.mxu0 %v2016
  %2856 = vmatprep.subr.bf16.mxu0 0
  %2857 = vmatpush1.bf16.msra.mxu0 %v2017
  %2858 = vmatprep.mubr.bf16.mxu0 %v736
  %2859 = vmatmul.mubr.bf16.gmra.mrb[0].mxu0 %v734
  %v2860 = vpop.f32.mrb[0].mxu0
  %v2861 = vadd.f32 %v2821, %v2860
  %v2862 = vpop.f32.mrb[0].mxu0
  %v2863 = vpop.f32.mrb[0].mxu0
  %v2864 = vpop.f32.mrb[0].mxu0
  %2865 = vdwg.mxu0
  %2866 = vmatprep.subr.bf16.mxu0 0
  %2867 = vmatpush1.bf16.msra.mxu0 %v2018
  %2868 = vmatprep.subr.bf16.mxu0 0
  %2869 = vmatpush1.bf16.msra.mxu0 %v2019
  %2870 = vmatprep.subr.bf16.mxu0 0
  %2871 = vmatpush1.bf16.msra.mxu0 %v2020
  %2872 = vmatprep.subr.bf16.mxu0 0
  %2873 = vmatpush1.bf16.msra.mxu0 %v2021
  %2874 = vmatprep.subr.bf16.mxu0 0
  %2875 = vmatpush1.bf16.msra.mxu0 %v2022
  %2876 = vmatprep.subr.bf16.mxu0 0
  %2877 = vmatpush1.bf16.msra.mxu0 %v2023
  %2878 = vmatprep.subr.bf16.mxu0 0
  %2879 = vmatpush1.bf16.msra.mxu0 %v2024
  %2880 = vmatprep.subr.bf16.mxu0 0
  %2881 = vmatpush1.bf16.msra.mxu0 %v2025
  %2882 = vmatprep.subr.bf16.mxu0 0
  %2883 = vmatpush1.bf16.msra.mxu0 %v2026
  %2884 = vmatprep.subr.bf16.mxu0 0
  %2885 = vmatpush1.bf16.msra.mxu0 %v2027
  %2886 = vmatprep.subr.bf16.mxu0 0
  %2887 = vmatpush1.bf16.msra.mxu0 %v2028
  %2888 = vmatprep.subr.bf16.mxu0 0
  %2889 = vmatpush1.bf16.msra.mxu0 %v2029
  %2890 = vmatprep.subr.bf16.mxu0 0
  %2891 = vmatpush1.bf16.msra.mxu0 %v2030
  %2892 = vmatprep.subr.bf16.mxu0 0
  %2893 = vmatpush1.bf16.msra.mxu0 %v2031
  %2894 = vmatprep.subr.bf16.mxu0 0
  %2895 = vmatpush1.bf16.msra.mxu0 %v2032
  %2896 = vmatprep.subr.bf16.mxu0 0
  %2897 = vmatpush1.bf16.msra.mxu0 %v2033
  %2898 = vmatprep.mubr.bf16.mxu0 %v733
  %2899 = vmatmul.mubr.bf16.gmra.mrb[0].mxu0 %v719
  %v2900 = vpop.f32.mrb[0].mxu0
  %v2901 = vadd.f32 %v2861, %v2900
  %v2902 = vpop.f32.mrb[0].mxu0
  %v2903 = vpop.f32.mrb[0].mxu0
  %v2904 = vpop.f32.mrb[0].mxu0
  %2905 = vdwg.mxu0
  %2906 = vmatprep.subr.bf16.mxu0 0
  %2907 = vmatpush1.bf16.msra.mxu0 %v2034
  %2908 = vmatprep.subr.bf16.mxu0 0
  %2909 = vmatpush1.bf16.msra.mxu0 %v2035
  %2910 = vmatprep.subr.bf16.mxu0 0
  %2911 = vmatpush1.bf16.msra.mxu0 %v2036
  %2912 = vmatprep.subr.bf16.mxu0 0
  %2913 = vmatpush1.bf16.msra.mxu0 %v2037
  %2914 = vmatprep.subr.bf16.mxu0 0
  %2915 = vmatpush1.bf16.msra.mxu0 %v2038
  %2916 = vmatprep.subr.bf16.mxu0 0
  %2917 = vmatpush1.bf16.msra.mxu0 %v2039
  %2918 = vmatprep.subr.bf16.mxu0 0
  %2919 = vmatpush1.bf16.msra.mxu0 %v2040
  %2920 = vmatprep.subr.bf16.mxu0 0
  %2921 = vmatpush1.bf16.msra.mxu0 %v2041
  %2922 = vmatprep.subr.bf16.mxu0 0
  %2923 = vmatpush1.bf16.msra.mxu0 %v2042
  %2924 = vmatprep.subr.bf16.mxu0 0
  %2925 = vmatpush1.bf16.msra.mxu0 %v2043
  %2926 = vmatprep.subr.bf16.mxu0 0
  %2927 = vmatpush1.bf16.msra.mxu0 %v2044
  %2928 = vmatprep.subr.bf16.mxu0 0
  %2929 = vmatpush1.bf16.msra.mxu0 %v2045
  %2930 = vmatprep.subr.bf16.mxu0 0
  %2931 = vmatpush1.bf16.msra.mxu0 %v2046
  %2932 = vmatprep.subr.bf16.mxu0 0
  %2933 = vmatpush1.bf16.msra.mxu0 %v2047
  %2934 = vmatprep.subr.bf16.mxu0 0
  %2935 = vmatpush1.bf16.msra.mxu0 %v2048
  %2936 = vmatprep.subr.bf16.mxu0 0
  %2937 = vmatpush1.bf16.msra.mxu0 %v2049
  %2938 = vmatprep.mubr.bf16.mxu0 %v737
  %2939 = vmatmul.mubr.bf16.gmra.mrb[0].mxu0 %v735
  %v2940 = vpop.f32.mrb[0].mxu0
  %v2941 = vadd.f32 %v2901, %v2940
  %v2942 = vpop.f32.mrb[0].mxu0
  %v2943 = vpop.f32.mrb[0].mxu0
  %v2944 = vpop.f32.mrb[0].mxu0
  %2945 = vdwg.mxu0
  %vm2946 = vcmask 517120
  %2947 = vst.msk [vmem:[%s3] sm:$0x3] %vm2946, %v2941
  // Predicated region
  $region14: #{vae_encoder_forward.5} parent=0 // pred_check
    _
  $region15: #{vae_encoder_forward.5} parent=0 // pred_check_branch
    %2949 = sbr.rel (0) target = $region17
  $region16: #{vae_encoder_forward.5} parent=0 // pred_region
    _
  $region17: #{vae_encoder_forward.5} parent=0 // pred_fallthru
    _
  // Predicated region
  $region18: #{vae_encoder_forward.5} parent=0 // pred_check
    _
  $region19: #{vae_encoder_forward.5} parent=0 // pred_check_branch
    %2951 = sbr.rel (0) target = $region21
  $region20: #{vae_encoder_forward.5} parent=0 // pred_region
    _
  $region21: #{vae_encoder_forward.5} parent=0 // pred_fallthru
    _

</llo_original>
